<compile_context>
chip_gen: v7x
topology: tpu7x:2x2x1
jax: 0.10.0
libtpu: 0.0.40
codegen_flags: <defaults>
</compile_context>

<pallas_src>
import functools
import math

import jax
import jax.numpy as jnp
from jax import lax
from jax.experimental import pallas as pl
from jax.experimental.pallas import tpu as pltpu


def _round_up(x, m):
    return (x + m - 1) // m * m


def _nbytes(shape, dtype):
    return math.prod(shape) * jnp.dtype(dtype).itemsize


def _vmem_limit(n_bytes):
    """Scoped-VMEM limit: 2x headroom for double-buffering / temporaries."""
    return int(min(max(2 * n_bytes + (2 << 20), 16 << 20), 100 << 20))


def _pick_tile(total, step, cap):
    """Largest multiple of `step` <= cap that divides `total` (total % step == 0)."""
    t = min(total, (cap // step) * step)
    t = max((t // step) * step, step)
    while total % t:
        t -= step
    return t


# ---------------------------------------------------------------------------
# Kernels
# ---------------------------------------------------------------------------

def encoder_kernel(x_ref, wi_ref, wh_ref, b_ref, bhn_ref, out_ref, gi_ref,
                   *, T, Bp, Hp, unroll):
    """One direction of the bidirectional GRU encoder (grid axis = direction).

    Grid (2,): d=0 forward (t = 0..T-1), d=1 backward (t = T-1..0).
    x_ref:   (T*Bp, E) bf16, time-major rows (row = t*Bp + b), shared by both dirs
    wi_ref:  (E, 3*Hp) bf16, wh_ref: (Hp, 3*Hp) bf16   (gates [r|z|n], lane-padded)
    b_ref:   (1, 3*Hp) f32  = b_ih + [b_hr, b_hz, 0]
    bhn_ref: (1, Hp)   f32  = b_hn (must stay inside r*(...))
    out_ref: (Bp, Hp)  f32  final hidden of this direction (one unmasked store)
    gi_ref:  (T*Bp, 3*Hp) bf16 scratch: hoisted input projection
    """
    d = pl.program_id(0)

    # Hoisted input projections for all timesteps: one MXU matmul, bias folded.
    gi_ref[...] = (jnp.dot(x_ref[...], wi_ref[...],
                           preferred_element_type=jnp.float32)
                   + b_ref[...]).astype(gi_ref.dtype)

    wh = wh_ref[...]
    bhn = jnp.broadcast_to(bhn_ref[...], (Bp, Hp))   # hoisted broadcast

    def body(t, h):
        t_eff = t + d * (T - 1 - 2 * t)              # fwd: t ; bwd: T-1-t
        row = pl.multiple_of(t_eff * Bp, Bp)
        gi_t = gi_ref[pl.ds(row, Bp), :].astype(jnp.float32)
        gh = jnp.dot(h.astype(jnp.bfloat16), wh,
                     preferred_element_type=jnp.float32)
        rz = jax.nn.sigmoid(gi_t[:, :2 * Hp] + gh[:, :2 * Hp])  # one EUP push
        r, z = rz[:, :Hp], rz[:, Hp:]
        n = jnp.tanh(gi_t[:, 2 * Hp:] + r * (gh[:, 2 * Hp:] + bhn))
        return (1.0 - z) * n + z * h

    h = lax.fori_loop(0, T, body, jnp.zeros((Bp, Hp), jnp.float32),
                      unroll=unroll)
    out_ref[...] = h                                  # full-width unmasked store


def decoder_rnn_kernel(x_ref, h0_ref, wi_ref, wh_ref, b_ref, bhn_ref,
                       hs_ref, hout_ref, gi_ref, *, T, Bp, Dp, unroll):
    """GRU decoder recurrence (hidden = 2H, padded to Dp = 2*Hp, [fwd|bwd] groups).

    x_ref:    (T*Bp, E)  bf16
    h0_ref:   (Bp, Dp)   f32  (encoder state in the same group layout)
    wi_ref:   (E, 3*Dp)  bf16, wh_ref: (Dp, 3*Dp) bf16
    b_ref:    (1, 3*Dp)  f32 = b_ih + [b_hr, b_hz, 0];  bhn_ref: (1, Dp) f32
    hs_ref:   (T*Bp, Dp) bf16 output: all hidden states (consumed by FC kernel)
    hout_ref: (Bp, Dp)   f32 output: final hidden
    gi_ref:   (T*Bp, 3*Dp) bf16 scratch: hoisted input projection
    """
    gi_ref[...] = (jnp.dot(x_ref[...], wi_ref[...],
                           preferred_element_type=jnp.float32)
                   + b_ref[...]).astype(gi_ref.dtype)

    wh = wh_ref[...]
    bhn = jnp.broadcast_to(bhn_ref[...], (Bp, Dp))

    def body(t, h):
        row = pl.multiple_of(t * Bp, Bp)
        gi_t = gi_ref[pl.ds(row, Bp), :].astype(jnp.float32)
        gh = jnp.dot(h.astype(jnp.bfloat16), wh,
                     preferred_element_type=jnp.float32)
        rz = jax.nn.sigmoid(gi_t[:, :2 * Dp] + gh[:, :2 * Dp])
        r, z = rz[:, :Dp], rz[:, Dp:]
        n = jnp.tanh(gi_t[:, 2 * Dp:] + r * (gh[:, 2 * Dp:] + bhn))
        h = (1.0 - z) * n + z * h
        hs_ref[pl.ds(row, Bp), :] = h.astype(hs_ref.dtype)
        return h

    h_final = lax.fori_loop(0, T, body, h0_ref[...], unroll=unroll)
    hout_ref[...] = h_final


def fc_kernel(hs_ref, w_ref, b_ref, out_ref):
    """Grid-tiled FC head: (tile_m, Dp) @ (Dp, tile_n) + bias -> (tile_m, tile_n)."""
    out_ref[...] = jnp.dot(hs_ref[...], w_ref[...],
                           preferred_element_type=jnp.float32) + b_ref[...]


# ---------------------------------------------------------------------------
# Wrapper: parameter / activation layout prep + pallas_call glue
# ---------------------------------------------------------------------------

def _prep_gru(wi, wh, bi, bh, H, Hp, groups=1):
    """Pad a GRU's parameters; hidden is `groups` groups of H, each padded to Hp.

    wi: (in, 3*G*H), wh: (G*H, 3*G*H), bi/bh: (1, 3*G*H), gate order [r|z|n].
    Returns bf16 weights + combined f32 biases (b_hn kept separate).
    """
    G = groups
    D, Dp = G * H, G * Hp

    def pad_gate_cols(a):                              # (..., 3*D) -> (..., 3*Dp)
        lead = a.shape[:-1]
        a = a.reshape(lead + (3, G, H))
        a = jnp.pad(a, [(0, 0)] * (len(lead) + 2) + [(0, Hp - H)])
        return a.reshape(lead + (3 * Dp,))

    wi_p = pad_gate_cols(wi)                                           # (in, 3*Dp)
    wh_rows = jnp.pad(wh.reshape(G, H, 3 * D),
                      ((0, 0), (0, Hp - H), (0, 0))).reshape(Dp, 3 * D)
    wh_p = pad_gate_cols(wh_rows)                                      # (Dp, 3*Dp)

    bi3 = bi.reshape(3, D)
    bh3 = bh.reshape(3, D)
    b_comb = jnp.stack([bi3[0] + bh3[0], bi3[1] + bh3[1], bi3[2]], axis=0)
    b_comb = pad_gate_cols(b_comb.reshape(1, 3 * D))                   # (1, 3*Dp)
    bhn = jnp.pad(bh3[2].reshape(G, H), ((0, 0), (0, Hp - H))).reshape(1, Dp)
    return (wi_p.astype(jnp.bfloat16), wh_p.astype(jnp.bfloat16),
            b_comb.astype(jnp.float32), bhn.astype(jnp.float32))


def _embed_time_major(emb_table, tokens, Bp):
    """(B, T) ids -> (T*Bp, E) bf16, batch padded to Bp sublanes."""
    B, T = tokens.shape
    x = jnp.take(emb_table, tokens, axis=0)              # (B, T, E)
    x = jnp.transpose(x, (1, 0, 2))                      # (T, B, E)
    x = jnp.pad(x, ((0, 0), (0, Bp - B), (0, 0)))        # (T, Bp, E)
    return x.reshape(T * Bp, -1).astype(jnp.bfloat16)


def seq2seq_forward(params, enc_tokens, dec_tokens):
    """Mirrors Seq2Seq.forward: returns (logits (B, Td, V), hidden (1, B, 2H))."""
    B, Te = enc_tokens.shape
    _, Td = dec_tokens.shape
    E = params["enc_emb"].shape[1]
    H = params["enc_whf"].shape[0]
    V = params["fc_w"].shape[1]

    # Batch padded to 16 sublanes so dynamic per-step row slices of bf16 scratch
    # stay aligned with the packed (16, 128) bf16 tile.
    Bp = _round_up(max(B, 16), 16)
    Hp = _round_up(H, 128)
    Dp = 2 * Hp                    # decoder hidden: [fwd | bwd] groups of Hp lanes
    Vp = _round_up(V, 128)

    enc_x = _embed_time_major(params["enc_emb"], enc_tokens, Bp)   # (Te*Bp, E)
    dec_x = _embed_time_major(params["dec_emb"], dec_tokens, Bp)   # (Td*Bp, E)

    # Encoder weights, stacked along a leading direction axis (fwd=0, bwd=1).
    wif, whf, bf, bhnf = _prep_gru(params["enc_wif"], params["enc_whf"],
                                   params["enc_bif"], params["enc_bhf"], H, Hp)
    wib, whb, bb, bhnb = _prep_gru(params["enc_wib"], params["enc_whb"],
                                   params["enc_bib"], params["enc_bhb"], H, Hp)
    wi_st = jnp.stack([wif, wib])        # (2, E, 3*Hp)
    wh_st = jnp.stack([whf, whb])        # (2, Hp, 3*Hp)
    b_st = jnp.stack([bf, bb])           # (2, 1, 3*Hp)
    bhn_st = jnp.stack([bhnf, bhnb])     # (2, 1, Hp)

    # Decoder GRU: hidden laid out as 2 groups of Hp (fwd lanes | bwd lanes),
    # matching the encoder's per-direction output blocks (no masked concat).
    wid, whd, bd, bhnd = _prep_gru(params["dec_wi"], params["dec_wh"],
                                   params["dec_bi"], params["dec_bh"], H, Hp,
                                   groups=2)

    # FC: rows follow the same 2-group hidden layout, cols padded to Vp.
    fc_w = jnp.pad(params["fc_w"].reshape(2, H, V),
                   ((0, 0), (0, Hp - H), (0, 0))).reshape(Dp, V)
    fc_w = jnp.pad(fc_w, ((0, 0), (0, Vp - V))).astype(jnp.bfloat16)
    fc_b = jnp.pad(params["fc_b"], ((0, 0), (0, Vp - V))).astype(jnp.float32)

    vmem = pl.BlockSpec(memory_space=pltpu.MemorySpace.VMEM)

    # --- encoder: one grid step per direction (v7x: one TensorCore each) -----
    enc_bytes = (_nbytes((Te * Bp, E), jnp.bfloat16)
                 + _nbytes((E, 3 * Hp), jnp.bfloat16)
                 + _nbytes((Hp, 3 * Hp), jnp.bfloat16)
                 + _nbytes((1, 3 * Hp), jnp.float32)
                 + _nbytes((1, Hp), jnp.float32)
                 + _nbytes((Bp, Hp), jnp.float32)
                 + _nbytes((Te * Bp, 3 * Hp), jnp.bfloat16))

    enc_hidden = pl.pallas_call(
        functools.partial(encoder_kernel, T=Te, Bp=Bp, Hp=Hp,
                          unroll=min(Te, 8)),
        out_shape=jax.ShapeDtypeStruct((Bp, Dp), jnp.float32),
        grid=(2,),
        in_specs=[
            pl.BlockSpec((Te * Bp, E), lambda d: (0, 0)),
            pl.BlockSpec((None, E, 3 * Hp), lambda d: (d, 0, 0)),
            pl.BlockSpec((None, Hp, 3 * Hp), lambda d: (d, 0, 0)),
            pl.BlockSpec((None, 1, 3 * Hp), lambda d: (d, 0, 0)),
            pl.BlockSpec((None, 1, Hp), lambda d: (d, 0, 0)),
        ],
        out_specs=pl.BlockSpec((Bp, Hp), lambda d: (0, d)),
        scratch_shapes=[pltpu.VMEM((Te * Bp, 3 * Hp), jnp.bfloat16)],
        compiler_params=pltpu.CompilerParams(
            dimension_semantics=("parallel",),
            vmem_limit_bytes=_vmem_limit(enc_bytes)),
    )(enc_x, wi_st, wh_st, b_st, bhn_st)

    # --- decoder recurrence: emits bf16 hidden states + final hidden ---------
    dec_bytes = (_nbytes((Td * Bp, E), jnp.bfloat16)
                 + _nbytes((Bp, Dp), jnp.float32)
                 + _nbytes((E, 3 * Dp), jnp.bfloat16)
                 + _nbytes((Dp, 3 * Dp), jnp.bfloat16)
                 + _nbytes((1, 3 * Dp), jnp.float32)
                 + _nbytes((1, Dp), jnp.float32)
                 + _nbytes((Td * Bp, Dp), jnp.bfloat16)
                 + _nbytes((Bp, Dp), jnp.float32)
                 + _nbytes((Td * Bp, 3 * Dp), jnp.bfloat16))

    hs, hidden_p = pl.pallas_call(
        functools.partial(decoder_rnn_kernel, T=Td, Bp=Bp, Dp=Dp,
                          unroll=min(Td, 8)),
        out_shape=(jax.ShapeDtypeStruct((Td * Bp, Dp), jnp.bfloat16),
                   jax.ShapeDtypeStruct((Bp, Dp), jnp.float32)),
        in_specs=[vmem] * 6,
        out_specs=(vmem, vmem),
        scratch_shapes=[pltpu.VMEM((Td * Bp, 3 * Dp), jnp.bfloat16)],
        compiler_params=pltpu.CompilerParams(
            vmem_limit_bytes=_vmem_limit(dec_bytes)),
    )(dec_x, enc_hidden, wid, whd, bd, bhnd)

    # --- FC head: standard grid-tiled MXU matmul (scales with T and V) -------
    TB = Td * Bp
    tile_m = _pick_tile(TB, 8, 512)
    tile_n = _pick_tile(Vp, 128, 512)
    fc_bytes = 2 * (_nbytes((tile_m, Dp), jnp.bfloat16)
                    + _nbytes((Dp, tile_n), jnp.bfloat16)
                    + _nbytes((1, tile_n), jnp.float32)
                    + _nbytes((tile_m, tile_n), jnp.float32))

    logits_p = pl.pallas_call(
        fc_kernel,
        out_shape=jax.ShapeDtypeStruct((TB, Vp), jnp.float32),
        grid=(TB // tile_m, Vp // tile_n),
        in_specs=[
            pl.BlockSpec((tile_m, Dp), lambda i, j: (i, 0)),
            pl.BlockSpec((Dp, tile_n), lambda i, j: (0, j)),
            pl.BlockSpec((1, tile_n), lambda i, j: (0, j)),
        ],
        out_specs=pl.BlockSpec((tile_m, tile_n), lambda i, j: (i, j)),
        compiler_params=pltpu.CompilerParams(
            dimension_semantics=("parallel", "parallel"),
            vmem_limit_bytes=_vmem_limit(fc_bytes)),
    )(hs, fc_w, fc_b)

    # Layout plumbing back to the PyTorch batch-first API (padded dims dropped).
    logits = logits_p.reshape(Td, Bp, Vp)[:, :B, :V]
    logits = jnp.transpose(logits, (1, 0, 2))                         # (B, Td, V)
    hidden = jnp.concatenate([hidden_p[:B, 0:H], hidden_p[:B, Hp:Hp + H]],
                             axis=1)[None]                            # (1, B, 2H)
    return logits, hidden


# ---------------------------------------------------------------------------
# Synthetic parameters matching the PyTorch module shapes
# ---------------------------------------------------------------------------

def init_params(key, enc_vocab, dec_vocab, emb_dim, hidden):
    ks = jax.random.split(key, 16)
    H, H2 = hidden, 2 * hidden
    kenc = 1.0 / jnp.sqrt(jnp.float32(H))
    kdec = 1.0 / jnp.sqrt(jnp.float32(H2))

    def u(k, shape, scale):
        return jax.random.uniform(k, shape, jnp.float32, -scale, scale)

    params = {
        # embeddings (PyTorch default: N(0, 1))
        "enc_emb": jax.random.normal(ks[0], (enc_vocab, emb_dim), jnp.float32),
        "dec_emb": jax.random.normal(ks[1], (dec_vocab, emb_dim), jnp.float32),
        # encoder bidirectional GRU, weights pre-transposed to (in, 3H), [r|z|n]
        "enc_wif": u(ks[2], (emb_dim, 3 * H), kenc),
        "enc_whf": u(ks[3], (H, 3 * H), kenc),
        "enc_bif": u(ks[4], (1, 3 * H), kenc),
        "enc_bhf": u(ks[5], (1, 3 * H), kenc),
        "enc_wib": u(ks[6], (emb_dim, 3 * H), kenc),
        "enc_whb": u(ks[7], (H, 3 * H), kenc),
        "enc_bib": u(ks[8], (1, 3 * H), kenc),
        "enc_bhb": u(ks[9], (1, 3 * H), kenc),
        # decoder GRU (hidden size 2H)
        "dec_wi": u(ks[10], (emb_dim, 3 * H2), kdec),
        "dec_wh": u(ks[11], (H2, 3 * H2), kdec),
        "dec_bi": u(ks[12], (1, 3 * H2), kdec),
        "dec_bh": u(ks[13], (1, 3 * H2), kdec),
        # fc: Linear(2H -> dec_vocab), stored as (2H, V)
        "fc_w": u(ks[14], (H2, dec_vocab), kdec),
        "fc_b": u(ks[15], (1, dec_vocab), kdec),
    }
    return params


if __name__ == "__main__":
    key = jax.random.PRNGKey(0)
    k_param, k_enc, k_dec = jax.random.split(key, 3)

    ENC_VOCAB, DEC_VOCAB = 32, 32
    EMB_DIM, HIDDEN = 16, 16
    B, T_ENC, T_DEC = 2, 8, 8

    params = init_params(k_param, ENC_VOCAB, DEC_VOCAB, EMB_DIM, HIDDEN)

    enc_tokens = jax.random.randint(k_enc, (B, T_ENC), 0, ENC_VOCAB, dtype=jnp.int32)
    dec_tokens = jax.random.randint(k_dec, (B, T_DEC), 0, DEC_VOCAB, dtype=jnp.int32)

    logits, hidden = jax.jit(seq2seq_forward)(params, enc_tokens, dec_tokens)
    logits = jax.block_until_ready(logits)
    hidden = jax.block_until_ready(hidden)

    assert logits.shape == (B, T_DEC, DEC_VOCAB), logits.shape
    assert hidden.shape == (1, B, 2 * HIDDEN), hidden.shape
    assert bool(jnp.all(jnp.isfinite(logits))) and bool(jnp.all(jnp.isfinite(hidden)))
    print("KERNEL_OK")
</pallas_src>

<mosaic_0001>
module attributes {stable_mosaic.version = 11 : i64} {
  func.func @encoder_kernel(%arg0: i32, %arg1: memref<128x16xbf16, #tpu.memory_space<vmem>>, %arg2: memref<1x16x384xbf16, #tpu.memory_space<vmem>>, %arg3: memref<1x128x384xbf16, #tpu.memory_space<vmem>>, %arg4: memref<1x1x384xf32, #tpu.memory_space<vmem>>, %arg5: memref<1x1x128xf32, #tpu.memory_space<vmem>>, %arg6: memref<16x128xf32, #tpu.memory_space<vmem>>, %arg7: memref<128x384xbf16, #tpu.memory_space<vmem>>) attributes {dimension_semantics = [#tpu.dimension_semantics<parallel>], iteration_bounds = array<i64: 2>, scalar_prefetch = 0 : i64, scratch_operands = 1 : i64, tpu.core_type = #tpu.core_type<tc>, window_params = [{pipeline_mode = #tpu.pipeline_mode<synchronous>, transform_indices = @transform_0, window_bounds = array<i64: 128, 16>}, {transform_indices = @transform_1, window_bounds = array<i64: 1, 16, 384>}, {transform_indices = @transform_2, window_bounds = array<i64: 1, 128, 384>}, {transform_indices = @transform_3, window_bounds = array<i64: 1, 1, 384>}, {transform_indices = @transform_4, window_bounds = array<i64: 1, 1, 128>}, {transform_indices = @transform_5, window_bounds = array<i64: 16, 128>}]} {
    %c0 = arith.constant 0 : index
    %c0_0 = arith.constant 0 : index
    %0 = vector.load %arg1[%c0, %c0_0] : memref<128x16xbf16, #tpu.memory_space<vmem>>, vector<128x16xbf16>
    %c0_1 = arith.constant 0 : index
    %c0_2 = arith.constant 0 : index
    %c0_3 = arith.constant 0 : index
    %1 = vector.load %arg2[%c0_1, %c0_2, %c0_3] : memref<1x16x384xbf16, #tpu.memory_space<vmem>>, vector<1x16x384xbf16>
    %2 = vector.shape_cast %1 : vector<1x16x384xbf16> to vector<16x384xbf16>
    %cst = arith.constant dense<0.000000e+00> : vector<128x384xf32>
    %3 = tpu.matmul %0, %2, %cst {dimension_numbers = #tpu.dot_dimension_numbers<[1], [0], [0], [1], [0, 0, 1, 1], [], []>} : vector<128x16xbf16>, vector<16x384xbf16>, vector<128x384xf32> -> vector<128x384xf32>
    %c0_4 = arith.constant 0 : index
    %c0_5 = arith.constant 0 : index
    %c0_6 = arith.constant 0 : index
    %4 = vector.load %arg4[%c0_4, %c0_5, %c0_6] : memref<1x1x384xf32, #tpu.memory_space<vmem>>, vector<1x1x384xf32>
    %5 = vector.shape_cast %4 : vector<1x1x384xf32> to vector<1x384xf32>
    %6 = vector.broadcast %5 : vector<1x384xf32> to vector<128x384xf32>
    %7 = arith.addf %3, %6 : vector<128x384xf32>
    %8 = arith.truncf %7 : vector<128x384xf32> to vector<128x384xbf16>
    %c0_7 = arith.constant 0 : index
    %c0_8 = arith.constant 0 : index
    %9 = vector.load %arg7[%c0_7, %c0_8] : memref<128x384xbf16, #tpu.memory_space<vmem>>, vector<128x384xbf16>
    tpu.vector_store %arg7[%c0_7, %c0_8], %8 {strides = array<i32>} : memref<128x384xbf16, #tpu.memory_space<vmem>>, vector<128x384xbf16>,
    %c0_9 = arith.constant 0 : index
    %c0_10 = arith.constant 0 : index
    %c0_11 = arith.constant 0 : index
    %10 = vector.load %arg3[%c0_9, %c0_10, %c0_11] : memref<1x128x384xbf16, #tpu.memory_space<vmem>>, vector<1x128x384xbf16>
    %11 = vector.shape_cast %10 : vector<1x128x384xbf16> to vector<128x384xbf16>
    %c0_12 = arith.constant 0 : index
    %c0_13 = arith.constant 0 : index
    %c0_14 = arith.constant 0 : index
    %12 = vector.load %arg5[%c0_12, %c0_13, %c0_14] : memref<1x1x128xf32, #tpu.memory_space<vmem>>, vector<1x1x128xf32>
    %13 = vector.shape_cast %12 : vector<1x1x128xf32> to vector<1x128xf32>
    %14 = vector.shape_cast %13 : vector<1x128xf32> to vector<1x128xf32>
    %15 = vector.broadcast %14 : vector<1x128xf32> to vector<16x128xf32>
    %cst_15 = arith.constant 0.000000e+00 : f32
    %16 = vector.broadcast %cst_15 : f32 to vector<16x128xf32>
    %c0_i32 = arith.constant 0 : i32
    %c2_i32 = arith.constant 2 : i32
    %17 = arith.muli %c2_i32, %c0_i32 : i32
    %c7_i32 = arith.constant 7 : i32
    %18 = arith.subi %c7_i32, %17 : i32
    %19 = arith.muli %arg0, %18 : i32
    %20 = arith.addi %c0_i32, %19 : i32
    %c16_i32 = arith.constant 16 : i32
    %21 = arith.muli %20, %c16_i32 : i32
    %22 = tpu.assume_multiple %21, 16 : i32
    %23 = arith.index_cast %22 : i32 to index
    %c0_16 = arith.constant 0 : index
    %24 = vector.load %arg7[%23, %c0_16] : memref<128x384xbf16, #tpu.memory_space<vmem>>, vector<16x384xbf16>
    %25 = arith.extf %24 : vector<16x384xbf16> to vector<16x384xf32>
    %26 = arith.truncf %16 : vector<16x128xf32> to vector<16x128xbf16>
    %cst_17 = arith.constant dense<0.000000e+00> : vector<16x384xf32>
    %27 = tpu.matmul %26, %11, %cst_17 {dimension_numbers = #tpu.dot_dimension_numbers<[1], [0], [0], [1], [0, 0, 1, 1], [], []>} : vector<16x128xbf16>, vector<128x384xbf16>, vector<16x384xf32> -> vector<16x384xf32>
    %28 = vector.extract_strided_slice %25 {offsets = [0, 0], sizes = [16, 256], strides = [1, 1]} : vector<16x384xf32> to vector<16x256xf32>
    %29 = vector.extract_strided_slice %27 {offsets = [0, 0], sizes = [16, 256], strides = [1, 1]} : vector<16x384xf32> to vector<16x256xf32>
    %30 = arith.addf %28, %29 : vector<16x256xf32>
    %31 = arith.negf %30 : vector<16x256xf32>
    %32 = math.exp %31 : vector<16x256xf32>
    %cst_18 = arith.constant 1.000000e+00 : f32
    %33 = vector.broadcast %cst_18 : f32 to vector<16x256xf32>
    %34 = arith.addf %33, %32 : vector<16x256xf32>
    %35 = arith.divf %33, %34 : vector<16x256xf32>
    %36 = vector.extract_strided_slice %35 {offsets = [0, 0], sizes = [16, 128], strides = [1, 1]} : vector<16x256xf32> to vector<16x128xf32>
    %37 = vector.extract_strided_slice %35 {offsets = [0, 128], sizes = [16, 128], strides = [1, 1]} : vector<16x256xf32> to vector<16x128xf32>
    %38 = vector.extract_strided_slice %25 {offsets = [0, 256], sizes = [16, 128], strides = [1, 1]} : vector<16x384xf32> to vector<16x128xf32>
    %39 = vector.extract_strided_slice %27 {offsets = [0, 256], sizes = [16, 128], strides = [1, 1]} : vector<16x384xf32> to vector<16x128xf32>
    %40 = arith.addf %39, %15 : vector<16x128xf32>
    %41 = arith.mulf %36, %40 : vector<16x128xf32>
    %42 = arith.addf %38, %41 : vector<16x128xf32>
    %43 = math.tanh %42 : vector<16x128xf32>
    %cst_19 = arith.constant 1.000000e+00 : f32
    %44 = vector.broadcast %cst_19 : f32 to vector<16x128xf32>
    %45 = arith.subf %44, %37 : vector<16x128xf32>
    %46 = arith.mulf %45, %43 : vector<16x128xf32>
    %47 = arith.mulf %37, %16 : vector<16x128xf32>
    %48 = arith.addf %46, %47 : vector<16x128xf32>
    %c1_i32 = arith.constant 1 : i32
    %c2_i32_20 = arith.constant 2 : i32
    %49 = arith.muli %c2_i32_20, %c1_i32 : i32
    %c7_i32_21 = arith.constant 7 : i32
    %50 = arith.subi %c7_i32_21, %49 : i32
    %51 = arith.muli %arg0, %50 : i32
    %52 = arith.addi %c1_i32, %51 : i32
    %c16_i32_22 = arith.constant 16 : i32
    %53 = arith.muli %52, %c16_i32_22 : i32
    %54 = tpu.assume_multiple %53, 16 : i32
    %55 = arith.index_cast %54 : i32 to index
    %c0_23 = arith.constant 0 : index
    %56 = vector.load %arg7[%55, %c0_23] : memref<128x384xbf16, #tpu.memory_space<vmem>>, vector<16x384xbf16>
    %57 = arith.extf %56 : vector<16x384xbf16> to vector<16x384xf32>
    %58 = arith.truncf %48 : vector<16x128xf32> to vector<16x128xbf16>
    %cst_24 = arith.constant dense<0.000000e+00> : vector<16x384xf32>
    %59 = tpu.matmul %58, %11, %cst_24 {dimension_numbers = #tpu.dot_dimension_numbers<[1], [0], [0], [1], [0, 0, 1, 1], [], []>} : vector<16x128xbf16>, vector<128x384xbf16>, vector<16x384xf32> -> vector<16x384xf32>
    %60 = vector.extract_strided_slice %57 {offsets = [0, 0], sizes = [16, 256], strides = [1, 1]} : vector<16x384xf32> to vector<16x256xf32>
    %61 = vector.extract_strided_slice %59 {offsets = [0, 0], sizes = [16, 256], strides = [1, 1]} : vector<16x384xf32> to vector<16x256xf32>
    %62 = arith.addf %60, %61 : vector<16x256xf32>
    %63 = arith.negf %62 : vector<16x256xf32>
    %64 = math.exp %63 : vector<16x256xf32>
    %cst_25 = arith.constant 1.000000e+00 : f32
    %65 = vector.broadcast %cst_25 : f32 to vector<16x256xf32>
    %66 = arith.addf %65, %64 : vector<16x256xf32>
    %67 = arith.divf %65, %66 : vector<16x256xf32>
    %68 = vector.extract_strided_slice %67 {offsets = [0, 0], sizes = [16, 128], strides = [1, 1]} : vector<16x256xf32> to vector<16x128xf32>
    %69 = vector.extract_strided_slice %67 {offsets = [0, 128], sizes = [16, 128], strides = [1, 1]} : vector<16x256xf32> to vector<16x128xf32>
    %70 = vector.extract_strided_slice %57 {offsets = [0, 256], sizes = [16, 128], strides = [1, 1]} : vector<16x384xf32> to vector<16x128xf32>
    %71 = vector.extract_strided_slice %59 {offsets = [0, 256], sizes = [16, 128], strides = [1, 1]} : vector<16x384xf32> to vector<16x128xf32>
    %72 = arith.addf %71, %15 : vector<16x128xf32>
    %73 = arith.mulf %68, %72 : vector<16x128xf32>
    %74 = arith.addf %70, %73 : vector<16x128xf32>
    %75 = math.tanh %74 : vector<16x128xf32>
    %cst_26 = arith.constant 1.000000e+00 : f32
    %76 = vector.broadcast %cst_26 : f32 to vector<16x128xf32>
    %77 = arith.subf %76, %69 : vector<16x128xf32>
    %78 = arith.mulf %77, %75 : vector<16x128xf32>
    %79 = arith.mulf %69, %48 : vector<16x128xf32>
    %80 = arith.addf %78, %79 : vector<16x128xf32>
    %c2_i32_27 = arith.constant 2 : i32
    %c2_i32_28 = arith.constant 2 : i32
    %81 = arith.muli %c2_i32_28, %c2_i32_27 : i32
    %c7_i32_29 = arith.constant 7 : i32
    %82 = arith.subi %c7_i32_29, %81 : i32
    %83 = arith.muli %arg0, %82 : i32
    %84 = arith.addi %c2_i32_27, %83 : i32
    %c16_i32_30 = arith.constant 16 : i32
    %85 = arith.muli %84, %c16_i32_30 : i32
    %86 = tpu.assume_multiple %85, 16 : i32
    %87 = arith.index_cast %86 : i32 to index
    %c0_31 = arith.constant 0 : index
    %88 = vector.load %arg7[%87, %c0_31] : memref<128x384xbf16, #tpu.memory_space<vmem>>, vector<16x384xbf16>
    %89 = arith.extf %88 : vector<16x384xbf16> to vector<16x384xf32>
    %90 = arith.truncf %80 : vector<16x128xf32> to vector<16x128xbf16>
    %cst_32 = arith.constant dense<0.000000e+00> : vector<16x384xf32>
    %91 = tpu.matmul %90, %11, %cst_32 {dimension_numbers = #tpu.dot_dimension_numbers<[1], [0], [0], [1], [0, 0, 1, 1], [], []>} : vector<16x128xbf16>, vector<128x384xbf16>, vector<16x384xf32> -> vector<16x384xf32>
    %92 = vector.extract_strided_slice %89 {offsets = [0, 0], sizes = [16, 256], strides = [1, 1]} : vector<16x384xf32> to vector<16x256xf32>
    %93 = vector.extract_strided_slice %91 {offsets = [0, 0], sizes = [16, 256], strides = [1, 1]} : vector<16x384xf32> to vector<16x256xf32>
    %94 = arith.addf %92, %93 : vector<16x256xf32>
    %95 = arith.negf %94 : vector<16x256xf32>
    %96 = math.exp %95 : vector<16x256xf32>
    %cst_33 = arith.constant 1.000000e+00 : f32
    %97 = vector.broadcast %cst_33 : f32 to vector<16x256xf32>
    %98 = arith.addf %97, %96 : vector<16x256xf32>
    %99 = arith.divf %97, %98 : vector<16x256xf32>
    %100 = vector.extract_strided_slice %99 {offsets = [0, 0], sizes = [16, 128], strides = [1, 1]} : vector<16x256xf32> to vector<16x128xf32>
    %101 = vector.extract_strided_slice %99 {offsets = [0, 128], sizes = [16, 128], strides = [1, 1]} : vector<16x256xf32> to vector<16x128xf32>
    %102 = vector.extract_strided_slice %89 {offsets = [0, 256], sizes = [16, 128], strides = [1, 1]} : vector<16x384xf32> to vector<16x128xf32>
    %103 = vector.extract_strided_slice %91 {offsets = [0, 256], sizes = [16, 128], strides = [1, 1]} : vector<16x384xf32> to vector<16x128xf32>
    %104 = arith.addf %103, %15 : vector<16x128xf32>
    %105 = arith.mulf %100, %104 : vector<16x128xf32>
    %106 = arith.addf %102, %105 : vector<16x128xf32>
    %107 = math.tanh %106 : vector<16x128xf32>
    %cst_34 = arith.constant 1.000000e+00 : f32
    %108 = vector.broadcast %cst_34 : f32 to vector<16x128xf32>
    %109 = arith.subf %108, %101 : vector<16x128xf32>
    %110 = arith.mulf %109, %107 : vector<16x128xf32>
    %111 = arith.mulf %101, %80 : vector<16x128xf32>
    %112 = arith.addf %110, %111 : vector<16x128xf32>
    %c3_i32 = arith.constant 3 : i32
    %c2_i32_35 = arith.constant 2 : i32
    %113 = arith.muli %c2_i32_35, %c3_i32 : i32
    %c7_i32_36 = arith.constant 7 : i32
    %114 = arith.subi %c7_i32_36, %113 : i32
    %115 = arith.muli %arg0, %114 : i32
    %116 = arith.addi %c3_i32, %115 : i32
    %c16_i32_37 = arith.constant 16 : i32
    %117 = arith.muli %116, %c16_i32_37 : i32
    %118 = tpu.assume_multiple %117, 16 : i32
    %119 = arith.index_cast %118 : i32 to index
    %c0_38 = arith.constant 0 : index
    %120 = vector.load %arg7[%119, %c0_38] : memref<128x384xbf16, #tpu.memory_space<vmem>>, vector<16x384xbf16>
    %121 = arith.extf %120 : vector<16x384xbf16> to vector<16x384xf32>
    %122 = arith.truncf %112 : vector<16x128xf32> to vector<16x128xbf16>
    %cst_39 = arith.constant dense<0.000000e+00> : vector<16x384xf32>
    %123 = tpu.matmul %122, %11, %cst_39 {dimension_numbers = #tpu.dot_dimension_numbers<[1], [0], [0], [1], [0, 0, 1, 1], [], []>} : vector<16x128xbf16>, vector<128x384xbf16>, vector<16x384xf32> -> vector<16x384xf32>
    %124 = vector.extract_strided_slice %121 {offsets = [0, 0], sizes = [16, 256], strides = [1, 1]} : vector<16x384xf32> to vector<16x256xf32>
    %125 = vector.extract_strided_slice %123 {offsets = [0, 0], sizes = [16, 256], strides = [1, 1]} : vector<16x384xf32> to vector<16x256xf32>
    %126 = arith.addf %124, %125 : vector<16x256xf32>
    %127 = arith.negf %126 : vector<16x256xf32>
    %128 = math.exp %127 : vector<16x256xf32>
    %cst_40 = arith.constant 1.000000e+00 : f32
    %129 = vector.broadcast %cst_40 : f32 to vector<16x256xf32>
    %130 = arith.addf %129, %128 : vector<16x256xf32>
    %131 = arith.divf %129, %130 : vector<16x256xf32>
    %132 = vector.extract_strided_slice %131 {offsets = [0, 0], sizes = [16, 128], strides = [1, 1]} : vector<16x256xf32> to vector<16x128xf32>
    %133 = vector.extract_strided_slice %131 {offsets = [0, 128], sizes = [16, 128], strides = [1, 1]} : vector<16x256xf32> to vector<16x128xf32>
    %134 = vector.extract_strided_slice %121 {offsets = [0, 256], sizes = [16, 128], strides = [1, 1]} : vector<16x384xf32> to vector<16x128xf32>
    %135 = vector.extract_strided_slice %123 {offsets = [0, 256], sizes = [16, 128], strides = [1, 1]} : vector<16x384xf32> to vector<16x128xf32>
    %136 = arith.addf %135, %15 : vector<16x128xf32>
    %137 = arith.mulf %132, %136 : vector<16x128xf32>
    %138 = arith.addf %134, %137 : vector<16x128xf32>
    %139 = math.tanh %138 : vector<16x128xf32>
    %cst_41 = arith.constant 1.000000e+00 : f32
    %140 = vector.broadcast %cst_41 : f32 to vector<16x128xf32>
    %141 = arith.subf %140, %133 : vector<16x128xf32>
    %142 = arith.mulf %141, %139 : vector<16x128xf32>
    %143 = arith.mulf %133, %112 : vector<16x128xf32>
    %144 = arith.addf %142, %143 : vector<16x128xf32>
    %c4_i32 = arith.constant 4 : i32
    %c2_i32_42 = arith.constant 2 : i32
    %145 = arith.muli %c2_i32_42, %c4_i32 : i32
    %c7_i32_43 = arith.constant 7 : i32
    %146 = arith.subi %c7_i32_43, %145 : i32
    %147 = arith.muli %arg0, %146 : i32
    %148 = arith.addi %c4_i32, %147 : i32
    %c16_i32_44 = arith.constant 16 : i32
    %149 = arith.muli %148, %c16_i32_44 : i32
    %150 = tpu.assume_multiple %149, 16 : i32
    %151 = arith.index_cast %150 : i32 to index
    %c0_45 = arith.constant 0 : index
    %152 = vector.load %arg7[%151, %c0_45] : memref<128x384xbf16, #tpu.memory_space<vmem>>, vector<16x384xbf16>
    %153 = arith.extf %152 : vector<16x384xbf16> to vector<16x384xf32>
    %154 = arith.truncf %144 : vector<16x128xf32> to vector<16x128xbf16>
    %cst_46 = arith.constant dense<0.000000e+00> : vector<16x384xf32>
    %155 = tpu.matmul %154, %11, %cst_46 {dimension_numbers = #tpu.dot_dimension_numbers<[1], [0], [0], [1], [0, 0, 1, 1], [], []>} : vector<16x128xbf16>, vector<128x384xbf16>, vector<16x384xf32> -> vector<16x384xf32>
    %156 = vector.extract_strided_slice %153 {offsets = [0, 0], sizes = [16, 256], strides = [1, 1]} : vector<16x384xf32> to vector<16x256xf32>
    %157 = vector.extract_strided_slice %155 {offsets = [0, 0], sizes = [16, 256], strides = [1, 1]} : vector<16x384xf32> to vector<16x256xf32>
    %158 = arith.addf %156, %157 : vector<16x256xf32>
    %159 = arith.negf %158 : vector<16x256xf32>
    %160 = math.exp %159 : vector<16x256xf32>
    %cst_47 = arith.constant 1.000000e+00 : f32
    %161 = vector.broadcast %cst_47 : f32 to vector<16x256xf32>
    %162 = arith.addf %161, %160 : vector<16x256xf32>
    %163 = arith.divf %161, %162 : vector<16x256xf32>
    %164 = vector.extract_strided_slice %163 {offsets = [0, 0], sizes = [16, 128], strides = [1, 1]} : vector<16x256xf32> to vector<16x128xf32>
    %165 = vector.extract_strided_slice %163 {offsets = [0, 128], sizes = [16, 128], strides = [1, 1]} : vector<16x256xf32> to vector<16x128xf32>
    %166 = vector.extract_strided_slice %153 {offsets = [0, 256], sizes = [16, 128], strides = [1, 1]} : vector<16x384xf32> to vector<16x128xf32>
    %167 = vector.extract_strided_slice %155 {offsets = [0, 256], sizes = [16, 128], strides = [1, 1]} : vector<16x384xf32> to vector<16x128xf32>
    %168 = arith.addf %167, %15 : vector<16x128xf32>
    %169 = arith.mulf %164, %168 : vector<16x128xf32>
    %170 = arith.addf %166, %169 : vector<16x128xf32>
    %171 = math.tanh %170 : vector<16x128xf32>
    %cst_48 = arith.constant 1.000000e+00 : f32
    %172 = vector.broadcast %cst_48 : f32 to vector<16x128xf32>
    %173 = arith.subf %172, %165 : vector<16x128xf32>
    %174 = arith.mulf %173, %171 : vector<16x128xf32>
    %175 = arith.mulf %165, %144 : vector<16x128xf32>
    %176 = arith.addf %174, %175 : vector<16x128xf32>
    %c5_i32 = arith.constant 5 : i32
    %c2_i32_49 = arith.constant 2 : i32
    %177 = arith.muli %c2_i32_49, %c5_i32 : i32
    %c7_i32_50 = arith.constant 7 : i32
    %178 = arith.subi %c7_i32_50, %177 : i32
    %179 = arith.muli %arg0, %178 : i32
    %180 = arith.addi %c5_i32, %179 : i32
    %c16_i32_51 = arith.constant 16 : i32
    %181 = arith.muli %180, %c16_i32_51 : i32
    %182 = tpu.assume_multiple %181, 16 : i32
    %183 = arith.index_cast %182 : i32 to index
    %c0_52 = arith.constant 0 : index
    %184 = vector.load %arg7[%183, %c0_52] : memref<128x384xbf16, #tpu.memory_space<vmem>>, vector<16x384xbf16>
    %185 = arith.extf %184 : vector<16x384xbf16> to vector<16x384xf32>
    %186 = arith.truncf %176 : vector<16x128xf32> to vector<16x128xbf16>
    %cst_53 = arith.constant dense<0.000000e+00> : vector<16x384xf32>
    %187 = tpu.matmul %186, %11, %cst_53 {dimension_numbers = #tpu.dot_dimension_numbers<[1], [0], [0], [1], [0, 0, 1, 1], [], []>} : vector<16x128xbf16>, vector<128x384xbf16>, vector<16x384xf32> -> vector<16x384xf32>
    %188 = vector.extract_strided_slice %185 {offsets = [0, 0], sizes = [16, 256], strides = [1, 1]} : vector<16x384xf32> to vector<16x256xf32>
    %189 = vector.extract_strided_slice %187 {offsets = [0, 0], sizes = [16, 256], strides = [1, 1]} : vector<16x384xf32> to vector<16x256xf32>
    %190 = arith.addf %188, %189 : vector<16x256xf32>
    %191 = arith.negf %190 : vector<16x256xf32>
    %192 = math.exp %191 : vector<16x256xf32>
    %cst_54 = arith.constant 1.000000e+00 : f32
    %193 = vector.broadcast %cst_54 : f32 to vector<16x256xf32>
    %194 = arith.addf %193, %192 : vector<16x256xf32>
    %195 = arith.divf %193, %194 : vector<16x256xf32>
    %196 = vector.extract_strided_slice %195 {offsets = [0, 0], sizes = [16, 128], strides = [1, 1]} : vector<16x256xf32> to vector<16x128xf32>
    %197 = vector.extract_strided_slice %195 {offsets = [0, 128], sizes = [16, 128], strides = [1, 1]} : vector<16x256xf32> to vector<16x128xf32>
    %198 = vector.extract_strided_slice %185 {offsets = [0, 256], sizes = [16, 128], strides = [1, 1]} : vector<16x384xf32> to vector<16x128xf32>
    %199 = vector.extract_strided_slice %187 {offsets = [0, 256], sizes = [16, 128], strides = [1, 1]} : vector<16x384xf32> to vector<16x128xf32>
    %200 = arith.addf %199, %15 : vector<16x128xf32>
    %201 = arith.mulf %196, %200 : vector<16x128xf32>
    %202 = arith.addf %198, %201 : vector<16x128xf32>
    %203 = math.tanh %202 : vector<16x128xf32>
    %cst_55 = arith.constant 1.000000e+00 : f32
    %204 = vector.broadcast %cst_55 : f32 to vector<16x128xf32>
    %205 = arith.subf %204, %197 : vector<16x128xf32>
    %206 = arith.mulf %205, %203 : vector<16x128xf32>
    %207 = arith.mulf %197, %176 : vector<16x128xf32>
    %208 = arith.addf %206, %207 : vector<16x128xf32>
    %c6_i32 = arith.constant 6 : i32
    %c2_i32_56 = arith.constant 2 : i32
    %209 = arith.muli %c2_i32_56, %c6_i32 : i32
    %c7_i32_57 = arith.constant 7 : i32
    %210 = arith.subi %c7_i32_57, %209 : i32
    %211 = arith.muli %arg0, %210 : i32
    %212 = arith.addi %c6_i32, %211 : i32
    %c16_i32_58 = arith.constant 16 : i32
    %213 = arith.muli %212, %c16_i32_58 : i32
    %214 = tpu.assume_multiple %213, 16 : i32
    %215 = arith.index_cast %214 : i32 to index
    %c0_59 = arith.constant 0 : index
    %216 = vector.load %arg7[%215, %c0_59] : memref<128x384xbf16, #tpu.memory_space<vmem>>, vector<16x384xbf16>
    %217 = arith.extf %216 : vector<16x384xbf16> to vector<16x384xf32>
    %218 = arith.truncf %208 : vector<16x128xf32> to vector<16x128xbf16>
    %cst_60 = arith.constant dense<0.000000e+00> : vector<16x384xf32>
    %219 = tpu.matmul %218, %11, %cst_60 {dimension_numbers = #tpu.dot_dimension_numbers<[1], [0], [0], [1], [0, 0, 1, 1], [], []>} : vector<16x128xbf16>, vector<128x384xbf16>, vector<16x384xf32> -> vector<16x384xf32>
    %220 = vector.extract_strided_slice %217 {offsets = [0, 0], sizes = [16, 256], strides = [1, 1]} : vector<16x384xf32> to vector<16x256xf32>
    %221 = vector.extract_strided_slice %219 {offsets = [0, 0], sizes = [16, 256], strides = [1, 1]} : vector<16x384xf32> to vector<16x256xf32>
    %222 = arith.addf %220, %221 : vector<16x256xf32>
    %223 = arith.negf %222 : vector<16x256xf32>
    %224 = math.exp %223 : vector<16x256xf32>
    %cst_61 = arith.constant 1.000000e+00 : f32
    %225 = vector.broadcast %cst_61 : f32 to vector<16x256xf32>
    %226 = arith.addf %225, %224 : vector<16x256xf32>
    %227 = arith.divf %225, %226 : vector<16x256xf32>
    %228 = vector.extract_strided_slice %227 {offsets = [0, 0], sizes = [16, 128], strides = [1, 1]} : vector<16x256xf32> to vector<16x128xf32>
    %229 = vector.extract_strided_slice %227 {offsets = [0, 128], sizes = [16, 128], strides = [1, 1]} : vector<16x256xf32> to vector<16x128xf32>
    %230 = vector.extract_strided_slice %217 {offsets = [0, 256], sizes = [16, 128], strides = [1, 1]} : vector<16x384xf32> to vector<16x128xf32>
    %231 = vector.extract_strided_slice %219 {offsets = [0, 256], sizes = [16, 128], strides = [1, 1]} : vector<16x384xf32> to vector<16x128xf32>
    %232 = arith.addf %231, %15 : vector<16x128xf32>
    %233 = arith.mulf %228, %232 : vector<16x128xf32>
    %234 = arith.addf %230, %233 : vector<16x128xf32>
    %235 = math.tanh %234 : vector<16x128xf32>
    %cst_62 = arith.constant 1.000000e+00 : f32
    %236 = vector.broadcast %cst_62 : f32 to vector<16x128xf32>
    %237 = arith.subf %236, %229 : vector<16x128xf32>
    %238 = arith.mulf %237, %235 : vector<16x128xf32>
    %239 = arith.mulf %229, %208 : vector<16x128xf32>
    %240 = arith.addf %238, %239 : vector<16x128xf32>
    %c7_i32_63 = arith.constant 7 : i32
    %c2_i32_64 = arith.constant 2 : i32
    %241 = arith.muli %c2_i32_64, %c7_i32_63 : i32
    %c7_i32_65 = arith.constant 7 : i32
    %242 = arith.subi %c7_i32_65, %241 : i32
    %243 = arith.muli %arg0, %242 : i32
    %244 = arith.addi %c7_i32_63, %243 : i32
    %c16_i32_66 = arith.constant 16 : i32
    %245 = arith.muli %244, %c16_i32_66 : i32
    %246 = tpu.assume_multiple %245, 16 : i32
    %247 = arith.index_cast %246 : i32 to index
    %c0_67 = arith.constant 0 : index
    %248 = vector.load %arg7[%247, %c0_67] : memref<128x384xbf16, #tpu.memory_space<vmem>>, vector<16x384xbf16>
    %249 = arith.extf %248 : vector<16x384xbf16> to vector<16x384xf32>
    %250 = arith.truncf %240 : vector<16x128xf32> to vector<16x128xbf16>
    %cst_68 = arith.constant dense<0.000000e+00> : vector<16x384xf32>
    %251 = tpu.matmul %250, %11, %cst_68 {dimension_numbers = #tpu.dot_dimension_numbers<[1], [0], [0], [1], [0, 0, 1, 1], [], []>} : vector<16x128xbf16>, vector<128x384xbf16>, vector<16x384xf32> -> vector<16x384xf32>
    %252 = vector.extract_strided_slice %249 {offsets = [0, 0], sizes = [16, 256], strides = [1, 1]} : vector<16x384xf32> to vector<16x256xf32>
    %253 = vector.extract_strided_slice %251 {offsets = [0, 0], sizes = [16, 256], strides = [1, 1]} : vector<16x384xf32> to vector<16x256xf32>
    %254 = arith.addf %252, %253 : vector<16x256xf32>
    %255 = arith.negf %254 : vector<16x256xf32>
    %256 = math.exp %255 : vector<16x256xf32>
    %cst_69 = arith.constant 1.000000e+00 : f32
    %257 = vector.broadcast %cst_69 : f32 to vector<16x256xf32>
    %258 = arith.addf %257, %256 : vector<16x256xf32>
    %259 = arith.divf %257, %258 : vector<16x256xf32>
    %260 = vector.extract_strided_slice %259 {offsets = [0, 0], sizes = [16, 128], strides = [1, 1]} : vector<16x256xf32> to vector<16x128xf32>
    %261 = vector.extract_strided_slice %259 {offsets = [0, 128], sizes = [16, 128], strides = [1, 1]} : vector<16x256xf32> to vector<16x128xf32>
    %262 = vector.extract_strided_slice %249 {offsets = [0, 256], sizes = [16, 128], strides = [1, 1]} : vector<16x384xf32> to vector<16x128xf32>
    %263 = vector.extract_strided_slice %251 {offsets = [0, 256], sizes = [16, 128], strides = [1, 1]} : vector<16x384xf32> to vector<16x128xf32>
    %264 = arith.addf %263, %15 : vector<16x128xf32>
    %265 = arith.mulf %260, %264 : vector<16x128xf32>
    %266 = arith.addf %262, %265 : vector<16x128xf32>
    %267 = math.tanh %266 : vector<16x128xf32>
    %cst_70 = arith.constant 1.000000e+00 : f32
    %268 = vector.broadcast %cst_70 : f32 to vector<16x128xf32>
    %269 = arith.subf %268, %261 : vector<16x128xf32>
    %270 = arith.mulf %269, %267 : vector<16x128xf32>
    %271 = arith.mulf %261, %240 : vector<16x128xf32>
    %272 = arith.addf %270, %271 : vector<16x128xf32>
    %c8_i32 = arith.constant 8 : i32
    %c0_71 = arith.constant 0 : index
    %c0_72 = arith.constant 0 : index
    %273 = vector.load %arg6[%c0_71, %c0_72] : memref<16x128xf32, #tpu.memory_space<vmem>>, vector<16x128xf32>
    tpu.vector_store %arg6[%c0_71, %c0_72], %272 {strides = array<i32>} : memref<16x128xf32, #tpu.memory_space<vmem>>, vector<16x128xf32>,
    return
  }
  func.func @transform_0(%arg0: i32) -> (i32, i32) {
    %c0_i32 = arith.constant 0 : i32
    %c0_i32_0 = arith.constant 0 : i32
    %c0_i32_1 = arith.constant 0 : i32
    return %c0_i32, %c0_i32_0 : i32, i32
  }
  func.func @transform_1(%arg0: i32) -> (i32, i32, i32) {
    %c0_i32 = arith.constant 0 : i32
    %c0_i32_0 = arith.constant 0 : i32
    %c0_i32_1 = arith.constant 0 : i32
    return %arg0, %c0_i32, %c0_i32_0 : i32, i32, i32
  }
  func.func @transform_2(%arg0: i32) -> (i32, i32, i32) {
    %c0_i32 = arith.constant 0 : i32
    %c0_i32_0 = arith.constant 0 : i32
    %c0_i32_1 = arith.constant 0 : i32
    return %arg0, %c0_i32, %c0_i32_0 : i32, i32, i32
  }
  func.func @transform_3(%arg0: i32) -> (i32, i32, i32) {
    %c0_i32 = arith.constant 0 : i32
    %c0_i32_0 = arith.constant 0 : i32
    %c0_i32_1 = arith.constant 0 : i32
    return %arg0, %c0_i32, %c0_i32_0 : i32, i32, i32
  }
  func.func @transform_4(%arg0: i32) -> (i32, i32, i32) {
    %c0_i32 = arith.constant 0 : i32
    %c0_i32_0 = arith.constant 0 : i32
    %c0_i32_1 = arith.constant 0 : i32
    return %arg0, %c0_i32, %c0_i32_0 : i32, i32, i32
  }
  func.func @transform_5(%arg0: i32) -> (i32, i32) {
    %c0_i32 = arith.constant 0 : i32
    %c0_i32_0 = arith.constant 0 : i32
    return %c0_i32, %arg0 : i32, i32
  }
}

module attributes {stable_mosaic.version = 11 : i64} {
  func.func @decoder_rnn_kernel(%arg0: memref<128x16xbf16, #tpu.memory_space<vmem>>, %arg1: memref<16x256xf32, #tpu.memory_space<vmem>>, %arg2: memref<16x768xbf16, #tpu.memory_space<vmem>>, %arg3: memref<256x768xbf16, #tpu.memory_space<vmem>>, %arg4: memref<1x768xf32, #tpu.memory_space<vmem>>, %arg5: memref<1x256xf32, #tpu.memory_space<vmem>>, %arg6: memref<128x256xbf16, #tpu.memory_space<vmem>>, %arg7: memref<16x256xf32, #tpu.memory_space<vmem>>, %arg8: memref<128x768xbf16, #tpu.memory_space<vmem>>) attributes {dimension_semantics = [], scalar_prefetch = 0 : i64, scratch_operands = 1 : i64, tpu.core_type = #tpu.core_type<tc>} {
    %c0 = arith.constant 0 : index
    %c0_0 = arith.constant 0 : index
    %0 = vector.load %arg0[%c0, %c0_0] : memref<128x16xbf16, #tpu.memory_space<vmem>>, vector<128x16xbf16>
    %c0_1 = arith.constant 0 : index
    %c0_2 = arith.constant 0 : index
    %1 = vector.load %arg2[%c0_1, %c0_2] : memref<16x768xbf16, #tpu.memory_space<vmem>>, vector<16x768xbf16>
    %cst = arith.constant dense<0.000000e+00> : vector<128x768xf32>
    %2 = tpu.matmul %0, %1, %cst {dimension_numbers = #tpu.dot_dimension_numbers<[1], [0], [0], [1], [0, 0, 1, 1], [], []>} : vector<128x16xbf16>, vector<16x768xbf16>, vector<128x768xf32> -> vector<128x768xf32>
    %c0_3 = arith.constant 0 : index
    %c0_4 = arith.constant 0 : index
    %3 = vector.load %arg4[%c0_3, %c0_4] : memref<1x768xf32, #tpu.memory_space<vmem>>, vector<1x768xf32>
    %4 = vector.broadcast %3 : vector<1x768xf32> to vector<128x768xf32>
    %5 = arith.addf %2, %4 : vector<128x768xf32>
    %6 = arith.truncf %5 : vector<128x768xf32> to vector<128x768xbf16>
    %c0_5 = arith.constant 0 : index
    %c0_6 = arith.constant 0 : index
    %7 = vector.load %arg8[%c0_5, %c0_6] : memref<128x768xbf16, #tpu.memory_space<vmem>>, vector<128x768xbf16>
    tpu.vector_store %arg8[%c0_5, %c0_6], %6 {strides = array<i32>} : memref<128x768xbf16, #tpu.memory_space<vmem>>, vector<128x768xbf16>,
    %c0_7 = arith.constant 0 : index
    %c0_8 = arith.constant 0 : index
    %8 = vector.load %arg3[%c0_7, %c0_8] : memref<256x768xbf16, #tpu.memory_space<vmem>>, vector<256x768xbf16>
    %c0_9 = arith.constant 0 : index
    %c0_10 = arith.constant 0 : index
    %9 = vector.load %arg5[%c0_9, %c0_10] : memref<1x256xf32, #tpu.memory_space<vmem>>, vector<1x256xf32>
    %10 = vector.shape_cast %9 : vector<1x256xf32> to vector<1x256xf32>
    %11 = vector.broadcast %10 : vector<1x256xf32> to vector<16x256xf32>
    %c0_11 = arith.constant 0 : index
    %c0_12 = arith.constant 0 : index
    %12 = vector.load %arg1[%c0_11, %c0_12] : memref<16x256xf32, #tpu.memory_space<vmem>>, vector<16x256xf32>
    %c0_i32 = arith.constant 0 : i32
    %c16_i32 = arith.constant 16 : i32
    %13 = arith.muli %c0_i32, %c16_i32 : i32
    %14 = tpu.assume_multiple %13, 16 : i32
    %15 = arith.index_cast %14 : i32 to index
    %c0_13 = arith.constant 0 : index
    %16 = vector.load %arg8[%15, %c0_13] : memref<128x768xbf16, #tpu.memory_space<vmem>>, vector<16x768xbf16>
    %17 = arith.extf %16 : vector<16x768xbf16> to vector<16x768xf32>
    %18 = arith.truncf %12 : vector<16x256xf32> to vector<16x256xbf16>
    %cst_14 = arith.constant dense<0.000000e+00> : vector<16x768xf32>
    %19 = tpu.matmul %18, %8, %cst_14 {dimension_numbers = #tpu.dot_dimension_numbers<[1], [0], [0], [1], [0, 0, 1, 1], [], []>} : vector<16x256xbf16>, vector<256x768xbf16>, vector<16x768xf32> -> vector<16x768xf32>
    %20 = vector.extract_strided_slice %17 {offsets = [0, 0], sizes = [16, 512], strides = [1, 1]} : vector<16x768xf32> to vector<16x512xf32>
    %21 = vector.extract_strided_slice %19 {offsets = [0, 0], sizes = [16, 512], strides = [1, 1]} : vector<16x768xf32> to vector<16x512xf32>
    %22 = arith.addf %20, %21 : vector<16x512xf32>
    %23 = arith.negf %22 : vector<16x512xf32>
    %24 = math.exp %23 : vector<16x512xf32>
    %cst_15 = arith.constant 1.000000e+00 : f32
    %25 = vector.broadcast %cst_15 : f32 to vector<16x512xf32>
    %26 = arith.addf %25, %24 : vector<16x512xf32>
    %27 = arith.divf %25, %26 : vector<16x512xf32>
    %28 = vector.extract_strided_slice %27 {offsets = [0, 0], sizes = [16, 256], strides = [1, 1]} : vector<16x512xf32> to vector<16x256xf32>
    %29 = vector.extract_strided_slice %27 {offsets = [0, 256], sizes = [16, 256], strides = [1, 1]} : vector<16x512xf32> to vector<16x256xf32>
    %30 = vector.extract_strided_slice %17 {offsets = [0, 512], sizes = [16, 256], strides = [1, 1]} : vector<16x768xf32> to vector<16x256xf32>
    %31 = vector.extract_strided_slice %19 {offsets = [0, 512], sizes = [16, 256], strides = [1, 1]} : vector<16x768xf32> to vector<16x256xf32>
    %32 = arith.addf %31, %11 : vector<16x256xf32>
    %33 = arith.mulf %28, %32 : vector<16x256xf32>
    %34 = arith.addf %30, %33 : vector<16x256xf32>
    %35 = math.tanh %34 : vector<16x256xf32>
    %cst_16 = arith.constant 1.000000e+00 : f32
    %36 = vector.broadcast %cst_16 : f32 to vector<16x256xf32>
    %37 = arith.subf %36, %29 : vector<16x256xf32>
    %38 = arith.mulf %37, %35 : vector<16x256xf32>
    %39 = arith.mulf %29, %12 : vector<16x256xf32>
    %40 = arith.addf %38, %39 : vector<16x256xf32>
    %41 = arith.truncf %40 : vector<16x256xf32> to vector<16x256xbf16>
    %42 = arith.index_cast %14 : i32 to index
    %c0_17 = arith.constant 0 : index
    %43 = vector.load %arg6[%42, %c0_17] : memref<128x256xbf16, #tpu.memory_space<vmem>>, vector<16x256xbf16>
    tpu.vector_store %arg6[%42, %c0_17], %41 {strides = array<i32>} : memref<128x256xbf16, #tpu.memory_space<vmem>>, vector<16x256xbf16>,
    %c1_i32 = arith.constant 1 : i32
    %c16_i32_18 = arith.constant 16 : i32
    %44 = arith.muli %c1_i32, %c16_i32_18 : i32
    %45 = tpu.assume_multiple %44, 16 : i32
    %46 = arith.index_cast %45 : i32 to index
    %c0_19 = arith.constant 0 : index
    %47 = vector.load %arg8[%46, %c0_19] : memref<128x768xbf16, #tpu.memory_space<vmem>>, vector<16x768xbf16>
    %48 = arith.extf %47 : vector<16x768xbf16> to vector<16x768xf32>
    %49 = arith.truncf %40 : vector<16x256xf32> to vector<16x256xbf16>
    %cst_20 = arith.constant dense<0.000000e+00> : vector<16x768xf32>
    %50 = tpu.matmul %49, %8, %cst_20 {dimension_numbers = #tpu.dot_dimension_numbers<[1], [0], [0], [1], [0, 0, 1, 1], [], []>} : vector<16x256xbf16>, vector<256x768xbf16>, vector<16x768xf32> -> vector<16x768xf32>
    %51 = vector.extract_strided_slice %48 {offsets = [0, 0], sizes = [16, 512], strides = [1, 1]} : vector<16x768xf32> to vector<16x512xf32>
    %52 = vector.extract_strided_slice %50 {offsets = [0, 0], sizes = [16, 512], strides = [1, 1]} : vector<16x768xf32> to vector<16x512xf32>
    %53 = arith.addf %51, %52 : vector<16x512xf32>
    %54 = arith.negf %53 : vector<16x512xf32>
    %55 = math.exp %54 : vector<16x512xf32>
    %cst_21 = arith.constant 1.000000e+00 : f32
    %56 = vector.broadcast %cst_21 : f32 to vector<16x512xf32>
    %57 = arith.addf %56, %55 : vector<16x512xf32>
    %58 = arith.divf %56, %57 : vector<16x512xf32>
    %59 = vector.extract_strided_slice %58 {offsets = [0, 0], sizes = [16, 256], strides = [1, 1]} : vector<16x512xf32> to vector<16x256xf32>
    %60 = vector.extract_strided_slice %58 {offsets = [0, 256], sizes = [16, 256], strides = [1, 1]} : vector<16x512xf32> to vector<16x256xf32>
    %61 = vector.extract_strided_slice %48 {offsets = [0, 512], sizes = [16, 256], strides = [1, 1]} : vector<16x768xf32> to vector<16x256xf32>
    %62 = vector.extract_strided_slice %50 {offsets = [0, 512], sizes = [16, 256], strides = [1, 1]} : vector<16x768xf32> to vector<16x256xf32>
    %63 = arith.addf %62, %11 : vector<16x256xf32>
    %64 = arith.mulf %59, %63 : vector<16x256xf32>
    %65 = arith.addf %61, %64 : vector<16x256xf32>
    %66 = math.tanh %65 : vector<16x256xf32>
    %cst_22 = arith.constant 1.000000e+00 : f32
    %67 = vector.broadcast %cst_22 : f32 to vector<16x256xf32>
    %68 = arith.subf %67, %60 : vector<16x256xf32>
    %69 = arith.mulf %68, %66 : vector<16x256xf32>
    %70 = arith.mulf %60, %40 : vector<16x256xf32>
    %71 = arith.addf %69, %70 : vector<16x256xf32>
    %72 = arith.truncf %71 : vector<16x256xf32> to vector<16x256xbf16>
    %73 = arith.index_cast %45 : i32 to index
    %c0_23 = arith.constant 0 : index
    %74 = vector.load %arg6[%73, %c0_23] : memref<128x256xbf16, #tpu.memory_space<vmem>>, vector<16x256xbf16>
    tpu.vector_store %arg6[%73, %c0_23], %72 {strides = array<i32>} : memref<128x256xbf16, #tpu.memory_space<vmem>>, vector<16x256xbf16>,
    %c2_i32 = arith.constant 2 : i32
    %c16_i32_24 = arith.constant 16 : i32
    %75 = arith.muli %c2_i32, %c16_i32_24 : i32
    %76 = tpu.assume_multiple %75, 16 : i32
    %77 = arith.index_cast %76 : i32 to index
    %c0_25 = arith.constant 0 : index
    %78 = vector.load %arg8[%77, %c0_25] : memref<128x768xbf16, #tpu.memory_space<vmem>>, vector<16x768xbf16>
    %79 = arith.extf %78 : vector<16x768xbf16> to vector<16x768xf32>
    %80 = arith.truncf %71 : vector<16x256xf32> to vector<16x256xbf16>
    %cst_26 = arith.constant dense<0.000000e+00> : vector<16x768xf32>
    %81 = tpu.matmul %80, %8, %cst_26 {dimension_numbers = #tpu.dot_dimension_numbers<[1], [0], [0], [1], [0, 0, 1, 1], [], []>} : vector<16x256xbf16>, vector<256x768xbf16>, vector<16x768xf32> -> vector<16x768xf32>
    %82 = vector.extract_strided_slice %79 {offsets = [0, 0], sizes = [16, 512], strides = [1, 1]} : vector<16x768xf32> to vector<16x512xf32>
    %83 = vector.extract_strided_slice %81 {offsets = [0, 0], sizes = [16, 512], strides = [1, 1]} : vector<16x768xf32> to vector<16x512xf32>
    %84 = arith.addf %82, %83 : vector<16x512xf32>
    %85 = arith.negf %84 : vector<16x512xf32>
    %86 = math.exp %85 : vector<16x512xf32>
    %cst_27 = arith.constant 1.000000e+00 : f32
    %87 = vector.broadcast %cst_27 : f32 to vector<16x512xf32>
    %88 = arith.addf %87, %86 : vector<16x512xf32>
    %89 = arith.divf %87, %88 : vector<16x512xf32>
    %90 = vector.extract_strided_slice %89 {offsets = [0, 0], sizes = [16, 256], strides = [1, 1]} : vector<16x512xf32> to vector<16x256xf32>
    %91 = vector.extract_strided_slice %89 {offsets = [0, 256], sizes = [16, 256], strides = [1, 1]} : vector<16x512xf32> to vector<16x256xf32>
    %92 = vector.extract_strided_slice %79 {offsets = [0, 512], sizes = [16, 256], strides = [1, 1]} : vector<16x768xf32> to vector<16x256xf32>
    %93 = vector.extract_strided_slice %81 {offsets = [0, 512], sizes = [16, 256], strides = [1, 1]} : vector<16x768xf32> to vector<16x256xf32>
    %94 = arith.addf %93, %11 : vector<16x256xf32>
    %95 = arith.mulf %90, %94 : vector<16x256xf32>
    %96 = arith.addf %92, %95 : vector<16x256xf32>
    %97 = math.tanh %96 : vector<16x256xf32>
    %cst_28 = arith.constant 1.000000e+00 : f32
    %98 = vector.broadcast %cst_28 : f32 to vector<16x256xf32>
    %99 = arith.subf %98, %91 : vector<16x256xf32>
    %100 = arith.mulf %99, %97 : vector<16x256xf32>
    %101 = arith.mulf %91, %71 : vector<16x256xf32>
    %102 = arith.addf %100, %101 : vector<16x256xf32>
    %103 = arith.truncf %102 : vector<16x256xf32> to vector<16x256xbf16>
    %104 = arith.index_cast %76 : i32 to index
    %c0_29 = arith.constant 0 : index
    %105 = vector.load %arg6[%104, %c0_29] : memref<128x256xbf16, #tpu.memory_space<vmem>>, vector<16x256xbf16>
    tpu.vector_store %arg6[%104, %c0_29], %103 {strides = array<i32>} : memref<128x256xbf16, #tpu.memory_space<vmem>>, vector<16x256xbf16>,
    %c3_i32 = arith.constant 3 : i32
    %c16_i32_30 = arith.constant 16 : i32
    %106 = arith.muli %c3_i32, %c16_i32_30 : i32
    %107 = tpu.assume_multiple %106, 16 : i32
    %108 = arith.index_cast %107 : i32 to index
    %c0_31 = arith.constant 0 : index
    %109 = vector.load %arg8[%108, %c0_31] : memref<128x768xbf16, #tpu.memory_space<vmem>>, vector<16x768xbf16>
    %110 = arith.extf %109 : vector<16x768xbf16> to vector<16x768xf32>
    %111 = arith.truncf %102 : vector<16x256xf32> to vector<16x256xbf16>
    %cst_32 = arith.constant dense<0.000000e+00> : vector<16x768xf32>
    %112 = tpu.matmul %111, %8, %cst_32 {dimension_numbers = #tpu.dot_dimension_numbers<[1], [0], [0], [1], [0, 0, 1, 1], [], []>} : vector<16x256xbf16>, vector<256x768xbf16>, vector<16x768xf32> -> vector<16x768xf32>
    %113 = vector.extract_strided_slice %110 {offsets = [0, 0], sizes = [16, 512], strides = [1, 1]} : vector<16x768xf32> to vector<16x512xf32>
    %114 = vector.extract_strided_slice %112 {offsets = [0, 0], sizes = [16, 512], strides = [1, 1]} : vector<16x768xf32> to vector<16x512xf32>
    %115 = arith.addf %113, %114 : vector<16x512xf32>
    %116 = arith.negf %115 : vector<16x512xf32>
    %117 = math.exp %116 : vector<16x512xf32>
    %cst_33 = arith.constant 1.000000e+00 : f32
    %118 = vector.broadcast %cst_33 : f32 to vector<16x512xf32>
    %119 = arith.addf %118, %117 : vector<16x512xf32>
    %120 = arith.divf %118, %119 : vector<16x512xf32>
    %121 = vector.extract_strided_slice %120 {offsets = [0, 0], sizes = [16, 256], strides = [1, 1]} : vector<16x512xf32> to vector<16x256xf32>
    %122 = vector.extract_strided_slice %120 {offsets = [0, 256], sizes = [16, 256], strides = [1, 1]} : vector<16x512xf32> to vector<16x256xf32>
    %123 = vector.extract_strided_slice %110 {offsets = [0, 512], sizes = [16, 256], strides = [1, 1]} : vector<16x768xf32> to vector<16x256xf32>
    %124 = vector.extract_strided_slice %112 {offsets = [0, 512], sizes = [16, 256], strides = [1, 1]} : vector<16x768xf32> to vector<16x256xf32>
    %125 = arith.addf %124, %11 : vector<16x256xf32>
    %126 = arith.mulf %121, %125 : vector<16x256xf32>
    %127 = arith.addf %123, %126 : vector<16x256xf32>
    %128 = math.tanh %127 : vector<16x256xf32>
    %cst_34 = arith.constant 1.000000e+00 : f32
    %129 = vector.broadcast %cst_34 : f32 to vector<16x256xf32>
    %130 = arith.subf %129, %122 : vector<16x256xf32>
    %131 = arith.mulf %130, %128 : vector<16x256xf32>
    %132 = arith.mulf %122, %102 : vector<16x256xf32>
    %133 = arith.addf %131, %132 : vector<16x256xf32>
    %134 = arith.truncf %133 : vector<16x256xf32> to vector<16x256xbf16>
    %135 = arith.index_cast %107 : i32 to index
    %c0_35 = arith.constant 0 : index
    %136 = vector.load %arg6[%135, %c0_35] : memref<128x256xbf16, #tpu.memory_space<vmem>>, vector<16x256xbf16>
    tpu.vector_store %arg6[%135, %c0_35], %134 {strides = array<i32>} : memref<128x256xbf16, #tpu.memory_space<vmem>>, vector<16x256xbf16>,
    %c4_i32 = arith.constant 4 : i32
    %c16_i32_36 = arith.constant 16 : i32
    %137 = arith.muli %c4_i32, %c16_i32_36 : i32
    %138 = tpu.assume_multiple %137, 16 : i32
    %139 = arith.index_cast %138 : i32 to index
    %c0_37 = arith.constant 0 : index
    %140 = vector.load %arg8[%139, %c0_37] : memref<128x768xbf16, #tpu.memory_space<vmem>>, vector<16x768xbf16>
    %141 = arith.extf %140 : vector<16x768xbf16> to vector<16x768xf32>
    %142 = arith.truncf %133 : vector<16x256xf32> to vector<16x256xbf16>
    %cst_38 = arith.constant dense<0.000000e+00> : vector<16x768xf32>
    %143 = tpu.matmul %142, %8, %cst_38 {dimension_numbers = #tpu.dot_dimension_numbers<[1], [0], [0], [1], [0, 0, 1, 1], [], []>} : vector<16x256xbf16>, vector<256x768xbf16>, vector<16x768xf32> -> vector<16x768xf32>
    %144 = vector.extract_strided_slice %141 {offsets = [0, 0], sizes = [16, 512], strides = [1, 1]} : vector<16x768xf32> to vector<16x512xf32>
    %145 = vector.extract_strided_slice %143 {offsets = [0, 0], sizes = [16, 512], strides = [1, 1]} : vector<16x768xf32> to vector<16x512xf32>
    %146 = arith.addf %144, %145 : vector<16x512xf32>
    %147 = arith.negf %146 : vector<16x512xf32>
    %148 = math.exp %147 : vector<16x512xf32>
    %cst_39 = arith.constant 1.000000e+00 : f32
    %149 = vector.broadcast %cst_39 : f32 to vector<16x512xf32>
    %150 = arith.addf %149, %148 : vector<16x512xf32>
    %151 = arith.divf %149, %150 : vector<16x512xf32>
    %152 = vector.extract_strided_slice %151 {offsets = [0, 0], sizes = [16, 256], strides = [1, 1]} : vector<16x512xf32> to vector<16x256xf32>
    %153 = vector.extract_strided_slice %151 {offsets = [0, 256], sizes = [16, 256], strides = [1, 1]} : vector<16x512xf32> to vector<16x256xf32>
    %154 = vector.extract_strided_slice %141 {offsets = [0, 512], sizes = [16, 256], strides = [1, 1]} : vector<16x768xf32> to vector<16x256xf32>
    %155 = vector.extract_strided_slice %143 {offsets = [0, 512], sizes = [16, 256], strides = [1, 1]} : vector<16x768xf32> to vector<16x256xf32>
    %156 = arith.addf %155, %11 : vector<16x256xf32>
    %157 = arith.mulf %152, %156 : vector<16x256xf32>
    %158 = arith.addf %154, %157 : vector<16x256xf32>
    %159 = math.tanh %158 : vector<16x256xf32>
    %cst_40 = arith.constant 1.000000e+00 : f32
    %160 = vector.broadcast %cst_40 : f32 to vector<16x256xf32>
    %161 = arith.subf %160, %153 : vector<16x256xf32>
    %162 = arith.mulf %161, %159 : vector<16x256xf32>
    %163 = arith.mulf %153, %133 : vector<16x256xf32>
    %164 = arith.addf %162, %163 : vector<16x256xf32>
    %165 = arith.truncf %164 : vector<16x256xf32> to vector<16x256xbf16>
    %166 = arith.index_cast %138 : i32 to index
    %c0_41 = arith.constant 0 : index
    %167 = vector.load %arg6[%166, %c0_41] : memref<128x256xbf16, #tpu.memory_space<vmem>>, vector<16x256xbf16>
    tpu.vector_store %arg6[%166, %c0_41], %165 {strides = array<i32>} : memref<128x256xbf16, #tpu.memory_space<vmem>>, vector<16x256xbf16>,
    %c5_i32 = arith.constant 5 : i32
    %c16_i32_42 = arith.constant 16 : i32
    %168 = arith.muli %c5_i32, %c16_i32_42 : i32
    %169 = tpu.assume_multiple %168, 16 : i32
    %170 = arith.index_cast %169 : i32 to index
    %c0_43 = arith.constant 0 : index
    %171 = vector.load %arg8[%170, %c0_43] : memref<128x768xbf16, #tpu.memory_space<vmem>>, vector<16x768xbf16>
    %172 = arith.extf %171 : vector<16x768xbf16> to vector<16x768xf32>
    %173 = arith.truncf %164 : vector<16x256xf32> to vector<16x256xbf16>
    %cst_44 = arith.constant dense<0.000000e+00> : vector<16x768xf32>
    %174 = tpu.matmul %173, %8, %cst_44 {dimension_numbers = #tpu.dot_dimension_numbers<[1], [0], [0], [1], [0, 0, 1, 1], [], []>} : vector<16x256xbf16>, vector<256x768xbf16>, vector<16x768xf32> -> vector<16x768xf32>
    %175 = vector.extract_strided_slice %172 {offsets = [0, 0], sizes = [16, 512], strides = [1, 1]} : vector<16x768xf32> to vector<16x512xf32>
    %176 = vector.extract_strided_slice %174 {offsets = [0, 0], sizes = [16, 512], strides = [1, 1]} : vector<16x768xf32> to vector<16x512xf32>
    %177 = arith.addf %175, %176 : vector<16x512xf32>
    %178 = arith.negf %177 : vector<16x512xf32>
    %179 = math.exp %178 : vector<16x512xf32>
    %cst_45 = arith.constant 1.000000e+00 : f32
    %180 = vector.broadcast %cst_45 : f32 to vector<16x512xf32>
    %181 = arith.addf %180, %179 : vector<16x512xf32>
    %182 = arith.divf %180, %181 : vector<16x512xf32>
    %183 = vector.extract_strided_slice %182 {offsets = [0, 0], sizes = [16, 256], strides = [1, 1]} : vector<16x512xf32> to vector<16x256xf32>
    %184 = vector.extract_strided_slice %182 {offsets = [0, 256], sizes = [16, 256], strides = [1, 1]} : vector<16x512xf32> to vector<16x256xf32>
    %185 = vector.extract_strided_slice %172 {offsets = [0, 512], sizes = [16, 256], strides = [1, 1]} : vector<16x768xf32> to vector<16x256xf32>
    %186 = vector.extract_strided_slice %174 {offsets = [0, 512], sizes = [16, 256], strides = [1, 1]} : vector<16x768xf32> to vector<16x256xf32>
    %187 = arith.addf %186, %11 : vector<16x256xf32>
    %188 = arith.mulf %183, %187 : vector<16x256xf32>
    %189 = arith.addf %185, %188 : vector<16x256xf32>
    %190 = math.tanh %189 : vector<16x256xf32>
    %cst_46 = arith.constant 1.000000e+00 : f32
    %191 = vector.broadcast %cst_46 : f32 to vector<16x256xf32>
    %192 = arith.subf %191, %184 : vector<16x256xf32>
    %193 = arith.mulf %192, %190 : vector<16x256xf32>
    %194 = arith.mulf %184, %164 : vector<16x256xf32>
    %195 = arith.addf %193, %194 : vector<16x256xf32>
    %196 = arith.truncf %195 : vector<16x256xf32> to vector<16x256xbf16>
    %197 = arith.index_cast %169 : i32 to index
    %c0_47 = arith.constant 0 : index
    %198 = vector.load %arg6[%197, %c0_47] : memref<128x256xbf16, #tpu.memory_space<vmem>>, vector<16x256xbf16>
    tpu.vector_store %arg6[%197, %c0_47], %196 {strides = array<i32>} : memref<128x256xbf16, #tpu.memory_space<vmem>>, vector<16x256xbf16>,
    %c6_i32 = arith.constant 6 : i32
    %c16_i32_48 = arith.constant 16 : i32
    %199 = arith.muli %c6_i32, %c16_i32_48 : i32
    %200 = tpu.assume_multiple %199, 16 : i32
    %201 = arith.index_cast %200 : i32 to index
    %c0_49 = arith.constant 0 : index
    %202 = vector.load %arg8[%201, %c0_49] : memref<128x768xbf16, #tpu.memory_space<vmem>>, vector<16x768xbf16>
    %203 = arith.extf %202 : vector<16x768xbf16> to vector<16x768xf32>
    %204 = arith.truncf %195 : vector<16x256xf32> to vector<16x256xbf16>
    %cst_50 = arith.constant dense<0.000000e+00> : vector<16x768xf32>
    %205 = tpu.matmul %204, %8, %cst_50 {dimension_numbers = #tpu.dot_dimension_numbers<[1], [0], [0], [1], [0, 0, 1, 1], [], []>} : vector<16x256xbf16>, vector<256x768xbf16>, vector<16x768xf32> -> vector<16x768xf32>
    %206 = vector.extract_strided_slice %203 {offsets = [0, 0], sizes = [16, 512], strides = [1, 1]} : vector<16x768xf32> to vector<16x512xf32>
    %207 = vector.extract_strided_slice %205 {offsets = [0, 0], sizes = [16, 512], strides = [1, 1]} : vector<16x768xf32> to vector<16x512xf32>
    %208 = arith.addf %206, %207 : vector<16x512xf32>
    %209 = arith.negf %208 : vector<16x512xf32>
    %210 = math.exp %209 : vector<16x512xf32>
    %cst_51 = arith.constant 1.000000e+00 : f32
    %211 = vector.broadcast %cst_51 : f32 to vector<16x512xf32>
    %212 = arith.addf %211, %210 : vector<16x512xf32>
    %213 = arith.divf %211, %212 : vector<16x512xf32>
    %214 = vector.extract_strided_slice %213 {offsets = [0, 0], sizes = [16, 256], strides = [1, 1]} : vector<16x512xf32> to vector<16x256xf32>
    %215 = vector.extract_strided_slice %213 {offsets = [0, 256], sizes = [16, 256], strides = [1, 1]} : vector<16x512xf32> to vector<16x256xf32>
    %216 = vector.extract_strided_slice %203 {offsets = [0, 512], sizes = [16, 256], strides = [1, 1]} : vector<16x768xf32> to vector<16x256xf32>
    %217 = vector.extract_strided_slice %205 {offsets = [0, 512], sizes = [16, 256], strides = [1, 1]} : vector<16x768xf32> to vector<16x256xf32>
    %218 = arith.addf %217, %11 : vector<16x256xf32>
    %219 = arith.mulf %214, %218 : vector<16x256xf32>
    %220 = arith.addf %216, %219 : vector<16x256xf32>
    %221 = math.tanh %220 : vector<16x256xf32>
    %cst_52 = arith.constant 1.000000e+00 : f32
    %222 = vector.broadcast %cst_52 : f32 to vector<16x256xf32>
    %223 = arith.subf %222, %215 : vector<16x256xf32>
    %224 = arith.mulf %223, %221 : vector<16x256xf32>
    %225 = arith.mulf %215, %195 : vector<16x256xf32>
    %226 = arith.addf %224, %225 : vector<16x256xf32>
    %227 = arith.truncf %226 : vector<16x256xf32> to vector<16x256xbf16>
    %228 = arith.index_cast %200 : i32 to index
    %c0_53 = arith.constant 0 : index
    %229 = vector.load %arg6[%228, %c0_53] : memref<128x256xbf16, #tpu.memory_space<vmem>>, vector<16x256xbf16>
    tpu.vector_store %arg6[%228, %c0_53], %227 {strides = array<i32>} : memref<128x256xbf16, #tpu.memory_space<vmem>>, vector<16x256xbf16>,
    %c7_i32 = arith.constant 7 : i32
    %c16_i32_54 = arith.constant 16 : i32
    %230 = arith.muli %c7_i32, %c16_i32_54 : i32
    %231 = tpu.assume_multiple %230, 16 : i32
    %232 = arith.index_cast %231 : i32 to index
    %c0_55 = arith.constant 0 : index
    %233 = vector.load %arg8[%232, %c0_55] : memref<128x768xbf16, #tpu.memory_space<vmem>>, vector<16x768xbf16>
    %234 = arith.extf %233 : vector<16x768xbf16> to vector<16x768xf32>
    %235 = arith.truncf %226 : vector<16x256xf32> to vector<16x256xbf16>
    %cst_56 = arith.constant dense<0.000000e+00> : vector<16x768xf32>
    %236 = tpu.matmul %235, %8, %cst_56 {dimension_numbers = #tpu.dot_dimension_numbers<[1], [0], [0], [1], [0, 0, 1, 1], [], []>} : vector<16x256xbf16>, vector<256x768xbf16>, vector<16x768xf32> -> vector<16x768xf32>
    %237 = vector.extract_strided_slice %234 {offsets = [0, 0], sizes = [16, 512], strides = [1, 1]} : vector<16x768xf32> to vector<16x512xf32>
    %238 = vector.extract_strided_slice %236 {offsets = [0, 0], sizes = [16, 512], strides = [1, 1]} : vector<16x768xf32> to vector<16x512xf32>
    %239 = arith.addf %237, %238 : vector<16x512xf32>
    %240 = arith.negf %239 : vector<16x512xf32>
    %241 = math.exp %240 : vector<16x512xf32>
    %cst_57 = arith.constant 1.000000e+00 : f32
    %242 = vector.broadcast %cst_57 : f32 to vector<16x512xf32>
    %243 = arith.addf %242, %241 : vector<16x512xf32>
    %244 = arith.divf %242, %243 : vector<16x512xf32>
    %245 = vector.extract_strided_slice %244 {offsets = [0, 0], sizes = [16, 256], strides = [1, 1]} : vector<16x512xf32> to vector<16x256xf32>
    %246 = vector.extract_strided_slice %244 {offsets = [0, 256], sizes = [16, 256], strides = [1, 1]} : vector<16x512xf32> to vector<16x256xf32>
    %247 = vector.extract_strided_slice %234 {offsets = [0, 512], sizes = [16, 256], strides = [1, 1]} : vector<16x768xf32> to vector<16x256xf32>
    %248 = vector.extract_strided_slice %236 {offsets = [0, 512], sizes = [16, 256], strides = [1, 1]} : vector<16x768xf32> to vector<16x256xf32>
    %249 = arith.addf %248, %11 : vector<16x256xf32>
    %250 = arith.mulf %245, %249 : vector<16x256xf32>
    %251 = arith.addf %247, %250 : vector<16x256xf32>
    %252 = math.tanh %251 : vector<16x256xf32>
    %cst_58 = arith.constant 1.000000e+00 : f32
    %253 = vector.broadcast %cst_58 : f32 to vector<16x256xf32>
    %254 = arith.subf %253, %246 : vector<16x256xf32>
    %255 = arith.mulf %254, %252 : vector<16x256xf32>
    %256 = arith.mulf %246, %226 : vector<16x256xf32>
    %257 = arith.addf %255, %256 : vector<16x256xf32>
    %258 = arith.truncf %257 : vector<16x256xf32> to vector<16x256xbf16>
    %259 = arith.index_cast %231 : i32 to index
    %c0_59 = arith.constant 0 : index
    %260 = vector.load %arg6[%259, %c0_59] : memref<128x256xbf16, #tpu.memory_space<vmem>>, vector<16x256xbf16>
    tpu.vector_store %arg6[%259, %c0_59], %258 {strides = array<i32>} : memref<128x256xbf16, #tpu.memory_space<vmem>>, vector<16x256xbf16>,
    %c8_i32 = arith.constant 8 : i32
    %c0_60 = arith.constant 0 : index
    %c0_61 = arith.constant 0 : index
    %261 = vector.load %arg7[%c0_60, %c0_61] : memref<16x256xf32, #tpu.memory_space<vmem>>, vector<16x256xf32>
    tpu.vector_store %arg7[%c0_60, %c0_61], %257 {strides = array<i32>} : memref<16x256xf32, #tpu.memory_space<vmem>>, vector<16x256xf32>,
    return
  }
}

module attributes {stable_mosaic.version = 11 : i64} {
  func.func @fc_kernel(%arg0: i32, %arg1: i32, %arg2: memref<128x256xbf16, #tpu.memory_space<vmem>>, %arg3: memref<256x128xbf16, #tpu.memory_space<vmem>>, %arg4: memref<1x128xf32, #tpu.memory_space<vmem>>, %arg5: memref<128x128xf32, #tpu.memory_space<vmem>>) attributes {dimension_semantics = [#tpu.dimension_semantics<parallel>, #tpu.dimension_semantics<parallel>], iteration_bounds = array<i64: 1, 1>, scalar_prefetch = 0 : i64, scratch_operands = 0 : i64, tpu.core_type = #tpu.core_type<tc>, window_params = [{transform_indices = @transform_0, window_bounds = array<i64: 128, 256>}, {transform_indices = @transform_1, window_bounds = array<i64: 256, 128>}, {transform_indices = @transform_2, window_bounds = array<i64: 1, 128>}, {transform_indices = @transform_3, window_bounds = array<i64: 128, 128>}]} {
    %c0 = arith.constant 0 : index
    %c0_0 = arith.constant 0 : index
    %0 = vector.load %arg2[%c0, %c0_0] : memref<128x256xbf16, #tpu.memory_space<vmem>>, vector<128x256xbf16>
    %c0_1 = arith.constant 0 : index
    %c0_2 = arith.constant 0 : index
    %1 = vector.load %arg3[%c0_1, %c0_2] : memref<256x128xbf16, #tpu.memory_space<vmem>>, vector<256x128xbf16>
    %cst = arith.constant dense<0.000000e+00> : vector<128x128xf32>
    %2 = tpu.matmul %0, %1, %cst {dimension_numbers = #tpu.dot_dimension_numbers<[1], [0], [0], [1], [0, 0, 1, 1], [], []>} : vector<128x256xbf16>, vector<256x128xbf16>, vector<128x128xf32> -> vector<128x128xf32>
    %c0_3 = arith.constant 0 : index
    %c0_4 = arith.constant 0 : index
    %3 = vector.load %arg4[%c0_3, %c0_4] : memref<1x128xf32, #tpu.memory_space<vmem>>, vector<1x128xf32>
    %4 = vector.broadcast %3 : vector<1x128xf32> to vector<128x128xf32>
    %5 = arith.addf %2, %4 : vector<128x128xf32>
    %c0_5 = arith.constant 0 : index
    %c0_6 = arith.constant 0 : index
    %6 = vector.load %arg5[%c0_5, %c0_6] : memref<128x128xf32, #tpu.memory_space<vmem>>, vector<128x128xf32>
    tpu.vector_store %arg5[%c0_5, %c0_6], %5 {strides = array<i32>} : memref<128x128xf32, #tpu.memory_space<vmem>>, vector<128x128xf32>,
    return
  }
  func.func @transform_0(%arg0: i32, %arg1: i32) -> (i32, i32) {
    %c0_i32 = arith.constant 0 : i32
    %c0_i32_0 = arith.constant 0 : i32
    return %arg0, %c0_i32 : i32, i32
  }
  func.func @transform_1(%arg0: i32, %arg1: i32) -> (i32, i32) {
    %c0_i32 = arith.constant 0 : i32
    %c0_i32_0 = arith.constant 0 : i32
    return %c0_i32, %arg1 : i32, i32
  }
  func.func @transform_2(%arg0: i32, %arg1: i32) -> (i32, i32) {
    %c0_i32 = arith.constant 0 : i32
    %c0_i32_0 = arith.constant 0 : i32
    return %c0_i32, %arg1 : i32, i32
  }
  func.func @transform_3(%arg0: i32, %arg1: i32) -> (i32, i32) {
    %c0_i32 = arith.constant 0 : i32
    return %arg0, %arg1 : i32, i32
  }
}

</mosaic_0001>

<llo_original>
// kernel: squeeze.25
$region0: #{squeeze.25}
  %s0 = inlined_call_operand.vmem [shape: f32[32], index: 0, kind: input, shape index: {}]
  %s1 = inlined_call_operand.vmem [shape: f32[2,16], index: 1, kind: output, shape index: {}]
  $region1: #{squeeze.25} parent=0
    #allocation0 [shape = 'u8[4096]{0}', space=vmem, size = 0x1000, scoped, tag = 'scoped mem for output reshape']
    #allocation1 [shape = 'u8[4096]{0}', space=vmem, size = 0x1000, scoped, tag = 'scoped mem for input reshape']
    %s3 = sshllo.u32 0, 1
    %v4 = vld [vmem:[%s0] sm:%s3]
    %5 = vst [vmem:[#allocation1] sm:%s3] %v4
    %v6 = vld [vmem:[#allocation1] sm:$0x1]
    %vm7 = vcmask 130048
    %8 = vst.msk [vmem:[#allocation0] sm:$0x1] %vm7, %v6
    %v9 = vld [vmem:[#allocation1] sm:$0x1]
    %10 = vrot.lane.b32.xlu0 %v9, 112
    %v11 = vpop.permute.xlu0 %10
    %vm12 = vcmask 130048
    %s13 = scalar_lea.vmem [#allocation0], 1
    %14 = vst.msk [vmem:[%s13] sm:$0x1] %vm12, %v11
    %s16 = sshllo.u32 0, 2
    %v18 = vld [vmem:[#allocation0] sm:%s16]
    %s19 = sshllo.u32 0, 2
    %20 = vst [vmem:[%s1] sm:%s19] %v18

// kernel: seq2seq_forward.3
$region0: #{seq2seq_forward.3}
  #allocation0 [shape = 'u32[]', space=smem, size = 0x4, offset = 0x4, fixed_abs, tag = 'smem constant byte address 0x4 - core index']
  #allocation1 [shape = 'u32[144,128]{1,0:T(1,128)}', space=vmem, size = 0x12000, scoped, tag = 'internal scratch']
  #allocation2 [shape = 'bf16[128,384]{1,0:T(16,128)(2,1)}', space=vmem, size = 0x18000, scoped, tag = 'scratch operand']
  %s0 = inlined_call_operand.vmem [shape: bf16[128,16], index: 0, kind: input, shape index: {}]
  %s1 = inlined_call_operand.vmem [shape: bf16[2,16,384], index: 1, kind: input, shape index: {}]
  %s2 = inlined_call_operand.vmem [shape: bf16[2,128,384], index: 2, kind: input, shape index: {}]
  %s3 = inlined_call_operand.vmem [shape: f32[2,1,384], index: 3, kind: input, shape index: {}]
  %s4 = inlined_call_operand.vmem [shape: f32[2,1,128], index: 4, kind: input, shape index: {}]
  %s5 = inlined_call_operand.vmem [shape: f32[16,256], index: 5, kind: output, shape index: {}]
  %s6 = sld [smem:[#allocation0]]
  $region87: #{seq2seq_forward.3} parent=0
    _
  %s8 = ssub.s32 1, %s6
  %s9 = scalar_select 0, %s8, %s6
  $region1: #{seq2seq_forward.3} parent=0
    #allocation3 [shape = 'u8[16384]{0}', space=vmem, size = 0x4000, scoped, tag = 'output window, operand 0']
    loop: start=0, step=1, limit=4
    $region2: #{seq2seq_forward.3} parent=1 // loop_pre_header
      _
    $region3: #{seq2seq_forward.3} parent=1 // loop_header
      %s11 = sphi 0, %s15
      %p12 = scmp.ge.s32.totalorder %s11, 4
      %s19 = sphi 0, %s19
      %s21 = sphi 0, %s19
      %s22 = sphi 0, %s21
      %s36 = sphi 0, %s22
      %s42 = sphi 0, %s44
      %s45 = sphi 0, %s42
      %s46 = sphi 0, %s45
      %s62 = sphi 0, %s46
      %s68 = sphi 0, %s70
      %s71 = sphi 0, %s68
      %s72 = sphi 0, %s71
      %s88 = sphi 0, %s72
      %s94 = sphi 0, %s96
      %s97 = sphi 0, %s94
      %s98 = sphi 0, %s97
      %s114 = sphi 0, %s98
      %s120 = sphi 0, %s122
      %s123 = sphi 0, %s120
      %s124 = sphi 0, %s123
      %s140 = sphi 0, %s124
      %s146 = sphi 0, %s148
      %s149 = sphi 0, %s146
      %s150 = sphi 0, %s149
      %s166 = sphi 0, %s150
    $region4: #{seq2seq_forward.3} parent=1 // loop_header_branch
      %14 = sbr.rel (%p12) target = $region8
    $region5: #{seq2seq_forward.3} parent=1 // loop_body
      %s16 = ssub.s32 %s11, 1
      %s17 = ssub.s32 %s11, 2
      %s18 = sadd.s32 %s11, 1
      %s20 = sadd.s32 %s19, 1
      %p23 = scmp.eq.s32.totalorder %s11, 1
      %p24 = scmp.ne.s32.totalorder %s19, %s21
      %p25 = scmp.eq.s32.totalorder %s11, 0
      %p26 = por %p24, %p25
      %p27 = scmp.ne.s32.totalorder %s19, %s21
      %p28 = scmp.eq.s32.totalorder %s16, 1
      %p29 = por %p27, %p28
      %p30 = scmp.ne.s32.totalorder %s21, %s22
      %p31 = scmp.eq.s32.totalorder %s16, 0
      %p32 = por %p30, %p31
      %p33 = scmp.ne.s32.totalorder %s21, %s22
      %p34 = scmp.eq.s32.totalorder %s17, 1
      %p35 = por %p33, %p34
      %p37 = scmp.ne.s32.totalorder %s22, %s36
      %p38 = scmp.eq.s32.totalorder %s17, 0
      %p39 = por %p37, %p38
      %s40 = ssub.s32 %s11, %s18
      %p41 = scmp.eq.s32.totalorder %s40, 0
      %s43 = sadd.s32 %s42, 1
      %s44 = scalar_select %p41, %s42, %s43
      %p47 = pneg %p41
      %p48 = scmp.eq.s32.totalorder %s11, 1
      %p49 = por %p47, %p48
      %p50 = scmp.ne.s32.totalorder %s42, %s45
      %p51 = scmp.eq.s32.totalorder %s11, 0
      %p52 = por %p50, %p51
      %p53 = scmp.ne.s32.totalorder %s42, %s45
      %p54 = scmp.eq.s32.totalorder %s16, 1
      %p55 = por %p53, %p54
      %p56 = scmp.ne.s32.totalorder %s45, %s46
      %p57 = scmp.eq.s32.totalorder %s16, 0
      %p58 = por %p56, %p57
      %p59 = scmp.ne.s32.totalorder %s45, %s46
      %p60 = scmp.eq.s32.totalorder %s17, 1
      %p61 = por %p59, %p60
      %p63 = scmp.ne.s32.totalorder %s46, %s62
      %p64 = scmp.eq.s32.totalorder %s17, 0
      %p65 = por %p63, %p64
      %s66 = ssub.s32 %s11, %s18
      %p67 = scmp.eq.s32.totalorder %s66, 0
      %s69 = sadd.s32 %s68, 1
      %s70 = scalar_select %p67, %s68, %s69
      %p73 = pneg %p67
      %p74 = scmp.eq.s32.totalorder %s11, 1
      %p75 = por %p73, %p74
      %p76 = scmp.ne.s32.totalorder %s68, %s71
      %p77 = scmp.eq.s32.totalorder %s11, 0
      %p78 = por %p76, %p77
      %p79 = scmp.ne.s32.totalorder %s68, %s71
      %p80 = scmp.eq.s32.totalorder %s16, 1
      %p81 = por %p79, %p80
      %p82 = scmp.ne.s32.totalorder %s71, %s72
      %p83 = scmp.eq.s32.totalorder %s16, 0
      %p84 = por %p82, %p83
      %p85 = scmp.ne.s32.totalorder %s71, %s72
      %p86 = scmp.eq.s32.totalorder %s17, 1
      %p87 = por %p85, %p86
      %p89 = scmp.ne.s32.totalorder %s72, %s88
      %p90 = scmp.eq.s32.totalorder %s17, 0
      %p91 = por %p89, %p90
      %s92 = ssub.s32 %s11, %s18
      %p93 = scmp.eq.s32.totalorder %s92, 0
      %s95 = sadd.s32 %s94, 1
      %s96 = scalar_select %p93, %s94, %s95
      %p99 = pneg %p93
      %p100 = scmp.eq.s32.totalorder %s11, 1
      %p101 = por %p99, %p100
      %p102 = scmp.ne.s32.totalorder %s94, %s97
      %p103 = scmp.eq.s32.totalorder %s11, 0
      %p104 = por %p102, %p103
      %p105 = scmp.ne.s32.totalorder %s94, %s97
      %p106 = scmp.eq.s32.totalorder %s16, 1
      %p107 = por %p105, %p106
      %p108 = scmp.ne.s32.totalorder %s97, %s98
      %p109 = scmp.eq.s32.totalorder %s16, 0
      %p110 = por %p108, %p109
      %p111 = scmp.ne.s32.totalorder %s97, %s98
      %p112 = scmp.eq.s32.totalorder %s17, 1
      %p113 = por %p111, %p112
      %p115 = scmp.ne.s32.totalorder %s98, %s114
      %p116 = scmp.eq.s32.totalorder %s17, 0
      %p117 = por %p115, %p116
      %s118 = ssub.s32 %s11, %s18
      %p119 = scmp.eq.s32.totalorder %s118, 0
      %s121 = sadd.s32 %s120, 1
      %s122 = scalar_select %p119, %s120, %s121
      %p125 = pneg %p119
      %p126 = scmp.eq.s32.totalorder %s11, 1
      %p127 = por %p125, %p126
      %p128 = scmp.ne.s32.totalorder %s120, %s123
      %p129 = scmp.eq.s32.totalorder %s11, 0
      %p130 = por %p128, %p129
      %p131 = scmp.ne.s32.totalorder %s120, %s123
      %p132 = scmp.eq.s32.totalorder %s16, 1
      %p133 = por %p131, %p132
      %p134 = scmp.ne.s32.totalorder %s123, %s124
      %p135 = scmp.eq.s32.totalorder %s16, 0
      %p136 = por %p134, %p135
      %p137 = scmp.ne.s32.totalorder %s123, %s124
      %p138 = scmp.eq.s32.totalorder %s17, 1
      %p139 = por %p137, %p138
      %p141 = scmp.ne.s32.totalorder %s124, %s140
      %p142 = scmp.eq.s32.totalorder %s17, 0
      %p143 = por %p141, %p142
      %s144 = ssub.s32 %s11, %s18
      %p145 = scmp.eq.s32.totalorder %s144, 0
      %s147 = sadd.s32 %s146, 1
      %s148 = scalar_select %p145, %s146, %s147
      %p151 = pneg %p145
      %p152 = scmp.eq.s32.totalorder %s11, 1
      %p153 = por %p151, %p152
      %p154 = scmp.ne.s32.totalorder %s146, %s149
      %p155 = scmp.eq.s32.totalorder %s11, 0
      %p156 = por %p154, %p155
      %p157 = scmp.ne.s32.totalorder %s146, %s149
      %p158 = scmp.eq.s32.totalorder %s16, 1
      %p159 = por %p157, %p158
      %p160 = scmp.ne.s32.totalorder %s149, %s150
      %p161 = scmp.eq.s32.totalorder %s16, 0
      %p162 = por %p160, %p161
      %p163 = scmp.ne.s32.totalorder %s149, %s150
      %p164 = scmp.eq.s32.totalorder %s17, 1
      %p165 = por %p163, %p164
      %p167 = scmp.ne.s32.totalorder %s150, %s166
      %p168 = scmp.eq.s32.totalorder %s17, 0
      %p169 = por %p167, %p168
      %p170 = scmp.le.s32.totalorder 1, %s11
      %p171 = scmp.lt.s32.totalorder %s11, 3
      %p172 = pnand %p170, %p171
      %p173 = pneg %p172
      // Predicated region
      $region9: #{seq2seq_forward.3} parent=5 // pred_check
        _
      $region10: #{seq2seq_forward.3} parent=5 // pred_check_branch
        %175 = sbr.rel (%p172) target = $region12
      $region11: #{seq2seq_forward.3} parent=5 // pred_region
        %s176 = ssub.s32 %s11, 1
        // Predicated region
        $region13: #{seq2seq_forward.3} parent=11 // pred_check
          %p177 = pneg %p32
        $region14: #{seq2seq_forward.3} parent=11 // pred_check_branch
          %179 = sbr.rel (%p177) target = $region16
        $region15: #{seq2seq_forward.3} parent=11 // pred_region
          _
        $region16: #{seq2seq_forward.3} parent=11 // pred_fallthru
          _
      $region12: #{seq2seq_forward.3} parent=5 // pred_fallthru
        _
      %p180 = scmp.lt.s32.totalorder %s11, 2
      // Predicated region
      $region17: #{seq2seq_forward.3} parent=5 // pred_check
        %p181 = pneg %p180
      $region18: #{seq2seq_forward.3} parent=5 // pred_check_branch
        %183 = sbr.rel (%p181) target = $region20
      $region19: #{seq2seq_forward.3} parent=5 // pred_region
        // Predicated region
        $region21: #{seq2seq_forward.3} parent=19 // pred_check
          %p184 = pneg %p52
        $region22: #{seq2seq_forward.3} parent=19 // pred_check_branch
          %186 = sbr.rel (%p184) target = $region24
        $region23: #{seq2seq_forward.3} parent=19 // pred_region
          %p187 = scmp.lt.s32.totalorder %s11, 1
          %s188 = scalar_select %p187, %s11, 1
          %s189 = smul.addr %s188, 6
          %s190 = smul.addr %s189, 4
          %s191 = scalar_lea.vmem %s1, %s190
        $region24: #{seq2seq_forward.3} parent=19 // pred_fallthru
          _
        // Predicated region
        $region25: #{seq2seq_forward.3} parent=19 // pred_check
          %p192 = pneg %p78
        $region26: #{seq2seq_forward.3} parent=19 // pred_check_branch
          %194 = sbr.rel (%p192) target = $region28
        $region27: #{seq2seq_forward.3} parent=19 // pred_region
          %p195 = scmp.lt.s32.totalorder %s11, 1
          %s196 = scalar_select %p195, %s11, 1
          %s197 = smul.addr %s196, 48
          %s198 = smul.addr %s197, 4
          %s199 = scalar_lea.vmem %s2, %s198
        $region28: #{seq2seq_forward.3} parent=19 // pred_fallthru
          _
        // Predicated region
        $region29: #{seq2seq_forward.3} parent=19 // pred_check
          %p200 = pneg %p104
        $region30: #{seq2seq_forward.3} parent=19 // pred_check_branch
          %202 = sbr.rel (%p200) target = $region32
        $region31: #{seq2seq_forward.3} parent=19 // pred_region
          %p203 = scmp.lt.s32.totalorder %s11, 1
          %s204 = scalar_select %p203, %s11, 1
          %s205 = smul.addr %s204, 3
          %s206 = scalar_lea.vmem %s3, %s205
        $region32: #{seq2seq_forward.3} parent=19 // pred_fallthru
          _
        // Predicated region
        $region33: #{seq2seq_forward.3} parent=19 // pred_check
          %p207 = pneg %p130
        $region34: #{seq2seq_forward.3} parent=19 // pred_check_branch
          %209 = sbr.rel (%p207) target = $region36
        $region35: #{seq2seq_forward.3} parent=19 // pred_region
          %p210 = scmp.lt.s32.totalorder %s11, 1
          %s211 = scalar_select %p210, %s11, 1
          %s212 = scalar_lea.vmem %s4, %s211
        $region36: #{seq2seq_forward.3} parent=19 // pred_fallthru
          _
      $region20: #{seq2seq_forward.3} parent=5 // pred_fallthru
        _
      %p213 = scmp.le.s32.totalorder 1, %s11
      %p214 = scmp.lt.s32.totalorder %s11, 3
      %p215 = pnand %p213, %p214
      %p216 = pneg %p215
      // Predicated region
      $region37: #{seq2seq_forward.3} parent=5 // pred_check
        _
      $region38: #{seq2seq_forward.3} parent=5 // pred_check_branch
        %218 = sbr.rel (%p215) target = $region40
      $region39: #{seq2seq_forward.3} parent=5 // pred_region
        %s219 = ssub.s32 %s11, 1
        %p220 = pneg %p32
        %p221 = pneg %p29
        %p222 = scmp.lt.s32.totalorder %s16, 1
        %s223 = scalar_select %p222, %s16, 1
        %s224 = smul.addr %s223, 6
        %s225 = smul.addr %s224, 4
        %s226 = scalar_lea.vmem %s1, %s225
        %p227 = pneg %p58
        %p228 = pneg %p55
        %p229 = scmp.lt.s32.totalorder %s16, 1
        %s230 = scalar_select %p229, %s16, 1
        %s231 = smul.addr %s230, 48
        %s232 = smul.addr %s231, 4
        %s233 = scalar_lea.vmem %s2, %s232
        %p234 = pneg %p84
        %p235 = pneg %p81
        %p236 = scmp.lt.s32.totalorder %s16, 1
        %s237 = scalar_select %p236, %s16, 1
        %s238 = smul.addr %s237, 3
        %s239 = scalar_lea.vmem %s3, %s238
        %p240 = pneg %p110
        %p241 = pneg %p107
        %p242 = scmp.lt.s32.totalorder %s16, 1
        %s243 = scalar_select %p242, %s16, 1
        %s244 = scalar_lea.vmem %s4, %s243
        %p245 = pneg %p136
        %p246 = pneg %p133
        %p247 = pneg %p162
        %p248 = pneg %p159
        %s249 = sand.u32 %s149, 1
        %s250 = sand.u32 %s149, 1
        %s251 = smul.addr %s250, 16
        %s252 = scalar_lea.vmem [#allocation3], %s251
        %p253 = scmp.lt.s32.totalorder %s16, 1
        %s254 = scalar_select %p253, %s16, 1
        %s255 = smul.addr %s254, 6
        %s256 = smul.addr %s255, 4
        %s257 = scalar_lea.vmem %s1, %s256
        %p258 = scmp.lt.s32.totalorder %s16, 1
        %s259 = scalar_select %p258, %s16, 1
        %s260 = smul.addr %s259, 48
        %s261 = smul.addr %s260, 4
        %s262 = scalar_lea.vmem %s2, %s261
        %p263 = scmp.lt.s32.totalorder %s16, 1
        %s264 = scalar_select %p263, %s16, 1
        %s265 = smul.addr %s264, 3
        %s266 = scalar_lea.vmem %s3, %s265
        %p267 = scmp.lt.s32.totalorder %s16, 1
        %s268 = scalar_select %p267, %s16, 1
        %s269 = scalar_lea.vmem %s4, %s268
        %v271 = vld [vmem:[%s0] sm:$0xf]
        %v272 = vld [vmem:[%s0 + $0x4] sm:$0xf]
        %v273 = vld [vmem:[%s0 + $0x8] sm:$0xf]
        %v274 = vld [vmem:[%s0 + $0xc] sm:$0xf]
        %v275 = vld [vmem:[%s0 + $0x10] sm:$0xf]
        %v276 = vld [vmem:[%s0 + $0x14] sm:$0xf]
        %v277 = vld [vmem:[%s0 + $0x18] sm:$0xf]
        %v278 = vld [vmem:[%s0 + $0x1c] sm:$0xf]
        %v279 = vld [vmem:[%s0 + $0x20] sm:$0xf]
        %v280 = vld [vmem:[%s0 + $0x24] sm:$0xf]
        %v281 = vld [vmem:[%s0 + $0x28] sm:$0xf]
        %v282 = vld [vmem:[%s0 + $0x2c] sm:$0xf]
        %v283 = vld [vmem:[%s0 + $0x30] sm:$0xf]
        %v284 = vld [vmem:[%s0 + $0x34] sm:$0xf]
        %v285 = vld [vmem:[%s0 + $0x38] sm:$0xf]
        %v286 = vld [vmem:[%s0 + $0x3c] sm:$0xf]
        %v287 = vld [vmem:[%s257] sm:$0xff]
        %v288 = vld [vmem:[%s257 + $0x8] sm:$0xf]
        %v289 = vld [vmem:[%s257 + $0xc] sm:$0xff]
        %v290 = vld [vmem:[%s257 + $0x14] sm:$0xf]
        %v291 = vld [vmem:[%s266] sm:$0x7]
        %v293 = vlaneseq
        %v294 = vshrl.u32 %v293, 7
        %v295 = vsub.s32 0, %v294
        %v296 = vrot.slane %v291, %v295
        %v297 = vlaneseq
        %v298 = vshrl.u32 %v297, 7
        %v299 = vsub.s32 1, %v298
        %v300 = vrot.slane %v291, %v299
        %v301 = vlaneseq
        %v302 = vshrl.u32 %v301, 7
        %v303 = vsub.s32 2, %v302
        %v304 = vrot.slane %v291, %v303
        %v324 = vunpack.c.l.b16 %v271
        %v325 = vunpack.c.l.b16 %v272
        %v326 = vunpack.c.l.b16 %v273
        %v327 = vunpack.c.l.b16 %v274
        %v328 = vunpack.c.l.b16 %v275
        %v329 = vunpack.c.l.b16 %v276
        %v330 = vunpack.c.l.b16 %v277
        %v331 = vunpack.c.l.b16 %v278
        %v332 = vunpack.c.l.b16 %v279
        %v333 = vunpack.c.l.b16 %v280
        %v334 = vunpack.c.l.b16 %v281
        %v335 = vunpack.c.l.b16 %v282
        %v336 = vunpack.c.l.b16 %v283
        %v337 = vunpack.c.l.b16 %v284
        %v338 = vunpack.c.l.b16 %v285
        %v339 = vunpack.c.l.b16 %v286
        %v340 = vpack.c.b16 %v325, %v324
        %v341 = vpack.c.b16 %v327, %v326
        %v342 = vpack.c.b16 %v329, %v328
        %v343 = vpack.c.b16 %v331, %v330
        %v344 = vpack.c.b16 %v333, %v332
        %v345 = vpack.c.b16 %v335, %v334
        %v346 = vpack.c.b16 %v337, %v336
        %v347 = vpack.c.b16 %v339, %v338
        %v352 = vunpack.c.l.b16 %v287
        %v353 = vunpack.c.h.b16 %v287
        %v354 = vunpack.c.l.b16 %v288
        %v355 = vunpack.c.l.b16 %v289
        %v356 = vunpack.c.h.b16 %v289
        %v357 = vunpack.c.l.b16 %v290
        %v358 = vpack.c.b16 %v355, %v352
        %v359 = vpack.c.b16 %v356, %v353
        %v360 = vpack.c.b16 %v357, %v354
        %vm364 = vcmask 130048
        %v366 = vsel %vm364, %v340, 0
        %v369 = vsel %vm364, %v341, 0
        %v372 = vsel %vm364, %v342, 0
        %v375 = vsel %vm364, %v343, 0
        %v378 = vsel %vm364, %v344, 0
        %v381 = vsel %vm364, %v345, 0
        %v384 = vsel %vm364, %v346, 0
        %v387 = vsel %vm364, %v347, 0
        %389 = vmatprep.subr.bf16.mxu0 %v359
        %390 = vmatpush1.bf16.msra.mxu0 %v358
        %391 = vmatprep.subr.bf16.mxu0 0
        %392 = vmatpush1.bf16.msra.mxu0 0
        %393 = vmatprep.subr.bf16.mxu0 0
        %394 = vmatpush1.bf16.msra.mxu0 0
        %395 = vmatprep.subr.bf16.mxu0 0
        %396 = vmatpush1.bf16.msra.mxu0 0
        %397 = vmatprep.subr.bf16.mxu0 0
        %398 = vmatpush1.bf16.msra.mxu0 0
        %399 = vmatprep.subr.bf16.mxu0 0
        %400 = vmatpush1.bf16.msra.mxu0 0
        %401 = vmatprep.subr.bf16.mxu0 0
        %402 = vmatpush1.bf16.msra.mxu0 0
        %403 = vmatprep.subr.bf16.mxu0 0
        %404 = vmatpush1.bf16.msra.mxu0 0
        %405 = vmatprep.subr.bf16.mxu0 0
        %406 = vmatpush1.bf16.msra.mxu0 0
        %407 = vmatprep.subr.bf16.mxu0 0
        %408 = vmatpush1.bf16.msra.mxu0 0
        %409 = vmatprep.subr.bf16.mxu0 0
        %410 = vmatpush1.bf16.msra.mxu0 0
        %411 = vmatprep.subr.bf16.mxu0 0
        %412 = vmatpush1.bf16.msra.mxu0 0
        %413 = vmatprep.subr.bf16.mxu0 0
        %414 = vmatpush1.bf16.msra.mxu0 0
        %415 = vmatprep.subr.bf16.mxu0 0
        %416 = vmatpush1.bf16.msra.mxu0 0
        %417 = vmatprep.subr.bf16.mxu0 0
        %418 = vmatpush1.bf16.msra.mxu0 0
        %419 = vmatprep.subr.bf16.mxu0 0
        %420 = vmatpush1.bf16.msra.mxu0 0
        %421 = vmatprep.mubr.bf16.mxu0 0
        %422 = vmatmul.mubr.bf16.gmra.mrb[0].mxu0 %v366
        %v423 = vpop.f32.mrb[0].mxu0
        %v424 = vadd.f32 %v296, %v423
        %v425 = vpop.f32.mrb[0].mxu0
        %v426 = vadd.f32 %v300, %v425
        %v427 = vpop.f32.mrb[0].mxu0
        %v428 = vadd.f32 %v296, %v427
        %v429 = vpop.f32.mrb[0].mxu0
        %v430 = vadd.f32 %v300, %v429
        %431 = vmatprep.mubr.bf16.mxu0 0
        %432 = vmatmul.mubr.bf16.gmra.mrb[0].mxu0 %v369
        %v433 = vpop.f32.mrb[0].mxu0
        %v434 = vadd.f32 %v296, %v433
        %v435 = vpop.f32.mrb[0].mxu0
        %v436 = vadd.f32 %v300, %v435
        %v437 = vpop.f32.mrb[0].mxu0
        %v438 = vadd.f32 %v296, %v437
        %v439 = vpop.f32.mrb[0].mxu0
        %v440 = vadd.f32 %v300, %v439
        %441 = vmatprep.mubr.bf16.mxu0 0
        %442 = vmatmul.mubr.bf16.gmra.mrb[0].mxu0 %v372
        %v443 = vpop.f32.mrb[0].mxu0
        %v444 = vadd.f32 %v296, %v443
        %v445 = vpop.f32.mrb[0].mxu0
        %v446 = vadd.f32 %v300, %v445
        %v447 = vpop.f32.mrb[0].mxu0
        %v448 = vadd.f32 %v296, %v447
        %v449 = vpop.f32.mrb[0].mxu0
        %v450 = vadd.f32 %v300, %v449
        %451 = vmatprep.mubr.bf16.mxu0 0
        %452 = vmatmul.mubr.bf16.gmra.mrb[0].mxu0 %v375
        %v453 = vpop.f32.mrb[0].mxu0
        %v454 = vadd.f32 %v296, %v453
        %v455 = vpop.f32.mrb[0].mxu0
        %v456 = vadd.f32 %v300, %v455
        %v457 = vpop.f32.mrb[0].mxu0
        %v458 = vadd.f32 %v296, %v457
        %v459 = vpop.f32.mrb[0].mxu0
        %v460 = vadd.f32 %v300, %v459
        %461 = vmatprep.mubr.bf16.mxu0 0
        %462 = vmatmul.mubr.bf16.gmra.mrb[0].mxu0 %v378
        %v463 = vpop.f32.mrb[0].mxu0
        %v464 = vadd.f32 %v296, %v463
        %v465 = vpop.f32.mrb[0].mxu0
        %v466 = vadd.f32 %v300, %v465
        %v467 = vpop.f32.mrb[0].mxu0
        %v468 = vadd.f32 %v296, %v467
        %v469 = vpop.f32.mrb[0].mxu0
        %v470 = vadd.f32 %v300, %v469
        %471 = vmatprep.mubr.bf16.mxu0 0
        %472 = vmatmul.mubr.bf16.gmra.mrb[0].mxu0 %v381
        %v473 = vpop.f32.mrb[0].mxu0
        %v474 = vadd.f32 %v296, %v473
        %v475 = vpop.f32.mrb[0].mxu0
        %v476 = vadd.f32 %v300, %v475
        %v477 = vpop.f32.mrb[0].mxu0
        %v478 = vadd.f32 %v296, %v477
        %v479 = vpop.f32.mrb[0].mxu0
        %v480 = vadd.f32 %v300, %v479
        %481 = vmatprep.mubr.bf16.mxu0 0
        %482 = vmatmul.mubr.bf16.gmra.mrb[0].mxu0 %v384
        %v483 = vpop.f32.mrb[0].mxu0
        %v484 = vadd.f32 %v296, %v483
        %v485 = vpop.f32.mrb[0].mxu0
        %v486 = vadd.f32 %v300, %v485
        %v487 = vpop.f32.mrb[0].mxu0
        %v488 = vadd.f32 %v296, %v487
        %v489 = vpop.f32.mrb[0].mxu0
        %v490 = vadd.f32 %v300, %v489
        %491 = vmatprep.mubr.bf16.mxu0 0
        %492 = vmatmul.mubr.bf16.gmra.mrb[0].mxu0 %v387
        %v493 = vpop.f32.mrb[0].mxu0
        %v494 = vadd.f32 %v296, %v493
        %v495 = vpop.f32.mrb[0].mxu0
        %v496 = vadd.f32 %v300, %v495
        %v497 = vpop.f32.mrb[0].mxu0
        %v498 = vadd.f32 %v296, %v497
        %v499 = vpop.f32.mrb[0].mxu0
        %v500 = vadd.f32 %v300, %v499
        %501 = vdwg.mxu0
        %502 = vmatprep.subr.bf16.mxu0 0
        %503 = vmatpush1.bf16.msra.mxu0 %v360
        %504 = vmatprep.subr.bf16.mxu0 0
        %505 = vmatpush1.bf16.msra.mxu0 0
        %506 = vmatprep.subr.bf16.mxu0 0
        %507 = vmatpush1.bf16.msra.mxu0 0
        %508 = vmatprep.subr.bf16.mxu0 0
        %509 = vmatpush1.bf16.msra.mxu0 0
        %510 = vmatprep.subr.bf16.mxu0 0
        %511 = vmatpush1.bf16.msra.mxu0 0
        %512 = vmatprep.subr.bf16.mxu0 0
        %513 = vmatpush1.bf16.msra.mxu0 0
        %514 = vmatprep.subr.bf16.mxu0 0
        %515 = vmatpush1.bf16.msra.mxu0 0
        %516 = vmatprep.subr.bf16.mxu0 0
        %517 = vmatpush1.bf16.msra.mxu0 0
        %518 = vmatprep.subr.bf16.mxu0 0
        %519 = vmatpush1.bf16.msra.mxu0 0
        %520 = vmatprep.subr.bf16.mxu0 0
        %521 = vmatpush1.bf16.msra.mxu0 0
        %522 = vmatprep.subr.bf16.mxu0 0
        %523 = vmatpush1.bf16.msra.mxu0 0
        %524 = vmatprep.subr.bf16.mxu0 0
        %525 = vmatpush1.bf16.msra.mxu0 0
        %526 = vmatprep.subr.bf16.mxu0 0
        %527 = vmatpush1.bf16.msra.mxu0 0
        %528 = vmatprep.subr.bf16.mxu0 0
        %529 = vmatpush1.bf16.msra.mxu0 0
        %530 = vmatprep.subr.bf16.mxu0 0
        %531 = vmatpush1.bf16.msra.mxu0 0
        %532 = vmatprep.subr.bf16.mxu0 0
        %533 = vmatpush1.bf16.msra.mxu0 0
        %534 = vmatprep.mubr.bf16.mxu0 0
        %535 = vmatmul.mubr.bf16.gmra.mrb[0].mxu0 %v366
        %v536 = vpop.f32.mrb[0].mxu0
        %v537 = vadd.f32 %v304, %v536
        %v538 = vpop.f32.mrb[0].mxu0
        %v539 = vpop.f32.mrb[0].mxu0
        %v540 = vadd.f32 %v304, %v539
        %v541 = vpop.f32.mrb[0].mxu0
        %542 = vmatprep.mubr.bf16.mxu0 0
        %543 = vmatmul.mubr.bf16.gmra.mrb[0].mxu0 %v369
        %v544 = vpop.f32.mrb[0].mxu0
        %v545 = vadd.f32 %v304, %v544
        %v546 = vpop.f32.mrb[0].mxu0
        %v547 = vpop.f32.mrb[0].mxu0
        %v548 = vadd.f32 %v304, %v547
        %v549 = vpop.f32.mrb[0].mxu0
        %550 = vmatprep.mubr.bf16.mxu0 0
        %551 = vmatmul.mubr.bf16.gmra.mrb[0].mxu0 %v372
        %v552 = vpop.f32.mrb[0].mxu0
        %v553 = vadd.f32 %v304, %v552
        %v554 = vpop.f32.mrb[0].mxu0
        %v555 = vpop.f32.mrb[0].mxu0
        %v556 = vadd.f32 %v304, %v555
        %v557 = vpop.f32.mrb[0].mxu0
        %558 = vmatprep.mubr.bf16.mxu0 0
        %559 = vmatmul.mubr.bf16.gmra.mrb[0].mxu0 %v375
        %v560 = vpop.f32.mrb[0].mxu0
        %v561 = vadd.f32 %v304, %v560
        %v562 = vpop.f32.mrb[0].mxu0
        %v563 = vpop.f32.mrb[0].mxu0
        %v564 = vadd.f32 %v304, %v563
        %v565 = vpop.f32.mrb[0].mxu0
        %566 = vmatprep.mubr.bf16.mxu0 0
        %567 = vmatmul.mubr.bf16.gmra.mrb[0].mxu0 %v378
        %v568 = vpop.f32.mrb[0].mxu0
        %v569 = vadd.f32 %v304, %v568
        %v570 = vpop.f32.mrb[0].mxu0
        %v571 = vpop.f32.mrb[0].mxu0
        %v572 = vadd.f32 %v304, %v571
        %v573 = vpop.f32.mrb[0].mxu0
        %574 = vmatprep.mubr.bf16.mxu0 0
        %575 = vmatmul.mubr.bf16.gmra.mrb[0].mxu0 %v381
        %v576 = vpop.f32.mrb[0].mxu0
        %v577 = vadd.f32 %v304, %v576
        %v578 = vpop.f32.mrb[0].mxu0
        %v579 = vpop.f32.mrb[0].mxu0
        %v580 = vadd.f32 %v304, %v579
        %v581 = vpop.f32.mrb[0].mxu0
        %582 = vmatprep.mubr.bf16.mxu0 0
        %583 = vmatmul.mubr.bf16.gmra.mrb[0].mxu0 %v384
        %v584 = vpop.f32.mrb[0].mxu0
        %v585 = vadd.f32 %v304, %v584
        %v586 = vpop.f32.mrb[0].mxu0
        %v587 = vpop.f32.mrb[0].mxu0
        %v588 = vadd.f32 %v304, %v587
        %v589 = vpop.f32.mrb[0].mxu0
        %590 = vmatprep.mubr.bf16.mxu0 0
        %591 = vmatmul.mubr.bf16.gmra.mrb[0].mxu0 %v387
        %v592 = vpop.f32.mrb[0].mxu0
        %v593 = vadd.f32 %v304, %v592
        %v594 = vpop.f32.mrb[0].mxu0
        %v595 = vpop.f32.mrb[0].mxu0
        %v596 = vadd.f32 %v304, %v595
        %v597 = vpop.f32.mrb[0].mxu0
        %598 = vdwg.mxu0
        %v599 = vpack.c.bf16 %v428, %v424
        %v600 = vpack.c.bf16 %v430, %v426
        %v601 = vpack.c.bf16 %v540, %v537
        %v602 = vpack.c.bf16 %v438, %v434
        %v603 = vpack.c.bf16 %v440, %v436
        %v604 = vpack.c.bf16 %v548, %v545
        %v605 = vpack.c.bf16 %v448, %v444
        %v606 = vpack.c.bf16 %v450, %v446
        %v607 = vpack.c.bf16 %v556, %v553
        %v608 = vpack.c.bf16 %v458, %v454
        %v609 = vpack.c.bf16 %v460, %v456
        %v610 = vpack.c.bf16 %v564, %v561
        %v611 = vpack.c.bf16 %v468, %v464
        %v612 = vpack.c.bf16 %v470, %v466
        %v613 = vpack.c.bf16 %v572, %v569
        %v614 = vpack.c.bf16 %v478, %v474
        %v615 = vpack.c.bf16 %v480, %v476
        %v616 = vpack.c.bf16 %v580, %v577
        %v617 = vpack.c.bf16 %v488, %v484
        %v618 = vpack.c.bf16 %v490, %v486
        %v619 = vpack.c.bf16 %v588, %v585
        %v620 = vpack.c.bf16 %v498, %v494
        %v621 = vpack.c.bf16 %v500, %v496
        %v622 = vpack.c.bf16 %v596, %v593
        %623 = vst [vmem:[#allocation2] sm:$0xff] %v599
        %624 = vst [vmem:[#allocation2 + $0x8] sm:$0xff] %v600
        %625 = vst [vmem:[#allocation2 + $0x10] sm:$0xff] %v601
        %626 = vst [vmem:[#allocation2 + $0x18] sm:$0xff] %v602
        %627 = vst [vmem:[#allocation2 + $0x20] sm:$0xff] %v603
        %628 = vst [vmem:[#allocation2 + $0x28] sm:$0xff] %v604
        %629 = vst [vmem:[#allocation2 + $0x30] sm:$0xff] %v605
        %630 = vst [vmem:[#allocation2 + $0x38] sm:$0xff] %v606
        %631 = vst [vmem:[#allocation2 + $0x40] sm:$0xff] %v607
        %632 = vst [vmem:[#allocation2 + $0x48] sm:$0xff] %v608
        %633 = vst [vmem:[#allocation2 + $0x50] sm:$0xff] %v609
        %634 = vst [vmem:[#allocation2 + $0x58] sm:$0xff] %v610
        %635 = vst [vmem:[#allocation2 + $0x60] sm:$0xff] %v611
        %636 = vst [vmem:[#allocation2 + $0x68] sm:$0xff] %v612
        %637 = vst [vmem:[#allocation2 + $0x70] sm:$0xff] %v613
        %638 = vst [vmem:[#allocation2 + $0x78] sm:$0xff] %v614
        %639 = vst [vmem:[#allocation2 + $0x80] sm:$0xff] %v615
        %640 = vst [vmem:[#allocation2 + $0x88] sm:$0xff] %v616
        %641 = vst [vmem:[#allocation2 + $0x90] sm:$0xff] %v617
        %642 = vst [vmem:[#allocation2 + $0x98] sm:$0xff] %v618
        %643 = vst [vmem:[#allocation2 + $0xa0] sm:$0xff] %v619
        %644 = vst [vmem:[#allocation2 + $0xa8] sm:$0xff] %v620
        %645 = vst [vmem:[#allocation2 + $0xb0] sm:$0xff] %v621
        %646 = vst [vmem:[#allocation2 + $0xb8] sm:$0xff] %v622
        %v647 = vld [vmem:[%s262] sm:$0xff]
        %v648 = vld [vmem:[%s262 + $0x8] sm:$0xf]
        %v649 = vld [vmem:[%s262 + $0xc] sm:$0xff]
        %v650 = vld [vmem:[%s262 + $0x14] sm:$0xf]
        %v651 = vld [vmem:[%s262 + $0x18] sm:$0xff]
        %v652 = vld [vmem:[%s262 + $0x20] sm:$0xf]
        %v653 = vld [vmem:[%s262 + $0x24] sm:$0xff]
        %v654 = vld [vmem:[%s262 + $0x2c] sm:$0xf]
        %v655 = vld [vmem:[%s262 + $0x30] sm:$0xff]
        %v656 = vld [vmem:[%s262 + $0x38] sm:$0xf]
        %v657 = vld [vmem:[%s262 + $0x3c] sm:$0xff]
        %v658 = vld [vmem:[%s262 + $0x44] sm:$0xf]
        %v659 = vld [vmem:[%s262 + $0x48] sm:$0xff]
        %v660 = vld [vmem:[%s262 + $0x50] sm:$0xf]
        %v661 = vld [vmem:[%s262 + $0x54] sm:$0xff]
        %v662 = vld [vmem:[%s262 + $0x5c] sm:$0xf]
        %v663 = vld [vmem:[%s262 + $0x60] sm:$0xff]
        %v664 = vld [vmem:[%s262 + $0x68] sm:$0xf]
        %v665 = vld [vmem:[%s262 + $0x6c] sm:$0xff]
        %v666 = vld [vmem:[%s262 + $0x74] sm:$0xf]
        %v667 = vld [vmem:[%s262 + $0x78] sm:$0xff]
        %v668 = vld [vmem:[%s262 + $0x80] sm:$0xf]
        %v669 = vld [vmem:[%s262 + $0x84] sm:$0xff]
        %v670 = vld [vmem:[%s262 + $0x8c] sm:$0xf]
        %v671 = vld [vmem:[%s262 + $0x90] sm:$0xff]
        %v672 = vld [vmem:[%s262 + $0x98] sm:$0xf]
        %v673 = vld [vmem:[%s262 + $0x9c] sm:$0xff]
        %v674 = vld [vmem:[%s262 + $0xa4] sm:$0xf]
        %v675 = vld [vmem:[%s262 + $0xa8] sm:$0xff]
        %v676 = vld [vmem:[%s262 + $0xb0] sm:$0xf]
        %v677 = vld [vmem:[%s262 + $0xb4] sm:$0xff]
        %v678 = vld [vmem:[%s262 + $0xbc] sm:$0xf]
        %v679 = vld [vmem:[%s269] sm:$0x1]
        %v681 = vlaneseq
        %v682 = vshrl.u32 %v681, 7
        %v683 = vsub.s32 0, %v682
        %v684 = vrot.slane %v679, %v683
        %s686 = smul.u32 %s16, 112
        %s687 = sshra.s32 %s686, 4
        %s688 = sand.u32 %s686, 15
        %s689 = smul.u32 %s687, 3
        %s690 = smul.addr %s689, 8
        %s691 = scalar_lea.vmem [#allocation2], %s690
        %v692 = vld [vmem:[%s691] sm:$0xff]
        %v693 = vld [vmem:[%s691 + $0x8] sm:$0xff]
        %v694 = vld [vmem:[%s691 + $0x10] sm:$0xff]
        %v695 = vunpack.c.l.bf16 %v692
        %v696 = vunpack.c.l.bf16 %v693
        %v697 = vunpack.c.l.bf16 %v694
        %v698 = vunpack.c.h.bf16 %v692
        %v699 = vunpack.c.h.bf16 %v693
        %v700 = vunpack.c.h.bf16 %v694
        %v733 = vunpack.c.l.b16 %v647
        %v734 = vunpack.c.h.b16 %v647
        %v735 = vunpack.c.l.b16 %v648
        %v736 = vunpack.c.l.b16 %v649
        %v737 = vunpack.c.h.b16 %v649
        %v738 = vunpack.c.l.b16 %v650
        %v739 = vunpack.c.l.b16 %v651
        %v740 = vunpack.c.h.b16 %v651
        %v741 = vunpack.c.l.b16 %v652
        %v742 = vunpack.c.l.b16 %v653
        %v743 = vunpack.c.h.b16 %v653
        %v744 = vunpack.c.l.b16 %v654
        %v745 = vunpack.c.l.b16 %v655
        %v746 = vunpack.c.h.b16 %v655
        %v747 = vunpack.c.l.b16 %v656
        %v748 = vunpack.c.l.b16 %v657
        %v749 = vunpack.c.h.b16 %v657
        %v750 = vunpack.c.l.b16 %v658
        %v751 = vunpack.c.l.b16 %v659
        %v752 = vunpack.c.h.b16 %v659
        %v753 = vunpack.c.l.b16 %v660
        %v754 = vunpack.c.l.b16 %v661
        %v755 = vunpack.c.h.b16 %v661
        %v756 = vunpack.c.l.b16 %v662
        %v757 = vunpack.c.l.b16 %v663
        %v758 = vunpack.c.h.b16 %v663
        %v759 = vunpack.c.l.b16 %v664
        %v760 = vunpack.c.l.b16 %v665
        %v761 = vunpack.c.h.b16 %v665
        %v762 = vunpack.c.l.b16 %v666
        %v763 = vunpack.c.l.b16 %v667
        %v764 = vunpack.c.h.b16 %v667
        %v765 = vunpack.c.l.b16 %v668
        %v766 = vunpack.c.l.b16 %v669
        %v767 = vunpack.c.h.b16 %v669
        %v768 = vunpack.c.l.b16 %v670
        %v769 = vunpack.c.l.b16 %v671
        %v770 = vunpack.c.h.b16 %v671
        %v771 = vunpack.c.l.b16 %v672
        %v772 = vunpack.c.l.b16 %v673
        %v773 = vunpack.c.h.b16 %v673
        %v774 = vunpack.c.l.b16 %v674
        %v775 = vunpack.c.l.b16 %v675
        %v776 = vunpack.c.h.b16 %v675
        %v777 = vunpack.c.l.b16 %v676
        %v778 = vunpack.c.l.b16 %v677
        %v779 = vunpack.c.h.b16 %v677
        %v780 = vunpack.c.l.b16 %v678
        %v781 = vpack.c.b16 %v736, %v733
        %v782 = vpack.c.b16 %v737, %v734
        %v783 = vpack.c.b16 %v738, %v735
        %v784 = vpack.c.b16 %v742, %v739
        %v785 = vpack.c.b16 %v743, %v740
        %v786 = vpack.c.b16 %v744, %v741
        %v787 = vpack.c.b16 %v748, %v745
        %v788 = vpack.c.b16 %v749, %v746
        %v789 = vpack.c.b16 %v750, %v747
        %v790 = vpack.c.b16 %v754, %v751
        %v791 = vpack.c.b16 %v755, %v752
        %v792 = vpack.c.b16 %v756, %v753
        %v793 = vpack.c.b16 %v760, %v757
        %v794 = vpack.c.b16 %v761, %v758
        %v795 = vpack.c.b16 %v762, %v759
        %v796 = vpack.c.b16 %v766, %v763
        %v797 = vpack.c.b16 %v767, %v764
        %v798 = vpack.c.b16 %v768, %v765
        %v799 = vpack.c.b16 %v772, %v769
        %v800 = vpack.c.b16 %v773, %v770
        %v801 = vpack.c.b16 %v774, %v771
        %v802 = vpack.c.b16 %v778, %v775
        %v803 = vpack.c.b16 %v779, %v776
        %v804 = vpack.c.b16 %v780, %v777
        %829 = vmatprep.subr.bf16.mxu0 %v782
        %830 = vmatpush1.bf16.msra.mxu0 %v781
        %831 = vmatprep.subr.bf16.mxu0 %v785
        %832 = vmatpush1.bf16.msra.mxu0 %v784
        %833 = vmatprep.subr.bf16.mxu0 %v788
        %834 = vmatpush1.bf16.msra.mxu0 %v787
        %835 = vmatprep.subr.bf16.mxu0 %v791
        %836 = vmatpush1.bf16.msra.mxu0 %v790
        %837 = vmatprep.subr.bf16.mxu0 %v794
        %838 = vmatpush1.bf16.msra.mxu0 %v793
        %839 = vmatprep.subr.bf16.mxu0 %v797
        %840 = vmatpush1.bf16.msra.mxu0 %v796
        %841 = vmatprep.subr.bf16.mxu0 %v800
        %842 = vmatpush1.bf16.msra.mxu0 %v799
        %843 = vmatprep.subr.bf16.mxu0 %v803
        %844 = vmatpush1.bf16.msra.mxu0 %v802
        %845 = vmatprep.subr.bf16.mxu0 0
        %846 = vmatpush1.bf16.msra.mxu0 0
        %847 = vmatprep.subr.bf16.mxu0 0
        %848 = vmatpush1.bf16.msra.mxu0 0
        %849 = vmatprep.subr.bf16.mxu0 0
        %850 = vmatpush1.bf16.msra.mxu0 0
        %851 = vmatprep.subr.bf16.mxu0 0
        %852 = vmatpush1.bf16.msra.mxu0 0
        %853 = vmatprep.subr.bf16.mxu0 0
        %854 = vmatpush1.bf16.msra.mxu0 0
        %855 = vmatprep.subr.bf16.mxu0 0
        %856 = vmatpush1.bf16.msra.mxu0 0
        %857 = vmatprep.subr.bf16.mxu0 0
        %858 = vmatpush1.bf16.msra.mxu0 0
        %859 = vmatprep.subr.bf16.mxu0 0
        %860 = vmatpush1.bf16.msra.mxu0 0
        %861 = vmatprep.mubr.bf16.mxu0 0
        %862 = vmatmul.mubr.bf16.gmra.mrb[0].mxu0 0
        %v863 = vpop.f32.mrb[0].mxu0
        %v864 = vadd.f32 0.0, %v863
        %v865 = vpop.f32.mrb[0].mxu0
        %v866 = vadd.f32 0.0, %v865
        %v867 = vpop.f32.mrb[0].mxu0
        %v868 = vadd.f32 0.0, %v867
        %v869 = vpop.f32.mrb[0].mxu0
        %v870 = vadd.f32 0.0, %v869
        %871 = vdwg.mxu0
        %872 = vmatprep.subr.bf16.mxu0 0
        %873 = vmatpush1.bf16.msra.mxu0 %v783
        %874 = vmatprep.subr.bf16.mxu0 0
        %875 = vmatpush1.bf16.msra.mxu0 %v786
        %876 = vmatprep.subr.bf16.mxu0 0
        %877 = vmatpush1.bf16.msra.mxu0 %v789
        %878 = vmatprep.subr.bf16.mxu0 0
        %879 = vmatpush1.bf16.msra.mxu0 %v792
        %880 = vmatprep.subr.bf16.mxu0 0
        %881 = vmatpush1.bf16.msra.mxu0 %v795
        %882 = vmatprep.subr.bf16.mxu0 0
        %883 = vmatpush1.bf16.msra.mxu0 %v798
        %884 = vmatprep.subr.bf16.mxu0 0
        %885 = vmatpush1.bf16.msra.mxu0 %v801
        %886 = vmatprep.subr.bf16.mxu0 0
        %887 = vmatpush1.bf16.msra.mxu0 %v804
        %888 = vmatprep.subr.bf16.mxu0 0
        %889 = vmatpush1.bf16.msra.mxu0 0
        %890 = vmatprep.subr.bf16.mxu0 0
        %891 = vmatpush1.bf16.msra.mxu0 0
        %892 = vmatprep.subr.bf16.mxu0 0
        %893 = vmatpush1.bf16.msra.mxu0 0
        %894 = vmatprep.subr.bf16.mxu0 0
        %895 = vmatpush1.bf16.msra.mxu0 0
        %896 = vmatprep.subr.bf16.mxu0 0
        %897 = vmatpush1.bf16.msra.mxu0 0
        %898 = vmatprep.subr.bf16.mxu0 0
        %899 = vmatpush1.bf16.msra.mxu0 0
        %900 = vmatprep.subr.bf16.mxu0 0
        %901 = vmatpush1.bf16.msra.mxu0 0
        %902 = vmatprep.subr.bf16.mxu0 0
        %903 = vmatpush1.bf16.msra.mxu0 0
        %904 = vmatprep.mubr.bf16.mxu0 0
        %905 = vmatmul.mubr.bf16.gmra.mrb[0].mxu0 0
        %v906 = vpop.f32.mrb[0].mxu0
        %v907 = vadd.f32 0.0, %v906
        %v908 = vpop.f32.mrb[0].mxu0
        %v909 = vpop.f32.mrb[0].mxu0
        %v910 = vadd.f32 0.0, %v909
        %v911 = vpop.f32.mrb[0].mxu0
        %912 = vdwg.mxu0
        %v913 = vadd.f32 %v695, %v864
        %v914 = vadd.f32 %v696, %v866
        %v915 = vadd.f32 %v698, %v868
        %v916 = vadd.f32 %v699, %v870
        %v917 = vxor.u32 %v913, 2147483648
        %v918 = vxor.u32 %v914, 2147483648
        %v919 = vxor.u32 %v915, 2147483648
        %v920 = vxor.u32 %v916, 2147483648
        %v921 = vmul.f32 %v917, 1.442695
        %v922 = vpow.pop %v921
        %v923 = vmul.f32 %v918, 1.442695
        %v924 = vpow.pop %v923
        %v925 = vmul.f32 %v919, 1.442695
        %v926 = vpow.pop %v925
        %v927 = vmul.f32 %v920, 1.442695
        %v928 = vpow.pop %v927
        %v929 = vadd.f32 %v922, 1.0
        %v930 = vadd.f32 %v924, 1.0
        %v931 = vadd.f32 %v926, 1.0
        %v932 = vadd.f32 %v928, 1.0
        %v933 = vrcp.pop %v929
        %v934 = vmul.f32 1.0, %v933
        %v935 = vrcp.pop %v930
        %v936 = vmul.f32 1.0, %v935
        %v937 = vrcp.pop %v931
        %v938 = vmul.f32 1.0, %v937
        %v939 = vrcp.pop %v932
        %v940 = vmul.f32 1.0, %v939
        %v941 = vadd.f32 %v907, %v684
        %v942 = vadd.f32 %v910, %v684
        %v943 = vmul.f32 %v934, %v941
        %v944 = vmul.f32 %v938, %v942
        %v945 = vadd.f32 %v697, %v943
        %v946 = vadd.f32 %v700, %v944
        %v947 = vtanh.pop %v945
        %v948 = vtanh.pop %v946
        %v949 = vsub.f32 1.0, %v936
        %v950 = vsub.f32 1.0, %v940
        %v951 = vmul.f32 %v949, %v947
        %v952 = vmul.f32 %v950, %v948
        %v953 = vmul.f32 %v936, 0.0
        %v954 = vmul.f32 %v940, 0.0
        %v955 = vadd.f32 %v951, %v953
        %v956 = vadd.f32 %v952, %v954
        %s957 = smul.u32 %s16, 5
        %s958 = sadd.s32 %s957, 1
        %s959 = smul.u32 %s958, 16
        %s960 = sshra.s32 %s959, 4
        %s961 = sand.u32 %s959, 15
        %s962 = smul.u32 %s960, 3
        %s963 = smul.addr %s962, 8
        %s964 = scalar_lea.vmem [#allocation2], %s963
        %v965 = vld [vmem:[%s964] sm:$0xff]
        %v966 = vld [vmem:[%s964 + $0x8] sm:$0xff]
        %v967 = vld [vmem:[%s964 + $0x10] sm:$0xff]
        %v968 = vunpack.c.l.bf16 %v965
        %v969 = vunpack.c.l.bf16 %v966
        %v970 = vunpack.c.l.bf16 %v967
        %v971 = vunpack.c.h.bf16 %v965
        %v972 = vunpack.c.h.bf16 %v966
        %v973 = vunpack.c.h.bf16 %v967
        %v974 = vpack.c.bf16 %v956, %v955
        %975 = vmatprep.subr.bf16.mxu0 %v782
        %976 = vmatpush1.bf16.msra.mxu0 %v781
        %977 = vmatprep.subr.bf16.mxu0 %v785
        %978 = vmatpush1.bf16.msra.mxu0 %v784
        %979 = vmatprep.subr.bf16.mxu0 %v788
        %980 = vmatpush1.bf16.msra.mxu0 %v787
        %981 = vmatprep.subr.bf16.mxu0 %v791
        %982 = vmatpush1.bf16.msra.mxu0 %v790
        %983 = vmatprep.subr.bf16.mxu0 %v794
        %984 = vmatpush1.bf16.msra.mxu0 %v793
        %985 = vmatprep.subr.bf16.mxu0 %v797
        %986 = vmatpush1.bf16.msra.mxu0 %v796
        %987 = vmatprep.subr.bf16.mxu0 %v800
        %988 = vmatpush1.bf16.msra.mxu0 %v799
        %989 = vmatprep.subr.bf16.mxu0 %v803
        %990 = vmatpush1.bf16.msra.mxu0 %v802
        %991 = vmatprep.subr.bf16.mxu0 0
        %992 = vmatpush1.bf16.msra.mxu0 0
        %993 = vmatprep.subr.bf16.mxu0 0
        %994 = vmatpush1.bf16.msra.mxu0 0
        %995 = vmatprep.subr.bf16.mxu0 0
        %996 = vmatpush1.bf16.msra.mxu0 0
        %997 = vmatprep.subr.bf16.mxu0 0
        %998 = vmatpush1.bf16.msra.mxu0 0
        %999 = vmatprep.subr.bf16.mxu0 0
        %1000 = vmatpush1.bf16.msra.mxu0 0
        %1001 = vmatprep.subr.bf16.mxu0 0
        %1002 = vmatpush1.bf16.msra.mxu0 0
        %1003 = vmatprep.subr.bf16.mxu0 0
        %1004 = vmatpush1.bf16.msra.mxu0 0
        %1005 = vmatprep.subr.bf16.mxu0 0
        %1006 = vmatpush1.bf16.msra.mxu0 0
        %1007 = vmatprep.mubr.bf16.mxu0 0
        %1008 = vmatmul.mubr.bf16.gmra.mrb[0].mxu0 %v974
        %v1009 = vpop.f32.mrb[0].mxu0
        %v1010 = vadd.f32 0.0, %v1009
        %v1011 = vpop.f32.mrb[0].mxu0
        %v1012 = vadd.f32 0.0, %v1011
        %v1013 = vpop.f32.mrb[0].mxu0
        %v1014 = vadd.f32 0.0, %v1013
        %v1015 = vpop.f32.mrb[0].mxu0
        %v1016 = vadd.f32 0.0, %v1015
        %1017 = vdwg.mxu0
        %1018 = vmatprep.subr.bf16.mxu0 0
        %1019 = vmatpush1.bf16.msra.mxu0 %v783
        %1020 = vmatprep.subr.bf16.mxu0 0
        %1021 = vmatpush1.bf16.msra.mxu0 %v786
        %1022 = vmatprep.subr.bf16.mxu0 0
        %1023 = vmatpush1.bf16.msra.mxu0 %v789
        %1024 = vmatprep.subr.bf16.mxu0 0
        %1025 = vmatpush1.bf16.msra.mxu0 %v792
        %1026 = vmatprep.subr.bf16.mxu0 0
        %1027 = vmatpush1.bf16.msra.mxu0 %v795
        %1028 = vmatprep.subr.bf16.mxu0 0
        %1029 = vmatpush1.bf16.msra.mxu0 %v798
        %1030 = vmatprep.subr.bf16.mxu0 0
        %1031 = vmatpush1.bf16.msra.mxu0 %v801
        %1032 = vmatprep.subr.bf16.mxu0 0
        %1033 = vmatpush1.bf16.msra.mxu0 %v804
        %1034 = vmatprep.subr.bf16.mxu0 0
        %1035 = vmatpush1.bf16.msra.mxu0 0
        %1036 = vmatprep.subr.bf16.mxu0 0
        %1037 = vmatpush1.bf16.msra.mxu0 0
        %1038 = vmatprep.subr.bf16.mxu0 0
        %1039 = vmatpush1.bf16.msra.mxu0 0
        %1040 = vmatprep.subr.bf16.mxu0 0
        %1041 = vmatpush1.bf16.msra.mxu0 0
        %1042 = vmatprep.subr.bf16.mxu0 0
        %1043 = vmatpush1.bf16.msra.mxu0 0
        %1044 = vmatprep.subr.bf16.mxu0 0
        %1045 = vmatpush1.bf16.msra.mxu0 0
        %1046 = vmatprep.subr.bf16.mxu0 0
        %1047 = vmatpush1.bf16.msra.mxu0 0
        %1048 = vmatprep.subr.bf16.mxu0 0
        %1049 = vmatpush1.bf16.msra.mxu0 0
        %1050 = vmatprep.mubr.bf16.mxu0 0
        %1051 = vmatmul.mubr.bf16.gmra.mrb[0].mxu0 %v974
        %v1052 = vpop.f32.mrb[0].mxu0
        %v1053 = vadd.f32 0.0, %v1052
        %v1054 = vpop.f32.mrb[0].mxu0
        %v1055 = vpop.f32.mrb[0].mxu0
        %v1056 = vadd.f32 0.0, %v1055
        %v1057 = vpop.f32.mrb[0].mxu0
        %1058 = vdwg.mxu0
        %v1059 = vadd.f32 %v968, %v1010
        %v1060 = vadd.f32 %v969, %v1012
        %v1061 = vadd.f32 %v971, %v1014
        %v1062 = vadd.f32 %v972, %v1016
        %v1063 = vxor.u32 %v1059, 2147483648
        %v1064 = vxor.u32 %v1060, 2147483648
        %v1065 = vxor.u32 %v1061, 2147483648
        %v1066 = vxor.u32 %v1062, 2147483648
        %v1067 = vmul.f32 %v1063, 1.442695
        %v1068 = vpow.pop %v1067
        %v1069 = vmul.f32 %v1064, 1.442695
        %v1070 = vpow.pop %v1069
        %v1071 = vmul.f32 %v1065, 1.442695
        %v1072 = vpow.pop %v1071
        %v1073 = vmul.f32 %v1066, 1.442695
        %v1074 = vpow.pop %v1073
        %v1075 = vadd.f32 %v1068, 1.0
        %v1076 = vadd.f32 %v1070, 1.0
        %v1077 = vadd.f32 %v1072, 1.0
        %v1078 = vadd.f32 %v1074, 1.0
        %v1079 = vrcp.pop %v1075
        %v1080 = vmul.f32 1.0, %v1079
        %v1081 = vrcp.pop %v1076
        %v1082 = vmul.f32 1.0, %v1081
        %v1083 = vrcp.pop %v1077
        %v1084 = vmul.f32 1.0, %v1083
        %v1085 = vrcp.pop %v1078
        %v1086 = vmul.f32 1.0, %v1085
        %v1087 = vadd.f32 %v1053, %v684
        %v1088 = vadd.f32 %v1056, %v684
        %v1089 = vmul.f32 %v1080, %v1087
        %v1090 = vmul.f32 %v1084, %v1088
        %v1091 = vadd.f32 %v970, %v1089
        %v1092 = vadd.f32 %v973, %v1090
        %v1093 = vtanh.pop %v1091
        %v1094 = vtanh.pop %v1092
        %v1095 = vsub.f32 1.0, %v1082
        %v1096 = vsub.f32 1.0, %v1086
        %v1097 = vmul.f32 %v1095, %v1093
        %v1098 = vmul.f32 %v1096, %v1094
        %v1099 = vmul.f32 %v1082, %v955
        %v1100 = vmul.f32 %v1086, %v956
        %v1101 = vadd.f32 %v1097, %v1099
        %v1102 = vadd.f32 %v1098, %v1100
        %s1103 = smul.u32 %s16, 3
        %s1104 = sadd.s32 %s1103, 2
        %s1105 = smul.u32 %s1104, 16
        %s1106 = sshra.s32 %s1105, 4
        %s1107 = sand.u32 %s1105, 15
        %s1108 = smul.u32 %s1106, 3
        %s1109 = smul.addr %s1108, 8
        %s1110 = scalar_lea.vmem [#allocation2], %s1109
        %v1111 = vld [vmem:[%s1110] sm:$0xff]
        %v1112 = vld [vmem:[%s1110 + $0x8] sm:$0xff]
        %v1113 = vld [vmem:[%s1110 + $0x10] sm:$0xff]
        %v1114 = vunpack.c.l.bf16 %v1111
        %v1115 = vunpack.c.l.bf16 %v1112
        %v1116 = vunpack.c.l.bf16 %v1113
        %v1117 = vunpack.c.h.bf16 %v1111
        %v1118 = vunpack.c.h.bf16 %v1112
        %v1119 = vunpack.c.h.bf16 %v1113
        %v1120 = vpack.c.bf16 %v1102, %v1101
        %1121 = vmatprep.subr.bf16.mxu0 %v782
        %1122 = vmatpush1.bf16.msra.mxu0 %v781
        %1123 = vmatprep.subr.bf16.mxu0 %v785
        %1124 = vmatpush1.bf16.msra.mxu0 %v784
        %1125 = vmatprep.subr.bf16.mxu0 %v788
        %1126 = vmatpush1.bf16.msra.mxu0 %v787
        %1127 = vmatprep.subr.bf16.mxu0 %v791
        %1128 = vmatpush1.bf16.msra.mxu0 %v790
        %1129 = vmatprep.subr.bf16.mxu0 %v794
        %1130 = vmatpush1.bf16.msra.mxu0 %v793
        %1131 = vmatprep.subr.bf16.mxu0 %v797
        %1132 = vmatpush1.bf16.msra.mxu0 %v796
        %1133 = vmatprep.subr.bf16.mxu0 %v800
        %1134 = vmatpush1.bf16.msra.mxu0 %v799
        %1135 = vmatprep.subr.bf16.mxu0 %v803
        %1136 = vmatpush1.bf16.msra.mxu0 %v802
        %1137 = vmatprep.subr.bf16.mxu0 0
        %1138 = vmatpush1.bf16.msra.mxu0 0
        %1139 = vmatprep.subr.bf16.mxu0 0
        %1140 = vmatpush1.bf16.msra.mxu0 0
        %1141 = vmatprep.subr.bf16.mxu0 0
        %1142 = vmatpush1.bf16.msra.mxu0 0
        %1143 = vmatprep.subr.bf16.mxu0 0
        %1144 = vmatpush1.bf16.msra.mxu0 0
        %1145 = vmatprep.subr.bf16.mxu0 0
        %1146 = vmatpush1.bf16.msra.mxu0 0
        %1147 = vmatprep.subr.bf16.mxu0 0
        %1148 = vmatpush1.bf16.msra.mxu0 0
        %1149 = vmatprep.subr.bf16.mxu0 0
        %1150 = vmatpush1.bf16.msra.mxu0 0
        %1151 = vmatprep.subr.bf16.mxu0 0
        %1152 = vmatpush1.bf16.msra.mxu0 0
        %1153 = vmatprep.mubr.bf16.mxu0 0
        %1154 = vmatmul.mubr.bf16.gmra.mrb[0].mxu0 %v1120
        %v1155 = vpop.f32.mrb[0].mxu0
        %v1156 = vadd.f32 0.0, %v1155
        %v1157 = vpop.f32.mrb[0].mxu0
        %v1158 = vadd.f32 0.0, %v1157
        %v1159 = vpop.f32.mrb[0].mxu0
        %v1160 = vadd.f32 0.0, %v1159
        %v1161 = vpop.f32.mrb[0].mxu0
        %v1162 = vadd.f32 0.0, %v1161
        %1163 = vdwg.mxu0
        %1164 = vmatprep.subr.bf16.mxu0 0
        %1165 = vmatpush1.bf16.msra.mxu0 %v783
        %1166 = vmatprep.subr.bf16.mxu0 0
        %1167 = vmatpush1.bf16.msra.mxu0 %v786
        %1168 = vmatprep.subr.bf16.mxu0 0
        %1169 = vmatpush1.bf16.msra.mxu0 %v789
        %1170 = vmatprep.subr.bf16.mxu0 0
        %1171 = vmatpush1.bf16.msra.mxu0 %v792
        %1172 = vmatprep.subr.bf16.mxu0 0
        %1173 = vmatpush1.bf16.msra.mxu0 %v795
        %1174 = vmatprep.subr.bf16.mxu0 0
        %1175 = vmatpush1.bf16.msra.mxu0 %v798
        %1176 = vmatprep.subr.bf16.mxu0 0
        %1177 = vmatpush1.bf16.msra.mxu0 %v801
        %1178 = vmatprep.subr.bf16.mxu0 0
        %1179 = vmatpush1.bf16.msra.mxu0 %v804
        %1180 = vmatprep.subr.bf16.mxu0 0
        %1181 = vmatpush1.bf16.msra.mxu0 0
        %1182 = vmatprep.subr.bf16.mxu0 0
        %1183 = vmatpush1.bf16.msra.mxu0 0
        %1184 = vmatprep.subr.bf16.mxu0 0
        %1185 = vmatpush1.bf16.msra.mxu0 0
        %1186 = vmatprep.subr.bf16.mxu0 0
        %1187 = vmatpush1.bf16.msra.mxu0 0
        %1188 = vmatprep.subr.bf16.mxu0 0
        %1189 = vmatpush1.bf16.msra.mxu0 0
        %1190 = vmatprep.subr.bf16.mxu0 0
        %1191 = vmatpush1.bf16.msra.mxu0 0
        %1192 = vmatprep.subr.bf16.mxu0 0
        %1193 = vmatpush1.bf16.msra.mxu0 0
        %1194 = vmatprep.subr.bf16.mxu0 0
        %1195 = vmatpush1.bf16.msra.mxu0 0
        %1196 = vmatprep.mubr.bf16.mxu0 0
        %1197 = vmatmul.mubr.bf16.gmra.mrb[0].mxu0 %v1120
        %v1198 = vpop.f32.mrb[0].mxu0
        %v1199 = vadd.f32 0.0, %v1198
        %v1200 = vpop.f32.mrb[0].mxu0
        %v1201 = vpop.f32.mrb[0].mxu0
        %v1202 = vadd.f32 0.0, %v1201
        %v1203 = vpop.f32.mrb[0].mxu0
        %1204 = vdwg.mxu0
        %v1205 = vadd.f32 %v1114, %v1156
        %v1206 = vadd.f32 %v1115, %v1158
        %v1207 = vadd.f32 %v1117, %v1160
        %v1208 = vadd.f32 %v1118, %v1162
        %v1209 = vxor.u32 %v1205, 2147483648
        %v1210 = vxor.u32 %v1206, 2147483648
        %v1211 = vxor.u32 %v1207, 2147483648
        %v1212 = vxor.u32 %v1208, 2147483648
        %v1213 = vmul.f32 %v1209, 1.442695
        %v1214 = vpow.pop %v1213
        %v1215 = vmul.f32 %v1210, 1.442695
        %v1216 = vpow.pop %v1215
        %v1217 = vmul.f32 %v1211, 1.442695
        %v1218 = vpow.pop %v1217
        %v1219 = vmul.f32 %v1212, 1.442695
        %v1220 = vpow.pop %v1219
        %v1221 = vadd.f32 %v1214, 1.0
        %v1222 = vadd.f32 %v1216, 1.0
        %v1223 = vadd.f32 %v1218, 1.0
        %v1224 = vadd.f32 %v1220, 1.0
        %v1225 = vrcp.pop %v1221
        %v1226 = vmul.f32 1.0, %v1225
        %v1227 = vrcp.pop %v1222
        %v1228 = vmul.f32 1.0, %v1227
        %v1229 = vrcp.pop %v1223
        %v1230 = vmul.f32 1.0, %v1229
        %v1231 = vrcp.pop %v1224
        %v1232 = vmul.f32 1.0, %v1231
        %v1233 = vadd.f32 %v1199, %v684
        %v1234 = vadd.f32 %v1202, %v684
        %v1235 = vmul.f32 %v1226, %v1233
        %v1236 = vmul.f32 %v1230, %v1234
        %v1237 = vadd.f32 %v1116, %v1235
        %v1238 = vadd.f32 %v1119, %v1236
        %v1239 = vtanh.pop %v1237
        %v1240 = vtanh.pop %v1238
        %v1241 = vsub.f32 1.0, %v1228
        %v1242 = vsub.f32 1.0, %v1232
        %v1243 = vmul.f32 %v1241, %v1239
        %v1244 = vmul.f32 %v1242, %v1240
        %v1245 = vmul.f32 %v1228, %v1101
        %v1246 = vmul.f32 %v1232, %v1102
        %v1247 = vadd.f32 %v1243, %v1245
        %v1248 = vadd.f32 %v1244, %v1246
        %s1249 = sadd.s32 %s16, 3
        %s1250 = smul.u32 %s1249, 16
        %s1251 = sshra.s32 %s1250, 4
        %s1252 = sand.u32 %s1250, 15
        %s1253 = smul.u32 %s1251, 3
        %s1254 = smul.addr %s1253, 8
        %s1255 = scalar_lea.vmem [#allocation2], %s1254
        %v1256 = vld [vmem:[%s1255] sm:$0xff]
        %v1257 = vld [vmem:[%s1255 + $0x8] sm:$0xff]
        %v1258 = vld [vmem:[%s1255 + $0x10] sm:$0xff]
        %v1259 = vunpack.c.l.bf16 %v1256
        %v1260 = vunpack.c.l.bf16 %v1257
        %v1261 = vunpack.c.l.bf16 %v1258
        %v1262 = vunpack.c.h.bf16 %v1256
        %v1263 = vunpack.c.h.bf16 %v1257
        %v1264 = vunpack.c.h.bf16 %v1258
        %v1265 = vpack.c.bf16 %v1248, %v1247
        %1266 = vmatprep.subr.bf16.mxu0 %v782
        %1267 = vmatpush1.bf16.msra.mxu0 %v781
        %1268 = vmatprep.subr.bf16.mxu0 %v785
        %1269 = vmatpush1.bf16.msra.mxu0 %v784
        %1270 = vmatprep.subr.bf16.mxu0 %v788
        %1271 = vmatpush1.bf16.msra.mxu0 %v787
        %1272 = vmatprep.subr.bf16.mxu0 %v791
        %1273 = vmatpush1.bf16.msra.mxu0 %v790
        %1274 = vmatprep.subr.bf16.mxu0 %v794
        %1275 = vmatpush1.bf16.msra.mxu0 %v793
        %1276 = vmatprep.subr.bf16.mxu0 %v797
        %1277 = vmatpush1.bf16.msra.mxu0 %v796
        %1278 = vmatprep.subr.bf16.mxu0 %v800
        %1279 = vmatpush1.bf16.msra.mxu0 %v799
        %1280 = vmatprep.subr.bf16.mxu0 %v803
        %1281 = vmatpush1.bf16.msra.mxu0 %v802
        %1282 = vmatprep.subr.bf16.mxu0 0
        %1283 = vmatpush1.bf16.msra.mxu0 0
        %1284 = vmatprep.subr.bf16.mxu0 0
        %1285 = vmatpush1.bf16.msra.mxu0 0
        %1286 = vmatprep.subr.bf16.mxu0 0
        %1287 = vmatpush1.bf16.msra.mxu0 0
        %1288 = vmatprep.subr.bf16.mxu0 0
        %1289 = vmatpush1.bf16.msra.mxu0 0
        %1290 = vmatprep.subr.bf16.mxu0 0
        %1291 = vmatpush1.bf16.msra.mxu0 0
        %1292 = vmatprep.subr.bf16.mxu0 0
        %1293 = vmatpush1.bf16.msra.mxu0 0
        %1294 = vmatprep.subr.bf16.mxu0 0
        %1295 = vmatpush1.bf16.msra.mxu0 0
        %1296 = vmatprep.subr.bf16.mxu0 0
        %1297 = vmatpush1.bf16.msra.mxu0 0
        %1298 = vmatprep.mubr.bf16.mxu0 0
        %1299 = vmatmul.mubr.bf16.gmra.mrb[0].mxu0 %v1265
        %v1300 = vpop.f32.mrb[0].mxu0
        %v1301 = vadd.f32 0.0, %v1300
        %v1302 = vpop.f32.mrb[0].mxu0
        %v1303 = vadd.f32 0.0, %v1302
        %v1304 = vpop.f32.mrb[0].mxu0
        %v1305 = vadd.f32 0.0, %v1304
        %v1306 = vpop.f32.mrb[0].mxu0
        %v1307 = vadd.f32 0.0, %v1306
        %1308 = vdwg.mxu0
        %1309 = vmatprep.subr.bf16.mxu0 0
        %1310 = vmatpush1.bf16.msra.mxu0 %v783
        %1311 = vmatprep.subr.bf16.mxu0 0
        %1312 = vmatpush1.bf16.msra.mxu0 %v786
        %1313 = vmatprep.subr.bf16.mxu0 0
        %1314 = vmatpush1.bf16.msra.mxu0 %v789
        %1315 = vmatprep.subr.bf16.mxu0 0
        %1316 = vmatpush1.bf16.msra.mxu0 %v792
        %1317 = vmatprep.subr.bf16.mxu0 0
        %1318 = vmatpush1.bf16.msra.mxu0 %v795
        %1319 = vmatprep.subr.bf16.mxu0 0
        %1320 = vmatpush1.bf16.msra.mxu0 %v798
        %1321 = vmatprep.subr.bf16.mxu0 0
        %1322 = vmatpush1.bf16.msra.mxu0 %v801
        %1323 = vmatprep.subr.bf16.mxu0 0
        %1324 = vmatpush1.bf16.msra.mxu0 %v804
        %1325 = vmatprep.subr.bf16.mxu0 0
        %1326 = vmatpush1.bf16.msra.mxu0 0
        %1327 = vmatprep.subr.bf16.mxu0 0
        %1328 = vmatpush1.bf16.msra.mxu0 0
        %1329 = vmatprep.subr.bf16.mxu0 0
        %1330 = vmatpush1.bf16.msra.mxu0 0
        %1331 = vmatprep.subr.bf16.mxu0 0
        %1332 = vmatpush1.bf16.msra.mxu0 0
        %1333 = vmatprep.subr.bf16.mxu0 0
        %1334 = vmatpush1.bf16.msra.mxu0 0
        %1335 = vmatprep.subr.bf16.mxu0 0
        %1336 = vmatpush1.bf16.msra.mxu0 0
        %1337 = vmatprep.subr.bf16.mxu0 0
        %1338 = vmatpush1.bf16.msra.mxu0 0
        %1339 = vmatprep.subr.bf16.mxu0 0
        %1340 = vmatpush1.bf16.msra.mxu0 0
        %1341 = vmatprep.mubr.bf16.mxu0 0
        %1342 = vmatmul.mubr.bf16.gmra.mrb[0].mxu0 %v1265
        %v1343 = vpop.f32.mrb[0].mxu0
        %v1344 = vadd.f32 0.0, %v1343
        %v1345 = vpop.f32.mrb[0].mxu0
        %v1346 = vpop.f32.mrb[0].mxu0
        %v1347 = vadd.f32 0.0, %v1346
        %v1348 = vpop.f32.mrb[0].mxu0
        %1349 = vdwg.mxu0
        %v1350 = vadd.f32 %v1259, %v1301
        %v1351 = vadd.f32 %v1260, %v1303
        %v1352 = vadd.f32 %v1262, %v1305
        %v1353 = vadd.f32 %v1263, %v1307
        %v1354 = vxor.u32 %v1350, 2147483648
        %v1355 = vxor.u32 %v1351, 2147483648
        %v1356 = vxor.u32 %v1352, 2147483648
        %v1357 = vxor.u32 %v1353, 2147483648
        %v1358 = vmul.f32 %v1354, 1.442695
        %v1359 = vpow.pop %v1358
        %v1360 = vmul.f32 %v1355, 1.442695
        %v1361 = vpow.pop %v1360
        %v1362 = vmul.f32 %v1356, 1.442695
        %v1363 = vpow.pop %v1362
        %v1364 = vmul.f32 %v1357, 1.442695
        %v1365 = vpow.pop %v1364
        %v1366 = vadd.f32 %v1359, 1.0
        %v1367 = vadd.f32 %v1361, 1.0
        %v1368 = vadd.f32 %v1363, 1.0
        %v1369 = vadd.f32 %v1365, 1.0
        %v1370 = vrcp.pop %v1366
        %v1371 = vmul.f32 1.0, %v1370
        %v1372 = vrcp.pop %v1367
        %v1373 = vmul.f32 1.0, %v1372
        %v1374 = vrcp.pop %v1368
        %v1375 = vmul.f32 1.0, %v1374
        %v1376 = vrcp.pop %v1369
        %v1377 = vmul.f32 1.0, %v1376
        %v1378 = vadd.f32 %v1344, %v684
        %v1379 = vadd.f32 %v1347, %v684
        %v1380 = vmul.f32 %v1371, %v1378
        %v1381 = vmul.f32 %v1375, %v1379
        %v1382 = vadd.f32 %v1261, %v1380
        %v1383 = vadd.f32 %v1264, %v1381
        %v1384 = vtanh.pop %v1382
        %v1385 = vtanh.pop %v1383
        %v1386 = vsub.f32 1.0, %v1373
        %v1387 = vsub.f32 1.0, %v1377
        %v1388 = vmul.f32 %v1386, %v1384
        %v1389 = vmul.f32 %v1387, %v1385
        %v1390 = vmul.f32 %v1373, %v1247
        %v1391 = vmul.f32 %v1377, %v1248
        %v1392 = vadd.f32 %v1388, %v1390
        %v1393 = vadd.f32 %v1389, %v1391
        %s1394 = ssub.s32 4, %s16
        %s1395 = smul.u32 %s1394, 16
        %s1396 = sshra.s32 %s1395, 4
        %s1397 = sand.u32 %s1395, 15
        %s1398 = smul.u32 %s1396, 3
        %s1399 = smul.addr %s1398, 8
        %s1400 = scalar_lea.vmem [#allocation2], %s1399
        %v1401 = vld [vmem:[%s1400] sm:$0xff]
        %v1402 = vld [vmem:[%s1400 + $0x8] sm:$0xff]
        %v1403 = vld [vmem:[%s1400 + $0x10] sm:$0xff]
        %v1404 = vunpack.c.l.bf16 %v1401
        %v1405 = vunpack.c.l.bf16 %v1402
        %v1406 = vunpack.c.l.bf16 %v1403
        %v1407 = vunpack.c.h.bf16 %v1401
        %v1408 = vunpack.c.h.bf16 %v1402
        %v1409 = vunpack.c.h.bf16 %v1403
        %v1410 = vpack.c.bf16 %v1393, %v1392
        %1411 = vmatprep.subr.bf16.mxu0 %v782
        %1412 = vmatpush1.bf16.msra.mxu0 %v781
        %1413 = vmatprep.subr.bf16.mxu0 %v785
        %1414 = vmatpush1.bf16.msra.mxu0 %v784
        %1415 = vmatprep.subr.bf16.mxu0 %v788
        %1416 = vmatpush1.bf16.msra.mxu0 %v787
        %1417 = vmatprep.subr.bf16.mxu0 %v791
        %1418 = vmatpush1.bf16.msra.mxu0 %v790
        %1419 = vmatprep.subr.bf16.mxu0 %v794
        %1420 = vmatpush1.bf16.msra.mxu0 %v793
        %1421 = vmatprep.subr.bf16.mxu0 %v797
        %1422 = vmatpush1.bf16.msra.mxu0 %v796
        %1423 = vmatprep.subr.bf16.mxu0 %v800
        %1424 = vmatpush1.bf16.msra.mxu0 %v799
        %1425 = vmatprep.subr.bf16.mxu0 %v803
        %1426 = vmatpush1.bf16.msra.mxu0 %v802
        %1427 = vmatprep.subr.bf16.mxu0 0
        %1428 = vmatpush1.bf16.msra.mxu0 0
        %1429 = vmatprep.subr.bf16.mxu0 0
        %1430 = vmatpush1.bf16.msra.mxu0 0
        %1431 = vmatprep.subr.bf16.mxu0 0
        %1432 = vmatpush1.bf16.msra.mxu0 0
        %1433 = vmatprep.subr.bf16.mxu0 0
        %1434 = vmatpush1.bf16.msra.mxu0 0
        %1435 = vmatprep.subr.bf16.mxu0 0
        %1436 = vmatpush1.bf16.msra.mxu0 0
        %1437 = vmatprep.subr.bf16.mxu0 0
        %1438 = vmatpush1.bf16.msra.mxu0 0
        %1439 = vmatprep.subr.bf16.mxu0 0
        %1440 = vmatpush1.bf16.msra.mxu0 0
        %1441 = vmatprep.subr.bf16.mxu0 0
        %1442 = vmatpush1.bf16.msra.mxu0 0
        %1443 = vmatprep.mubr.bf16.mxu0 0
        %1444 = vmatmul.mubr.bf16.gmra.mrb[0].mxu0 %v1410
        %v1445 = vpop.f32.mrb[0].mxu0
        %v1446 = vadd.f32 0.0, %v1445
        %v1447 = vpop.f32.mrb[0].mxu0
        %v1448 = vadd.f32 0.0, %v1447
        %v1449 = vpop.f32.mrb[0].mxu0
        %v1450 = vadd.f32 0.0, %v1449
        %v1451 = vpop.f32.mrb[0].mxu0
        %v1452 = vadd.f32 0.0, %v1451
        %1453 = vdwg.mxu0
        %1454 = vmatprep.subr.bf16.mxu0 0
        %1455 = vmatpush1.bf16.msra.mxu0 %v783
        %1456 = vmatprep.subr.bf16.mxu0 0
        %1457 = vmatpush1.bf16.msra.mxu0 %v786
        %1458 = vmatprep.subr.bf16.mxu0 0
        %1459 = vmatpush1.bf16.msra.mxu0 %v789
        %1460 = vmatprep.subr.bf16.mxu0 0
        %1461 = vmatpush1.bf16.msra.mxu0 %v792
        %1462 = vmatprep.subr.bf16.mxu0 0
        %1463 = vmatpush1.bf16.msra.mxu0 %v795
        %1464 = vmatprep.subr.bf16.mxu0 0
        %1465 = vmatpush1.bf16.msra.mxu0 %v798
        %1466 = vmatprep.subr.bf16.mxu0 0
        %1467 = vmatpush1.bf16.msra.mxu0 %v801
        %1468 = vmatprep.subr.bf16.mxu0 0
        %1469 = vmatpush1.bf16.msra.mxu0 %v804
        %1470 = vmatprep.subr.bf16.mxu0 0
        %1471 = vmatpush1.bf16.msra.mxu0 0
        %1472 = vmatprep.subr.bf16.mxu0 0
        %1473 = vmatpush1.bf16.msra.mxu0 0
        %1474 = vmatprep.subr.bf16.mxu0 0
        %1475 = vmatpush1.bf16.msra.mxu0 0
        %1476 = vmatprep.subr.bf16.mxu0 0
        %1477 = vmatpush1.bf16.msra.mxu0 0
        %1478 = vmatprep.subr.bf16.mxu0 0
        %1479 = vmatpush1.bf16.msra.mxu0 0
        %1480 = vmatprep.subr.bf16.mxu0 0
        %1481 = vmatpush1.bf16.msra.mxu0 0
        %1482 = vmatprep.subr.bf16.mxu0 0
        %1483 = vmatpush1.bf16.msra.mxu0 0
        %1484 = vmatprep.subr.bf16.mxu0 0
        %1485 = vmatpush1.bf16.msra.mxu0 0
        %1486 = vmatprep.mubr.bf16.mxu0 0
        %1487 = vmatmul.mubr.bf16.gmra.mrb[0].mxu0 %v1410
        %v1488 = vpop.f32.mrb[0].mxu0
        %v1489 = vadd.f32 0.0, %v1488
        %v1490 = vpop.f32.mrb[0].mxu0
        %v1491 = vpop.f32.mrb[0].mxu0
        %v1492 = vadd.f32 0.0, %v1491
        %v1493 = vpop.f32.mrb[0].mxu0
        %1494 = vdwg.mxu0
        %v1495 = vadd.f32 %v1404, %v1446
        %v1496 = vadd.f32 %v1405, %v1448
        %v1497 = vadd.f32 %v1407, %v1450
        %v1498 = vadd.f32 %v1408, %v1452
        %v1499 = vxor.u32 %v1495, 2147483648
        %v1500 = vxor.u32 %v1496, 2147483648
        %v1501 = vxor.u32 %v1497, 2147483648
        %v1502 = vxor.u32 %v1498, 2147483648
        %v1503 = vmul.f32 %v1499, 1.442695
        %v1504 = vpow.pop %v1503
        %v1505 = vmul.f32 %v1500, 1.442695
        %v1506 = vpow.pop %v1505
        %v1507 = vmul.f32 %v1501, 1.442695
        %v1508 = vpow.pop %v1507
        %v1509 = vmul.f32 %v1502, 1.442695
        %v1510 = vpow.pop %v1509
        %v1511 = vadd.f32 %v1504, 1.0
        %v1512 = vadd.f32 %v1506, 1.0
        %v1513 = vadd.f32 %v1508, 1.0
        %v1514 = vadd.f32 %v1510, 1.0
        %v1515 = vrcp.pop %v1511
        %v1516 = vmul.f32 1.0, %v1515
        %v1517 = vrcp.pop %v1512
        %v1518 = vmul.f32 1.0, %v1517
        %v1519 = vrcp.pop %v1513
        %v1520 = vmul.f32 1.0, %v1519
        %v1521 = vrcp.pop %v1514
        %v1522 = vmul.f32 1.0, %v1521
        %v1523 = vadd.f32 %v1489, %v684
        %v1524 = vadd.f32 %v1492, %v684
        %v1525 = vmul.f32 %v1516, %v1523
        %v1526 = vmul.f32 %v1520, %v1524
        %v1527 = vadd.f32 %v1406, %v1525
        %v1528 = vadd.f32 %v1409, %v1526
        %v1529 = vtanh.pop %v1527
        %v1530 = vtanh.pop %v1528
        %v1531 = vsub.f32 1.0, %v1518
        %v1532 = vsub.f32 1.0, %v1522
        %v1533 = vmul.f32 %v1531, %v1529
        %v1534 = vmul.f32 %v1532, %v1530
        %v1535 = vmul.f32 %v1518, %v1392
        %v1536 = vmul.f32 %v1522, %v1393
        %v1537 = vadd.f32 %v1533, %v1535
        %v1538 = vadd.f32 %v1534, %v1536
        %s1539 = smul.u32 %s16, 4294967293
        %s1540 = sadd.s32 %s1539, 5
        %s1541 = smul.u32 %s1540, 16
        %s1542 = sshra.s32 %s1541, 4
        %s1543 = sand.u32 %s1541, 15
        %s1544 = smul.u32 %s1542, 3
        %s1545 = smul.addr %s1544, 8
        %s1546 = scalar_lea.vmem [#allocation2], %s1545
        %v1547 = vld [vmem:[%s1546] sm:$0xff]
        %v1548 = vld [vmem:[%s1546 + $0x8] sm:$0xff]
        %v1549 = vld [vmem:[%s1546 + $0x10] sm:$0xff]
        %v1550 = vunpack.c.l.bf16 %v1547
        %v1551 = vunpack.c.l.bf16 %v1548
        %v1552 = vunpack.c.l.bf16 %v1549
        %v1553 = vunpack.c.h.bf16 %v1547
        %v1554 = vunpack.c.h.bf16 %v1548
        %v1555 = vunpack.c.h.bf16 %v1549
        %v1556 = vpack.c.bf16 %v1538, %v1537
        %1557 = vmatprep.subr.bf16.mxu0 %v782
        %1558 = vmatpush1.bf16.msra.mxu0 %v781
        %1559 = vmatprep.subr.bf16.mxu0 %v785
        %1560 = vmatpush1.bf16.msra.mxu0 %v784
        %1561 = vmatprep.subr.bf16.mxu0 %v788
        %1562 = vmatpush1.bf16.msra.mxu0 %v787
        %1563 = vmatprep.subr.bf16.mxu0 %v791
        %1564 = vmatpush1.bf16.msra.mxu0 %v790
        %1565 = vmatprep.subr.bf16.mxu0 %v794
        %1566 = vmatpush1.bf16.msra.mxu0 %v793
        %1567 = vmatprep.subr.bf16.mxu0 %v797
        %1568 = vmatpush1.bf16.msra.mxu0 %v796
        %1569 = vmatprep.subr.bf16.mxu0 %v800
        %1570 = vmatpush1.bf16.msra.mxu0 %v799
        %1571 = vmatprep.subr.bf16.mxu0 %v803
        %1572 = vmatpush1.bf16.msra.mxu0 %v802
        %1573 = vmatprep.subr.bf16.mxu0 0
        %1574 = vmatpush1.bf16.msra.mxu0 0
        %1575 = vmatprep.subr.bf16.mxu0 0
        %1576 = vmatpush1.bf16.msra.mxu0 0
        %1577 = vmatprep.subr.bf16.mxu0 0
        %1578 = vmatpush1.bf16.msra.mxu0 0
        %1579 = vmatprep.subr.bf16.mxu0 0
        %1580 = vmatpush1.bf16.msra.mxu0 0
        %1581 = vmatprep.subr.bf16.mxu0 0
        %1582 = vmatpush1.bf16.msra.mxu0 0
        %1583 = vmatprep.subr.bf16.mxu0 0
        %1584 = vmatpush1.bf16.msra.mxu0 0
        %1585 = vmatprep.subr.bf16.mxu0 0
        %1586 = vmatpush1.bf16.msra.mxu0 0
        %1587 = vmatprep.subr.bf16.mxu0 0
        %1588 = vmatpush1.bf16.msra.mxu0 0
        %1589 = vmatprep.mubr.bf16.mxu0 0
        %1590 = vmatmul.mubr.bf16.gmra.mrb[0].mxu0 %v1556
        %v1591 = vpop.f32.mrb[0].mxu0
        %v1592 = vadd.f32 0.0, %v1591
        %v1593 = vpop.f32.mrb[0].mxu0
        %v1594 = vadd.f32 0.0, %v1593
        %v1595 = vpop.f32.mrb[0].mxu0
        %v1596 = vadd.f32 0.0, %v1595
        %v1597 = vpop.f32.mrb[0].mxu0
        %v1598 = vadd.f32 0.0, %v1597
        %1599 = vdwg.mxu0
        %1600 = vmatprep.subr.bf16.mxu0 0
        %1601 = vmatpush1.bf16.msra.mxu0 %v783
        %1602 = vmatprep.subr.bf16.mxu0 0
        %1603 = vmatpush1.bf16.msra.mxu0 %v786
        %1604 = vmatprep.subr.bf16.mxu0 0
        %1605 = vmatpush1.bf16.msra.mxu0 %v789
        %1606 = vmatprep.subr.bf16.mxu0 0
        %1607 = vmatpush1.bf16.msra.mxu0 %v792
        %1608 = vmatprep.subr.bf16.mxu0 0
        %1609 = vmatpush1.bf16.msra.mxu0 %v795
        %1610 = vmatprep.subr.bf16.mxu0 0
        %1611 = vmatpush1.bf16.msra.mxu0 %v798
        %1612 = vmatprep.subr.bf16.mxu0 0
        %1613 = vmatpush1.bf16.msra.mxu0 %v801
        %1614 = vmatprep.subr.bf16.mxu0 0
        %1615 = vmatpush1.bf16.msra.mxu0 %v804
        %1616 = vmatprep.subr.bf16.mxu0 0
        %1617 = vmatpush1.bf16.msra.mxu0 0
        %1618 = vmatprep.subr.bf16.mxu0 0
        %1619 = vmatpush1.bf16.msra.mxu0 0
        %1620 = vmatprep.subr.bf16.mxu0 0
        %1621 = vmatpush1.bf16.msra.mxu0 0
        %1622 = vmatprep.subr.bf16.mxu0 0
        %1623 = vmatpush1.bf16.msra.mxu0 0
        %1624 = vmatprep.subr.bf16.mxu0 0
        %1625 = vmatpush1.bf16.msra.mxu0 0
        %1626 = vmatprep.subr.bf16.mxu0 0
        %1627 = vmatpush1.bf16.msra.mxu0 0
        %1628 = vmatprep.subr.bf16.mxu0 0
        %1629 = vmatpush1.bf16.msra.mxu0 0
        %1630 = vmatprep.subr.bf16.mxu0 0
        %1631 = vmatpush1.bf16.msra.mxu0 0
        %1632 = vmatprep.mubr.bf16.mxu0 0
        %1633 = vmatmul.mubr.bf16.gmra.mrb[0].mxu0 %v1556
        %v1634 = vpop.f32.mrb[0].mxu0
        %v1635 = vadd.f32 0.0, %v1634
        %v1636 = vpop.f32.mrb[0].mxu0
        %v1637 = vpop.f32.mrb[0].mxu0
        %v1638 = vadd.f32 0.0, %v1637
        %v1639 = vpop.f32.mrb[0].mxu0
        %1640 = vdwg.mxu0
        %v1641 = vadd.f32 %v1550, %v1592
        %v1642 = vadd.f32 %v1551, %v1594
        %v1643 = vadd.f32 %v1553, %v1596
        %v1644 = vadd.f32 %v1554, %v1598
        %v1645 = vxor.u32 %v1641, 2147483648
        %v1646 = vxor.u32 %v1642, 2147483648
        %v1647 = vxor.u32 %v1643, 2147483648
        %v1648 = vxor.u32 %v1644, 2147483648
        %v1649 = vmul.f32 %v1645, 1.442695
        %v1650 = vpow.pop %v1649
        %v1651 = vmul.f32 %v1646, 1.442695
        %v1652 = vpow.pop %v1651
        %v1653 = vmul.f32 %v1647, 1.442695
        %v1654 = vpow.pop %v1653
        %v1655 = vmul.f32 %v1648, 1.442695
        %v1656 = vpow.pop %v1655
        %v1657 = vadd.f32 %v1650, 1.0
        %v1658 = vadd.f32 %v1652, 1.0
        %v1659 = vadd.f32 %v1654, 1.0
        %v1660 = vadd.f32 %v1656, 1.0
        %v1661 = vrcp.pop %v1657
        %v1662 = vmul.f32 1.0, %v1661
        %v1663 = vrcp.pop %v1658
        %v1664 = vmul.f32 1.0, %v1663
        %v1665 = vrcp.pop %v1659
        %v1666 = vmul.f32 1.0, %v1665
        %v1667 = vrcp.pop %v1660
        %v1668 = vmul.f32 1.0, %v1667
        %v1669 = vadd.f32 %v1635, %v684
        %v1670 = vadd.f32 %v1638, %v684
        %v1671 = vmul.f32 %v1662, %v1669
        %v1672 = vmul.f32 %v1666, %v1670
        %v1673 = vadd.f32 %v1552, %v1671
        %v1674 = vadd.f32 %v1555, %v1672
        %v1675 = vtanh.pop %v1673
        %v1676 = vtanh.pop %v1674
        %v1677 = vsub.f32 1.0, %v1664
        %v1678 = vsub.f32 1.0, %v1668
        %v1679 = vmul.f32 %v1677, %v1675
        %v1680 = vmul.f32 %v1678, %v1676
        %v1681 = vmul.f32 %v1664, %v1537
        %v1682 = vmul.f32 %v1668, %v1538
        %v1683 = vadd.f32 %v1679, %v1681
        %v1684 = vadd.f32 %v1680, %v1682
        %s1685 = smul.u32 %s16, 4294967291
        %s1686 = sadd.s32 %s1685, 6
        %s1687 = smul.u32 %s1686, 16
        %s1688 = sshra.s32 %s1687, 4
        %s1689 = sand.u32 %s1687, 15
        %s1690 = smul.u32 %s1688, 3
        %s1691 = smul.addr %s1690, 8
        %s1692 = scalar_lea.vmem [#allocation2], %s1691
        %v1693 = vld [vmem:[%s1692] sm:$0xff]
        %v1694 = vld [vmem:[%s1692 + $0x8] sm:$0xff]
        %v1695 = vld [vmem:[%s1692 + $0x10] sm:$0xff]
        %v1696 = vunpack.c.l.bf16 %v1693
        %v1697 = vunpack.c.l.bf16 %v1694
        %v1698 = vunpack.c.l.bf16 %v1695
        %v1699 = vunpack.c.h.bf16 %v1693
        %v1700 = vunpack.c.h.bf16 %v1694
        %v1701 = vunpack.c.h.bf16 %v1695
        %v1702 = vpack.c.bf16 %v1684, %v1683
        %1703 = vmatprep.subr.bf16.mxu0 %v782
        %1704 = vmatpush1.bf16.msra.mxu0 %v781
        %1705 = vmatprep.subr.bf16.mxu0 %v785
        %1706 = vmatpush1.bf16.msra.mxu0 %v784
        %1707 = vmatprep.subr.bf16.mxu0 %v788
        %1708 = vmatpush1.bf16.msra.mxu0 %v787
        %1709 = vmatprep.subr.bf16.mxu0 %v791
        %1710 = vmatpush1.bf16.msra.mxu0 %v790
        %1711 = vmatprep.subr.bf16.mxu0 %v794
        %1712 = vmatpush1.bf16.msra.mxu0 %v793
        %1713 = vmatprep.subr.bf16.mxu0 %v797
        %1714 = vmatpush1.bf16.msra.mxu0 %v796
        %1715 = vmatprep.subr.bf16.mxu0 %v800
        %1716 = vmatpush1.bf16.msra.mxu0 %v799
        %1717 = vmatprep.subr.bf16.mxu0 %v803
        %1718 = vmatpush1.bf16.msra.mxu0 %v802
        %1719 = vmatprep.subr.bf16.mxu0 0
        %1720 = vmatpush1.bf16.msra.mxu0 0
        %1721 = vmatprep.subr.bf16.mxu0 0
        %1722 = vmatpush1.bf16.msra.mxu0 0
        %1723 = vmatprep.subr.bf16.mxu0 0
        %1724 = vmatpush1.bf16.msra.mxu0 0
        %1725 = vmatprep.subr.bf16.mxu0 0
        %1726 = vmatpush1.bf16.msra.mxu0 0
        %1727 = vmatprep.subr.bf16.mxu0 0
        %1728 = vmatpush1.bf16.msra.mxu0 0
        %1729 = vmatprep.subr.bf16.mxu0 0
        %1730 = vmatpush1.bf16.msra.mxu0 0
        %1731 = vmatprep.subr.bf16.mxu0 0
        %1732 = vmatpush1.bf16.msra.mxu0 0
        %1733 = vmatprep.subr.bf16.mxu0 0
        %1734 = vmatpush1.bf16.msra.mxu0 0
        %1735 = vmatprep.mubr.bf16.mxu0 0
        %1736 = vmatmul.mubr.bf16.gmra.mrb[0].mxu0 %v1702
        %v1737 = vpop.f32.mrb[0].mxu0
        %v1738 = vadd.f32 0.0, %v1737
        %v1739 = vpop.f32.mrb[0].mxu0
        %v1740 = vadd.f32 0.0, %v1739
        %v1741 = vpop.f32.mrb[0].mxu0
        %v1742 = vadd.f32 0.0, %v1741
        %v1743 = vpop.f32.mrb[0].mxu0
        %v1744 = vadd.f32 0.0, %v1743
        %1745 = vdwg.mxu0
        %1746 = vmatprep.subr.bf16.mxu0 0
        %1747 = vmatpush1.bf16.msra.mxu0 %v783
        %1748 = vmatprep.subr.bf16.mxu0 0
        %1749 = vmatpush1.bf16.msra.mxu0 %v786
        %1750 = vmatprep.subr.bf16.mxu0 0
        %1751 = vmatpush1.bf16.msra.mxu0 %v789
        %1752 = vmatprep.subr.bf16.mxu0 0
        %1753 = vmatpush1.bf16.msra.mxu0 %v792
        %1754 = vmatprep.subr.bf16.mxu0 0
        %1755 = vmatpush1.bf16.msra.mxu0 %v795
        %1756 = vmatprep.subr.bf16.mxu0 0
        %1757 = vmatpush1.bf16.msra.mxu0 %v798
        %1758 = vmatprep.subr.bf16.mxu0 0
        %1759 = vmatpush1.bf16.msra.mxu0 %v801
        %1760 = vmatprep.subr.bf16.mxu0 0
        %1761 = vmatpush1.bf16.msra.mxu0 %v804
        %1762 = vmatprep.subr.bf16.mxu0 0
        %1763 = vmatpush1.bf16.msra.mxu0 0
        %1764 = vmatprep.subr.bf16.mxu0 0
        %1765 = vmatpush1.bf16.msra.mxu0 0
        %1766 = vmatprep.subr.bf16.mxu0 0
        %1767 = vmatpush1.bf16.msra.mxu0 0
        %1768 = vmatprep.subr.bf16.mxu0 0
        %1769 = vmatpush1.bf16.msra.mxu0 0
        %1770 = vmatprep.subr.bf16.mxu0 0
        %1771 = vmatpush1.bf16.msra.mxu0 0
        %1772 = vmatprep.subr.bf16.mxu0 0
        %1773 = vmatpush1.bf16.msra.mxu0 0
        %1774 = vmatprep.subr.bf16.mxu0 0
        %1775 = vmatpush1.bf16.msra.mxu0 0
        %1776 = vmatprep.subr.bf16.mxu0 0
        %1777 = vmatpush1.bf16.msra.mxu0 0
        %1778 = vmatprep.mubr.bf16.mxu0 0
        %1779 = vmatmul.mubr.bf16.gmra.mrb[0].mxu0 %v1702
        %v1780 = vpop.f32.mrb[0].mxu0
        %v1781 = vadd.f32 0.0, %v1780
        %v1782 = vpop.f32.mrb[0].mxu0
        %v1783 = vpop.f32.mrb[0].mxu0
        %v1784 = vadd.f32 0.0, %v1783
        %v1785 = vpop.f32.mrb[0].mxu0
        %1786 = vdwg.mxu0
        %v1787 = vadd.f32 %v1696, %v1738
        %v1788 = vadd.f32 %v1697, %v1740
        %v1789 = vadd.f32 %v1699, %v1742
        %v1790 = vadd.f32 %v1700, %v1744
        %v1791 = vxor.u32 %v1787, 2147483648
        %v1792 = vxor.u32 %v1788, 2147483648
        %v1793 = vxor.u32 %v1789, 2147483648
        %v1794 = vxor.u32 %v1790, 2147483648
        %v1795 = vmul.f32 %v1791, 1.442695
        %v1796 = vpow.pop %v1795
        %v1797 = vmul.f32 %v1792, 1.442695
        %v1798 = vpow.pop %v1797
        %v1799 = vmul.f32 %v1793, 1.442695
        %v1800 = vpow.pop %v1799
        %v1801 = vmul.f32 %v1794, 1.442695
        %v1802 = vpow.pop %v1801
        %v1803 = vadd.f32 %v1796, 1.0
        %v1804 = vadd.f32 %v1798, 1.0
        %v1805 = vadd.f32 %v1800, 1.0
        %v1806 = vadd.f32 %v1802, 1.0
        %v1807 = vrcp.pop %v1803
        %v1808 = vmul.f32 1.0, %v1807
        %v1809 = vrcp.pop %v1804
        %v1810 = vmul.f32 1.0, %v1809
        %v1811 = vrcp.pop %v1805
        %v1812 = vmul.f32 1.0, %v1811
        %v1813 = vrcp.pop %v1806
        %v1814 = vmul.f32 1.0, %v1813
        %v1815 = vadd.f32 %v1781, %v684
        %v1816 = vadd.f32 %v1784, %v684
        %v1817 = vmul.f32 %v1808, %v1815
        %v1818 = vmul.f32 %v1812, %v1816
        %v1819 = vadd.f32 %v1698, %v1817
        %v1820 = vadd.f32 %v1701, %v1818
        %v1821 = vtanh.pop %v1819
        %v1822 = vtanh.pop %v1820
        %v1823 = vsub.f32 1.0, %v1810
        %v1824 = vsub.f32 1.0, %v1814
        %v1825 = vmul.f32 %v1823, %v1821
        %v1826 = vmul.f32 %v1824, %v1822
        %v1827 = vmul.f32 %v1810, %v1683
        %v1828 = vmul.f32 %v1814, %v1684
        %v1829 = vadd.f32 %v1825, %v1827
        %v1830 = vadd.f32 %v1826, %v1828
        %s1831 = smul.u32 %s16, 4294967289
        %s1832 = sadd.s32 %s1831, 7
        %s1833 = smul.u32 %s1832, 16
        %s1834 = sshra.s32 %s1833, 4
        %s1835 = sand.u32 %s1833, 15
        %s1836 = smul.u32 %s1834, 3
        %s1837 = smul.addr %s1836, 8
        %s1838 = scalar_lea.vmem [#allocation2], %s1837
        %v1839 = vld [vmem:[%s1838] sm:$0xff]
        %v1840 = vld [vmem:[%s1838 + $0x8] sm:$0xff]
        %v1841 = vld [vmem:[%s1838 + $0x10] sm:$0xff]
        %v1842 = vunpack.c.l.bf16 %v1839
        %v1843 = vunpack.c.l.bf16 %v1840
        %v1844 = vunpack.c.l.bf16 %v1841
        %v1845 = vunpack.c.h.bf16 %v1839
        %v1846 = vunpack.c.h.bf16 %v1840
        %v1847 = vunpack.c.h.bf16 %v1841
        %v1848 = vpack.c.bf16 %v1830, %v1829
        %1849 = vmatprep.subr.bf16.mxu0 %v782
        %1850 = vmatpush1.bf16.msra.mxu0 %v781
        %1851 = vmatprep.subr.bf16.mxu0 %v785
        %1852 = vmatpush1.bf16.msra.mxu0 %v784
        %1853 = vmatprep.subr.bf16.mxu0 %v788
        %1854 = vmatpush1.bf16.msra.mxu0 %v787
        %1855 = vmatprep.subr.bf16.mxu0 %v791
        %1856 = vmatpush1.bf16.msra.mxu0 %v790
        %1857 = vmatprep.subr.bf16.mxu0 %v794
        %1858 = vmatpush1.bf16.msra.mxu0 %v793
        %1859 = vmatprep.subr.bf16.mxu0 %v797
        %1860 = vmatpush1.bf16.msra.mxu0 %v796
        %1861 = vmatprep.subr.bf16.mxu0 %v800
        %1862 = vmatpush1.bf16.msra.mxu0 %v799
        %1863 = vmatprep.subr.bf16.mxu0 %v803
        %1864 = vmatpush1.bf16.msra.mxu0 %v802
        %1865 = vmatprep.subr.bf16.mxu0 0
        %1866 = vmatpush1.bf16.msra.mxu0 0
        %1867 = vmatprep.subr.bf16.mxu0 0
        %1868 = vmatpush1.bf16.msra.mxu0 0
        %1869 = vmatprep.subr.bf16.mxu0 0
        %1870 = vmatpush1.bf16.msra.mxu0 0
        %1871 = vmatprep.subr.bf16.mxu0 0
        %1872 = vmatpush1.bf16.msra.mxu0 0
        %1873 = vmatprep.subr.bf16.mxu0 0
        %1874 = vmatpush1.bf16.msra.mxu0 0
        %1875 = vmatprep.subr.bf16.mxu0 0
        %1876 = vmatpush1.bf16.msra.mxu0 0
        %1877 = vmatprep.subr.bf16.mxu0 0
        %1878 = vmatpush1.bf16.msra.mxu0 0
        %1879 = vmatprep.subr.bf16.mxu0 0
        %1880 = vmatpush1.bf16.msra.mxu0 0
        %1881 = vmatprep.mubr.bf16.mxu0 0
        %1882 = vmatmul.mubr.bf16.gmra.mrb[0].mxu0 %v1848
        %v1883 = vpop.f32.mrb[0].mxu0
        %v1884 = vadd.f32 0.0, %v1883
        %v1885 = vpop.f32.mrb[0].mxu0
        %v1886 = vadd.f32 0.0, %v1885
        %v1887 = vpop.f32.mrb[0].mxu0
        %v1888 = vadd.f32 0.0, %v1887
        %v1889 = vpop.f32.mrb[0].mxu0
        %v1890 = vadd.f32 0.0, %v1889
        %1891 = vdwg.mxu0
        %1892 = vmatprep.subr.bf16.mxu0 0
        %1893 = vmatpush1.bf16.msra.mxu0 %v783
        %1894 = vmatprep.subr.bf16.mxu0 0
        %1895 = vmatpush1.bf16.msra.mxu0 %v786
        %1896 = vmatprep.subr.bf16.mxu0 0
        %1897 = vmatpush1.bf16.msra.mxu0 %v789
        %1898 = vmatprep.subr.bf16.mxu0 0
        %1899 = vmatpush1.bf16.msra.mxu0 %v792
        %1900 = vmatprep.subr.bf16.mxu0 0
        %1901 = vmatpush1.bf16.msra.mxu0 %v795
        %1902 = vmatprep.subr.bf16.mxu0 0
        %1903 = vmatpush1.bf16.msra.mxu0 %v798
        %1904 = vmatprep.subr.bf16.mxu0 0
        %1905 = vmatpush1.bf16.msra.mxu0 %v801
        %1906 = vmatprep.subr.bf16.mxu0 0
        %1907 = vmatpush1.bf16.msra.mxu0 %v804
        %1908 = vmatprep.subr.bf16.mxu0 0
        %1909 = vmatpush1.bf16.msra.mxu0 0
        %1910 = vmatprep.subr.bf16.mxu0 0
        %1911 = vmatpush1.bf16.msra.mxu0 0
        %1912 = vmatprep.subr.bf16.mxu0 0
        %1913 = vmatpush1.bf16.msra.mxu0 0
        %1914 = vmatprep.subr.bf16.mxu0 0
        %1915 = vmatpush1.bf16.msra.mxu0 0
        %1916 = vmatprep.subr.bf16.mxu0 0
        %1917 = vmatpush1.bf16.msra.mxu0 0
        %1918 = vmatprep.subr.bf16.mxu0 0
        %1919 = vmatpush1.bf16.msra.mxu0 0
        %1920 = vmatprep.subr.bf16.mxu0 0
        %1921 = vmatpush1.bf16.msra.mxu0 0
        %1922 = vmatprep.subr.bf16.mxu0 0
        %1923 = vmatpush1.bf16.msra.mxu0 0
        %1924 = vmatprep.mubr.bf16.mxu0 0
        %1925 = vmatmul.mubr.bf16.gmra.mrb[0].mxu0 %v1848
        %v1926 = vpop.f32.mrb[0].mxu0
        %v1927 = vadd.f32 0.0, %v1926
        %v1928 = vpop.f32.mrb[0].mxu0
        %v1929 = vpop.f32.mrb[0].mxu0
        %v1930 = vadd.f32 0.0, %v1929
        %v1931 = vpop.f32.mrb[0].mxu0
        %1932 = vdwg.mxu0
        %v1933 = vadd.f32 %v1842, %v1884
        %v1934 = vadd.f32 %v1843, %v1886
        %v1935 = vadd.f32 %v1845, %v1888
        %v1936 = vadd.f32 %v1846, %v1890
        %v1937 = vxor.u32 %v1933, 2147483648
        %v1938 = vxor.u32 %v1934, 2147483648
        %v1939 = vxor.u32 %v1935, 2147483648
        %v1940 = vxor.u32 %v1936, 2147483648
        %v1941 = vmul.f32 %v1937, 1.442695
        %v1942 = vpow.pop %v1941
        %v1943 = vmul.f32 %v1938, 1.442695
        %v1944 = vpow.pop %v1943
        %v1945 = vmul.f32 %v1939, 1.442695
        %v1946 = vpow.pop %v1945
        %v1947 = vmul.f32 %v1940, 1.442695
        %v1948 = vpow.pop %v1947
        %v1949 = vadd.f32 %v1942, 1.0
        %v1950 = vadd.f32 %v1944, 1.0
        %v1951 = vadd.f32 %v1946, 1.0
        %v1952 = vadd.f32 %v1948, 1.0
        %v1953 = vrcp.pop %v1949
        %v1954 = vmul.f32 1.0, %v1953
        %v1955 = vrcp.pop %v1950
        %v1956 = vmul.f32 1.0, %v1955
        %v1957 = vrcp.pop %v1951
        %v1958 = vmul.f32 1.0, %v1957
        %v1959 = vrcp.pop %v1952
        %v1960 = vmul.f32 1.0, %v1959
        %v1961 = vadd.f32 %v1927, %v684
        %v1962 = vadd.f32 %v1930, %v684
        %v1963 = vmul.f32 %v1954, %v1961
        %v1964 = vmul.f32 %v1958, %v1962
        %v1965 = vadd.f32 %v1844, %v1963
        %v1966 = vadd.f32 %v1847, %v1964
        %v1967 = vtanh.pop %v1965
        %v1968 = vtanh.pop %v1966
        %v1969 = vsub.f32 1.0, %v1956
        %v1970 = vsub.f32 1.0, %v1960
        %v1971 = vmul.f32 %v1969, %v1967
        %v1972 = vmul.f32 %v1970, %v1968
        %v1973 = vmul.f32 %v1956, %v1829
        %v1974 = vmul.f32 %v1960, %v1830
        %v1975 = vadd.f32 %v1971, %v1973
        %v1976 = vadd.f32 %v1972, %v1974
        %1977 = vst [vmem:[%s252] sm:$0xff] %v1975
        %1978 = vst [vmem:[%s252 + $0x8] sm:$0xff] %v1976
        %s1979 = sand.u32 %s149, 1
        %s1980 = sand.u32 %s149, 1
        %s1981 = smul.addr %s1980, 16
        %s1982 = scalar_lea.vmem [#allocation3], %s1981
        // Predicated region
        $region41: #{seq2seq_forward.3} parent=39 // pred_check
          %p1983 = pneg %p159
        $region42: #{seq2seq_forward.3} parent=39 // pred_check_branch
          %1985 = sbr.rel (%p1983) target = $region44
        $region43: #{seq2seq_forward.3} parent=39 // pred_region
          %s1986 = smul.addr %s16, 8
          %s1987 = scalar_lea.vmem %s5, %s1986
          // Predicated region
          $region45: #{seq2seq_forward.3} parent=43 // pred_check
            _
          $region46: #{seq2seq_forward.3} parent=43 // pred_check_branch
            %1989 = sbr.rel (0) target = $region48
          $region47: #{seq2seq_forward.3} parent=43 // pred_region
            // Predicated region
            $region49: #{seq2seq_forward.3} parent=47 // pred_check
              _
            $region50: #{seq2seq_forward.3} parent=47 // pred_check_branch
              %1991 = sbr.rel (0) target = $region52
            $region51: #{seq2seq_forward.3} parent=47 // pred_region
              // Predicated region
              $region64: #{seq2seq_forward.3} parent=51 // pred_check
                _
              $region65: #{seq2seq_forward.3} parent=51 // pred_check_branch
                %2008 = sbr.rel (0) target = $region67
              $region66: #{seq2seq_forward.3} parent=51 // pred_region
                loop: start=0, step=1, limit=1
                $region68: #{seq2seq_forward.3} parent=66 // loop_pre_header
                  _
                $region69: #{seq2seq_forward.3} parent=66 // loop_header
                  %s2010 = sphi 0, %s2014
                  %p2011 = scmp.ge.s32.totalorder %s2010, 1
                  %s2015 = sphi %s1982, %s1982
                  %s2016 = sphi %s1987, %s1987
                $region70: #{seq2seq_forward.3} parent=66 // loop_header_branch
                  %2013 = sbr.rel (%p2011) target = $region74
                $region71: #{seq2seq_forward.3} parent=66 // loop_body
                  %v2017 = vld [vmem:[%s2015] sm:$0xff]
                  %2018 = vst [vmem:[%s2016] sm:$0xff] %v2017
                  %v2019 = vld [vmem:[%s2015 + $0x8] sm:$0xff]
                  %2020 = vst [vmem:[%s2016 + $0x10] sm:$0xff] %v2019
                $region72: #{seq2seq_forward.3} parent=66 // loop_footer
                  %s2014 = sadd.s32 1, %s2010
                $region73: #{seq2seq_forward.3} parent=66 // loop_footer_branch
                  %2009 = sbr.rel target = $region69
                $region74: #{seq2seq_forward.3} parent=66 // loop_exit
                  _
              $region67: #{seq2seq_forward.3} parent=51 // pred_fallthru
                _
              // Predicated region
              $region75: #{seq2seq_forward.3} parent=51 // pred_check
                _
              $region76: #{seq2seq_forward.3} parent=51 // pred_check_branch
                %2022 = sbr.rel target = $region78
              $region77: #{seq2seq_forward.3} parent=51 // pred_region
                _
              $region78: #{seq2seq_forward.3} parent=51 // pred_fallthru
                _
            $region52: #{seq2seq_forward.3} parent=47 // pred_fallthru
              _
            // Predicated region
            $region53: #{seq2seq_forward.3} parent=47 // pred_check
              _
            $region54: #{seq2seq_forward.3} parent=47 // pred_check_branch
              %1993 = sbr.rel target = $region56
            $region55: #{seq2seq_forward.3} parent=47 // pred_region
              loop: start=0, step=1, limit=1
              $region57: #{seq2seq_forward.3} parent=55 // loop_pre_header
                _
              $region58: #{seq2seq_forward.3} parent=55 // loop_header
                %s1996 = sphi 0, %s2000
                %p1997 = scmp.ge.s32.totalorder %s1996, 1
                %s2001 = sphi %s1982, %s1982
                %s2002 = sphi %s1987, %s1987
              $region59: #{seq2seq_forward.3} parent=55 // loop_header_branch
                %1999 = sbr.rel (%p1997) target = $region63
              $region60: #{seq2seq_forward.3} parent=55 // loop_body
                %v2003 = vld [vmem:[%s2001] sm:$0xff]
                %2004 = vst [vmem:[%s2002] sm:$0xff] %v2003
                %v2005 = vld [vmem:[%s2001 + $0x8] sm:$0xff]
                %2006 = vst [vmem:[%s2002 + $0x10] sm:$0xff] %v2005
              $region61: #{seq2seq_forward.3} parent=55 // loop_footer
                %s2000 = sadd.s32 1, %s1996
              $region62: #{seq2seq_forward.3} parent=55 // loop_footer_branch
                %1995 = sbr.rel target = $region58
              $region63: #{seq2seq_forward.3} parent=55 // loop_exit
                _
            $region56: #{seq2seq_forward.3} parent=47 // pred_fallthru
              _
          $region48: #{seq2seq_forward.3} parent=43 // pred_fallthru
            _
          %2023 = vnop
        $region44: #{seq2seq_forward.3} parent=39 // pred_fallthru
          _
      $region40: #{seq2seq_forward.3} parent=5 // pred_fallthru
        _
      %p2024 = scmp.le.s32.totalorder 2, %s11
      // Predicated region
      $region79: #{seq2seq_forward.3} parent=5 // pred_check
        %p2025 = pneg %p2024
      $region80: #{seq2seq_forward.3} parent=5 // pred_check_branch
        %2027 = sbr.rel (%p2025) target = $region82
      $region81: #{seq2seq_forward.3} parent=5 // pred_region
        %s2028 = ssub.s32 %s11, 2
        // Predicated region
        $region83: #{seq2seq_forward.3} parent=81 // pred_check
          %p2029 = pneg %p165
        $region84: #{seq2seq_forward.3} parent=81 // pred_check_branch
          %2031 = sbr.rel (%p2029) target = $region86
        $region85: #{seq2seq_forward.3} parent=81 // pred_region
          %s2032 = sand.u32 %s150, 1
          %s2033 = sand.u32 %s150, 1
          %s2034 = smul.addr %s2033, 16
          %s2035 = scalar_lea.vmem [#allocation3], %s2034
        $region86: #{seq2seq_forward.3} parent=81 // pred_fallthru
          _
      $region82: #{seq2seq_forward.3} parent=5 // pred_fallthru
        _
    $region6: #{seq2seq_forward.3} parent=1 // loop_footer
      %s15 = sadd.s32 1, %s11
    $region7: #{seq2seq_forward.3} parent=1 // loop_footer_branch
      %10 = sbr.rel target = $region3
    $region8: #{seq2seq_forward.3} parent=1 // loop_exit
      _

// kernel: seq2seq_forward.5
$region0: #{seq2seq_forward.5}
  #allocation0 [shape = 'u32[]', space=smem, size = 0x4, offset = 0x4, fixed_abs, tag = 'smem constant byte address 0x4 - core index']
  #allocation1 [shape = 'u32[144,128]{1,0:T(1,128)}', space=vmem, size = 0x12000, scoped, tag = 'internal scratch']
  %s0 = inlined_call_operand.vmem [shape: bf16[128,256], index: 0, kind: input, shape index: {}]
  %s1 = inlined_call_operand.vmem [shape: bf16[256,128], index: 1, kind: input, shape index: {}]
  %s2 = inlined_call_operand.vmem [shape: f32[1,128], index: 2, kind: input, shape index: {}]
  %s3 = inlined_call_operand.vmem [shape: f32[128,128], index: 3, kind: output, shape index: {}]
  %s4 = sld [smem:[#allocation0]]
  $region22: #{seq2seq_forward.5} parent=0
    _
  %s6 = ssub.s32 1, %s4
  %s7 = scalar_select 0, %s6, %s4
  // Predicated region
  $region2: #{seq2seq_forward.5} parent=0 // pred_check
    _
  $region3: #{seq2seq_forward.5} parent=0 // pred_check_branch
    %9 = sbr.rel (0) target = $region5
  $region4: #{seq2seq_forward.5} parent=0 // pred_region
    _
  $region5: #{seq2seq_forward.5} parent=0 // pred_fallthru
    _
  // Predicated region
  $region6: #{seq2seq_forward.5} parent=0 // pred_check
    _
  $region7: #{seq2seq_forward.5} parent=0 // pred_check_branch
    %11 = sbr.rel (0) target = $region9
  $region8: #{seq2seq_forward.5} parent=0 // pred_region
    _
  $region9: #{seq2seq_forward.5} parent=0 // pred_fallthru
    _
  // Predicated region
  $region10: #{seq2seq_forward.5} parent=0 // pred_check
    _
  $region11: #{seq2seq_forward.5} parent=0 // pred_check_branch
    %13 = sbr.rel (0) target = $region13
  $region12: #{seq2seq_forward.5} parent=0 // pred_region
    _
  $region13: #{seq2seq_forward.5} parent=0 // pred_fallthru
    _
  %v15 = vld [vmem:[%s0] sm:$0xff]
  %v16 = vld [vmem:[%s0 + $0x8] sm:$0xff]
  %v17 = vld [vmem:[%s0 + $0x10] sm:$0xff]
  %v18 = vld [vmem:[%s0 + $0x18] sm:$0xff]
  %v19 = vld [vmem:[%s0 + $0x20] sm:$0xff]
  %v20 = vld [vmem:[%s0 + $0x28] sm:$0xff]
  %v21 = vld [vmem:[%s0 + $0x30] sm:$0xff]
  %v22 = vld [vmem:[%s0 + $0x38] sm:$0xff]
  %v23 = vld [vmem:[%s0 + $0x40] sm:$0xff]
  %v24 = vld [vmem:[%s0 + $0x48] sm:$0xff]
  %v25 = vld [vmem:[%s0 + $0x50] sm:$0xff]
  %v26 = vld [vmem:[%s0 + $0x58] sm:$0xff]
  %v27 = vld [vmem:[%s0 + $0x60] sm:$0xff]
  %v28 = vld [vmem:[%s0 + $0x68] sm:$0xff]
  %v29 = vld [vmem:[%s0 + $0x70] sm:$0xff]
  %v30 = vld [vmem:[%s0 + $0x78] sm:$0xff]
  %v31 = vld [vmem:[%s1] sm:$0xf]
  %v32 = vld [vmem:[%s1 + $0x4] sm:$0xf]
  %v33 = vld [vmem:[%s1 + $0x8] sm:$0xf]
  %v34 = vld [vmem:[%s1 + $0xc] sm:$0xf]
  %v35 = vld [vmem:[%s1 + $0x10] sm:$0xf]
  %v36 = vld [vmem:[%s1 + $0x14] sm:$0xf]
  %v37 = vld [vmem:[%s1 + $0x18] sm:$0xf]
  %v38 = vld [vmem:[%s1 + $0x1c] sm:$0xf]
  %v39 = vld [vmem:[%s1 + $0x20] sm:$0xf]
  %v40 = vld [vmem:[%s1 + $0x24] sm:$0xf]
  %v41 = vld [vmem:[%s1 + $0x28] sm:$0xf]
  %v42 = vld [vmem:[%s1 + $0x2c] sm:$0xf]
  %v43 = vld [vmem:[%s1 + $0x30] sm:$0xf]
  %v44 = vld [vmem:[%s1 + $0x34] sm:$0xf]
  %v45 = vld [vmem:[%s1 + $0x38] sm:$0xf]
  %v46 = vld [vmem:[%s1 + $0x3c] sm:$0xf]
  %v47 = vld [vmem:[%s1 + $0x40] sm:$0xf]
  %v48 = vld [vmem:[%s1 + $0x44] sm:$0xf]
  %v49 = vld [vmem:[%s1 + $0x48] sm:$0xf]
  %v50 = vld [vmem:[%s1 + $0x4c] sm:$0xf]
  %v51 = vld [vmem:[%s1 + $0x50] sm:$0xf]
  %v52 = vld [vmem:[%s1 + $0x54] sm:$0xf]
  %v53 = vld [vmem:[%s1 + $0x58] sm:$0xf]
  %v54 = vld [vmem:[%s1 + $0x5c] sm:$0xf]
  %v55 = vld [vmem:[%s1 + $0x60] sm:$0xf]
  %v56 = vld [vmem:[%s1 + $0x64] sm:$0xf]
  %v57 = vld [vmem:[%s1 + $0x68] sm:$0xf]
  %v58 = vld [vmem:[%s1 + $0x6c] sm:$0xf]
  %v59 = vld [vmem:[%s1 + $0x70] sm:$0xf]
  %v60 = vld [vmem:[%s1 + $0x74] sm:$0xf]
  %v61 = vld [vmem:[%s1 + $0x78] sm:$0xf]
  %v62 = vld [vmem:[%s1 + $0x7c] sm:$0xf]
  %v63 = vld [vmem:[%s2] sm:$0x1]
  %v65 = vlaneseq
  %v66 = vshrl.u32 %v65, 7
  %v67 = vsub.s32 0, %v66
  %v68 = vrot.slane %v63, %v67
  %v86 = vunpack.c.l.b16 %v15
  %v87 = vunpack.c.h.b16 %v15
  %v88 = vunpack.c.l.b16 %v16
  %v89 = vunpack.c.h.b16 %v16
  %v90 = vunpack.c.l.b16 %v17
  %v91 = vunpack.c.h.b16 %v17
  %v92 = vunpack.c.l.b16 %v18
  %v93 = vunpack.c.h.b16 %v18
  %v94 = vunpack.c.l.b16 %v19
  %v95 = vunpack.c.h.b16 %v19
  %v96 = vunpack.c.l.b16 %v20
  %v97 = vunpack.c.h.b16 %v20
  %v98 = vunpack.c.l.b16 %v21
  %v99 = vunpack.c.h.b16 %v21
  %v100 = vunpack.c.l.b16 %v22
  %v101 = vunpack.c.h.b16 %v22
  %v102 = vunpack.c.l.b16 %v23
  %v103 = vunpack.c.h.b16 %v23
  %v104 = vunpack.c.l.b16 %v24
  %v105 = vunpack.c.h.b16 %v24
  %v106 = vunpack.c.l.b16 %v25
  %v107 = vunpack.c.h.b16 %v25
  %v108 = vunpack.c.l.b16 %v26
  %v109 = vunpack.c.h.b16 %v26
  %v110 = vunpack.c.l.b16 %v27
  %v111 = vunpack.c.h.b16 %v27
  %v112 = vunpack.c.l.b16 %v28
  %v113 = vunpack.c.h.b16 %v28
  %v114 = vunpack.c.l.b16 %v29
  %v115 = vunpack.c.h.b16 %v29
  %v116 = vunpack.c.l.b16 %v30
  %v117 = vunpack.c.h.b16 %v30
  %v118 = vpack.c.b16 %v88, %v86
  %v119 = vpack.c.b16 %v89, %v87
  %v120 = vpack.c.b16 %v92, %v90
  %v121 = vpack.c.b16 %v93, %v91
  %v122 = vpack.c.b16 %v96, %v94
  %v123 = vpack.c.b16 %v97, %v95
  %v124 = vpack.c.b16 %v100, %v98
  %v125 = vpack.c.b16 %v101, %v99
  %v126 = vpack.c.b16 %v104, %v102
  %v127 = vpack.c.b16 %v105, %v103
  %v128 = vpack.c.b16 %v108, %v106
  %v129 = vpack.c.b16 %v109, %v107
  %v130 = vpack.c.b16 %v112, %v110
  %v131 = vpack.c.b16 %v113, %v111
  %v132 = vpack.c.b16 %v116, %v114
  %v133 = vpack.c.b16 %v117, %v115
  %v182 = vunpack.c.l.b16 %v31
  %v183 = vunpack.c.l.b16 %v32
  %v184 = vunpack.c.l.b16 %v33
  %v185 = vunpack.c.l.b16 %v34
  %v186 = vunpack.c.l.b16 %v35
  %v187 = vunpack.c.l.b16 %v36
  %v188 = vunpack.c.l.b16 %v37
  %v189 = vunpack.c.l.b16 %v38
  %v190 = vunpack.c.l.b16 %v39
  %v191 = vunpack.c.l.b16 %v40
  %v192 = vunpack.c.l.b16 %v41
  %v193 = vunpack.c.l.b16 %v42
  %v194 = vunpack.c.l.b16 %v43
  %v195 = vunpack.c.l.b16 %v44
  %v196 = vunpack.c.l.b16 %v45
  %v197 = vunpack.c.l.b16 %v46
  %v198 = vunpack.c.l.b16 %v47
  %v199 = vunpack.c.l.b16 %v48
  %v200 = vunpack.c.l.b16 %v49
  %v201 = vunpack.c.l.b16 %v50
  %v202 = vunpack.c.l.b16 %v51
  %v203 = vunpack.c.l.b16 %v52
  %v204 = vunpack.c.l.b16 %v53
  %v205 = vunpack.c.l.b16 %v54
  %v206 = vunpack.c.l.b16 %v55
  %v207 = vunpack.c.l.b16 %v56
  %v208 = vunpack.c.l.b16 %v57
  %v209 = vunpack.c.l.b16 %v58
  %v210 = vunpack.c.l.b16 %v59
  %v211 = vunpack.c.l.b16 %v60
  %v212 = vunpack.c.l.b16 %v61
  %v213 = vunpack.c.l.b16 %v62
  %v214 = vpack.c.b16 %v183, %v182
  %v215 = vpack.c.b16 %v185, %v184
  %v216 = vpack.c.b16 %v187, %v186
  %v217 = vpack.c.b16 %v189, %v188
  %v218 = vpack.c.b16 %v191, %v190
  %v219 = vpack.c.b16 %v193, %v192
  %v220 = vpack.c.b16 %v195, %v194
  %v221 = vpack.c.b16 %v197, %v196
  %v222 = vpack.c.b16 %v199, %v198
  %v223 = vpack.c.b16 %v201, %v200
  %v224 = vpack.c.b16 %v203, %v202
  %v225 = vpack.c.b16 %v205, %v204
  %v226 = vpack.c.b16 %v207, %v206
  %v227 = vpack.c.b16 %v209, %v208
  %v228 = vpack.c.b16 %v211, %v210
  %v229 = vpack.c.b16 %v213, %v212
  %246 = vmatprep.subr.bf16.mxu0 0
  %247 = vmatpush1.bf16.msra.mxu0 %v214
  %248 = vmatprep.subr.bf16.mxu0 0
  %249 = vmatpush1.bf16.msra.mxu0 %v215
  %250 = vmatprep.subr.bf16.mxu0 0
  %251 = vmatpush1.bf16.msra.mxu0 %v216
  %252 = vmatprep.subr.bf16.mxu0 0
  %253 = vmatpush1.bf16.msra.mxu0 %v217
  %254 = vmatprep.subr.bf16.mxu0 0
  %255 = vmatpush1.bf16.msra.mxu0 %v218
  %256 = vmatprep.subr.bf16.mxu0 0
  %257 = vmatpush1.bf16.msra.mxu0 %v219
  %258 = vmatprep.subr.bf16.mxu0 0
  %259 = vmatpush1.bf16.msra.mxu0 %v220
  %260 = vmatprep.subr.bf16.mxu0 0
  %261 = vmatpush1.bf16.msra.mxu0 %v221
  %262 = vmatprep.subr.bf16.mxu0 0
  %263 = vmatpush1.bf16.msra.mxu0 %v222
  %264 = vmatprep.subr.bf16.mxu0 0
  %265 = vmatpush1.bf16.msra.mxu0 %v223
  %266 = vmatprep.subr.bf16.mxu0 0
  %267 = vmatpush1.bf16.msra.mxu0 %v224
  %268 = vmatprep.subr.bf16.mxu0 0
  %269 = vmatpush1.bf16.msra.mxu0 %v225
  %270 = vmatprep.subr.bf16.mxu0 0
  %271 = vmatpush1.bf16.msra.mxu0 %v226
  %272 = vmatprep.subr.bf16.mxu0 0
  %273 = vmatpush1.bf16.msra.mxu0 %v227
  %274 = vmatprep.subr.bf16.mxu0 0
  %275 = vmatpush1.bf16.msra.mxu0 %v228
  %276 = vmatprep.subr.bf16.mxu0 0
  %277 = vmatpush1.bf16.msra.mxu0 %v229
  %278 = vmatprep.mubr.bf16.mxu0 %v119
  %279 = vmatmul.mubr.bf16.gmra.mrb[0].mxu0 %v118
  %v280 = vpop.f32.mrb[0].mxu0
  %v281 = vadd.f32 %v68, %v280
  %v282 = vpop.f32.mrb[0].mxu0
  %v283 = vpop.f32.mrb[0].mxu0
  %v284 = vadd.f32 %v68, %v283
  %v285 = vpop.f32.mrb[0].mxu0
  %286 = vmatprep.mubr.bf16.mxu0 %v121
  %287 = vmatmul.mubr.bf16.gmra.mrb[0].mxu0 %v120
  %v288 = vpop.f32.mrb[0].mxu0
  %v289 = vadd.f32 %v68, %v288
  %v290 = vpop.f32.mrb[0].mxu0
  %v291 = vpop.f32.mrb[0].mxu0
  %v292 = vadd.f32 %v68, %v291
  %v293 = vpop.f32.mrb[0].mxu0
  %294 = vmatprep.mubr.bf16.mxu0 %v123
  %295 = vmatmul.mubr.bf16.gmra.mrb[0].mxu0 %v122
  %v296 = vpop.f32.mrb[0].mxu0
  %v297 = vadd.f32 %v68, %v296
  %v298 = vpop.f32.mrb[0].mxu0
  %v299 = vpop.f32.mrb[0].mxu0
  %v300 = vadd.f32 %v68, %v299
  %v301 = vpop.f32.mrb[0].mxu0
  %302 = vmatprep.mubr.bf16.mxu0 %v125
  %303 = vmatmul.mubr.bf16.gmra.mrb[0].mxu0 %v124
  %v304 = vpop.f32.mrb[0].mxu0
  %v305 = vadd.f32 %v68, %v304
  %v306 = vpop.f32.mrb[0].mxu0
  %v307 = vpop.f32.mrb[0].mxu0
  %v308 = vadd.f32 %v68, %v307
  %v309 = vpop.f32.mrb[0].mxu0
  %310 = vmatprep.mubr.bf16.mxu0 %v127
  %311 = vmatmul.mubr.bf16.gmra.mrb[0].mxu0 %v126
  %v312 = vpop.f32.mrb[0].mxu0
  %v313 = vadd.f32 %v68, %v312
  %v314 = vpop.f32.mrb[0].mxu0
  %v315 = vpop.f32.mrb[0].mxu0
  %v316 = vadd.f32 %v68, %v315
  %v317 = vpop.f32.mrb[0].mxu0
  %318 = vmatprep.mubr.bf16.mxu0 %v129
  %319 = vmatmul.mubr.bf16.gmra.mrb[0].mxu0 %v128
  %v320 = vpop.f32.mrb[0].mxu0
  %v321 = vadd.f32 %v68, %v320
  %v322 = vpop.f32.mrb[0].mxu0
  %v323 = vpop.f32.mrb[0].mxu0
  %v324 = vadd.f32 %v68, %v323
  %v325 = vpop.f32.mrb[0].mxu0
  %326 = vmatprep.mubr.bf16.mxu0 %v131
  %327 = vmatmul.mubr.bf16.gmra.mrb[0].mxu0 %v130
  %v328 = vpop.f32.mrb[0].mxu0
  %v329 = vadd.f32 %v68, %v328
  %v330 = vpop.f32.mrb[0].mxu0
  %v331 = vpop.f32.mrb[0].mxu0
  %v332 = vadd.f32 %v68, %v331
  %v333 = vpop.f32.mrb[0].mxu0
  %334 = vmatprep.mubr.bf16.mxu0 %v133
  %335 = vmatmul.mubr.bf16.gmra.mrb[0].mxu0 %v132
  %v336 = vpop.f32.mrb[0].mxu0
  %v337 = vadd.f32 %v68, %v336
  %v338 = vpop.f32.mrb[0].mxu0
  %v339 = vpop.f32.mrb[0].mxu0
  %v340 = vadd.f32 %v68, %v339
  %v341 = vpop.f32.mrb[0].mxu0
  %342 = vdwg.mxu0
  %343 = vst [vmem:[%s3] sm:$0xff] %v281
  %344 = vst [vmem:[%s3 + $0x8] sm:$0xff] %v284
  %345 = vst [vmem:[%s3 + $0x10] sm:$0xff] %v289
  %346 = vst [vmem:[%s3 + $0x18] sm:$0xff] %v292
  %347 = vst [vmem:[%s3 + $0x20] sm:$0xff] %v297
  %348 = vst [vmem:[%s3 + $0x28] sm:$0xff] %v300
  %349 = vst [vmem:[%s3 + $0x30] sm:$0xff] %v305
  %350 = vst [vmem:[%s3 + $0x38] sm:$0xff] %v308
  %351 = vst [vmem:[%s3 + $0x40] sm:$0xff] %v313
  %352 = vst [vmem:[%s3 + $0x48] sm:$0xff] %v316
  %353 = vst [vmem:[%s3 + $0x50] sm:$0xff] %v321
  %354 = vst [vmem:[%s3 + $0x58] sm:$0xff] %v324
  %355 = vst [vmem:[%s3 + $0x60] sm:$0xff] %v329
  %356 = vst [vmem:[%s3 + $0x68] sm:$0xff] %v332
  %357 = vst [vmem:[%s3 + $0x70] sm:$0xff] %v337
  %358 = vst [vmem:[%s3 + $0x78] sm:$0xff] %v340
  // Predicated region
  $region14: #{seq2seq_forward.5} parent=0 // pred_check
    _
  $region15: #{seq2seq_forward.5} parent=0 // pred_check_branch
    %360 = sbr.rel (0) target = $region17
  $region16: #{seq2seq_forward.5} parent=0 // pred_region
    _
  $region17: #{seq2seq_forward.5} parent=0 // pred_fallthru
    _
  // Predicated region
  $region18: #{seq2seq_forward.5} parent=0 // pred_check
    _
  $region19: #{seq2seq_forward.5} parent=0 // pred_check_branch
    %362 = sbr.rel (0) target = $region21
  $region20: #{seq2seq_forward.5} parent=0 // pred_region
    _
  $region21: #{seq2seq_forward.5} parent=0 // pred_fallthru
    _

// kernel: seq2seq_forward.4
$region0: #{seq2seq_forward.4}
  #allocation0 [shape = 'u32[]', space=smem, size = 0x4, offset = 0x4, fixed_abs, tag = 'smem constant byte address 0x4 - core index']
  #allocation1 [shape = 'u32[144,128]{1,0:T(1,128)}', space=vmem, size = 0x12000, scoped, tag = 'internal scratch']
  #allocation2 [shape = 'bf16[128,768]{1,0:T(16,128)(2,1)}', space=vmem, size = 0x30000, scoped, tag = 'scratch operand']
  %s0 = inlined_call_operand.vmem [shape: bf16[128,16], index: 0, kind: input, shape index: {}]
  %s1 = inlined_call_operand.vmem [shape: f32[16,256], index: 1, kind: input, shape index: {}]
  %s2 = inlined_call_operand.vmem [shape: bf16[16,768], index: 2, kind: input, shape index: {}]
  %s3 = inlined_call_operand.vmem [shape: bf16[256,768], index: 3, kind: input, shape index: {}]
  %s4 = inlined_call_operand.vmem [shape: f32[1,768], index: 4, kind: input, shape index: {}]
  %s5 = inlined_call_operand.vmem [shape: f32[1,256], index: 5, kind: input, shape index: {}]
  %s6 = inlined_call_operand.vmem [shape: bf16[128,256], index: 6, kind: output, shape index: {0}]
  %s7 = inlined_call_operand.vmem [shape: f32[16,256], index: 7, kind: output, shape index: {1}]
  %8 = xla_tuple %s6, %s7
  %s9 = sld [smem:[#allocation0]]
  $region42: #{seq2seq_forward.4} parent=0
    _
  %s11 = ssub.s32 1, %s9
  %s12 = scalar_select 0, %s11, %s9
  // Predicated region
  $region2: #{seq2seq_forward.4} parent=0 // pred_check
    _
  $region3: #{seq2seq_forward.4} parent=0 // pred_check_branch
    %14 = sbr.rel (0) target = $region5
  $region4: #{seq2seq_forward.4} parent=0 // pred_region
    _
  $region5: #{seq2seq_forward.4} parent=0 // pred_fallthru
    _
  // Predicated region
  $region6: #{seq2seq_forward.4} parent=0 // pred_check
    _
  $region7: #{seq2seq_forward.4} parent=0 // pred_check_branch
    %16 = sbr.rel (0) target = $region9
  $region8: #{seq2seq_forward.4} parent=0 // pred_region
    _
  $region9: #{seq2seq_forward.4} parent=0 // pred_fallthru
    _
  // Predicated region
  $region10: #{seq2seq_forward.4} parent=0 // pred_check
    _
  $region11: #{seq2seq_forward.4} parent=0 // pred_check_branch
    %18 = sbr.rel (0) target = $region13
  $region12: #{seq2seq_forward.4} parent=0 // pred_region
    _
  $region13: #{seq2seq_forward.4} parent=0 // pred_fallthru
    _
  // Predicated region
  $region14: #{seq2seq_forward.4} parent=0 // pred_check
    _
  $region15: #{seq2seq_forward.4} parent=0 // pred_check_branch
    %20 = sbr.rel (0) target = $region17
  $region16: #{seq2seq_forward.4} parent=0 // pred_region
    _
  $region17: #{seq2seq_forward.4} parent=0 // pred_fallthru
    _
  // Predicated region
  $region18: #{seq2seq_forward.4} parent=0 // pred_check
    _
  $region19: #{seq2seq_forward.4} parent=0 // pred_check_branch
    %22 = sbr.rel (0) target = $region21
  $region20: #{seq2seq_forward.4} parent=0 // pred_region
    _
  $region21: #{seq2seq_forward.4} parent=0 // pred_fallthru
    _
  // Predicated region
  $region22: #{seq2seq_forward.4} parent=0 // pred_check
    _
  $region23: #{seq2seq_forward.4} parent=0 // pred_check_branch
    %24 = sbr.rel (0) target = $region25
  $region24: #{seq2seq_forward.4} parent=0 // pred_region
    _
  $region25: #{seq2seq_forward.4} parent=0 // pred_fallthru
    _
  %v26 = vld [vmem:[%s0] sm:$0xf]
  %v27 = vld [vmem:[%s0 + $0x4] sm:$0xf]
  %v28 = vld [vmem:[%s0 + $0x8] sm:$0xf]
  %v29 = vld [vmem:[%s0 + $0xc] sm:$0xf]
  %v30 = vld [vmem:[%s0 + $0x10] sm:$0xf]
  %v31 = vld [vmem:[%s0 + $0x14] sm:$0xf]
  %v32 = vld [vmem:[%s0 + $0x18] sm:$0xf]
  %v33 = vld [vmem:[%s0 + $0x1c] sm:$0xf]
  %v34 = vld [vmem:[%s0 + $0x20] sm:$0xf]
  %v35 = vld [vmem:[%s0 + $0x24] sm:$0xf]
  %v36 = vld [vmem:[%s0 + $0x28] sm:$0xf]
  %v37 = vld [vmem:[%s0 + $0x2c] sm:$0xf]
  %v38 = vld [vmem:[%s0 + $0x30] sm:$0xf]
  %v39 = vld [vmem:[%s0 + $0x34] sm:$0xf]
  %v40 = vld [vmem:[%s0 + $0x38] sm:$0xf]
  %v41 = vld [vmem:[%s0 + $0x3c] sm:$0xf]
  %v42 = vld [vmem:[%s2] sm:$0xff]
  %v43 = vld [vmem:[%s2 + $0x8] sm:$0xff]
  %v44 = vld [vmem:[%s2 + $0x10] sm:$0xff]
  %v45 = vld [vmem:[%s2 + $0x18] sm:$0xff]
  %v46 = vld [vmem:[%s2 + $0x20] sm:$0xff]
  %v47 = vld [vmem:[%s2 + $0x28] sm:$0xff]
  %v48 = vld [vmem:[%s4] sm:$0x3f]
  %v50 = vlaneseq
  %v51 = vshrl.u32 %v50, 7
  %v52 = vsub.s32 0, %v51
  %v53 = vrot.slane %v48, %v52
  %v54 = vlaneseq
  %v55 = vshrl.u32 %v54, 7
  %v56 = vsub.s32 1, %v55
  %v57 = vrot.slane %v48, %v56
  %v58 = vlaneseq
  %v59 = vshrl.u32 %v58, 7
  %v60 = vsub.s32 2, %v59
  %v61 = vrot.slane %v48, %v60
  %v62 = vlaneseq
  %v63 = vshrl.u32 %v62, 7
  %v64 = vsub.s32 3, %v63
  %v65 = vrot.slane %v48, %v64
  %v66 = vlaneseq
  %v67 = vshrl.u32 %v66, 7
  %v68 = vsub.s32 4, %v67
  %v69 = vrot.slane %v48, %v68
  %v70 = vlaneseq
  %v71 = vshrl.u32 %v70, 7
  %v72 = vsub.s32 5, %v71
  %v73 = vrot.slane %v48, %v72
  %v96 = vunpack.c.l.b16 %v26
  %v97 = vunpack.c.l.b16 %v27
  %v98 = vunpack.c.l.b16 %v28
  %v99 = vunpack.c.l.b16 %v29
  %v100 = vunpack.c.l.b16 %v30
  %v101 = vunpack.c.l.b16 %v31
  %v102 = vunpack.c.l.b16 %v32
  %v103 = vunpack.c.l.b16 %v33
  %v104 = vunpack.c.l.b16 %v34
  %v105 = vunpack.c.l.b16 %v35
  %v106 = vunpack.c.l.b16 %v36
  %v107 = vunpack.c.l.b16 %v37
  %v108 = vunpack.c.l.b16 %v38
  %v109 = vunpack.c.l.b16 %v39
  %v110 = vunpack.c.l.b16 %v40
  %v111 = vunpack.c.l.b16 %v41
  %v112 = vpack.c.b16 %v97, %v96
  %v113 = vpack.c.b16 %v99, %v98
  %v114 = vpack.c.b16 %v101, %v100
  %v115 = vpack.c.b16 %v103, %v102
  %v116 = vpack.c.b16 %v105, %v104
  %v117 = vpack.c.b16 %v107, %v106
  %v118 = vpack.c.b16 %v109, %v108
  %v119 = vpack.c.b16 %v111, %v110
  %v126 = vunpack.c.l.b16 %v42
  %v127 = vunpack.c.h.b16 %v42
  %v128 = vunpack.c.l.b16 %v43
  %v129 = vunpack.c.h.b16 %v43
  %v130 = vunpack.c.l.b16 %v44
  %v131 = vunpack.c.h.b16 %v44
  %v132 = vunpack.c.l.b16 %v45
  %v133 = vunpack.c.h.b16 %v45
  %v134 = vunpack.c.l.b16 %v46
  %v135 = vunpack.c.h.b16 %v46
  %v136 = vunpack.c.l.b16 %v47
  %v137 = vunpack.c.h.b16 %v47
  %v138 = vpack.c.b16 %v132, %v126
  %v139 = vpack.c.b16 %v133, %v127
  %v140 = vpack.c.b16 %v134, %v128
  %v141 = vpack.c.b16 %v135, %v129
  %v142 = vpack.c.b16 %v136, %v130
  %v143 = vpack.c.b16 %v137, %v131
  %vm150 = vcmask 130048
  %v152 = vsel %vm150, %v112, 0
  %v155 = vsel %vm150, %v113, 0
  %v158 = vsel %vm150, %v114, 0
  %v161 = vsel %vm150, %v115, 0
  %v164 = vsel %vm150, %v116, 0
  %v167 = vsel %vm150, %v117, 0
  %v170 = vsel %vm150, %v118, 0
  %v173 = vsel %vm150, %v119, 0
  %175 = vmatprep.subr.bf16.mxu0 %v139
  %176 = vmatpush1.bf16.msra.mxu0 %v138
  %177 = vmatprep.subr.bf16.mxu0 0
  %178 = vmatpush1.bf16.msra.mxu0 0
  %179 = vmatprep.subr.bf16.mxu0 0
  %180 = vmatpush1.bf16.msra.mxu0 0
  %181 = vmatprep.subr.bf16.mxu0 0
  %182 = vmatpush1.bf16.msra.mxu0 0
  %183 = vmatprep.subr.bf16.mxu0 0
  %184 = vmatpush1.bf16.msra.mxu0 0
  %185 = vmatprep.subr.bf16.mxu0 0
  %186 = vmatpush1.bf16.msra.mxu0 0
  %187 = vmatprep.subr.bf16.mxu0 0
  %188 = vmatpush1.bf16.msra.mxu0 0
  %189 = vmatprep.subr.bf16.mxu0 0
  %190 = vmatpush1.bf16.msra.mxu0 0
  %191 = vmatprep.subr.bf16.mxu0 0
  %192 = vmatpush1.bf16.msra.mxu0 0
  %193 = vmatprep.subr.bf16.mxu0 0
  %194 = vmatpush1.bf16.msra.mxu0 0
  %195 = vmatprep.subr.bf16.mxu0 0
  %196 = vmatpush1.bf16.msra.mxu0 0
  %197 = vmatprep.subr.bf16.mxu0 0
  %198 = vmatpush1.bf16.msra.mxu0 0
  %199 = vmatprep.subr.bf16.mxu0 0
  %200 = vmatpush1.bf16.msra.mxu0 0
  %201 = vmatprep.subr.bf16.mxu0 0
  %202 = vmatpush1.bf16.msra.mxu0 0
  %203 = vmatprep.subr.bf16.mxu0 0
  %204 = vmatpush1.bf16.msra.mxu0 0
  %205 = vmatprep.subr.bf16.mxu0 0
  %206 = vmatpush1.bf16.msra.mxu0 0
  %207 = vmatprep.mubr.bf16.mxu0 0
  %208 = vmatmul.mubr.bf16.gmra.mrb[0].mxu0 %v152
  %v209 = vpop.f32.mrb[0].mxu0
  %v210 = vadd.f32 %v53, %v209
  %v211 = vpop.f32.mrb[0].mxu0
  %v212 = vadd.f32 %v57, %v211
  %v213 = vpop.f32.mrb[0].mxu0
  %v214 = vadd.f32 %v53, %v213
  %v215 = vpop.f32.mrb[0].mxu0
  %v216 = vadd.f32 %v57, %v215
  %217 = vmatprep.mubr.bf16.mxu0 0
  %218 = vmatmul.mubr.bf16.gmra.mrb[0].mxu0 %v155
  %v219 = vpop.f32.mrb[0].mxu0
  %v220 = vadd.f32 %v53, %v219
  %v221 = vpop.f32.mrb[0].mxu0
  %v222 = vadd.f32 %v57, %v221
  %v223 = vpop.f32.mrb[0].mxu0
  %v224 = vadd.f32 %v53, %v223
  %v225 = vpop.f32.mrb[0].mxu0
  %v226 = vadd.f32 %v57, %v225
  %227 = vmatprep.mubr.bf16.mxu0 0
  %228 = vmatmul.mubr.bf16.gmra.mrb[0].mxu0 %v158
  %v229 = vpop.f32.mrb[0].mxu0
  %v230 = vadd.f32 %v53, %v229
  %v231 = vpop.f32.mrb[0].mxu0
  %v232 = vadd.f32 %v57, %v231
  %v233 = vpop.f32.mrb[0].mxu0
  %v234 = vadd.f32 %v53, %v233
  %v235 = vpop.f32.mrb[0].mxu0
  %v236 = vadd.f32 %v57, %v235
  %237 = vmatprep.mubr.bf16.mxu0 0
  %238 = vmatmul.mubr.bf16.gmra.mrb[0].mxu0 %v161
  %v239 = vpop.f32.mrb[0].mxu0
  %v240 = vadd.f32 %v53, %v239
  %v241 = vpop.f32.mrb[0].mxu0
  %v242 = vadd.f32 %v57, %v241
  %v243 = vpop.f32.mrb[0].mxu0
  %v244 = vadd.f32 %v53, %v243
  %v245 = vpop.f32.mrb[0].mxu0
  %v246 = vadd.f32 %v57, %v245
  %247 = vmatprep.mubr.bf16.mxu0 0
  %248 = vmatmul.mubr.bf16.gmra.mrb[0].mxu0 %v164
  %v249 = vpop.f32.mrb[0].mxu0
  %v250 = vadd.f32 %v53, %v249
  %v251 = vpop.f32.mrb[0].mxu0
  %v252 = vadd.f32 %v57, %v251
  %v253 = vpop.f32.mrb[0].mxu0
  %v254 = vadd.f32 %v53, %v253
  %v255 = vpop.f32.mrb[0].mxu0
  %v256 = vadd.f32 %v57, %v255
  %257 = vmatprep.mubr.bf16.mxu0 0
  %258 = vmatmul.mubr.bf16.gmra.mrb[0].mxu0 %v167
  %v259 = vpop.f32.mrb[0].mxu0
  %v260 = vadd.f32 %v53, %v259
  %v261 = vpop.f32.mrb[0].mxu0
  %v262 = vadd.f32 %v57, %v261
  %v263 = vpop.f32.mrb[0].mxu0
  %v264 = vadd.f32 %v53, %v263
  %v265 = vpop.f32.mrb[0].mxu0
  %v266 = vadd.f32 %v57, %v265
  %267 = vmatprep.mubr.bf16.mxu0 0
  %268 = vmatmul.mubr.bf16.gmra.mrb[0].mxu0 %v170
  %v269 = vpop.f32.mrb[0].mxu0
  %v270 = vadd.f32 %v53, %v269
  %v271 = vpop.f32.mrb[0].mxu0
  %v272 = vadd.f32 %v57, %v271
  %v273 = vpop.f32.mrb[0].mxu0
  %v274 = vadd.f32 %v53, %v273
  %v275 = vpop.f32.mrb[0].mxu0
  %v276 = vadd.f32 %v57, %v275
  %277 = vmatprep.mubr.bf16.mxu0 0
  %278 = vmatmul.mubr.bf16.gmra.mrb[0].mxu0 %v173
  %v279 = vpop.f32.mrb[0].mxu0
  %v280 = vadd.f32 %v53, %v279
  %v281 = vpop.f32.mrb[0].mxu0
  %v282 = vadd.f32 %v57, %v281
  %v283 = vpop.f32.mrb[0].mxu0
  %v284 = vadd.f32 %v53, %v283
  %v285 = vpop.f32.mrb[0].mxu0
  %v286 = vadd.f32 %v57, %v285
  %287 = vdwg.mxu0
  %288 = vmatprep.subr.bf16.mxu0 %v141
  %289 = vmatpush1.bf16.msra.mxu0 %v140
  %290 = vmatprep.subr.bf16.mxu0 0
  %291 = vmatpush1.bf16.msra.mxu0 0
  %292 = vmatprep.subr.bf16.mxu0 0
  %293 = vmatpush1.bf16.msra.mxu0 0
  %294 = vmatprep.subr.bf16.mxu0 0
  %295 = vmatpush1.bf16.msra.mxu0 0
  %296 = vmatprep.subr.bf16.mxu0 0
  %297 = vmatpush1.bf16.msra.mxu0 0
  %298 = vmatprep.subr.bf16.mxu0 0
  %299 = vmatpush1.bf16.msra.mxu0 0
  %300 = vmatprep.subr.bf16.mxu0 0
  %301 = vmatpush1.bf16.msra.mxu0 0
  %302 = vmatprep.subr.bf16.mxu0 0
  %303 = vmatpush1.bf16.msra.mxu0 0
  %304 = vmatprep.subr.bf16.mxu0 0
  %305 = vmatpush1.bf16.msra.mxu0 0
  %306 = vmatprep.subr.bf16.mxu0 0
  %307 = vmatpush1.bf16.msra.mxu0 0
  %308 = vmatprep.subr.bf16.mxu0 0
  %309 = vmatpush1.bf16.msra.mxu0 0
  %310 = vmatprep.subr.bf16.mxu0 0
  %311 = vmatpush1.bf16.msra.mxu0 0
  %312 = vmatprep.subr.bf16.mxu0 0
  %313 = vmatpush1.bf16.msra.mxu0 0
  %314 = vmatprep.subr.bf16.mxu0 0
  %315 = vmatpush1.bf16.msra.mxu0 0
  %316 = vmatprep.subr.bf16.mxu0 0
  %317 = vmatpush1.bf16.msra.mxu0 0
  %318 = vmatprep.subr.bf16.mxu0 0
  %319 = vmatpush1.bf16.msra.mxu0 0
  %320 = vmatprep.mubr.bf16.mxu0 0
  %321 = vmatmul.mubr.bf16.gmra.mrb[0].mxu0 %v152
  %v322 = vpop.f32.mrb[0].mxu0
  %v323 = vadd.f32 %v61, %v322
  %v324 = vpop.f32.mrb[0].mxu0
  %v325 = vadd.f32 %v65, %v324
  %v326 = vpop.f32.mrb[0].mxu0
  %v327 = vadd.f32 %v61, %v326
  %v328 = vpop.f32.mrb[0].mxu0
  %v329 = vadd.f32 %v65, %v328
  %330 = vmatprep.mubr.bf16.mxu0 0
  %331 = vmatmul.mubr.bf16.gmra.mrb[0].mxu0 %v155
  %v332 = vpop.f32.mrb[0].mxu0
  %v333 = vadd.f32 %v61, %v332
  %v334 = vpop.f32.mrb[0].mxu0
  %v335 = vadd.f32 %v65, %v334
  %v336 = vpop.f32.mrb[0].mxu0
  %v337 = vadd.f32 %v61, %v336
  %v338 = vpop.f32.mrb[0].mxu0
  %v339 = vadd.f32 %v65, %v338
  %340 = vmatprep.mubr.bf16.mxu0 0
  %341 = vmatmul.mubr.bf16.gmra.mrb[0].mxu0 %v158
  %v342 = vpop.f32.mrb[0].mxu0
  %v343 = vadd.f32 %v61, %v342
  %v344 = vpop.f32.mrb[0].mxu0
  %v345 = vadd.f32 %v65, %v344
  %v346 = vpop.f32.mrb[0].mxu0
  %v347 = vadd.f32 %v61, %v346
  %v348 = vpop.f32.mrb[0].mxu0
  %v349 = vadd.f32 %v65, %v348
  %350 = vmatprep.mubr.bf16.mxu0 0
  %351 = vmatmul.mubr.bf16.gmra.mrb[0].mxu0 %v161
  %v352 = vpop.f32.mrb[0].mxu0
  %v353 = vadd.f32 %v61, %v352
  %v354 = vpop.f32.mrb[0].mxu0
  %v355 = vadd.f32 %v65, %v354
  %v356 = vpop.f32.mrb[0].mxu0
  %v357 = vadd.f32 %v61, %v356
  %v358 = vpop.f32.mrb[0].mxu0
  %v359 = vadd.f32 %v65, %v358
  %360 = vmatprep.mubr.bf16.mxu0 0
  %361 = vmatmul.mubr.bf16.gmra.mrb[0].mxu0 %v164
  %v362 = vpop.f32.mrb[0].mxu0
  %v363 = vadd.f32 %v61, %v362
  %v364 = vpop.f32.mrb[0].mxu0
  %v365 = vadd.f32 %v65, %v364
  %v366 = vpop.f32.mrb[0].mxu0
  %v367 = vadd.f32 %v61, %v366
  %v368 = vpop.f32.mrb[0].mxu0
  %v369 = vadd.f32 %v65, %v368
  %370 = vmatprep.mubr.bf16.mxu0 0
  %371 = vmatmul.mubr.bf16.gmra.mrb[0].mxu0 %v167
  %v372 = vpop.f32.mrb[0].mxu0
  %v373 = vadd.f32 %v61, %v372
  %v374 = vpop.f32.mrb[0].mxu0
  %v375 = vadd.f32 %v65, %v374
  %v376 = vpop.f32.mrb[0].mxu0
  %v377 = vadd.f32 %v61, %v376
  %v378 = vpop.f32.mrb[0].mxu0
  %v379 = vadd.f32 %v65, %v378
  %380 = vmatprep.mubr.bf16.mxu0 0
  %381 = vmatmul.mubr.bf16.gmra.mrb[0].mxu0 %v170
  %v382 = vpop.f32.mrb[0].mxu0
  %v383 = vadd.f32 %v61, %v382
  %v384 = vpop.f32.mrb[0].mxu0
  %v385 = vadd.f32 %v65, %v384
  %v386 = vpop.f32.mrb[0].mxu0
  %v387 = vadd.f32 %v61, %v386
  %v388 = vpop.f32.mrb[0].mxu0
  %v389 = vadd.f32 %v65, %v388
  %390 = vmatprep.mubr.bf16.mxu0 0
  %391 = vmatmul.mubr.bf16.gmra.mrb[0].mxu0 %v173
  %v392 = vpop.f32.mrb[0].mxu0
  %v393 = vadd.f32 %v61, %v392
  %v394 = vpop.f32.mrb[0].mxu0
  %v395 = vadd.f32 %v65, %v394
  %v396 = vpop.f32.mrb[0].mxu0
  %v397 = vadd.f32 %v61, %v396
  %v398 = vpop.f32.mrb[0].mxu0
  %v399 = vadd.f32 %v65, %v398
  %400 = vdwg.mxu0
  %401 = vmatprep.subr.bf16.mxu0 %v143
  %402 = vmatpush1.bf16.msra.mxu0 %v142
  %403 = vmatprep.subr.bf16.mxu0 0
  %404 = vmatpush1.bf16.msra.mxu0 0
  %405 = vmatprep.subr.bf16.mxu0 0
  %406 = vmatpush1.bf16.msra.mxu0 0
  %407 = vmatprep.subr.bf16.mxu0 0
  %408 = vmatpush1.bf16.msra.mxu0 0
  %409 = vmatprep.subr.bf16.mxu0 0
  %410 = vmatpush1.bf16.msra.mxu0 0
  %411 = vmatprep.subr.bf16.mxu0 0
  %412 = vmatpush1.bf16.msra.mxu0 0
  %413 = vmatprep.subr.bf16.mxu0 0
  %414 = vmatpush1.bf16.msra.mxu0 0
  %415 = vmatprep.subr.bf16.mxu0 0
  %416 = vmatpush1.bf16.msra.mxu0 0
  %417 = vmatprep.subr.bf16.mxu0 0
  %418 = vmatpush1.bf16.msra.mxu0 0
  %419 = vmatprep.subr.bf16.mxu0 0
  %420 = vmatpush1.bf16.msra.mxu0 0
  %421 = vmatprep.subr.bf16.mxu0 0
  %422 = vmatpush1.bf16.msra.mxu0 0
  %423 = vmatprep.subr.bf16.mxu0 0
  %424 = vmatpush1.bf16.msra.mxu0 0
  %425 = vmatprep.subr.bf16.mxu0 0
  %426 = vmatpush1.bf16.msra.mxu0 0
  %427 = vmatprep.subr.bf16.mxu0 0
  %428 = vmatpush1.bf16.msra.mxu0 0
  %429 = vmatprep.subr.bf16.mxu0 0
  %430 = vmatpush1.bf16.msra.mxu0 0
  %431 = vmatprep.subr.bf16.mxu0 0
  %432 = vmatpush1.bf16.msra.mxu0 0
  %433 = vmatprep.mubr.bf16.mxu0 0
  %434 = vmatmul.mubr.bf16.gmra.mrb[0].mxu0 %v152
  %v435 = vpop.f32.mrb[0].mxu0
  %v436 = vadd.f32 %v69, %v435
  %v437 = vpop.f32.mrb[0].mxu0
  %v438 = vadd.f32 %v73, %v437
  %v439 = vpop.f32.mrb[0].mxu0
  %v440 = vadd.f32 %v69, %v439
  %v441 = vpop.f32.mrb[0].mxu0
  %v442 = vadd.f32 %v73, %v441
  %443 = vmatprep.mubr.bf16.mxu0 0
  %444 = vmatmul.mubr.bf16.gmra.mrb[0].mxu0 %v155
  %v445 = vpop.f32.mrb[0].mxu0
  %v446 = vadd.f32 %v69, %v445
  %v447 = vpop.f32.mrb[0].mxu0
  %v448 = vadd.f32 %v73, %v447
  %v449 = vpop.f32.mrb[0].mxu0
  %v450 = vadd.f32 %v69, %v449
  %v451 = vpop.f32.mrb[0].mxu0
  %v452 = vadd.f32 %v73, %v451
  %453 = vmatprep.mubr.bf16.mxu0 0
  %454 = vmatmul.mubr.bf16.gmra.mrb[0].mxu0 %v158
  %v455 = vpop.f32.mrb[0].mxu0
  %v456 = vadd.f32 %v69, %v455
  %v457 = vpop.f32.mrb[0].mxu0
  %v458 = vadd.f32 %v73, %v457
  %v459 = vpop.f32.mrb[0].mxu0
  %v460 = vadd.f32 %v69, %v459
  %v461 = vpop.f32.mrb[0].mxu0
  %v462 = vadd.f32 %v73, %v461
  %463 = vmatprep.mubr.bf16.mxu0 0
  %464 = vmatmul.mubr.bf16.gmra.mrb[0].mxu0 %v161
  %v465 = vpop.f32.mrb[0].mxu0
  %v466 = vadd.f32 %v69, %v465
  %v467 = vpop.f32.mrb[0].mxu0
  %v468 = vadd.f32 %v73, %v467
  %v469 = vpop.f32.mrb[0].mxu0
  %v470 = vadd.f32 %v69, %v469
  %v471 = vpop.f32.mrb[0].mxu0
  %v472 = vadd.f32 %v73, %v471
  %473 = vmatprep.mubr.bf16.mxu0 0
  %474 = vmatmul.mubr.bf16.gmra.mrb[0].mxu0 %v164
  %v475 = vpop.f32.mrb[0].mxu0
  %v476 = vadd.f32 %v69, %v475
  %v477 = vpop.f32.mrb[0].mxu0
  %v478 = vadd.f32 %v73, %v477
  %v479 = vpop.f32.mrb[0].mxu0
  %v480 = vadd.f32 %v69, %v479
  %v481 = vpop.f32.mrb[0].mxu0
  %v482 = vadd.f32 %v73, %v481
  %483 = vmatprep.mubr.bf16.mxu0 0
  %484 = vmatmul.mubr.bf16.gmra.mrb[0].mxu0 %v167
  %v485 = vpop.f32.mrb[0].mxu0
  %v486 = vadd.f32 %v69, %v485
  %v487 = vpop.f32.mrb[0].mxu0
  %v488 = vadd.f32 %v73, %v487
  %v489 = vpop.f32.mrb[0].mxu0
  %v490 = vadd.f32 %v69, %v489
  %v491 = vpop.f32.mrb[0].mxu0
  %v492 = vadd.f32 %v73, %v491
  %493 = vmatprep.mubr.bf16.mxu0 0
  %494 = vmatmul.mubr.bf16.gmra.mrb[0].mxu0 %v170
  %v495 = vpop.f32.mrb[0].mxu0
  %v496 = vadd.f32 %v69, %v495
  %v497 = vpop.f32.mrb[0].mxu0
  %v498 = vadd.f32 %v73, %v497
  %v499 = vpop.f32.mrb[0].mxu0
  %v500 = vadd.f32 %v69, %v499
  %v501 = vpop.f32.mrb[0].mxu0
  %v502 = vadd.f32 %v73, %v501
  %503 = vmatprep.mubr.bf16.mxu0 0
  %504 = vmatmul.mubr.bf16.gmra.mrb[0].mxu0 %v173
  %v505 = vpop.f32.mrb[0].mxu0
  %v506 = vadd.f32 %v69, %v505
  %v507 = vpop.f32.mrb[0].mxu0
  %v508 = vadd.f32 %v73, %v507
  %v509 = vpop.f32.mrb[0].mxu0
  %v510 = vadd.f32 %v69, %v509
  %v511 = vpop.f32.mrb[0].mxu0
  %v512 = vadd.f32 %v73, %v511
  %513 = vdwg.mxu0
  %v514 = vpack.c.bf16 %v214, %v210
  %v515 = vpack.c.bf16 %v216, %v212
  %v516 = vpack.c.bf16 %v327, %v323
  %v517 = vpack.c.bf16 %v329, %v325
  %v518 = vpack.c.bf16 %v440, %v436
  %v519 = vpack.c.bf16 %v442, %v438
  %v520 = vpack.c.bf16 %v224, %v220
  %v521 = vpack.c.bf16 %v226, %v222
  %v522 = vpack.c.bf16 %v337, %v333
  %v523 = vpack.c.bf16 %v339, %v335
  %v524 = vpack.c.bf16 %v450, %v446
  %v525 = vpack.c.bf16 %v452, %v448
  %v526 = vpack.c.bf16 %v234, %v230
  %v527 = vpack.c.bf16 %v236, %v232
  %v528 = vpack.c.bf16 %v347, %v343
  %v529 = vpack.c.bf16 %v349, %v345
  %v530 = vpack.c.bf16 %v460, %v456
  %v531 = vpack.c.bf16 %v462, %v458
  %v532 = vpack.c.bf16 %v244, %v240
  %v533 = vpack.c.bf16 %v246, %v242
  %v534 = vpack.c.bf16 %v357, %v353
  %v535 = vpack.c.bf16 %v359, %v355
  %v536 = vpack.c.bf16 %v470, %v466
  %v537 = vpack.c.bf16 %v472, %v468
  %v538 = vpack.c.bf16 %v254, %v250
  %v539 = vpack.c.bf16 %v256, %v252
  %v540 = vpack.c.bf16 %v367, %v363
  %v541 = vpack.c.bf16 %v369, %v365
  %v542 = vpack.c.bf16 %v480, %v476
  %v543 = vpack.c.bf16 %v482, %v478
  %v544 = vpack.c.bf16 %v264, %v260
  %v545 = vpack.c.bf16 %v266, %v262
  %v546 = vpack.c.bf16 %v377, %v373
  %v547 = vpack.c.bf16 %v379, %v375
  %v548 = vpack.c.bf16 %v490, %v486
  %v549 = vpack.c.bf16 %v492, %v488
  %v550 = vpack.c.bf16 %v274, %v270
  %v551 = vpack.c.bf16 %v276, %v272
  %v552 = vpack.c.bf16 %v387, %v383
  %v553 = vpack.c.bf16 %v389, %v385
  %v554 = vpack.c.bf16 %v500, %v496
  %v555 = vpack.c.bf16 %v502, %v498
  %v556 = vpack.c.bf16 %v284, %v280
  %v557 = vpack.c.bf16 %v286, %v282
  %v558 = vpack.c.bf16 %v397, %v393
  %v559 = vpack.c.bf16 %v399, %v395
  %v560 = vpack.c.bf16 %v510, %v506
  %v561 = vpack.c.bf16 %v512, %v508
  %562 = vst [vmem:[#allocation2] sm:$0xff] %v514
  %563 = vst [vmem:[#allocation2 + $0x8] sm:$0xff] %v515
  %564 = vst [vmem:[#allocation2 + $0x10] sm:$0xff] %v516
  %565 = vst [vmem:[#allocation2 + $0x18] sm:$0xff] %v517
  %566 = vst [vmem:[#allocation2 + $0x20] sm:$0xff] %v518
  %567 = vst [vmem:[#allocation2 + $0x28] sm:$0xff] %v519
  %568 = vst [vmem:[#allocation2 + $0x30] sm:$0xff] %v520
  %569 = vst [vmem:[#allocation2 + $0x38] sm:$0xff] %v521
  %570 = vst [vmem:[#allocation2 + $0x40] sm:$0xff] %v522
  %571 = vst [vmem:[#allocation2 + $0x48] sm:$0xff] %v523
  %572 = vst [vmem:[#allocation2 + $0x50] sm:$0xff] %v524
  %573 = vst [vmem:[#allocation2 + $0x58] sm:$0xff] %v525
  %574 = vst [vmem:[#allocation2 + $0x60] sm:$0xff] %v526
  %575 = vst [vmem:[#allocation2 + $0x68] sm:$0xff] %v527
  %576 = vst [vmem:[#allocation2 + $0x70] sm:$0xff] %v528
  %577 = vst [vmem:[#allocation2 + $0x78] sm:$0xff] %v529
  %578 = vst [vmem:[#allocation2 + $0x80] sm:$0xff] %v530
  %579 = vst [vmem:[#allocation2 + $0x88] sm:$0xff] %v531
  %580 = vst [vmem:[#allocation2 + $0x90] sm:$0xff] %v532
  %581 = vst [vmem:[#allocation2 + $0x98] sm:$0xff] %v533
  %582 = vst [vmem:[#allocation2 + $0xa0] sm:$0xff] %v534
  %583 = vst [vmem:[#allocation2 + $0xa8] sm:$0xff] %v535
  %584 = vst [vmem:[#allocation2 + $0xb0] sm:$0xff] %v536
  %585 = vst [vmem:[#allocation2 + $0xb8] sm:$0xff] %v537
  %586 = vst [vmem:[#allocation2 + $0xc0] sm:$0xff] %v538
  %587 = vst [vmem:[#allocation2 + $0xc8] sm:$0xff] %v539
  %588 = vst [vmem:[#allocation2 + $0xd0] sm:$0xff] %v540
  %589 = vst [vmem:[#allocation2 + $0xd8] sm:$0xff] %v541
  %590 = vst [vmem:[#allocation2 + $0xe0] sm:$0xff] %v542
  %591 = vst [vmem:[#allocation2 + $0xe8] sm:$0xff] %v543
  %592 = vst [vmem:[#allocation2 + $0xf0] sm:$0xff] %v544
  %593 = vst [vmem:[#allocation2 + $0xf8] sm:$0xff] %v545
  %594 = vst [vmem:[#allocation2 + $0x100] sm:$0xff] %v546
  %595 = vst [vmem:[#allocation2 + $0x108] sm:$0xff] %v547
  %596 = vst [vmem:[#allocation2 + $0x110] sm:$0xff] %v548
  %597 = vst [vmem:[#allocation2 + $0x118] sm:$0xff] %v549
  %598 = vst [vmem:[#allocation2 + $0x120] sm:$0xff] %v550
  %599 = vst [vmem:[#allocation2 + $0x128] sm:$0xff] %v551
  %600 = vst [vmem:[#allocation2 + $0x130] sm:$0xff] %v552
  %601 = vst [vmem:[#allocation2 + $0x138] sm:$0xff] %v553
  %602 = vst [vmem:[#allocation2 + $0x140] sm:$0xff] %v554
  %603 = vst [vmem:[#allocation2 + $0x148] sm:$0xff] %v555
  %604 = vst [vmem:[#allocation2 + $0x150] sm:$0xff] %v556
  %605 = vst [vmem:[#allocation2 + $0x158] sm:$0xff] %v557
  %606 = vst [vmem:[#allocation2 + $0x160] sm:$0xff] %v558
  %607 = vst [vmem:[#allocation2 + $0x168] sm:$0xff] %v559
  %608 = vst [vmem:[#allocation2 + $0x170] sm:$0xff] %v560
  %609 = vst [vmem:[#allocation2 + $0x178] sm:$0xff] %v561
  %v610 = vld [vmem:[%s3] sm:$0xff]
  %v611 = vld [vmem:[%s3 + $0x8] sm:$0xff]
  %v612 = vld [vmem:[%s3 + $0x10] sm:$0xff]
  %v613 = vld [vmem:[%s3 + $0x18] sm:$0xff]
  %v614 = vld [vmem:[%s3 + $0x20] sm:$0xff]
  %v615 = vld [vmem:[%s3 + $0x28] sm:$0xff]
  %v616 = vld [vmem:[%s3 + $0x30] sm:$0xff]
  %v617 = vld [vmem:[%s3 + $0x38] sm:$0xff]
  %v618 = vld [vmem:[%s3 + $0x40] sm:$0xff]
  %v619 = vld [vmem:[%s3 + $0x48] sm:$0xff]
  %v620 = vld [vmem:[%s3 + $0x50] sm:$0xff]
  %v621 = vld [vmem:[%s3 + $0x58] sm:$0xff]
  %v622 = vld [vmem:[%s3 + $0x60] sm:$0xff]
  %v623 = vld [vmem:[%s3 + $0x68] sm:$0xff]
  %v624 = vld [vmem:[%s3 + $0x70] sm:$0xff]
  %v625 = vld [vmem:[%s3 + $0x78] sm:$0xff]
  %v626 = vld [vmem:[%s3 + $0x80] sm:$0xff]
  %v627 = vld [vmem:[%s3 + $0x88] sm:$0xff]
  %v628 = vld [vmem:[%s3 + $0x90] sm:$0xff]
  %v629 = vld [vmem:[%s3 + $0x98] sm:$0xff]
  %v630 = vld [vmem:[%s3 + $0xa0] sm:$0xff]
  %v631 = vld [vmem:[%s3 + $0xa8] sm:$0xff]
  %v632 = vld [vmem:[%s3 + $0xb0] sm:$0xff]
  %v633 = vld [vmem:[%s3 + $0xb8] sm:$0xff]
  %v634 = vld [vmem:[%s3 + $0xc0] sm:$0xff]
  %v635 = vld [vmem:[%s3 + $0xc8] sm:$0xff]
  %v636 = vld [vmem:[%s3 + $0xd0] sm:$0xff]
  %v637 = vld [vmem:[%s3 + $0xd8] sm:$0xff]
  %v638 = vld [vmem:[%s3 + $0xe0] sm:$0xff]
  %v639 = vld [vmem:[%s3 + $0xe8] sm:$0xff]
  %v640 = vld [vmem:[%s3 + $0xf0] sm:$0xff]
  %v641 = vld [vmem:[%s3 + $0xf8] sm:$0xff]
  %v642 = vld [vmem:[%s3 + $0x100] sm:$0xff]
  %v643 = vld [vmem:[%s3 + $0x108] sm:$0xff]
  %v644 = vld [vmem:[%s3 + $0x110] sm:$0xff]
  %v645 = vld [vmem:[%s3 + $0x118] sm:$0xff]
  %v646 = vld [vmem:[%s3 + $0x120] sm:$0xff]
  %v647 = vld [vmem:[%s3 + $0x128] sm:$0xff]
  %v648 = vld [vmem:[%s3 + $0x130] sm:$0xff]
  %v649 = vld [vmem:[%s3 + $0x138] sm:$0xff]
  %v650 = vld [vmem:[%s3 + $0x140] sm:$0xff]
  %v651 = vld [vmem:[%s3 + $0x148] sm:$0xff]
  %v652 = vld [vmem:[%s3 + $0x150] sm:$0xff]
  %v653 = vld [vmem:[%s3 + $0x158] sm:$0xff]
  %v654 = vld [vmem:[%s3 + $0x160] sm:$0xff]
  %v655 = vld [vmem:[%s3 + $0x168] sm:$0xff]
  %v656 = vld [vmem:[%s3 + $0x170] sm:$0xff]
  %v657 = vld [vmem:[%s3 + $0x178] sm:$0xff]
  %v658 = vld [vmem:[%s3 + $0x180] sm:$0xff]
  %v659 = vld [vmem:[%s3 + $0x188] sm:$0xff]
  %v660 = vld [vmem:[%s3 + $0x190] sm:$0xff]
  %v661 = vld [vmem:[%s3 + $0x198] sm:$0xff]
  %v662 = vld [vmem:[%s3 + $0x1a0] sm:$0xff]
  %v663 = vld [vmem:[%s3 + $0x1a8] sm:$0xff]
  %v664 = vld [vmem:[%s3 + $0x1b0] sm:$0xff]
  %v665 = vld [vmem:[%s3 + $0x1b8] sm:$0xff]
  %v666 = vld [vmem:[%s3 + $0x1c0] sm:$0xff]
  %v667 = vld [vmem:[%s3 + $0x1c8] sm:$0xff]
  %v668 = vld [vmem:[%s3 + $0x1d0] sm:$0xff]
  %v669 = vld [vmem:[%s3 + $0x1d8] sm:$0xff]
  %v670 = vld [vmem:[%s3 + $0x1e0] sm:$0xff]
  %v671 = vld [vmem:[%s3 + $0x1e8] sm:$0xff]
  %v672 = vld [vmem:[%s3 + $0x1f0] sm:$0xff]
  %v673 = vld [vmem:[%s3 + $0x1f8] sm:$0xff]
  %v674 = vld [vmem:[%s3 + $0x200] sm:$0xff]
  %v675 = vld [vmem:[%s3 + $0x208] sm:$0xff]
  %v676 = vld [vmem:[%s3 + $0x210] sm:$0xff]
  %v677 = vld [vmem:[%s3 + $0x218] sm:$0xff]
  %v678 = vld [vmem:[%s3 + $0x220] sm:$0xff]
  %v679 = vld [vmem:[%s3 + $0x228] sm:$0xff]
  %v680 = vld [vmem:[%s3 + $0x230] sm:$0xff]
  %v681 = vld [vmem:[%s3 + $0x238] sm:$0xff]
  %v682 = vld [vmem:[%s3 + $0x240] sm:$0xff]
  %v683 = vld [vmem:[%s3 + $0x248] sm:$0xff]
  %v684 = vld [vmem:[%s3 + $0x250] sm:$0xff]
  %v685 = vld [vmem:[%s3 + $0x258] sm:$0xff]
  %v686 = vld [vmem:[%s3 + $0x260] sm:$0xff]
  %v687 = vld [vmem:[%s3 + $0x268] sm:$0xff]
  %v688 = vld [vmem:[%s3 + $0x270] sm:$0xff]
  %v689 = vld [vmem:[%s3 + $0x278] sm:$0xff]
  %v690 = vld [vmem:[%s3 + $0x280] sm:$0xff]
  %v691 = vld [vmem:[%s3 + $0x288] sm:$0xff]
  %v692 = vld [vmem:[%s3 + $0x290] sm:$0xff]
  %v693 = vld [vmem:[%s3 + $0x298] sm:$0xff]
  %v694 = vld [vmem:[%s3 + $0x2a0] sm:$0xff]
  %v695 = vld [vmem:[%s3 + $0x2a8] sm:$0xff]
  %v696 = vld [vmem:[%s3 + $0x2b0] sm:$0xff]
  %v697 = vld [vmem:[%s3 + $0x2b8] sm:$0xff]
  %v698 = vld [vmem:[%s3 + $0x2c0] sm:$0xff]
  %v699 = vld [vmem:[%s3 + $0x2c8] sm:$0xff]
  %v700 = vld [vmem:[%s3 + $0x2d0] sm:$0xff]
  %v701 = vld [vmem:[%s3 + $0x2d8] sm:$0xff]
  %v702 = vld [vmem:[%s3 + $0x2e0] sm:$0xff]
  %v703 = vld [vmem:[%s3 + $0x2e8] sm:$0xff]
  %v704 = vld [vmem:[%s3 + $0x2f0] sm:$0xff]
  %v705 = vld [vmem:[%s3 + $0x2f8] sm:$0xff]
  %v706 = vld [vmem:[%s5] sm:$0x3]
  %v708 = vlaneseq
  %v709 = vshrl.u32 %v708, 7
  %v710 = vsub.s32 0, %v709
  %v711 = vrot.slane %v706, %v710
  %v712 = vlaneseq
  %v713 = vshrl.u32 %v712, 7
  %v714 = vsub.s32 1, %v713
  %v715 = vrot.slane %v706, %v714
  %v718 = vld [vmem:[%s1] sm:$0xff]
  %v719 = vld [vmem:[%s1 + $0x8] sm:$0xff]
  %v720 = vld [vmem:[%s1 + $0x10] sm:$0xff]
  %v721 = vld [vmem:[%s1 + $0x18] sm:$0xff]
  %s722 = smul.u32 0, 6
  %s723 = smul.addr %s722, 8
  %s724 = scalar_lea.vmem [#allocation2], %s723
  %v725 = vld [vmem:[%s724] sm:$0xff]
  %v726 = vld [vmem:[%s724 + $0x8] sm:$0xff]
  %v727 = vld [vmem:[%s724 + $0x10] sm:$0xff]
  %v728 = vld [vmem:[%s724 + $0x18] sm:$0xff]
  %v729 = vld [vmem:[%s724 + $0x20] sm:$0xff]
  %v730 = vld [vmem:[%s724 + $0x28] sm:$0xff]
  %v731 = vunpack.c.l.bf16 %v725
  %v732 = vunpack.c.l.bf16 %v726
  %v733 = vunpack.c.l.bf16 %v727
  %v734 = vunpack.c.l.bf16 %v728
  %v735 = vunpack.c.l.bf16 %v729
  %v736 = vunpack.c.l.bf16 %v730
  %v737 = vunpack.c.h.bf16 %v725
  %v738 = vunpack.c.h.bf16 %v726
  %v739 = vunpack.c.h.bf16 %v727
  %v740 = vunpack.c.h.bf16 %v728
  %v741 = vunpack.c.h.bf16 %v729
  %v742 = vunpack.c.h.bf16 %v730
  %v743 = vpack.c.bf16 %v720, %v718
  %v744 = vpack.c.bf16 %v721, %v719
  %v841 = vunpack.c.l.b16 %v610
  %v842 = vunpack.c.h.b16 %v610
  %v843 = vunpack.c.l.b16 %v611
  %v844 = vunpack.c.h.b16 %v611
  %v845 = vunpack.c.l.b16 %v612
  %v846 = vunpack.c.h.b16 %v612
  %v847 = vunpack.c.l.b16 %v613
  %v848 = vunpack.c.h.b16 %v613
  %v849 = vunpack.c.l.b16 %v614
  %v850 = vunpack.c.h.b16 %v614
  %v851 = vunpack.c.l.b16 %v615
  %v852 = vunpack.c.h.b16 %v615
  %v853 = vunpack.c.l.b16 %v616
  %v854 = vunpack.c.h.b16 %v616
  %v855 = vunpack.c.l.b16 %v617
  %v856 = vunpack.c.h.b16 %v617
  %v857 = vunpack.c.l.b16 %v618
  %v858 = vunpack.c.h.b16 %v618
  %v859 = vunpack.c.l.b16 %v619
  %v860 = vunpack.c.h.b16 %v619
  %v861 = vunpack.c.l.b16 %v620
  %v862 = vunpack.c.h.b16 %v620
  %v863 = vunpack.c.l.b16 %v621
  %v864 = vunpack.c.h.b16 %v621
  %v865 = vunpack.c.l.b16 %v622
  %v866 = vunpack.c.h.b16 %v622
  %v867 = vunpack.c.l.b16 %v623
  %v868 = vunpack.c.h.b16 %v623
  %v869 = vunpack.c.l.b16 %v624
  %v870 = vunpack.c.h.b16 %v624
  %v871 = vunpack.c.l.b16 %v625
  %v872 = vunpack.c.h.b16 %v625
  %v873 = vunpack.c.l.b16 %v626
  %v874 = vunpack.c.h.b16 %v626
  %v875 = vunpack.c.l.b16 %v627
  %v876 = vunpack.c.h.b16 %v627
  %v877 = vunpack.c.l.b16 %v628
  %v878 = vunpack.c.h.b16 %v628
  %v879 = vunpack.c.l.b16 %v629
  %v880 = vunpack.c.h.b16 %v629
  %v881 = vunpack.c.l.b16 %v630
  %v882 = vunpack.c.h.b16 %v630
  %v883 = vunpack.c.l.b16 %v631
  %v884 = vunpack.c.h.b16 %v631
  %v885 = vunpack.c.l.b16 %v632
  %v886 = vunpack.c.h.b16 %v632
  %v887 = vunpack.c.l.b16 %v633
  %v888 = vunpack.c.h.b16 %v633
  %v889 = vunpack.c.l.b16 %v634
  %v890 = vunpack.c.h.b16 %v634
  %v891 = vunpack.c.l.b16 %v635
  %v892 = vunpack.c.h.b16 %v635
  %v893 = vunpack.c.l.b16 %v636
  %v894 = vunpack.c.h.b16 %v636
  %v895 = vunpack.c.l.b16 %v637
  %v896 = vunpack.c.h.b16 %v637
  %v897 = vunpack.c.l.b16 %v638
  %v898 = vunpack.c.h.b16 %v638
  %v899 = vunpack.c.l.b16 %v639
  %v900 = vunpack.c.h.b16 %v639
  %v901 = vunpack.c.l.b16 %v640
  %v902 = vunpack.c.h.b16 %v640
  %v903 = vunpack.c.l.b16 %v641
  %v904 = vunpack.c.h.b16 %v641
  %v905 = vunpack.c.l.b16 %v642
  %v906 = vunpack.c.h.b16 %v642
  %v907 = vunpack.c.l.b16 %v643
  %v908 = vunpack.c.h.b16 %v643
  %v909 = vunpack.c.l.b16 %v644
  %v910 = vunpack.c.h.b16 %v644
  %v911 = vunpack.c.l.b16 %v645
  %v912 = vunpack.c.h.b16 %v645
  %v913 = vunpack.c.l.b16 %v646
  %v914 = vunpack.c.h.b16 %v646
  %v915 = vunpack.c.l.b16 %v647
  %v916 = vunpack.c.h.b16 %v647
  %v917 = vunpack.c.l.b16 %v648
  %v918 = vunpack.c.h.b16 %v648
  %v919 = vunpack.c.l.b16 %v649
  %v920 = vunpack.c.h.b16 %v649
  %v921 = vunpack.c.l.b16 %v650
  %v922 = vunpack.c.h.b16 %v650
  %v923 = vunpack.c.l.b16 %v651
  %v924 = vunpack.c.h.b16 %v651
  %v925 = vunpack.c.l.b16 %v652
  %v926 = vunpack.c.h.b16 %v652
  %v927 = vunpack.c.l.b16 %v653
  %v928 = vunpack.c.h.b16 %v653
  %v929 = vunpack.c.l.b16 %v654
  %v930 = vunpack.c.h.b16 %v654
  %v931 = vunpack.c.l.b16 %v655
  %v932 = vunpack.c.h.b16 %v655
  %v933 = vunpack.c.l.b16 %v656
  %v934 = vunpack.c.h.b16 %v656
  %v935 = vunpack.c.l.b16 %v657
  %v936 = vunpack.c.h.b16 %v657
  %v937 = vunpack.c.l.b16 %v658
  %v938 = vunpack.c.h.b16 %v658
  %v939 = vunpack.c.l.b16 %v659
  %v940 = vunpack.c.h.b16 %v659
  %v941 = vunpack.c.l.b16 %v660
  %v942 = vunpack.c.h.b16 %v660
  %v943 = vunpack.c.l.b16 %v661
  %v944 = vunpack.c.h.b16 %v661
  %v945 = vunpack.c.l.b16 %v662
  %v946 = vunpack.c.h.b16 %v662
  %v947 = vunpack.c.l.b16 %v663
  %v948 = vunpack.c.h.b16 %v663
  %v949 = vunpack.c.l.b16 %v664
  %v950 = vunpack.c.h.b16 %v664
  %v951 = vunpack.c.l.b16 %v665
  %v952 = vunpack.c.h.b16 %v665
  %v953 = vunpack.c.l.b16 %v666
  %v954 = vunpack.c.h.b16 %v666
  %v955 = vunpack.c.l.b16 %v667
  %v956 = vunpack.c.h.b16 %v667
  %v957 = vunpack.c.l.b16 %v668
  %v958 = vunpack.c.h.b16 %v668
  %v959 = vunpack.c.l.b16 %v669
  %v960 = vunpack.c.h.b16 %v669
  %v961 = vunpack.c.l.b16 %v670
  %v962 = vunpack.c.h.b16 %v670
  %v963 = vunpack.c.l.b16 %v671
  %v964 = vunpack.c.h.b16 %v671
  %v965 = vunpack.c.l.b16 %v672
  %v966 = vunpack.c.h.b16 %v672
  %v967 = vunpack.c.l.b16 %v673
  %v968 = vunpack.c.h.b16 %v673
  %v969 = vunpack.c.l.b16 %v674
  %v970 = vunpack.c.h.b16 %v674
  %v971 = vunpack.c.l.b16 %v675
  %v972 = vunpack.c.h.b16 %v675
  %v973 = vunpack.c.l.b16 %v676
  %v974 = vunpack.c.h.b16 %v676
  %v975 = vunpack.c.l.b16 %v677
  %v976 = vunpack.c.h.b16 %v677
  %v977 = vunpack.c.l.b16 %v678
  %v978 = vunpack.c.h.b16 %v678
  %v979 = vunpack.c.l.b16 %v679
  %v980 = vunpack.c.h.b16 %v679
  %v981 = vunpack.c.l.b16 %v680
  %v982 = vunpack.c.h.b16 %v680
  %v983 = vunpack.c.l.b16 %v681
  %v984 = vunpack.c.h.b16 %v681
  %v985 = vunpack.c.l.b16 %v682
  %v986 = vunpack.c.h.b16 %v682
  %v987 = vunpack.c.l.b16 %v683
  %v988 = vunpack.c.h.b16 %v683
  %v989 = vunpack.c.l.b16 %v684
  %v990 = vunpack.c.h.b16 %v684
  %v991 = vunpack.c.l.b16 %v685
  %v992 = vunpack.c.h.b16 %v685
  %v993 = vunpack.c.l.b16 %v686
  %v994 = vunpack.c.h.b16 %v686
  %v995 = vunpack.c.l.b16 %v687
  %v996 = vunpack.c.h.b16 %v687
  %v997 = vunpack.c.l.b16 %v688
  %v998 = vunpack.c.h.b16 %v688
  %v999 = vunpack.c.l.b16 %v689
  %v1000 = vunpack.c.h.b16 %v689
  %v1001 = vunpack.c.l.b16 %v690
  %v1002 = vunpack.c.h.b16 %v690
  %v1003 = vunpack.c.l.b16 %v691
  %v1004 = vunpack.c.h.b16 %v691
  %v1005 = vunpack.c.l.b16 %v692
  %v1006 = vunpack.c.h.b16 %v692
  %v1007 = vunpack.c.l.b16 %v693
  %v1008 = vunpack.c.h.b16 %v693
  %v1009 = vunpack.c.l.b16 %v694
  %v1010 = vunpack.c.h.b16 %v694
  %v1011 = vunpack.c.l.b16 %v695
  %v1012 = vunpack.c.h.b16 %v695
  %v1013 = vunpack.c.l.b16 %v696
  %v1014 = vunpack.c.h.b16 %v696
  %v1015 = vunpack.c.l.b16 %v697
  %v1016 = vunpack.c.h.b16 %v697
  %v1017 = vunpack.c.l.b16 %v698
  %v1018 = vunpack.c.h.b16 %v698
  %v1019 = vunpack.c.l.b16 %v699
  %v1020 = vunpack.c.h.b16 %v699
  %v1021 = vunpack.c.l.b16 %v700
  %v1022 = vunpack.c.h.b16 %v700
  %v1023 = vunpack.c.l.b16 %v701
  %v1024 = vunpack.c.h.b16 %v701
  %v1025 = vunpack.c.l.b16 %v702
  %v1026 = vunpack.c.h.b16 %v702
  %v1027 = vunpack.c.l.b16 %v703
  %v1028 = vunpack.c.h.b16 %v703
  %v1029 = vunpack.c.l.b16 %v704
  %v1030 = vunpack.c.h.b16 %v704
  %v1031 = vunpack.c.l.b16 %v705
  %v1032 = vunpack.c.h.b16 %v705
  %v1033 = vpack.c.b16 %v847, %v841
  %v1034 = vpack.c.b16 %v848, %v842
  %v1035 = vpack.c.b16 %v849, %v843
  %v1036 = vpack.c.b16 %v850, %v844
  %v1037 = vpack.c.b16 %v851, %v845
  %v1038 = vpack.c.b16 %v852, %v846
  %v1039 = vpack.c.b16 %v859, %v853
  %v1040 = vpack.c.b16 %v860, %v854
  %v1041 = vpack.c.b16 %v861, %v855
  %v1042 = vpack.c.b16 %v862, %v856
  %v1043 = vpack.c.b16 %v863, %v857
  %v1044 = vpack.c.b16 %v864, %v858
  %v1045 = vpack.c.b16 %v871, %v865
  %v1046 = vpack.c.b16 %v872, %v866
  %v1047 = vpack.c.b16 %v873, %v867
  %v1048 = vpack.c.b16 %v874, %v868
  %v1049 = vpack.c.b16 %v875, %v869
  %v1050 = vpack.c.b16 %v876, %v870
  %v1051 = vpack.c.b16 %v883, %v877
  %v1052 = vpack.c.b16 %v884, %v878
  %v1053 = vpack.c.b16 %v885, %v879
  %v1054 = vpack.c.b16 %v886, %v880
  %v1055 = vpack.c.b16 %v887, %v881
  %v1056 = vpack.c.b16 %v888, %v882
  %v1057 = vpack.c.b16 %v895, %v889
  %v1058 = vpack.c.b16 %v896, %v890
  %v1059 = vpack.c.b16 %v897, %v891
  %v1060 = vpack.c.b16 %v898, %v892
  %v1061 = vpack.c.b16 %v899, %v893
  %v1062 = vpack.c.b16 %v900, %v894
  %v1063 = vpack.c.b16 %v907, %v901
  %v1064 = vpack.c.b16 %v908, %v902
  %v1065 = vpack.c.b16 %v909, %v903
  %v1066 = vpack.c.b16 %v910, %v904
  %v1067 = vpack.c.b16 %v911, %v905
  %v1068 = vpack.c.b16 %v912, %v906
  %v1069 = vpack.c.b16 %v919, %v913
  %v1070 = vpack.c.b16 %v920, %v914
  %v1071 = vpack.c.b16 %v921, %v915
  %v1072 = vpack.c.b16 %v922, %v916
  %v1073 = vpack.c.b16 %v923, %v917
  %v1074 = vpack.c.b16 %v924, %v918
  %v1075 = vpack.c.b16 %v931, %v925
  %v1076 = vpack.c.b16 %v932, %v926
  %v1077 = vpack.c.b16 %v933, %v927
  %v1078 = vpack.c.b16 %v934, %v928
  %v1079 = vpack.c.b16 %v935, %v929
  %v1080 = vpack.c.b16 %v936, %v930
  %v1081 = vpack.c.b16 %v943, %v937
  %v1082 = vpack.c.b16 %v944, %v938
  %v1083 = vpack.c.b16 %v945, %v939
  %v1084 = vpack.c.b16 %v946, %v940
  %v1085 = vpack.c.b16 %v947, %v941
  %v1086 = vpack.c.b16 %v948, %v942
  %v1087 = vpack.c.b16 %v955, %v949
  %v1088 = vpack.c.b16 %v956, %v950
  %v1089 = vpack.c.b16 %v957, %v951
  %v1090 = vpack.c.b16 %v958, %v952
  %v1091 = vpack.c.b16 %v959, %v953
  %v1092 = vpack.c.b16 %v960, %v954
  %v1093 = vpack.c.b16 %v967, %v961
  %v1094 = vpack.c.b16 %v968, %v962
  %v1095 = vpack.c.b16 %v969, %v963
  %v1096 = vpack.c.b16 %v970, %v964
  %v1097 = vpack.c.b16 %v971, %v965
  %v1098 = vpack.c.b16 %v972, %v966
  %v1099 = vpack.c.b16 %v979, %v973
  %v1100 = vpack.c.b16 %v980, %v974
  %v1101 = vpack.c.b16 %v981, %v975
  %v1102 = vpack.c.b16 %v982, %v976
  %v1103 = vpack.c.b16 %v983, %v977
  %v1104 = vpack.c.b16 %v984, %v978
  %v1105 = vpack.c.b16 %v991, %v985
  %v1106 = vpack.c.b16 %v992, %v986
  %v1107 = vpack.c.b16 %v993, %v987
  %v1108 = vpack.c.b16 %v994, %v988
  %v1109 = vpack.c.b16 %v995, %v989
  %v1110 = vpack.c.b16 %v996, %v990
  %v1111 = vpack.c.b16 %v1003, %v997
  %v1112 = vpack.c.b16 %v1004, %v998
  %v1113 = vpack.c.b16 %v1005, %v999
  %v1114 = vpack.c.b16 %v1006, %v1000
  %v1115 = vpack.c.b16 %v1007, %v1001
  %v1116 = vpack.c.b16 %v1008, %v1002
  %v1117 = vpack.c.b16 %v1015, %v1009
  %v1118 = vpack.c.b16 %v1016, %v1010
  %v1119 = vpack.c.b16 %v1017, %v1011
  %v1120 = vpack.c.b16 %v1018, %v1012
  %v1121 = vpack.c.b16 %v1019, %v1013
  %v1122 = vpack.c.b16 %v1020, %v1014
  %v1123 = vpack.c.b16 %v1027, %v1021
  %v1124 = vpack.c.b16 %v1028, %v1022
  %v1125 = vpack.c.b16 %v1029, %v1023
  %v1126 = vpack.c.b16 %v1030, %v1024
  %v1127 = vpack.c.b16 %v1031, %v1025
  %v1128 = vpack.c.b16 %v1032, %v1026
  %1225 = vmatprep.subr.bf16.mxu0 %v1034
  %1226 = vmatpush1.bf16.msra.mxu0 %v1033
  %1227 = vmatprep.subr.bf16.mxu0 %v1040
  %1228 = vmatpush1.bf16.msra.mxu0 %v1039
  %1229 = vmatprep.subr.bf16.mxu0 %v1046
  %1230 = vmatpush1.bf16.msra.mxu0 %v1045
  %1231 = vmatprep.subr.bf16.mxu0 %v1052
  %1232 = vmatpush1.bf16.msra.mxu0 %v1051
  %1233 = vmatprep.subr.bf16.mxu0 %v1058
  %1234 = vmatpush1.bf16.msra.mxu0 %v1057
  %1235 = vmatprep.subr.bf16.mxu0 %v1064
  %1236 = vmatpush1.bf16.msra.mxu0 %v1063
  %1237 = vmatprep.subr.bf16.mxu0 %v1070
  %1238 = vmatpush1.bf16.msra.mxu0 %v1069
  %1239 = vmatprep.subr.bf16.mxu0 %v1076
  %1240 = vmatpush1.bf16.msra.mxu0 %v1075
  %1241 = vmatprep.subr.bf16.mxu0 %v1082
  %1242 = vmatpush1.bf16.msra.mxu0 %v1081
  %1243 = vmatprep.subr.bf16.mxu0 %v1088
  %1244 = vmatpush1.bf16.msra.mxu0 %v1087
  %1245 = vmatprep.subr.bf16.mxu0 %v1094
  %1246 = vmatpush1.bf16.msra.mxu0 %v1093
  %1247 = vmatprep.subr.bf16.mxu0 %v1100
  %1248 = vmatpush1.bf16.msra.mxu0 %v1099
  %1249 = vmatprep.subr.bf16.mxu0 %v1106
  %1250 = vmatpush1.bf16.msra.mxu0 %v1105
  %1251 = vmatprep.subr.bf16.mxu0 %v1112
  %1252 = vmatpush1.bf16.msra.mxu0 %v1111
  %1253 = vmatprep.subr.bf16.mxu0 %v1118
  %1254 = vmatpush1.bf16.msra.mxu0 %v1117
  %1255 = vmatprep.subr.bf16.mxu0 %v1124
  %1256 = vmatpush1.bf16.msra.mxu0 %v1123
  %1257 = vmatprep.mubr.bf16.mxu0 %v744
  %1258 = vmatmul.mubr.bf16.gmra.mrb[0].mxu0 %v743
  %v1259 = vpop.f32.mrb[0].mxu0
  %v1260 = vadd.f32 0.0, %v1259
  %v1261 = vpop.f32.mrb[0].mxu0
  %v1262 = vadd.f32 0.0, %v1261
  %v1263 = vpop.f32.mrb[0].mxu0
  %v1264 = vadd.f32 0.0, %v1263
  %v1265 = vpop.f32.mrb[0].mxu0
  %v1266 = vadd.f32 0.0, %v1265
  %1267 = vdwg.mxu0
  %1268 = vmatprep.subr.bf16.mxu0 %v1036
  %1269 = vmatpush1.bf16.msra.mxu0 %v1035
  %1270 = vmatprep.subr.bf16.mxu0 %v1042
  %1271 = vmatpush1.bf16.msra.mxu0 %v1041
  %1272 = vmatprep.subr.bf16.mxu0 %v1048
  %1273 = vmatpush1.bf16.msra.mxu0 %v1047
  %1274 = vmatprep.subr.bf16.mxu0 %v1054
  %1275 = vmatpush1.bf16.msra.mxu0 %v1053
  %1276 = vmatprep.subr.bf16.mxu0 %v1060
  %1277 = vmatpush1.bf16.msra.mxu0 %v1059
  %1278 = vmatprep.subr.bf16.mxu0 %v1066
  %1279 = vmatpush1.bf16.msra.mxu0 %v1065
  %1280 = vmatprep.subr.bf16.mxu0 %v1072
  %1281 = vmatpush1.bf16.msra.mxu0 %v1071
  %1282 = vmatprep.subr.bf16.mxu0 %v1078
  %1283 = vmatpush1.bf16.msra.mxu0 %v1077
  %1284 = vmatprep.subr.bf16.mxu0 %v1084
  %1285 = vmatpush1.bf16.msra.mxu0 %v1083
  %1286 = vmatprep.subr.bf16.mxu0 %v1090
  %1287 = vmatpush1.bf16.msra.mxu0 %v1089
  %1288 = vmatprep.subr.bf16.mxu0 %v1096
  %1289 = vmatpush1.bf16.msra.mxu0 %v1095
  %1290 = vmatprep.subr.bf16.mxu0 %v1102
  %1291 = vmatpush1.bf16.msra.mxu0 %v1101
  %1292 = vmatprep.subr.bf16.mxu0 %v1108
  %1293 = vmatpush1.bf16.msra.mxu0 %v1107
  %1294 = vmatprep.subr.bf16.mxu0 %v1114
  %1295 = vmatpush1.bf16.msra.mxu0 %v1113
  %1296 = vmatprep.subr.bf16.mxu0 %v1120
  %1297 = vmatpush1.bf16.msra.mxu0 %v1119
  %1298 = vmatprep.subr.bf16.mxu0 %v1126
  %1299 = vmatpush1.bf16.msra.mxu0 %v1125
  %1300 = vmatprep.mubr.bf16.mxu0 %v744
  %1301 = vmatmul.mubr.bf16.gmra.mrb[0].mxu0 %v743
  %v1302 = vpop.f32.mrb[0].mxu0
  %v1303 = vadd.f32 0.0, %v1302
  %v1304 = vpop.f32.mrb[0].mxu0
  %v1305 = vadd.f32 0.0, %v1304
  %v1306 = vpop.f32.mrb[0].mxu0
  %v1307 = vadd.f32 0.0, %v1306
  %v1308 = vpop.f32.mrb[0].mxu0
  %v1309 = vadd.f32 0.0, %v1308
  %1310 = vdwg.mxu0
  %1311 = vmatprep.subr.bf16.mxu0 %v1038
  %1312 = vmatpush1.bf16.msra.mxu0 %v1037
  %1313 = vmatprep.subr.bf16.mxu0 %v1044
  %1314 = vmatpush1.bf16.msra.mxu0 %v1043
  %1315 = vmatprep.subr.bf16.mxu0 %v1050
  %1316 = vmatpush1.bf16.msra.mxu0 %v1049
  %1317 = vmatprep.subr.bf16.mxu0 %v1056
  %1318 = vmatpush1.bf16.msra.mxu0 %v1055
  %1319 = vmatprep.subr.bf16.mxu0 %v1062
  %1320 = vmatpush1.bf16.msra.mxu0 %v1061
  %1321 = vmatprep.subr.bf16.mxu0 %v1068
  %1322 = vmatpush1.bf16.msra.mxu0 %v1067
  %1323 = vmatprep.subr.bf16.mxu0 %v1074
  %1324 = vmatpush1.bf16.msra.mxu0 %v1073
  %1325 = vmatprep.subr.bf16.mxu0 %v1080
  %1326 = vmatpush1.bf16.msra.mxu0 %v1079
  %1327 = vmatprep.subr.bf16.mxu0 %v1086
  %1328 = vmatpush1.bf16.msra.mxu0 %v1085
  %1329 = vmatprep.subr.bf16.mxu0 %v1092
  %1330 = vmatpush1.bf16.msra.mxu0 %v1091
  %1331 = vmatprep.subr.bf16.mxu0 %v1098
  %1332 = vmatpush1.bf16.msra.mxu0 %v1097
  %1333 = vmatprep.subr.bf16.mxu0 %v1104
  %1334 = vmatpush1.bf16.msra.mxu0 %v1103
  %1335 = vmatprep.subr.bf16.mxu0 %v1110
  %1336 = vmatpush1.bf16.msra.mxu0 %v1109
  %1337 = vmatprep.subr.bf16.mxu0 %v1116
  %1338 = vmatpush1.bf16.msra.mxu0 %v1115
  %1339 = vmatprep.subr.bf16.mxu0 %v1122
  %1340 = vmatpush1.bf16.msra.mxu0 %v1121
  %1341 = vmatprep.subr.bf16.mxu0 %v1128
  %1342 = vmatpush1.bf16.msra.mxu0 %v1127
  %1343 = vmatprep.mubr.bf16.mxu0 %v744
  %1344 = vmatmul.mubr.bf16.gmra.mrb[0].mxu0 %v743
  %v1345 = vpop.f32.mrb[0].mxu0
  %v1346 = vadd.f32 0.0, %v1345
  %v1347 = vpop.f32.mrb[0].mxu0
  %v1348 = vadd.f32 0.0, %v1347
  %v1349 = vpop.f32.mrb[0].mxu0
  %v1350 = vadd.f32 0.0, %v1349
  %v1351 = vpop.f32.mrb[0].mxu0
  %v1352 = vadd.f32 0.0, %v1351
  %1353 = vdwg.mxu0
  %v1354 = vadd.f32 %v731, %v1260
  %v1355 = vadd.f32 %v732, %v1262
  %v1356 = vadd.f32 %v733, %v1303
  %v1357 = vadd.f32 %v734, %v1305
  %v1358 = vadd.f32 %v737, %v1264
  %v1359 = vadd.f32 %v738, %v1266
  %v1360 = vadd.f32 %v739, %v1307
  %v1361 = vadd.f32 %v740, %v1309
  %v1362 = vxor.u32 %v1354, 2147483648
  %v1363 = vxor.u32 %v1355, 2147483648
  %v1364 = vxor.u32 %v1356, 2147483648
  %v1365 = vxor.u32 %v1357, 2147483648
  %v1366 = vxor.u32 %v1358, 2147483648
  %v1367 = vxor.u32 %v1359, 2147483648
  %v1368 = vxor.u32 %v1360, 2147483648
  %v1369 = vxor.u32 %v1361, 2147483648
  %v1370 = vmul.f32 %v1362, 1.442695
  %v1371 = vpow.pop %v1370
  %v1372 = vmul.f32 %v1363, 1.442695
  %v1373 = vpow.pop %v1372
  %v1374 = vmul.f32 %v1364, 1.442695
  %v1375 = vpow.pop %v1374
  %v1376 = vmul.f32 %v1365, 1.442695
  %v1377 = vpow.pop %v1376
  %v1378 = vmul.f32 %v1366, 1.442695
  %v1379 = vpow.pop %v1378
  %v1380 = vmul.f32 %v1367, 1.442695
  %v1381 = vpow.pop %v1380
  %v1382 = vmul.f32 %v1368, 1.442695
  %v1383 = vpow.pop %v1382
  %v1384 = vmul.f32 %v1369, 1.442695
  %v1385 = vpow.pop %v1384
  %v1386 = vadd.f32 %v1371, 1.0
  %v1387 = vadd.f32 %v1373, 1.0
  %v1388 = vadd.f32 %v1375, 1.0
  %v1389 = vadd.f32 %v1377, 1.0
  %v1390 = vadd.f32 %v1379, 1.0
  %v1391 = vadd.f32 %v1381, 1.0
  %v1392 = vadd.f32 %v1383, 1.0
  %v1393 = vadd.f32 %v1385, 1.0
  %v1394 = vrcp.pop %v1386
  %v1395 = vmul.f32 1.0, %v1394
  %v1396 = vrcp.pop %v1387
  %v1397 = vmul.f32 1.0, %v1396
  %v1398 = vrcp.pop %v1388
  %v1399 = vmul.f32 1.0, %v1398
  %v1400 = vrcp.pop %v1389
  %v1401 = vmul.f32 1.0, %v1400
  %v1402 = vrcp.pop %v1390
  %v1403 = vmul.f32 1.0, %v1402
  %v1404 = vrcp.pop %v1391
  %v1405 = vmul.f32 1.0, %v1404
  %v1406 = vrcp.pop %v1392
  %v1407 = vmul.f32 1.0, %v1406
  %v1408 = vrcp.pop %v1393
  %v1409 = vmul.f32 1.0, %v1408
  %v1410 = vadd.f32 %v1346, %v711
  %v1411 = vadd.f32 %v1348, %v715
  %v1412 = vadd.f32 %v1350, %v711
  %v1413 = vadd.f32 %v1352, %v715
  %v1414 = vmul.f32 %v1395, %v1410
  %v1415 = vmul.f32 %v1397, %v1411
  %v1416 = vmul.f32 %v1403, %v1412
  %v1417 = vmul.f32 %v1405, %v1413
  %v1418 = vadd.f32 %v735, %v1414
  %v1419 = vadd.f32 %v736, %v1415
  %v1420 = vadd.f32 %v741, %v1416
  %v1421 = vadd.f32 %v742, %v1417
  %v1422 = vtanh.pop %v1418
  %v1423 = vtanh.pop %v1419
  %v1424 = vtanh.pop %v1420
  %v1425 = vtanh.pop %v1421
  %v1426 = vsub.f32 1.0, %v1399
  %v1427 = vsub.f32 1.0, %v1401
  %v1428 = vsub.f32 1.0, %v1407
  %v1429 = vsub.f32 1.0, %v1409
  %v1430 = vmul.f32 %v1426, %v1422
  %v1431 = vmul.f32 %v1427, %v1423
  %v1432 = vmul.f32 %v1428, %v1424
  %v1433 = vmul.f32 %v1429, %v1425
  %v1434 = vmul.f32 %v1399, %v718
  %v1435 = vmul.f32 %v1401, %v719
  %v1436 = vmul.f32 %v1407, %v720
  %v1437 = vmul.f32 %v1409, %v721
  %v1438 = vadd.f32 %v1430, %v1434
  %v1439 = vadd.f32 %v1431, %v1435
  %v1440 = vadd.f32 %v1432, %v1436
  %v1441 = vadd.f32 %v1433, %v1437
  %v1442 = vpack.c.bf16 %v1440, %v1438
  %v1443 = vpack.c.bf16 %v1441, %v1439
  %v1446 = vunpack.c.l.b16 %v1442
  %v1447 = vunpack.c.l.b16 %v1443
  %v1448 = vunpack.c.h.b16 %v1442
  %v1449 = vunpack.c.h.b16 %v1443
  %v1450 = vpack.c.b16 %v1447, %v1446
  %v1451 = vpack.c.b16 %v1449, %v1448
  %s1454 = smul.u32 0, 2
  %s1455 = smul.addr %s1454, 4
  %s1456 = scalar_lea.vmem %s6, %s1455
  %1457 = vst [vmem:[%s1456] sm:$0xff] %v1450
  %1458 = vst [vmem:[%s1456 + $0x8] sm:$0xff] %v1451
  %s1459 = smul.u32 1, 6
  %s1460 = smul.addr %s1459, 8
  %s1461 = scalar_lea.vmem [#allocation2], %s1460
  %v1462 = vld [vmem:[%s1461] sm:$0xff]
  %v1463 = vld [vmem:[%s1461 + $0x8] sm:$0xff]
  %v1464 = vld [vmem:[%s1461 + $0x10] sm:$0xff]
  %v1465 = vld [vmem:[%s1461 + $0x18] sm:$0xff]
  %v1466 = vld [vmem:[%s1461 + $0x20] sm:$0xff]
  %v1467 = vld [vmem:[%s1461 + $0x28] sm:$0xff]
  %v1468 = vunpack.c.l.bf16 %v1462
  %v1469 = vunpack.c.l.bf16 %v1463
  %v1470 = vunpack.c.l.bf16 %v1464
  %v1471 = vunpack.c.l.bf16 %v1465
  %v1472 = vunpack.c.l.bf16 %v1466
  %v1473 = vunpack.c.l.bf16 %v1467
  %v1474 = vunpack.c.h.bf16 %v1462
  %v1475 = vunpack.c.h.bf16 %v1463
  %v1476 = vunpack.c.h.bf16 %v1464
  %v1477 = vunpack.c.h.bf16 %v1465
  %v1478 = vunpack.c.h.bf16 %v1466
  %v1479 = vunpack.c.h.bf16 %v1467
  %1480 = vmatprep.subr.bf16.mxu0 %v1034
  %1481 = vmatpush1.bf16.msra.mxu0 %v1033
  %1482 = vmatprep.subr.bf16.mxu0 %v1040
  %1483 = vmatpush1.bf16.msra.mxu0 %v1039
  %1484 = vmatprep.subr.bf16.mxu0 %v1046
  %1485 = vmatpush1.bf16.msra.mxu0 %v1045
  %1486 = vmatprep.subr.bf16.mxu0 %v1052
  %1487 = vmatpush1.bf16.msra.mxu0 %v1051
  %1488 = vmatprep.subr.bf16.mxu0 %v1058
  %1489 = vmatpush1.bf16.msra.mxu0 %v1057
  %1490 = vmatprep.subr.bf16.mxu0 %v1064
  %1491 = vmatpush1.bf16.msra.mxu0 %v1063
  %1492 = vmatprep.subr.bf16.mxu0 %v1070
  %1493 = vmatpush1.bf16.msra.mxu0 %v1069
  %1494 = vmatprep.subr.bf16.mxu0 %v1076
  %1495 = vmatpush1.bf16.msra.mxu0 %v1075
  %1496 = vmatprep.subr.bf16.mxu0 %v1082
  %1497 = vmatpush1.bf16.msra.mxu0 %v1081
  %1498 = vmatprep.subr.bf16.mxu0 %v1088
  %1499 = vmatpush1.bf16.msra.mxu0 %v1087
  %1500 = vmatprep.subr.bf16.mxu0 %v1094
  %1501 = vmatpush1.bf16.msra.mxu0 %v1093
  %1502 = vmatprep.subr.bf16.mxu0 %v1100
  %1503 = vmatpush1.bf16.msra.mxu0 %v1099
  %1504 = vmatprep.subr.bf16.mxu0 %v1106
  %1505 = vmatpush1.bf16.msra.mxu0 %v1105
  %1506 = vmatprep.subr.bf16.mxu0 %v1112
  %1507 = vmatpush1.bf16.msra.mxu0 %v1111
  %1508 = vmatprep.subr.bf16.mxu0 %v1118
  %1509 = vmatpush1.bf16.msra.mxu0 %v1117
  %1510 = vmatprep.subr.bf16.mxu0 %v1124
  %1511 = vmatpush1.bf16.msra.mxu0 %v1123
  %1512 = vmatprep.mubr.bf16.mxu0 %v1443
  %1513 = vmatmul.mubr.bf16.gmra.mrb[0].mxu0 %v1442
  %v1514 = vpop.f32.mrb[0].mxu0
  %v1515 = vadd.f32 0.0, %v1514
  %v1516 = vpop.f32.mrb[0].mxu0
  %v1517 = vadd.f32 0.0, %v1516
  %v1518 = vpop.f32.mrb[0].mxu0
  %v1519 = vadd.f32 0.0, %v1518
  %v1520 = vpop.f32.mrb[0].mxu0
  %v1521 = vadd.f32 0.0, %v1520
  %1522 = vdwg.mxu0
  %1523 = vmatprep.subr.bf16.mxu0 %v1036
  %1524 = vmatpush1.bf16.msra.mxu0 %v1035
  %1525 = vmatprep.subr.bf16.mxu0 %v1042
  %1526 = vmatpush1.bf16.msra.mxu0 %v1041
  %1527 = vmatprep.subr.bf16.mxu0 %v1048
  %1528 = vmatpush1.bf16.msra.mxu0 %v1047
  %1529 = vmatprep.subr.bf16.mxu0 %v1054
  %1530 = vmatpush1.bf16.msra.mxu0 %v1053
  %1531 = vmatprep.subr.bf16.mxu0 %v1060
  %1532 = vmatpush1.bf16.msra.mxu0 %v1059
  %1533 = vmatprep.subr.bf16.mxu0 %v1066
  %1534 = vmatpush1.bf16.msra.mxu0 %v1065
  %1535 = vmatprep.subr.bf16.mxu0 %v1072
  %1536 = vmatpush1.bf16.msra.mxu0 %v1071
  %1537 = vmatprep.subr.bf16.mxu0 %v1078
  %1538 = vmatpush1.bf16.msra.mxu0 %v1077
  %1539 = vmatprep.subr.bf16.mxu0 %v1084
  %1540 = vmatpush1.bf16.msra.mxu0 %v1083
  %1541 = vmatprep.subr.bf16.mxu0 %v1090
  %1542 = vmatpush1.bf16.msra.mxu0 %v1089
  %1543 = vmatprep.subr.bf16.mxu0 %v1096
  %1544 = vmatpush1.bf16.msra.mxu0 %v1095
  %1545 = vmatprep.subr.bf16.mxu0 %v1102
  %1546 = vmatpush1.bf16.msra.mxu0 %v1101
  %1547 = vmatprep.subr.bf16.mxu0 %v1108
  %1548 = vmatpush1.bf16.msra.mxu0 %v1107
  %1549 = vmatprep.subr.bf16.mxu0 %v1114
  %1550 = vmatpush1.bf16.msra.mxu0 %v1113
  %1551 = vmatprep.subr.bf16.mxu0 %v1120
  %1552 = vmatpush1.bf16.msra.mxu0 %v1119
  %1553 = vmatprep.subr.bf16.mxu0 %v1126
  %1554 = vmatpush1.bf16.msra.mxu0 %v1125
  %1555 = vmatprep.mubr.bf16.mxu0 %v1443
  %1556 = vmatmul.mubr.bf16.gmra.mrb[0].mxu0 %v1442
  %v1557 = vpop.f32.mrb[0].mxu0
  %v1558 = vadd.f32 0.0, %v1557
  %v1559 = vpop.f32.mrb[0].mxu0
  %v1560 = vadd.f32 0.0, %v1559
  %v1561 = vpop.f32.mrb[0].mxu0
  %v1562 = vadd.f32 0.0, %v1561
  %v1563 = vpop.f32.mrb[0].mxu0
  %v1564 = vadd.f32 0.0, %v1563
  %1565 = vdwg.mxu0
  %1566 = vmatprep.subr.bf16.mxu0 %v1038
  %1567 = vmatpush1.bf16.msra.mxu0 %v1037
  %1568 = vmatprep.subr.bf16.mxu0 %v1044
  %1569 = vmatpush1.bf16.msra.mxu0 %v1043
  %1570 = vmatprep.subr.bf16.mxu0 %v1050
  %1571 = vmatpush1.bf16.msra.mxu0 %v1049
  %1572 = vmatprep.subr.bf16.mxu0 %v1056
  %1573 = vmatpush1.bf16.msra.mxu0 %v1055
  %1574 = vmatprep.subr.bf16.mxu0 %v1062
  %1575 = vmatpush1.bf16.msra.mxu0 %v1061
  %1576 = vmatprep.subr.bf16.mxu0 %v1068
  %1577 = vmatpush1.bf16.msra.mxu0 %v1067
  %1578 = vmatprep.subr.bf16.mxu0 %v1074
  %1579 = vmatpush1.bf16.msra.mxu0 %v1073
  %1580 = vmatprep.subr.bf16.mxu0 %v1080
  %1581 = vmatpush1.bf16.msra.mxu0 %v1079
  %1582 = vmatprep.subr.bf16.mxu0 %v1086
  %1583 = vmatpush1.bf16.msra.mxu0 %v1085
  %1584 = vmatprep.subr.bf16.mxu0 %v1092
  %1585 = vmatpush1.bf16.msra.mxu0 %v1091
  %1586 = vmatprep.subr.bf16.mxu0 %v1098
  %1587 = vmatpush1.bf16.msra.mxu0 %v1097
  %1588 = vmatprep.subr.bf16.mxu0 %v1104
  %1589 = vmatpush1.bf16.msra.mxu0 %v1103
  %1590 = vmatprep.subr.bf16.mxu0 %v1110
  %1591 = vmatpush1.bf16.msra.mxu0 %v1109
  %1592 = vmatprep.subr.bf16.mxu0 %v1116
  %1593 = vmatpush1.bf16.msra.mxu0 %v1115
  %1594 = vmatprep.subr.bf16.mxu0 %v1122
  %1595 = vmatpush1.bf16.msra.mxu0 %v1121
  %1596 = vmatprep.subr.bf16.mxu0 %v1128
  %1597 = vmatpush1.bf16.msra.mxu0 %v1127
  %1598 = vmatprep.mubr.bf16.mxu0 %v1443
  %1599 = vmatmul.mubr.bf16.gmra.mrb[0].mxu0 %v1442
  %v1600 = vpop.f32.mrb[0].mxu0
  %v1601 = vadd.f32 0.0, %v1600
  %v1602 = vpop.f32.mrb[0].mxu0
  %v1603 = vadd.f32 0.0, %v1602
  %v1604 = vpop.f32.mrb[0].mxu0
  %v1605 = vadd.f32 0.0, %v1604
  %v1606 = vpop.f32.mrb[0].mxu0
  %v1607 = vadd.f32 0.0, %v1606
  %1608 = vdwg.mxu0
  %v1609 = vadd.f32 %v1468, %v1515
  %v1610 = vadd.f32 %v1469, %v1517
  %v1611 = vadd.f32 %v1470, %v1558
  %v1612 = vadd.f32 %v1471, %v1560
  %v1613 = vadd.f32 %v1474, %v1519
  %v1614 = vadd.f32 %v1475, %v1521
  %v1615 = vadd.f32 %v1476, %v1562
  %v1616 = vadd.f32 %v1477, %v1564
  %v1617 = vxor.u32 %v1609, 2147483648
  %v1618 = vxor.u32 %v1610, 2147483648
  %v1619 = vxor.u32 %v1611, 2147483648
  %v1620 = vxor.u32 %v1612, 2147483648
  %v1621 = vxor.u32 %v1613, 2147483648
  %v1622 = vxor.u32 %v1614, 2147483648
  %v1623 = vxor.u32 %v1615, 2147483648
  %v1624 = vxor.u32 %v1616, 2147483648
  %v1625 = vmul.f32 %v1617, 1.442695
  %v1626 = vpow.pop %v1625
  %v1627 = vmul.f32 %v1618, 1.442695
  %v1628 = vpow.pop %v1627
  %v1629 = vmul.f32 %v1619, 1.442695
  %v1630 = vpow.pop %v1629
  %v1631 = vmul.f32 %v1620, 1.442695
  %v1632 = vpow.pop %v1631
  %v1633 = vmul.f32 %v1621, 1.442695
  %v1634 = vpow.pop %v1633
  %v1635 = vmul.f32 %v1622, 1.442695
  %v1636 = vpow.pop %v1635
  %v1637 = vmul.f32 %v1623, 1.442695
  %v1638 = vpow.pop %v1637
  %v1639 = vmul.f32 %v1624, 1.442695
  %v1640 = vpow.pop %v1639
  %v1641 = vadd.f32 %v1626, 1.0
  %v1642 = vadd.f32 %v1628, 1.0
  %v1643 = vadd.f32 %v1630, 1.0
  %v1644 = vadd.f32 %v1632, 1.0
  %v1645 = vadd.f32 %v1634, 1.0
  %v1646 = vadd.f32 %v1636, 1.0
  %v1647 = vadd.f32 %v1638, 1.0
  %v1648 = vadd.f32 %v1640, 1.0
  %v1649 = vrcp.pop %v1641
  %v1650 = vmul.f32 1.0, %v1649
  %v1651 = vrcp.pop %v1642
  %v1652 = vmul.f32 1.0, %v1651
  %v1653 = vrcp.pop %v1643
  %v1654 = vmul.f32 1.0, %v1653
  %v1655 = vrcp.pop %v1644
  %v1656 = vmul.f32 1.0, %v1655
  %v1657 = vrcp.pop %v1645
  %v1658 = vmul.f32 1.0, %v1657
  %v1659 = vrcp.pop %v1646
  %v1660 = vmul.f32 1.0, %v1659
  %v1661 = vrcp.pop %v1647
  %v1662 = vmul.f32 1.0, %v1661
  %v1663 = vrcp.pop %v1648
  %v1664 = vmul.f32 1.0, %v1663
  %v1665 = vadd.f32 %v1601, %v711
  %v1666 = vadd.f32 %v1603, %v715
  %v1667 = vadd.f32 %v1605, %v711
  %v1668 = vadd.f32 %v1607, %v715
  %v1669 = vmul.f32 %v1650, %v1665
  %v1670 = vmul.f32 %v1652, %v1666
  %v1671 = vmul.f32 %v1658, %v1667
  %v1672 = vmul.f32 %v1660, %v1668
  %v1673 = vadd.f32 %v1472, %v1669
  %v1674 = vadd.f32 %v1473, %v1670
  %v1675 = vadd.f32 %v1478, %v1671
  %v1676 = vadd.f32 %v1479, %v1672
  %v1677 = vtanh.pop %v1673
  %v1678 = vtanh.pop %v1674
  %v1679 = vtanh.pop %v1675
  %v1680 = vtanh.pop %v1676
  %v1681 = vsub.f32 1.0, %v1654
  %v1682 = vsub.f32 1.0, %v1656
  %v1683 = vsub.f32 1.0, %v1662
  %v1684 = vsub.f32 1.0, %v1664
  %v1685 = vmul.f32 %v1681, %v1677
  %v1686 = vmul.f32 %v1682, %v1678
  %v1687 = vmul.f32 %v1683, %v1679
  %v1688 = vmul.f32 %v1684, %v1680
  %v1689 = vmul.f32 %v1654, %v1438
  %v1690 = vmul.f32 %v1656, %v1439
  %v1691 = vmul.f32 %v1662, %v1440
  %v1692 = vmul.f32 %v1664, %v1441
  %v1693 = vadd.f32 %v1685, %v1689
  %v1694 = vadd.f32 %v1686, %v1690
  %v1695 = vadd.f32 %v1687, %v1691
  %v1696 = vadd.f32 %v1688, %v1692
  %v1697 = vpack.c.bf16 %v1695, %v1693
  %v1698 = vpack.c.bf16 %v1696, %v1694
  %v1701 = vunpack.c.l.b16 %v1697
  %v1702 = vunpack.c.l.b16 %v1698
  %v1703 = vunpack.c.h.b16 %v1697
  %v1704 = vunpack.c.h.b16 %v1698
  %v1705 = vpack.c.b16 %v1702, %v1701
  %v1706 = vpack.c.b16 %v1704, %v1703
  %s1709 = smul.u32 2, 2
  %s1710 = smul.addr %s1709, 4
  %s1711 = scalar_lea.vmem %s6, %s1710
  %1712 = vst [vmem:[%s1711] sm:$0xff] %v1705
  %1713 = vst [vmem:[%s1711 + $0x8] sm:$0xff] %v1706
  %s1714 = smul.u32 2, 6
  %s1715 = smul.addr %s1714, 8
  %s1716 = scalar_lea.vmem [#allocation2], %s1715
  %v1717 = vld [vmem:[%s1716] sm:$0xff]
  %v1718 = vld [vmem:[%s1716 + $0x8] sm:$0xff]
  %v1719 = vld [vmem:[%s1716 + $0x10] sm:$0xff]
  %v1720 = vld [vmem:[%s1716 + $0x18] sm:$0xff]
  %v1721 = vld [vmem:[%s1716 + $0x20] sm:$0xff]
  %v1722 = vld [vmem:[%s1716 + $0x28] sm:$0xff]
  %v1723 = vunpack.c.l.bf16 %v1717
  %v1724 = vunpack.c.l.bf16 %v1718
  %v1725 = vunpack.c.l.bf16 %v1719
  %v1726 = vunpack.c.l.bf16 %v1720
  %v1727 = vunpack.c.l.bf16 %v1721
  %v1728 = vunpack.c.l.bf16 %v1722
  %v1729 = vunpack.c.h.bf16 %v1717
  %v1730 = vunpack.c.h.bf16 %v1718
  %v1731 = vunpack.c.h.bf16 %v1719
  %v1732 = vunpack.c.h.bf16 %v1720
  %v1733 = vunpack.c.h.bf16 %v1721
  %v1734 = vunpack.c.h.bf16 %v1722
  %1735 = vmatprep.subr.bf16.mxu0 %v1034
  %1736 = vmatpush1.bf16.msra.mxu0 %v1033
  %1737 = vmatprep.subr.bf16.mxu0 %v1040
  %1738 = vmatpush1.bf16.msra.mxu0 %v1039
  %1739 = vmatprep.subr.bf16.mxu0 %v1046
  %1740 = vmatpush1.bf16.msra.mxu0 %v1045
  %1741 = vmatprep.subr.bf16.mxu0 %v1052
  %1742 = vmatpush1.bf16.msra.mxu0 %v1051
  %1743 = vmatprep.subr.bf16.mxu0 %v1058
  %1744 = vmatpush1.bf16.msra.mxu0 %v1057
  %1745 = vmatprep.subr.bf16.mxu0 %v1064
  %1746 = vmatpush1.bf16.msra.mxu0 %v1063
  %1747 = vmatprep.subr.bf16.mxu0 %v1070
  %1748 = vmatpush1.bf16.msra.mxu0 %v1069
  %1749 = vmatprep.subr.bf16.mxu0 %v1076
  %1750 = vmatpush1.bf16.msra.mxu0 %v1075
  %1751 = vmatprep.subr.bf16.mxu0 %v1082
  %1752 = vmatpush1.bf16.msra.mxu0 %v1081
  %1753 = vmatprep.subr.bf16.mxu0 %v1088
  %1754 = vmatpush1.bf16.msra.mxu0 %v1087
  %1755 = vmatprep.subr.bf16.mxu0 %v1094
  %1756 = vmatpush1.bf16.msra.mxu0 %v1093
  %1757 = vmatprep.subr.bf16.mxu0 %v1100
  %1758 = vmatpush1.bf16.msra.mxu0 %v1099
  %1759 = vmatprep.subr.bf16.mxu0 %v1106
  %1760 = vmatpush1.bf16.msra.mxu0 %v1105
  %1761 = vmatprep.subr.bf16.mxu0 %v1112
  %1762 = vmatpush1.bf16.msra.mxu0 %v1111
  %1763 = vmatprep.subr.bf16.mxu0 %v1118
  %1764 = vmatpush1.bf16.msra.mxu0 %v1117
  %1765 = vmatprep.subr.bf16.mxu0 %v1124
  %1766 = vmatpush1.bf16.msra.mxu0 %v1123
  %1767 = vmatprep.mubr.bf16.mxu0 %v1698
  %1768 = vmatmul.mubr.bf16.gmra.mrb[0].mxu0 %v1697
  %v1769 = vpop.f32.mrb[0].mxu0
  %v1770 = vadd.f32 0.0, %v1769
  %v1771 = vpop.f32.mrb[0].mxu0
  %v1772 = vadd.f32 0.0, %v1771
  %v1773 = vpop.f32.mrb[0].mxu0
  %v1774 = vadd.f32 0.0, %v1773
  %v1775 = vpop.f32.mrb[0].mxu0
  %v1776 = vadd.f32 0.0, %v1775
  %1777 = vdwg.mxu0
  %1778 = vmatprep.subr.bf16.mxu0 %v1036
  %1779 = vmatpush1.bf16.msra.mxu0 %v1035
  %1780 = vmatprep.subr.bf16.mxu0 %v1042
  %1781 = vmatpush1.bf16.msra.mxu0 %v1041
  %1782 = vmatprep.subr.bf16.mxu0 %v1048
  %1783 = vmatpush1.bf16.msra.mxu0 %v1047
  %1784 = vmatprep.subr.bf16.mxu0 %v1054
  %1785 = vmatpush1.bf16.msra.mxu0 %v1053
  %1786 = vmatprep.subr.bf16.mxu0 %v1060
  %1787 = vmatpush1.bf16.msra.mxu0 %v1059
  %1788 = vmatprep.subr.bf16.mxu0 %v1066
  %1789 = vmatpush1.bf16.msra.mxu0 %v1065
  %1790 = vmatprep.subr.bf16.mxu0 %v1072
  %1791 = vmatpush1.bf16.msra.mxu0 %v1071
  %1792 = vmatprep.subr.bf16.mxu0 %v1078
  %1793 = vmatpush1.bf16.msra.mxu0 %v1077
  %1794 = vmatprep.subr.bf16.mxu0 %v1084
  %1795 = vmatpush1.bf16.msra.mxu0 %v1083
  %1796 = vmatprep.subr.bf16.mxu0 %v1090
  %1797 = vmatpush1.bf16.msra.mxu0 %v1089
  %1798 = vmatprep.subr.bf16.mxu0 %v1096
  %1799 = vmatpush1.bf16.msra.mxu0 %v1095
  %1800 = vmatprep.subr.bf16.mxu0 %v1102
  %1801 = vmatpush1.bf16.msra.mxu0 %v1101
  %1802 = vmatprep.subr.bf16.mxu0 %v1108
  %1803 = vmatpush1.bf16.msra.mxu0 %v1107
  %1804 = vmatprep.subr.bf16.mxu0 %v1114
  %1805 = vmatpush1.bf16.msra.mxu0 %v1113
  %1806 = vmatprep.subr.bf16.mxu0 %v1120
  %1807 = vmatpush1.bf16.msra.mxu0 %v1119
  %1808 = vmatprep.subr.bf16.mxu0 %v1126
  %1809 = vmatpush1.bf16.msra.mxu0 %v1125
  %1810 = vmatprep.mubr.bf16.mxu0 %v1698
  %1811 = vmatmul.mubr.bf16.gmra.mrb[0].mxu0 %v1697
  %v1812 = vpop.f32.mrb[0].mxu0
  %v1813 = vadd.f32 0.0, %v1812
  %v1814 = vpop.f32.mrb[0].mxu0
  %v1815 = vadd.f32 0.0, %v1814
  %v1816 = vpop.f32.mrb[0].mxu0
  %v1817 = vadd.f32 0.0, %v1816
  %v1818 = vpop.f32.mrb[0].mxu0
  %v1819 = vadd.f32 0.0, %v1818
  %1820 = vdwg.mxu0
  %1821 = vmatprep.subr.bf16.mxu0 %v1038
  %1822 = vmatpush1.bf16.msra.mxu0 %v1037
  %1823 = vmatprep.subr.bf16.mxu0 %v1044
  %1824 = vmatpush1.bf16.msra.mxu0 %v1043
  %1825 = vmatprep.subr.bf16.mxu0 %v1050
  %1826 = vmatpush1.bf16.msra.mxu0 %v1049
  %1827 = vmatprep.subr.bf16.mxu0 %v1056
  %1828 = vmatpush1.bf16.msra.mxu0 %v1055
  %1829 = vmatprep.subr.bf16.mxu0 %v1062
  %1830 = vmatpush1.bf16.msra.mxu0 %v1061
  %1831 = vmatprep.subr.bf16.mxu0 %v1068
  %1832 = vmatpush1.bf16.msra.mxu0 %v1067
  %1833 = vmatprep.subr.bf16.mxu0 %v1074
  %1834 = vmatpush1.bf16.msra.mxu0 %v1073
  %1835 = vmatprep.subr.bf16.mxu0 %v1080
  %1836 = vmatpush1.bf16.msra.mxu0 %v1079
  %1837 = vmatprep.subr.bf16.mxu0 %v1086
  %1838 = vmatpush1.bf16.msra.mxu0 %v1085
  %1839 = vmatprep.subr.bf16.mxu0 %v1092
  %1840 = vmatpush1.bf16.msra.mxu0 %v1091
  %1841 = vmatprep.subr.bf16.mxu0 %v1098
  %1842 = vmatpush1.bf16.msra.mxu0 %v1097
  %1843 = vmatprep.subr.bf16.mxu0 %v1104
  %1844 = vmatpush1.bf16.msra.mxu0 %v1103
  %1845 = vmatprep.subr.bf16.mxu0 %v1110
  %1846 = vmatpush1.bf16.msra.mxu0 %v1109
  %1847 = vmatprep.subr.bf16.mxu0 %v1116
  %1848 = vmatpush1.bf16.msra.mxu0 %v1115
  %1849 = vmatprep.subr.bf16.mxu0 %v1122
  %1850 = vmatpush1.bf16.msra.mxu0 %v1121
  %1851 = vmatprep.subr.bf16.mxu0 %v1128
  %1852 = vmatpush1.bf16.msra.mxu0 %v1127
  %1853 = vmatprep.mubr.bf16.mxu0 %v1698
  %1854 = vmatmul.mubr.bf16.gmra.mrb[0].mxu0 %v1697
  %v1855 = vpop.f32.mrb[0].mxu0
  %v1856 = vadd.f32 0.0, %v1855
  %v1857 = vpop.f32.mrb[0].mxu0
  %v1858 = vadd.f32 0.0, %v1857
  %v1859 = vpop.f32.mrb[0].mxu0
  %v1860 = vadd.f32 0.0, %v1859
  %v1861 = vpop.f32.mrb[0].mxu0
  %v1862 = vadd.f32 0.0, %v1861
  %1863 = vdwg.mxu0
  %v1864 = vadd.f32 %v1723, %v1770
  %v1865 = vadd.f32 %v1724, %v1772
  %v1866 = vadd.f32 %v1725, %v1813
  %v1867 = vadd.f32 %v1726, %v1815
  %v1868 = vadd.f32 %v1729, %v1774
  %v1869 = vadd.f32 %v1730, %v1776
  %v1870 = vadd.f32 %v1731, %v1817
  %v1871 = vadd.f32 %v1732, %v1819
  %v1872 = vxor.u32 %v1864, 2147483648
  %v1873 = vxor.u32 %v1865, 2147483648
  %v1874 = vxor.u32 %v1866, 2147483648
  %v1875 = vxor.u32 %v1867, 2147483648
  %v1876 = vxor.u32 %v1868, 2147483648
  %v1877 = vxor.u32 %v1869, 2147483648
  %v1878 = vxor.u32 %v1870, 2147483648
  %v1879 = vxor.u32 %v1871, 2147483648
  %v1880 = vmul.f32 %v1872, 1.442695
  %v1881 = vpow.pop %v1880
  %v1882 = vmul.f32 %v1873, 1.442695
  %v1883 = vpow.pop %v1882
  %v1884 = vmul.f32 %v1874, 1.442695
  %v1885 = vpow.pop %v1884
  %v1886 = vmul.f32 %v1875, 1.442695
  %v1887 = vpow.pop %v1886
  %v1888 = vmul.f32 %v1876, 1.442695
  %v1889 = vpow.pop %v1888
  %v1890 = vmul.f32 %v1877, 1.442695
  %v1891 = vpow.pop %v1890
  %v1892 = vmul.f32 %v1878, 1.442695
  %v1893 = vpow.pop %v1892
  %v1894 = vmul.f32 %v1879, 1.442695
  %v1895 = vpow.pop %v1894
  %v1896 = vadd.f32 %v1881, 1.0
  %v1897 = vadd.f32 %v1883, 1.0
  %v1898 = vadd.f32 %v1885, 1.0
  %v1899 = vadd.f32 %v1887, 1.0
  %v1900 = vadd.f32 %v1889, 1.0
  %v1901 = vadd.f32 %v1891, 1.0
  %v1902 = vadd.f32 %v1893, 1.0
  %v1903 = vadd.f32 %v1895, 1.0
  %v1904 = vrcp.pop %v1896
  %v1905 = vmul.f32 1.0, %v1904
  %v1906 = vrcp.pop %v1897
  %v1907 = vmul.f32 1.0, %v1906
  %v1908 = vrcp.pop %v1898
  %v1909 = vmul.f32 1.0, %v1908
  %v1910 = vrcp.pop %v1899
  %v1911 = vmul.f32 1.0, %v1910
  %v1912 = vrcp.pop %v1900
  %v1913 = vmul.f32 1.0, %v1912
  %v1914 = vrcp.pop %v1901
  %v1915 = vmul.f32 1.0, %v1914
  %v1916 = vrcp.pop %v1902
  %v1917 = vmul.f32 1.0, %v1916
  %v1918 = vrcp.pop %v1903
  %v1919 = vmul.f32 1.0, %v1918
  %v1920 = vadd.f32 %v1856, %v711
  %v1921 = vadd.f32 %v1858, %v715
  %v1922 = vadd.f32 %v1860, %v711
  %v1923 = vadd.f32 %v1862, %v715
  %v1924 = vmul.f32 %v1905, %v1920
  %v1925 = vmul.f32 %v1907, %v1921
  %v1926 = vmul.f32 %v1913, %v1922
  %v1927 = vmul.f32 %v1915, %v1923
  %v1928 = vadd.f32 %v1727, %v1924
  %v1929 = vadd.f32 %v1728, %v1925
  %v1930 = vadd.f32 %v1733, %v1926
  %v1931 = vadd.f32 %v1734, %v1927
  %v1932 = vtanh.pop %v1928
  %v1933 = vtanh.pop %v1929
  %v1934 = vtanh.pop %v1930
  %v1935 = vtanh.pop %v1931
  %v1936 = vsub.f32 1.0, %v1909
  %v1937 = vsub.f32 1.0, %v1911
  %v1938 = vsub.f32 1.0, %v1917
  %v1939 = vsub.f32 1.0, %v1919
  %v1940 = vmul.f32 %v1936, %v1932
  %v1941 = vmul.f32 %v1937, %v1933
  %v1942 = vmul.f32 %v1938, %v1934
  %v1943 = vmul.f32 %v1939, %v1935
  %v1944 = vmul.f32 %v1909, %v1693
  %v1945 = vmul.f32 %v1911, %v1694
  %v1946 = vmul.f32 %v1917, %v1695
  %v1947 = vmul.f32 %v1919, %v1696
  %v1948 = vadd.f32 %v1940, %v1944
  %v1949 = vadd.f32 %v1941, %v1945
  %v1950 = vadd.f32 %v1942, %v1946
  %v1951 = vadd.f32 %v1943, %v1947
  %v1952 = vpack.c.bf16 %v1950, %v1948
  %v1953 = vpack.c.bf16 %v1951, %v1949
  %v1956 = vunpack.c.l.b16 %v1952
  %v1957 = vunpack.c.l.b16 %v1953
  %v1958 = vunpack.c.h.b16 %v1952
  %v1959 = vunpack.c.h.b16 %v1953
  %v1960 = vpack.c.b16 %v1957, %v1956
  %v1961 = vpack.c.b16 %v1959, %v1958
  %s1964 = smul.u32 4, 2
  %s1965 = smul.addr %s1964, 4
  %s1966 = scalar_lea.vmem %s6, %s1965
  %1967 = vst [vmem:[%s1966] sm:$0xff] %v1960
  %1968 = vst [vmem:[%s1966 + $0x8] sm:$0xff] %v1961
  %s1969 = smul.u32 3, 6
  %s1970 = smul.addr %s1969, 8
  %s1971 = scalar_lea.vmem [#allocation2], %s1970
  %v1972 = vld [vmem:[%s1971] sm:$0xff]
  %v1973 = vld [vmem:[%s1971 + $0x8] sm:$0xff]
  %v1974 = vld [vmem:[%s1971 + $0x10] sm:$0xff]
  %v1975 = vld [vmem:[%s1971 + $0x18] sm:$0xff]
  %v1976 = vld [vmem:[%s1971 + $0x20] sm:$0xff]
  %v1977 = vld [vmem:[%s1971 + $0x28] sm:$0xff]
  %v1978 = vunpack.c.l.bf16 %v1972
  %v1979 = vunpack.c.l.bf16 %v1973
  %v1980 = vunpack.c.l.bf16 %v1974
  %v1981 = vunpack.c.l.bf16 %v1975
  %v1982 = vunpack.c.l.bf16 %v1976
  %v1983 = vunpack.c.l.bf16 %v1977
  %v1984 = vunpack.c.h.bf16 %v1972
  %v1985 = vunpack.c.h.bf16 %v1973
  %v1986 = vunpack.c.h.bf16 %v1974
  %v1987 = vunpack.c.h.bf16 %v1975
  %v1988 = vunpack.c.h.bf16 %v1976
  %v1989 = vunpack.c.h.bf16 %v1977
  %1990 = vmatprep.subr.bf16.mxu0 %v1034
  %1991 = vmatpush1.bf16.msra.mxu0 %v1033
  %1992 = vmatprep.subr.bf16.mxu0 %v1040
  %1993 = vmatpush1.bf16.msra.mxu0 %v1039
  %1994 = vmatprep.subr.bf16.mxu0 %v1046
  %1995 = vmatpush1.bf16.msra.mxu0 %v1045
  %1996 = vmatprep.subr.bf16.mxu0 %v1052
  %1997 = vmatpush1.bf16.msra.mxu0 %v1051
  %1998 = vmatprep.subr.bf16.mxu0 %v1058
  %1999 = vmatpush1.bf16.msra.mxu0 %v1057
  %2000 = vmatprep.subr.bf16.mxu0 %v1064
  %2001 = vmatpush1.bf16.msra.mxu0 %v1063
  %2002 = vmatprep.subr.bf16.mxu0 %v1070
  %2003 = vmatpush1.bf16.msra.mxu0 %v1069
  %2004 = vmatprep.subr.bf16.mxu0 %v1076
  %2005 = vmatpush1.bf16.msra.mxu0 %v1075
  %2006 = vmatprep.subr.bf16.mxu0 %v1082
  %2007 = vmatpush1.bf16.msra.mxu0 %v1081
  %2008 = vmatprep.subr.bf16.mxu0 %v1088
  %2009 = vmatpush1.bf16.msra.mxu0 %v1087
  %2010 = vmatprep.subr.bf16.mxu0 %v1094
  %2011 = vmatpush1.bf16.msra.mxu0 %v1093
  %2012 = vmatprep.subr.bf16.mxu0 %v1100
  %2013 = vmatpush1.bf16.msra.mxu0 %v1099
  %2014 = vmatprep.subr.bf16.mxu0 %v1106
  %2015 = vmatpush1.bf16.msra.mxu0 %v1105
  %2016 = vmatprep.subr.bf16.mxu0 %v1112
  %2017 = vmatpush1.bf16.msra.mxu0 %v1111
  %2018 = vmatprep.subr.bf16.mxu0 %v1118
  %2019 = vmatpush1.bf16.msra.mxu0 %v1117
  %2020 = vmatprep.subr.bf16.mxu0 %v1124
  %2021 = vmatpush1.bf16.msra.mxu0 %v1123
  %2022 = vmatprep.mubr.bf16.mxu0 %v1953
  %2023 = vmatmul.mubr.bf16.gmra.mrb[0].mxu0 %v1952
  %v2024 = vpop.f32.mrb[0].mxu0
  %v2025 = vadd.f32 0.0, %v2024
  %v2026 = vpop.f32.mrb[0].mxu0
  %v2027 = vadd.f32 0.0, %v2026
  %v2028 = vpop.f32.mrb[0].mxu0
  %v2029 = vadd.f32 0.0, %v2028
  %v2030 = vpop.f32.mrb[0].mxu0
  %v2031 = vadd.f32 0.0, %v2030
  %2032 = vdwg.mxu0
  %2033 = vmatprep.subr.bf16.mxu0 %v1036
  %2034 = vmatpush1.bf16.msra.mxu0 %v1035
  %2035 = vmatprep.subr.bf16.mxu0 %v1042
  %2036 = vmatpush1.bf16.msra.mxu0 %v1041
  %2037 = vmatprep.subr.bf16.mxu0 %v1048
  %2038 = vmatpush1.bf16.msra.mxu0 %v1047
  %2039 = vmatprep.subr.bf16.mxu0 %v1054
  %2040 = vmatpush1.bf16.msra.mxu0 %v1053
  %2041 = vmatprep.subr.bf16.mxu0 %v1060
  %2042 = vmatpush1.bf16.msra.mxu0 %v1059
  %2043 = vmatprep.subr.bf16.mxu0 %v1066
  %2044 = vmatpush1.bf16.msra.mxu0 %v1065
  %2045 = vmatprep.subr.bf16.mxu0 %v1072
  %2046 = vmatpush1.bf16.msra.mxu0 %v1071
  %2047 = vmatprep.subr.bf16.mxu0 %v1078
  %2048 = vmatpush1.bf16.msra.mxu0 %v1077
  %2049 = vmatprep.subr.bf16.mxu0 %v1084
  %2050 = vmatpush1.bf16.msra.mxu0 %v1083
  %2051 = vmatprep.subr.bf16.mxu0 %v1090
  %2052 = vmatpush1.bf16.msra.mxu0 %v1089
  %2053 = vmatprep.subr.bf16.mxu0 %v1096
  %2054 = vmatpush1.bf16.msra.mxu0 %v1095
  %2055 = vmatprep.subr.bf16.mxu0 %v1102
  %2056 = vmatpush1.bf16.msra.mxu0 %v1101
  %2057 = vmatprep.subr.bf16.mxu0 %v1108
  %2058 = vmatpush1.bf16.msra.mxu0 %v1107
  %2059 = vmatprep.subr.bf16.mxu0 %v1114
  %2060 = vmatpush1.bf16.msra.mxu0 %v1113
  %2061 = vmatprep.subr.bf16.mxu0 %v1120
  %2062 = vmatpush1.bf16.msra.mxu0 %v1119
  %2063 = vmatprep.subr.bf16.mxu0 %v1126
  %2064 = vmatpush1.bf16.msra.mxu0 %v1125
  %2065 = vmatprep.mubr.bf16.mxu0 %v1953
  %2066 = vmatmul.mubr.bf16.gmra.mrb[0].mxu0 %v1952
  %v2067 = vpop.f32.mrb[0].mxu0
  %v2068 = vadd.f32 0.0, %v2067
  %v2069 = vpop.f32.mrb[0].mxu0
  %v2070 = vadd.f32 0.0, %v2069
  %v2071 = vpop.f32.mrb[0].mxu0
  %v2072 = vadd.f32 0.0, %v2071
  %v2073 = vpop.f32.mrb[0].mxu0
  %v2074 = vadd.f32 0.0, %v2073
  %2075 = vdwg.mxu0
  %2076 = vmatprep.subr.bf16.mxu0 %v1038
  %2077 = vmatpush1.bf16.msra.mxu0 %v1037
  %2078 = vmatprep.subr.bf16.mxu0 %v1044
  %2079 = vmatpush1.bf16.msra.mxu0 %v1043
  %2080 = vmatprep.subr.bf16.mxu0 %v1050
  %2081 = vmatpush1.bf16.msra.mxu0 %v1049
  %2082 = vmatprep.subr.bf16.mxu0 %v1056
  %2083 = vmatpush1.bf16.msra.mxu0 %v1055
  %2084 = vmatprep.subr.bf16.mxu0 %v1062
  %2085 = vmatpush1.bf16.msra.mxu0 %v1061
  %2086 = vmatprep.subr.bf16.mxu0 %v1068
  %2087 = vmatpush1.bf16.msra.mxu0 %v1067
  %2088 = vmatprep.subr.bf16.mxu0 %v1074
  %2089 = vmatpush1.bf16.msra.mxu0 %v1073
  %2090 = vmatprep.subr.bf16.mxu0 %v1080
  %2091 = vmatpush1.bf16.msra.mxu0 %v1079
  %2092 = vmatprep.subr.bf16.mxu0 %v1086
  %2093 = vmatpush1.bf16.msra.mxu0 %v1085
  %2094 = vmatprep.subr.bf16.mxu0 %v1092
  %2095 = vmatpush1.bf16.msra.mxu0 %v1091
  %2096 = vmatprep.subr.bf16.mxu0 %v1098
  %2097 = vmatpush1.bf16.msra.mxu0 %v1097
  %2098 = vmatprep.subr.bf16.mxu0 %v1104
  %2099 = vmatpush1.bf16.msra.mxu0 %v1103
  %2100 = vmatprep.subr.bf16.mxu0 %v1110
  %2101 = vmatpush1.bf16.msra.mxu0 %v1109
  %2102 = vmatprep.subr.bf16.mxu0 %v1116
  %2103 = vmatpush1.bf16.msra.mxu0 %v1115
  %2104 = vmatprep.subr.bf16.mxu0 %v1122
  %2105 = vmatpush1.bf16.msra.mxu0 %v1121
  %2106 = vmatprep.subr.bf16.mxu0 %v1128
  %2107 = vmatpush1.bf16.msra.mxu0 %v1127
  %2108 = vmatprep.mubr.bf16.mxu0 %v1953
  %2109 = vmatmul.mubr.bf16.gmra.mrb[0].mxu0 %v1952
  %v2110 = vpop.f32.mrb[0].mxu0
  %v2111 = vadd.f32 0.0, %v2110
  %v2112 = vpop.f32.mrb[0].mxu0
  %v2113 = vadd.f32 0.0, %v2112
  %v2114 = vpop.f32.mrb[0].mxu0
  %v2115 = vadd.f32 0.0, %v2114
  %v2116 = vpop.f32.mrb[0].mxu0
  %v2117 = vadd.f32 0.0, %v2116
  %2118 = vdwg.mxu0
  %v2119 = vadd.f32 %v1978, %v2025
  %v2120 = vadd.f32 %v1979, %v2027
  %v2121 = vadd.f32 %v1980, %v2068
  %v2122 = vadd.f32 %v1981, %v2070
  %v2123 = vadd.f32 %v1984, %v2029
  %v2124 = vadd.f32 %v1985, %v2031
  %v2125 = vadd.f32 %v1986, %v2072
  %v2126 = vadd.f32 %v1987, %v2074
  %v2127 = vxor.u32 %v2119, 2147483648
  %v2128 = vxor.u32 %v2120, 2147483648
  %v2129 = vxor.u32 %v2121, 2147483648
  %v2130 = vxor.u32 %v2122, 2147483648
  %v2131 = vxor.u32 %v2123, 2147483648
  %v2132 = vxor.u32 %v2124, 2147483648
  %v2133 = vxor.u32 %v2125, 2147483648
  %v2134 = vxor.u32 %v2126, 2147483648
  %v2135 = vmul.f32 %v2127, 1.442695
  %v2136 = vpow.pop %v2135
  %v2137 = vmul.f32 %v2128, 1.442695
  %v2138 = vpow.pop %v2137
  %v2139 = vmul.f32 %v2129, 1.442695
  %v2140 = vpow.pop %v2139
  %v2141 = vmul.f32 %v2130, 1.442695
  %v2142 = vpow.pop %v2141
  %v2143 = vmul.f32 %v2131, 1.442695
  %v2144 = vpow.pop %v2143
  %v2145 = vmul.f32 %v2132, 1.442695
  %v2146 = vpow.pop %v2145
  %v2147 = vmul.f32 %v2133, 1.442695
  %v2148 = vpow.pop %v2147
  %v2149 = vmul.f32 %v2134, 1.442695
  %v2150 = vpow.pop %v2149
  %v2151 = vadd.f32 %v2136, 1.0
  %v2152 = vadd.f32 %v2138, 1.0
  %v2153 = vadd.f32 %v2140, 1.0
  %v2154 = vadd.f32 %v2142, 1.0
  %v2155 = vadd.f32 %v2144, 1.0
  %v2156 = vadd.f32 %v2146, 1.0
  %v2157 = vadd.f32 %v2148, 1.0
  %v2158 = vadd.f32 %v2150, 1.0
  %v2159 = vrcp.pop %v2151
  %v2160 = vmul.f32 1.0, %v2159
  %v2161 = vrcp.pop %v2152
  %v2162 = vmul.f32 1.0, %v2161
  %v2163 = vrcp.pop %v2153
  %v2164 = vmul.f32 1.0, %v2163
  %v2165 = vrcp.pop %v2154
  %v2166 = vmul.f32 1.0, %v2165
  %v2167 = vrcp.pop %v2155
  %v2168 = vmul.f32 1.0, %v2167
  %v2169 = vrcp.pop %v2156
  %v2170 = vmul.f32 1.0, %v2169
  %v2171 = vrcp.pop %v2157
  %v2172 = vmul.f32 1.0, %v2171
  %v2173 = vrcp.pop %v2158
  %v2174 = vmul.f32 1.0, %v2173
  %v2175 = vadd.f32 %v2111, %v711
  %v2176 = vadd.f32 %v2113, %v715
  %v2177 = vadd.f32 %v2115, %v711
  %v2178 = vadd.f32 %v2117, %v715
  %v2179 = vmul.f32 %v2160, %v2175
  %v2180 = vmul.f32 %v2162, %v2176
  %v2181 = vmul.f32 %v2168, %v2177
  %v2182 = vmul.f32 %v2170, %v2178
  %v2183 = vadd.f32 %v1982, %v2179
  %v2184 = vadd.f32 %v1983, %v2180
  %v2185 = vadd.f32 %v1988, %v2181
  %v2186 = vadd.f32 %v1989, %v2182
  %v2187 = vtanh.pop %v2183
  %v2188 = vtanh.pop %v2184
  %v2189 = vtanh.pop %v2185
  %v2190 = vtanh.pop %v2186
  %v2191 = vsub.f32 1.0, %v2164
  %v2192 = vsub.f32 1.0, %v2166
  %v2193 = vsub.f32 1.0, %v2172
  %v2194 = vsub.f32 1.0, %v2174
  %v2195 = vmul.f32 %v2191, %v2187
  %v2196 = vmul.f32 %v2192, %v2188
  %v2197 = vmul.f32 %v2193, %v2189
  %v2198 = vmul.f32 %v2194, %v2190
  %v2199 = vmul.f32 %v2164, %v1948
  %v2200 = vmul.f32 %v2166, %v1949
  %v2201 = vmul.f32 %v2172, %v1950
  %v2202 = vmul.f32 %v2174, %v1951
  %v2203 = vadd.f32 %v2195, %v2199
  %v2204 = vadd.f32 %v2196, %v2200
  %v2205 = vadd.f32 %v2197, %v2201
  %v2206 = vadd.f32 %v2198, %v2202
  %v2207 = vpack.c.bf16 %v2205, %v2203
  %v2208 = vpack.c.bf16 %v2206, %v2204
  %v2211 = vunpack.c.l.b16 %v2207
  %v2212 = vunpack.c.l.b16 %v2208
  %v2213 = vunpack.c.h.b16 %v2207
  %v2214 = vunpack.c.h.b16 %v2208
  %v2215 = vpack.c.b16 %v2212, %v2211
  %v2216 = vpack.c.b16 %v2214, %v2213
  %s2219 = smul.u32 6, 2
  %s2220 = smul.addr %s2219, 4
  %s2221 = scalar_lea.vmem %s6, %s2220
  %2222 = vst [vmem:[%s2221] sm:$0xff] %v2215
  %2223 = vst [vmem:[%s2221 + $0x8] sm:$0xff] %v2216
  %s2224 = smul.u32 4, 6
  %s2225 = smul.addr %s2224, 8
  %s2226 = scalar_lea.vmem [#allocation2], %s2225
  %v2227 = vld [vmem:[%s2226] sm:$0xff]
  %v2228 = vld [vmem:[%s2226 + $0x8] sm:$0xff]
  %v2229 = vld [vmem:[%s2226 + $0x10] sm:$0xff]
  %v2230 = vld [vmem:[%s2226 + $0x18] sm:$0xff]
  %v2231 = vld [vmem:[%s2226 + $0x20] sm:$0xff]
  %v2232 = vld [vmem:[%s2226 + $0x28] sm:$0xff]
  %v2233 = vunpack.c.l.bf16 %v2227
  %v2234 = vunpack.c.l.bf16 %v2228
  %v2235 = vunpack.c.l.bf16 %v2229
  %v2236 = vunpack.c.l.bf16 %v2230
  %v2237 = vunpack.c.l.bf16 %v2231
  %v2238 = vunpack.c.l.bf16 %v2232
  %v2239 = vunpack.c.h.bf16 %v2227
  %v2240 = vunpack.c.h.bf16 %v2228
  %v2241 = vunpack.c.h.bf16 %v2229
  %v2242 = vunpack.c.h.bf16 %v2230
  %v2243 = vunpack.c.h.bf16 %v2231
  %v2244 = vunpack.c.h.bf16 %v2232
  %2245 = vmatprep.subr.bf16.mxu0 %v1034
  %2246 = vmatpush1.bf16.msra.mxu0 %v1033
  %2247 = vmatprep.subr.bf16.mxu0 %v1040
  %2248 = vmatpush1.bf16.msra.mxu0 %v1039
  %2249 = vmatprep.subr.bf16.mxu0 %v1046
  %2250 = vmatpush1.bf16.msra.mxu0 %v1045
  %2251 = vmatprep.subr.bf16.mxu0 %v1052
  %2252 = vmatpush1.bf16.msra.mxu0 %v1051
  %2253 = vmatprep.subr.bf16.mxu0 %v1058
  %2254 = vmatpush1.bf16.msra.mxu0 %v1057
  %2255 = vmatprep.subr.bf16.mxu0 %v1064
  %2256 = vmatpush1.bf16.msra.mxu0 %v1063
  %2257 = vmatprep.subr.bf16.mxu0 %v1070
  %2258 = vmatpush1.bf16.msra.mxu0 %v1069
  %2259 = vmatprep.subr.bf16.mxu0 %v1076
  %2260 = vmatpush1.bf16.msra.mxu0 %v1075
  %2261 = vmatprep.subr.bf16.mxu0 %v1082
  %2262 = vmatpush1.bf16.msra.mxu0 %v1081
  %2263 = vmatprep.subr.bf16.mxu0 %v1088
  %2264 = vmatpush1.bf16.msra.mxu0 %v1087
  %2265 = vmatprep.subr.bf16.mxu0 %v1094
  %2266 = vmatpush1.bf16.msra.mxu0 %v1093
  %2267 = vmatprep.subr.bf16.mxu0 %v1100
  %2268 = vmatpush1.bf16.msra.mxu0 %v1099
  %2269 = vmatprep.subr.bf16.mxu0 %v1106
  %2270 = vmatpush1.bf16.msra.mxu0 %v1105
  %2271 = vmatprep.subr.bf16.mxu0 %v1112
  %2272 = vmatpush1.bf16.msra.mxu0 %v1111
  %2273 = vmatprep.subr.bf16.mxu0 %v1118
  %2274 = vmatpush1.bf16.msra.mxu0 %v1117
  %2275 = vmatprep.subr.bf16.mxu0 %v1124
  %2276 = vmatpush1.bf16.msra.mxu0 %v1123
  %2277 = vmatprep.mubr.bf16.mxu0 %v2208
  %2278 = vmatmul.mubr.bf16.gmra.mrb[0].mxu0 %v2207
  %v2279 = vpop.f32.mrb[0].mxu0
  %v2280 = vadd.f32 0.0, %v2279
  %v2281 = vpop.f32.mrb[0].mxu0
  %v2282 = vadd.f32 0.0, %v2281
  %v2283 = vpop.f32.mrb[0].mxu0
  %v2284 = vadd.f32 0.0, %v2283
  %v2285 = vpop.f32.mrb[0].mxu0
  %v2286 = vadd.f32 0.0, %v2285
  %2287 = vdwg.mxu0
  %2288 = vmatprep.subr.bf16.mxu0 %v1036
  %2289 = vmatpush1.bf16.msra.mxu0 %v1035
  %2290 = vmatprep.subr.bf16.mxu0 %v1042
  %2291 = vmatpush1.bf16.msra.mxu0 %v1041
  %2292 = vmatprep.subr.bf16.mxu0 %v1048
  %2293 = vmatpush1.bf16.msra.mxu0 %v1047
  %2294 = vmatprep.subr.bf16.mxu0 %v1054
  %2295 = vmatpush1.bf16.msra.mxu0 %v1053
  %2296 = vmatprep.subr.bf16.mxu0 %v1060
  %2297 = vmatpush1.bf16.msra.mxu0 %v1059
  %2298 = vmatprep.subr.bf16.mxu0 %v1066
  %2299 = vmatpush1.bf16.msra.mxu0 %v1065
  %2300 = vmatprep.subr.bf16.mxu0 %v1072
  %2301 = vmatpush1.bf16.msra.mxu0 %v1071
  %2302 = vmatprep.subr.bf16.mxu0 %v1078
  %2303 = vmatpush1.bf16.msra.mxu0 %v1077
  %2304 = vmatprep.subr.bf16.mxu0 %v1084
  %2305 = vmatpush1.bf16.msra.mxu0 %v1083
  %2306 = vmatprep.subr.bf16.mxu0 %v1090
  %2307 = vmatpush1.bf16.msra.mxu0 %v1089
  %2308 = vmatprep.subr.bf16.mxu0 %v1096
  %2309 = vmatpush1.bf16.msra.mxu0 %v1095
  %2310 = vmatprep.subr.bf16.mxu0 %v1102
  %2311 = vmatpush1.bf16.msra.mxu0 %v1101
  %2312 = vmatprep.subr.bf16.mxu0 %v1108
  %2313 = vmatpush1.bf16.msra.mxu0 %v1107
  %2314 = vmatprep.subr.bf16.mxu0 %v1114
  %2315 = vmatpush1.bf16.msra.mxu0 %v1113
  %2316 = vmatprep.subr.bf16.mxu0 %v1120
  %2317 = vmatpush1.bf16.msra.mxu0 %v1119
  %2318 = vmatprep.subr.bf16.mxu0 %v1126
  %2319 = vmatpush1.bf16.msra.mxu0 %v1125
  %2320 = vmatprep.mubr.bf16.mxu0 %v2208
  %2321 = vmatmul.mubr.bf16.gmra.mrb[0].mxu0 %v2207
  %v2322 = vpop.f32.mrb[0].mxu0
  %v2323 = vadd.f32 0.0, %v2322
  %v2324 = vpop.f32.mrb[0].mxu0
  %v2325 = vadd.f32 0.0, %v2324
  %v2326 = vpop.f32.mrb[0].mxu0
  %v2327 = vadd.f32 0.0, %v2326
  %v2328 = vpop.f32.mrb[0].mxu0
  %v2329 = vadd.f32 0.0, %v2328
  %2330 = vdwg.mxu0
  %2331 = vmatprep.subr.bf16.mxu0 %v1038
  %2332 = vmatpush1.bf16.msra.mxu0 %v1037
  %2333 = vmatprep.subr.bf16.mxu0 %v1044
  %2334 = vmatpush1.bf16.msra.mxu0 %v1043
  %2335 = vmatprep.subr.bf16.mxu0 %v1050
  %2336 = vmatpush1.bf16.msra.mxu0 %v1049
  %2337 = vmatprep.subr.bf16.mxu0 %v1056
  %2338 = vmatpush1.bf16.msra.mxu0 %v1055
  %2339 = vmatprep.subr.bf16.mxu0 %v1062
  %2340 = vmatpush1.bf16.msra.mxu0 %v1061
  %2341 = vmatprep.subr.bf16.mxu0 %v1068
  %2342 = vmatpush1.bf16.msra.mxu0 %v1067
  %2343 = vmatprep.subr.bf16.mxu0 %v1074
  %2344 = vmatpush1.bf16.msra.mxu0 %v1073
  %2345 = vmatprep.subr.bf16.mxu0 %v1080
  %2346 = vmatpush1.bf16.msra.mxu0 %v1079
  %2347 = vmatprep.subr.bf16.mxu0 %v1086
  %2348 = vmatpush1.bf16.msra.mxu0 %v1085
  %2349 = vmatprep.subr.bf16.mxu0 %v1092
  %2350 = vmatpush1.bf16.msra.mxu0 %v1091
  %2351 = vmatprep.subr.bf16.mxu0 %v1098
  %2352 = vmatpush1.bf16.msra.mxu0 %v1097
  %2353 = vmatprep.subr.bf16.mxu0 %v1104
  %2354 = vmatpush1.bf16.msra.mxu0 %v1103
  %2355 = vmatprep.subr.bf16.mxu0 %v1110
  %2356 = vmatpush1.bf16.msra.mxu0 %v1109
  %2357 = vmatprep.subr.bf16.mxu0 %v1116
  %2358 = vmatpush1.bf16.msra.mxu0 %v1115
  %2359 = vmatprep.subr.bf16.mxu0 %v1122
  %2360 = vmatpush1.bf16.msra.mxu0 %v1121
  %2361 = vmatprep.subr.bf16.mxu0 %v1128
  %2362 = vmatpush1.bf16.msra.mxu0 %v1127
  %2363 = vmatprep.mubr.bf16.mxu0 %v2208
  %2364 = vmatmul.mubr.bf16.gmra.mrb[0].mxu0 %v2207
  %v2365 = vpop.f32.mrb[0].mxu0
  %v2366 = vadd.f32 0.0, %v2365
  %v2367 = vpop.f32.mrb[0].mxu0
  %v2368 = vadd.f32 0.0, %v2367
  %v2369 = vpop.f32.mrb[0].mxu0
  %v2370 = vadd.f32 0.0, %v2369
  %v2371 = vpop.f32.mrb[0].mxu0
  %v2372 = vadd.f32 0.0, %v2371
  %2373 = vdwg.mxu0
  %v2374 = vadd.f32 %v2233, %v2280
  %v2375 = vadd.f32 %v2234, %v2282
  %v2376 = vadd.f32 %v2235, %v2323
  %v2377 = vadd.f32 %v2236, %v2325
  %v2378 = vadd.f32 %v2239, %v2284
  %v2379 = vadd.f32 %v2240, %v2286
  %v2380 = vadd.f32 %v2241, %v2327
  %v2381 = vadd.f32 %v2242, %v2329
  %v2382 = vxor.u32 %v2374, 2147483648
  %v2383 = vxor.u32 %v2375, 2147483648
  %v2384 = vxor.u32 %v2376, 2147483648
  %v2385 = vxor.u32 %v2377, 2147483648
  %v2386 = vxor.u32 %v2378, 2147483648
  %v2387 = vxor.u32 %v2379, 2147483648
  %v2388 = vxor.u32 %v2380, 2147483648
  %v2389 = vxor.u32 %v2381, 2147483648
  %v2390 = vmul.f32 %v2382, 1.442695
  %v2391 = vpow.pop %v2390
  %v2392 = vmul.f32 %v2383, 1.442695
  %v2393 = vpow.pop %v2392
  %v2394 = vmul.f32 %v2384, 1.442695
  %v2395 = vpow.pop %v2394
  %v2396 = vmul.f32 %v2385, 1.442695
  %v2397 = vpow.pop %v2396
  %v2398 = vmul.f32 %v2386, 1.442695
  %v2399 = vpow.pop %v2398
  %v2400 = vmul.f32 %v2387, 1.442695
  %v2401 = vpow.pop %v2400
  %v2402 = vmul.f32 %v2388, 1.442695
  %v2403 = vpow.pop %v2402
  %v2404 = vmul.f32 %v2389, 1.442695
  %v2405 = vpow.pop %v2404
  %v2406 = vadd.f32 %v2391, 1.0
  %v2407 = vadd.f32 %v2393, 1.0
  %v2408 = vadd.f32 %v2395, 1.0
  %v2409 = vadd.f32 %v2397, 1.0
  %v2410 = vadd.f32 %v2399, 1.0
  %v2411 = vadd.f32 %v2401, 1.0
  %v2412 = vadd.f32 %v2403, 1.0
  %v2413 = vadd.f32 %v2405, 1.0
  %v2414 = vrcp.pop %v2406
  %v2415 = vmul.f32 1.0, %v2414
  %v2416 = vrcp.pop %v2407
  %v2417 = vmul.f32 1.0, %v2416
  %v2418 = vrcp.pop %v2408
  %v2419 = vmul.f32 1.0, %v2418
  %v2420 = vrcp.pop %v2409
  %v2421 = vmul.f32 1.0, %v2420
  %v2422 = vrcp.pop %v2410
  %v2423 = vmul.f32 1.0, %v2422
  %v2424 = vrcp.pop %v2411
  %v2425 = vmul.f32 1.0, %v2424
  %v2426 = vrcp.pop %v2412
  %v2427 = vmul.f32 1.0, %v2426
  %v2428 = vrcp.pop %v2413
  %v2429 = vmul.f32 1.0, %v2428
  %v2430 = vadd.f32 %v2366, %v711
  %v2431 = vadd.f32 %v2368, %v715
  %v2432 = vadd.f32 %v2370, %v711
  %v2433 = vadd.f32 %v2372, %v715
  %v2434 = vmul.f32 %v2415, %v2430
  %v2435 = vmul.f32 %v2417, %v2431
  %v2436 = vmul.f32 %v2423, %v2432
  %v2437 = vmul.f32 %v2425, %v2433
  %v2438 = vadd.f32 %v2237, %v2434
  %v2439 = vadd.f32 %v2238, %v2435
  %v2440 = vadd.f32 %v2243, %v2436
  %v2441 = vadd.f32 %v2244, %v2437
  %v2442 = vtanh.pop %v2438
  %v2443 = vtanh.pop %v2439
  %v2444 = vtanh.pop %v2440
  %v2445 = vtanh.pop %v2441
  %v2446 = vsub.f32 1.0, %v2419
  %v2447 = vsub.f32 1.0, %v2421
  %v2448 = vsub.f32 1.0, %v2427
  %v2449 = vsub.f32 1.0, %v2429
  %v2450 = vmul.f32 %v2446, %v2442
  %v2451 = vmul.f32 %v2447, %v2443
  %v2452 = vmul.f32 %v2448, %v2444
  %v2453 = vmul.f32 %v2449, %v2445
  %v2454 = vmul.f32 %v2419, %v2203
  %v2455 = vmul.f32 %v2421, %v2204
  %v2456 = vmul.f32 %v2427, %v2205
  %v2457 = vmul.f32 %v2429, %v2206
  %v2458 = vadd.f32 %v2450, %v2454
  %v2459 = vadd.f32 %v2451, %v2455
  %v2460 = vadd.f32 %v2452, %v2456
  %v2461 = vadd.f32 %v2453, %v2457
  %v2462 = vpack.c.bf16 %v2460, %v2458
  %v2463 = vpack.c.bf16 %v2461, %v2459
  %v2466 = vunpack.c.l.b16 %v2462
  %v2467 = vunpack.c.l.b16 %v2463
  %v2468 = vunpack.c.h.b16 %v2462
  %v2469 = vunpack.c.h.b16 %v2463
  %v2470 = vpack.c.b16 %v2467, %v2466
  %v2471 = vpack.c.b16 %v2469, %v2468
  %s2474 = smul.u32 8, 2
  %s2475 = smul.addr %s2474, 4
  %s2476 = scalar_lea.vmem %s6, %s2475
  %2477 = vst [vmem:[%s2476] sm:$0xff] %v2470
  %2478 = vst [vmem:[%s2476 + $0x8] sm:$0xff] %v2471
  %s2479 = smul.u32 5, 6
  %s2480 = smul.addr %s2479, 8
  %s2481 = scalar_lea.vmem [#allocation2], %s2480
  %v2482 = vld [vmem:[%s2481] sm:$0xff]
  %v2483 = vld [vmem:[%s2481 + $0x8] sm:$0xff]
  %v2484 = vld [vmem:[%s2481 + $0x10] sm:$0xff]
  %v2485 = vld [vmem:[%s2481 + $0x18] sm:$0xff]
  %v2486 = vld [vmem:[%s2481 + $0x20] sm:$0xff]
  %v2487 = vld [vmem:[%s2481 + $0x28] sm:$0xff]
  %v2488 = vunpack.c.l.bf16 %v2482
  %v2489 = vunpack.c.l.bf16 %v2483
  %v2490 = vunpack.c.l.bf16 %v2484
  %v2491 = vunpack.c.l.bf16 %v2485
  %v2492 = vunpack.c.l.bf16 %v2486
  %v2493 = vunpack.c.l.bf16 %v2487
  %v2494 = vunpack.c.h.bf16 %v2482
  %v2495 = vunpack.c.h.bf16 %v2483
  %v2496 = vunpack.c.h.bf16 %v2484
  %v2497 = vunpack.c.h.bf16 %v2485
  %v2498 = vunpack.c.h.bf16 %v2486
  %v2499 = vunpack.c.h.bf16 %v2487
  %2500 = vmatprep.subr.bf16.mxu0 %v1034
  %2501 = vmatpush1.bf16.msra.mxu0 %v1033
  %2502 = vmatprep.subr.bf16.mxu0 %v1040
  %2503 = vmatpush1.bf16.msra.mxu0 %v1039
  %2504 = vmatprep.subr.bf16.mxu0 %v1046
  %2505 = vmatpush1.bf16.msra.mxu0 %v1045
  %2506 = vmatprep.subr.bf16.mxu0 %v1052
  %2507 = vmatpush1.bf16.msra.mxu0 %v1051
  %2508 = vmatprep.subr.bf16.mxu0 %v1058
  %2509 = vmatpush1.bf16.msra.mxu0 %v1057
  %2510 = vmatprep.subr.bf16.mxu0 %v1064
  %2511 = vmatpush1.bf16.msra.mxu0 %v1063
  %2512 = vmatprep.subr.bf16.mxu0 %v1070
  %2513 = vmatpush1.bf16.msra.mxu0 %v1069
  %2514 = vmatprep.subr.bf16.mxu0 %v1076
  %2515 = vmatpush1.bf16.msra.mxu0 %v1075
  %2516 = vmatprep.subr.bf16.mxu0 %v1082
  %2517 = vmatpush1.bf16.msra.mxu0 %v1081
  %2518 = vmatprep.subr.bf16.mxu0 %v1088
  %2519 = vmatpush1.bf16.msra.mxu0 %v1087
  %2520 = vmatprep.subr.bf16.mxu0 %v1094
  %2521 = vmatpush1.bf16.msra.mxu0 %v1093
  %2522 = vmatprep.subr.bf16.mxu0 %v1100
  %2523 = vmatpush1.bf16.msra.mxu0 %v1099
  %2524 = vmatprep.subr.bf16.mxu0 %v1106
  %2525 = vmatpush1.bf16.msra.mxu0 %v1105
  %2526 = vmatprep.subr.bf16.mxu0 %v1112
  %2527 = vmatpush1.bf16.msra.mxu0 %v1111
  %2528 = vmatprep.subr.bf16.mxu0 %v1118
  %2529 = vmatpush1.bf16.msra.mxu0 %v1117
  %2530 = vmatprep.subr.bf16.mxu0 %v1124
  %2531 = vmatpush1.bf16.msra.mxu0 %v1123
  %2532 = vmatprep.mubr.bf16.mxu0 %v2463
  %2533 = vmatmul.mubr.bf16.gmra.mrb[0].mxu0 %v2462
  %v2534 = vpop.f32.mrb[0].mxu0
  %v2535 = vadd.f32 0.0, %v2534
  %v2536 = vpop.f32.mrb[0].mxu0
  %v2537 = vadd.f32 0.0, %v2536
  %v2538 = vpop.f32.mrb[0].mxu0
  %v2539 = vadd.f32 0.0, %v2538
  %v2540 = vpop.f32.mrb[0].mxu0
  %v2541 = vadd.f32 0.0, %v2540
  %2542 = vdwg.mxu0
  %2543 = vmatprep.subr.bf16.mxu0 %v1036
  %2544 = vmatpush1.bf16.msra.mxu0 %v1035
  %2545 = vmatprep.subr.bf16.mxu0 %v1042
  %2546 = vmatpush1.bf16.msra.mxu0 %v1041
  %2547 = vmatprep.subr.bf16.mxu0 %v1048
  %2548 = vmatpush1.bf16.msra.mxu0 %v1047
  %2549 = vmatprep.subr.bf16.mxu0 %v1054
  %2550 = vmatpush1.bf16.msra.mxu0 %v1053
  %2551 = vmatprep.subr.bf16.mxu0 %v1060
  %2552 = vmatpush1.bf16.msra.mxu0 %v1059
  %2553 = vmatprep.subr.bf16.mxu0 %v1066
  %2554 = vmatpush1.bf16.msra.mxu0 %v1065
  %2555 = vmatprep.subr.bf16.mxu0 %v1072
  %2556 = vmatpush1.bf16.msra.mxu0 %v1071
  %2557 = vmatprep.subr.bf16.mxu0 %v1078
  %2558 = vmatpush1.bf16.msra.mxu0 %v1077
  %2559 = vmatprep.subr.bf16.mxu0 %v1084
  %2560 = vmatpush1.bf16.msra.mxu0 %v1083
  %2561 = vmatprep.subr.bf16.mxu0 %v1090
  %2562 = vmatpush1.bf16.msra.mxu0 %v1089
  %2563 = vmatprep.subr.bf16.mxu0 %v1096
  %2564 = vmatpush1.bf16.msra.mxu0 %v1095
  %2565 = vmatprep.subr.bf16.mxu0 %v1102
  %2566 = vmatpush1.bf16.msra.mxu0 %v1101
  %2567 = vmatprep.subr.bf16.mxu0 %v1108
  %2568 = vmatpush1.bf16.msra.mxu0 %v1107
  %2569 = vmatprep.subr.bf16.mxu0 %v1114
  %2570 = vmatpush1.bf16.msra.mxu0 %v1113
  %2571 = vmatprep.subr.bf16.mxu0 %v1120
  %2572 = vmatpush1.bf16.msra.mxu0 %v1119
  %2573 = vmatprep.subr.bf16.mxu0 %v1126
  %2574 = vmatpush1.bf16.msra.mxu0 %v1125
  %2575 = vmatprep.mubr.bf16.mxu0 %v2463
  %2576 = vmatmul.mubr.bf16.gmra.mrb[0].mxu0 %v2462
  %v2577 = vpop.f32.mrb[0].mxu0
  %v2578 = vadd.f32 0.0, %v2577
  %v2579 = vpop.f32.mrb[0].mxu0
  %v2580 = vadd.f32 0.0, %v2579
  %v2581 = vpop.f32.mrb[0].mxu0
  %v2582 = vadd.f32 0.0, %v2581
  %v2583 = vpop.f32.mrb[0].mxu0
  %v2584 = vadd.f32 0.0, %v2583
  %2585 = vdwg.mxu0
  %2586 = vmatprep.subr.bf16.mxu0 %v1038
  %2587 = vmatpush1.bf16.msra.mxu0 %v1037
  %2588 = vmatprep.subr.bf16.mxu0 %v1044
  %2589 = vmatpush1.bf16.msra.mxu0 %v1043
  %2590 = vmatprep.subr.bf16.mxu0 %v1050
  %2591 = vmatpush1.bf16.msra.mxu0 %v1049
  %2592 = vmatprep.subr.bf16.mxu0 %v1056
  %2593 = vmatpush1.bf16.msra.mxu0 %v1055
  %2594 = vmatprep.subr.bf16.mxu0 %v1062
  %2595 = vmatpush1.bf16.msra.mxu0 %v1061
  %2596 = vmatprep.subr.bf16.mxu0 %v1068
  %2597 = vmatpush1.bf16.msra.mxu0 %v1067
  %2598 = vmatprep.subr.bf16.mxu0 %v1074
  %2599 = vmatpush1.bf16.msra.mxu0 %v1073
  %2600 = vmatprep.subr.bf16.mxu0 %v1080
  %2601 = vmatpush1.bf16.msra.mxu0 %v1079
  %2602 = vmatprep.subr.bf16.mxu0 %v1086
  %2603 = vmatpush1.bf16.msra.mxu0 %v1085
  %2604 = vmatprep.subr.bf16.mxu0 %v1092
  %2605 = vmatpush1.bf16.msra.mxu0 %v1091
  %2606 = vmatprep.subr.bf16.mxu0 %v1098
  %2607 = vmatpush1.bf16.msra.mxu0 %v1097
  %2608 = vmatprep.subr.bf16.mxu0 %v1104
  %2609 = vmatpush1.bf16.msra.mxu0 %v1103
  %2610 = vmatprep.subr.bf16.mxu0 %v1110
  %2611 = vmatpush1.bf16.msra.mxu0 %v1109
  %2612 = vmatprep.subr.bf16.mxu0 %v1116
  %2613 = vmatpush1.bf16.msra.mxu0 %v1115
  %2614 = vmatprep.subr.bf16.mxu0 %v1122
  %2615 = vmatpush1.bf16.msra.mxu0 %v1121
  %2616 = vmatprep.subr.bf16.mxu0 %v1128
  %2617 = vmatpush1.bf16.msra.mxu0 %v1127
  %2618 = vmatprep.mubr.bf16.mxu0 %v2463
  %2619 = vmatmul.mubr.bf16.gmra.mrb[0].mxu0 %v2462
  %v2620 = vpop.f32.mrb[0].mxu0
  %v2621 = vadd.f32 0.0, %v2620
  %v2622 = vpop.f32.mrb[0].mxu0
  %v2623 = vadd.f32 0.0, %v2622
  %v2624 = vpop.f32.mrb[0].mxu0
  %v2625 = vadd.f32 0.0, %v2624
  %v2626 = vpop.f32.mrb[0].mxu0
  %v2627 = vadd.f32 0.0, %v2626
  %2628 = vdwg.mxu0
  %v2629 = vadd.f32 %v2488, %v2535
  %v2630 = vadd.f32 %v2489, %v2537
  %v2631 = vadd.f32 %v2490, %v2578
  %v2632 = vadd.f32 %v2491, %v2580
  %v2633 = vadd.f32 %v2494, %v2539
  %v2634 = vadd.f32 %v2495, %v2541
  %v2635 = vadd.f32 %v2496, %v2582
  %v2636 = vadd.f32 %v2497, %v2584
  %v2637 = vxor.u32 %v2629, 2147483648
  %v2638 = vxor.u32 %v2630, 2147483648
  %v2639 = vxor.u32 %v2631, 2147483648
  %v2640 = vxor.u32 %v2632, 2147483648
  %v2641 = vxor.u32 %v2633, 2147483648
  %v2642 = vxor.u32 %v2634, 2147483648
  %v2643 = vxor.u32 %v2635, 2147483648
  %v2644 = vxor.u32 %v2636, 2147483648
  %v2645 = vmul.f32 %v2637, 1.442695
  %v2646 = vpow.pop %v2645
  %v2647 = vmul.f32 %v2638, 1.442695
  %v2648 = vpow.pop %v2647
  %v2649 = vmul.f32 %v2639, 1.442695
  %v2650 = vpow.pop %v2649
  %v2651 = vmul.f32 %v2640, 1.442695
  %v2652 = vpow.pop %v2651
  %v2653 = vmul.f32 %v2641, 1.442695
  %v2654 = vpow.pop %v2653
  %v2655 = vmul.f32 %v2642, 1.442695
  %v2656 = vpow.pop %v2655
  %v2657 = vmul.f32 %v2643, 1.442695
  %v2658 = vpow.pop %v2657
  %v2659 = vmul.f32 %v2644, 1.442695
  %v2660 = vpow.pop %v2659
  %v2661 = vadd.f32 %v2646, 1.0
  %v2662 = vadd.f32 %v2648, 1.0
  %v2663 = vadd.f32 %v2650, 1.0
  %v2664 = vadd.f32 %v2652, 1.0
  %v2665 = vadd.f32 %v2654, 1.0
  %v2666 = vadd.f32 %v2656, 1.0
  %v2667 = vadd.f32 %v2658, 1.0
  %v2668 = vadd.f32 %v2660, 1.0
  %v2669 = vrcp.pop %v2661
  %v2670 = vmul.f32 1.0, %v2669
  %v2671 = vrcp.pop %v2662
  %v2672 = vmul.f32 1.0, %v2671
  %v2673 = vrcp.pop %v2663
  %v2674 = vmul.f32 1.0, %v2673
  %v2675 = vrcp.pop %v2664
  %v2676 = vmul.f32 1.0, %v2675
  %v2677 = vrcp.pop %v2665
  %v2678 = vmul.f32 1.0, %v2677
  %v2679 = vrcp.pop %v2666
  %v2680 = vmul.f32 1.0, %v2679
  %v2681 = vrcp.pop %v2667
  %v2682 = vmul.f32 1.0, %v2681
  %v2683 = vrcp.pop %v2668
  %v2684 = vmul.f32 1.0, %v2683
  %v2685 = vadd.f32 %v2621, %v711
  %v2686 = vadd.f32 %v2623, %v715
  %v2687 = vadd.f32 %v2625, %v711
  %v2688 = vadd.f32 %v2627, %v715
  %v2689 = vmul.f32 %v2670, %v2685
  %v2690 = vmul.f32 %v2672, %v2686
  %v2691 = vmul.f32 %v2678, %v2687
  %v2692 = vmul.f32 %v2680, %v2688
  %v2693 = vadd.f32 %v2492, %v2689
  %v2694 = vadd.f32 %v2493, %v2690
  %v2695 = vadd.f32 %v2498, %v2691
  %v2696 = vadd.f32 %v2499, %v2692
  %v2697 = vtanh.pop %v2693
  %v2698 = vtanh.pop %v2694
  %v2699 = vtanh.pop %v2695
  %v2700 = vtanh.pop %v2696
  %v2701 = vsub.f32 1.0, %v2674
  %v2702 = vsub.f32 1.0, %v2676
  %v2703 = vsub.f32 1.0, %v2682
  %v2704 = vsub.f32 1.0, %v2684
  %v2705 = vmul.f32 %v2701, %v2697
  %v2706 = vmul.f32 %v2702, %v2698
  %v2707 = vmul.f32 %v2703, %v2699
  %v2708 = vmul.f32 %v2704, %v2700
  %v2709 = vmul.f32 %v2674, %v2458
  %v2710 = vmul.f32 %v2676, %v2459
  %v2711 = vmul.f32 %v2682, %v2460
  %v2712 = vmul.f32 %v2684, %v2461
  %v2713 = vadd.f32 %v2705, %v2709
  %v2714 = vadd.f32 %v2706, %v2710
  %v2715 = vadd.f32 %v2707, %v2711
  %v2716 = vadd.f32 %v2708, %v2712
  %v2717 = vpack.c.bf16 %v2715, %v2713
  %v2718 = vpack.c.bf16 %v2716, %v2714
  %v2721 = vunpack.c.l.b16 %v2717
  %v2722 = vunpack.c.l.b16 %v2718
  %v2723 = vunpack.c.h.b16 %v2717
  %v2724 = vunpack.c.h.b16 %v2718
  %v2725 = vpack.c.b16 %v2722, %v2721
  %v2726 = vpack.c.b16 %v2724, %v2723
  %s2729 = smul.u32 10, 2
  %s2730 = smul.addr %s2729, 4
  %s2731 = scalar_lea.vmem %s6, %s2730
  %2732 = vst [vmem:[%s2731] sm:$0xff] %v2725
  %2733 = vst [vmem:[%s2731 + $0x8] sm:$0xff] %v2726
  %s2734 = smul.u32 6, 6
  %s2735 = smul.addr %s2734, 8
  %s2736 = scalar_lea.vmem [#allocation2], %s2735
  %v2737 = vld [vmem:[%s2736] sm:$0xff]
  %v2738 = vld [vmem:[%s2736 + $0x8] sm:$0xff]
  %v2739 = vld [vmem:[%s2736 + $0x10] sm:$0xff]
  %v2740 = vld [vmem:[%s2736 + $0x18] sm:$0xff]
  %v2741 = vld [vmem:[%s2736 + $0x20] sm:$0xff]
  %v2742 = vld [vmem:[%s2736 + $0x28] sm:$0xff]
  %v2743 = vunpack.c.l.bf16 %v2737
  %v2744 = vunpack.c.l.bf16 %v2738
  %v2745 = vunpack.c.l.bf16 %v2739
  %v2746 = vunpack.c.l.bf16 %v2740
  %v2747 = vunpack.c.l.bf16 %v2741
  %v2748 = vunpack.c.l.bf16 %v2742
  %v2749 = vunpack.c.h.bf16 %v2737
  %v2750 = vunpack.c.h.bf16 %v2738
  %v2751 = vunpack.c.h.bf16 %v2739
  %v2752 = vunpack.c.h.bf16 %v2740
  %v2753 = vunpack.c.h.bf16 %v2741
  %v2754 = vunpack.c.h.bf16 %v2742
  %2755 = vmatprep.subr.bf16.mxu0 %v1034
  %2756 = vmatpush1.bf16.msra.mxu0 %v1033
  %2757 = vmatprep.subr.bf16.mxu0 %v1040
  %2758 = vmatpush1.bf16.msra.mxu0 %v1039
  %2759 = vmatprep.subr.bf16.mxu0 %v1046
  %2760 = vmatpush1.bf16.msra.mxu0 %v1045
  %2761 = vmatprep.subr.bf16.mxu0 %v1052
  %2762 = vmatpush1.bf16.msra.mxu0 %v1051
  %2763 = vmatprep.subr.bf16.mxu0 %v1058
  %2764 = vmatpush1.bf16.msra.mxu0 %v1057
  %2765 = vmatprep.subr.bf16.mxu0 %v1064
  %2766 = vmatpush1.bf16.msra.mxu0 %v1063
  %2767 = vmatprep.subr.bf16.mxu0 %v1070
  %2768 = vmatpush1.bf16.msra.mxu0 %v1069
  %2769 = vmatprep.subr.bf16.mxu0 %v1076
  %2770 = vmatpush1.bf16.msra.mxu0 %v1075
  %2771 = vmatprep.subr.bf16.mxu0 %v1082
  %2772 = vmatpush1.bf16.msra.mxu0 %v1081
  %2773 = vmatprep.subr.bf16.mxu0 %v1088
  %2774 = vmatpush1.bf16.msra.mxu0 %v1087
  %2775 = vmatprep.subr.bf16.mxu0 %v1094
  %2776 = vmatpush1.bf16.msra.mxu0 %v1093
  %2777 = vmatprep.subr.bf16.mxu0 %v1100
  %2778 = vmatpush1.bf16.msra.mxu0 %v1099
  %2779 = vmatprep.subr.bf16.mxu0 %v1106
  %2780 = vmatpush1.bf16.msra.mxu0 %v1105
  %2781 = vmatprep.subr.bf16.mxu0 %v1112
  %2782 = vmatpush1.bf16.msra.mxu0 %v1111
  %2783 = vmatprep.subr.bf16.mxu0 %v1118
  %2784 = vmatpush1.bf16.msra.mxu0 %v1117
  %2785 = vmatprep.subr.bf16.mxu0 %v1124
  %2786 = vmatpush1.bf16.msra.mxu0 %v1123
  %2787 = vmatprep.mubr.bf16.mxu0 %v2718
  %2788 = vmatmul.mubr.bf16.gmra.mrb[0].mxu0 %v2717
  %v2789 = vpop.f32.mrb[0].mxu0
  %v2790 = vadd.f32 0.0, %v2789
  %v2791 = vpop.f32.mrb[0].mxu0
  %v2792 = vadd.f32 0.0, %v2791
  %v2793 = vpop.f32.mrb[0].mxu0
  %v2794 = vadd.f32 0.0, %v2793
  %v2795 = vpop.f32.mrb[0].mxu0
  %v2796 = vadd.f32 0.0, %v2795
  %2797 = vdwg.mxu0
  %2798 = vmatprep.subr.bf16.mxu0 %v1036
  %2799 = vmatpush1.bf16.msra.mxu0 %v1035
  %2800 = vmatprep.subr.bf16.mxu0 %v1042
  %2801 = vmatpush1.bf16.msra.mxu0 %v1041
  %2802 = vmatprep.subr.bf16.mxu0 %v1048
  %2803 = vmatpush1.bf16.msra.mxu0 %v1047
  %2804 = vmatprep.subr.bf16.mxu0 %v1054
  %2805 = vmatpush1.bf16.msra.mxu0 %v1053
  %2806 = vmatprep.subr.bf16.mxu0 %v1060
  %2807 = vmatpush1.bf16.msra.mxu0 %v1059
  %2808 = vmatprep.subr.bf16.mxu0 %v1066
  %2809 = vmatpush1.bf16.msra.mxu0 %v1065
  %2810 = vmatprep.subr.bf16.mxu0 %v1072
  %2811 = vmatpush1.bf16.msra.mxu0 %v1071
  %2812 = vmatprep.subr.bf16.mxu0 %v1078
  %2813 = vmatpush1.bf16.msra.mxu0 %v1077
  %2814 = vmatprep.subr.bf16.mxu0 %v1084
  %2815 = vmatpush1.bf16.msra.mxu0 %v1083
  %2816 = vmatprep.subr.bf16.mxu0 %v1090
  %2817 = vmatpush1.bf16.msra.mxu0 %v1089
  %2818 = vmatprep.subr.bf16.mxu0 %v1096
  %2819 = vmatpush1.bf16.msra.mxu0 %v1095
  %2820 = vmatprep.subr.bf16.mxu0 %v1102
  %2821 = vmatpush1.bf16.msra.mxu0 %v1101
  %2822 = vmatprep.subr.bf16.mxu0 %v1108
  %2823 = vmatpush1.bf16.msra.mxu0 %v1107
  %2824 = vmatprep.subr.bf16.mxu0 %v1114
  %2825 = vmatpush1.bf16.msra.mxu0 %v1113
  %2826 = vmatprep.subr.bf16.mxu0 %v1120
  %2827 = vmatpush1.bf16.msra.mxu0 %v1119
  %2828 = vmatprep.subr.bf16.mxu0 %v1126
  %2829 = vmatpush1.bf16.msra.mxu0 %v1125
  %2830 = vmatprep.mubr.bf16.mxu0 %v2718
  %2831 = vmatmul.mubr.bf16.gmra.mrb[0].mxu0 %v2717
  %v2832 = vpop.f32.mrb[0].mxu0
  %v2833 = vadd.f32 0.0, %v2832
  %v2834 = vpop.f32.mrb[0].mxu0
  %v2835 = vadd.f32 0.0, %v2834
  %v2836 = vpop.f32.mrb[0].mxu0
  %v2837 = vadd.f32 0.0, %v2836
  %v2838 = vpop.f32.mrb[0].mxu0
  %v2839 = vadd.f32 0.0, %v2838
  %2840 = vdwg.mxu0
  %2841 = vmatprep.subr.bf16.mxu0 %v1038
  %2842 = vmatpush1.bf16.msra.mxu0 %v1037
  %2843 = vmatprep.subr.bf16.mxu0 %v1044
  %2844 = vmatpush1.bf16.msra.mxu0 %v1043
  %2845 = vmatprep.subr.bf16.mxu0 %v1050
  %2846 = vmatpush1.bf16.msra.mxu0 %v1049
  %2847 = vmatprep.subr.bf16.mxu0 %v1056
  %2848 = vmatpush1.bf16.msra.mxu0 %v1055
  %2849 = vmatprep.subr.bf16.mxu0 %v1062
  %2850 = vmatpush1.bf16.msra.mxu0 %v1061
  %2851 = vmatprep.subr.bf16.mxu0 %v1068
  %2852 = vmatpush1.bf16.msra.mxu0 %v1067
  %2853 = vmatprep.subr.bf16.mxu0 %v1074
  %2854 = vmatpush1.bf16.msra.mxu0 %v1073
  %2855 = vmatprep.subr.bf16.mxu0 %v1080
  %2856 = vmatpush1.bf16.msra.mxu0 %v1079
  %2857 = vmatprep.subr.bf16.mxu0 %v1086
  %2858 = vmatpush1.bf16.msra.mxu0 %v1085
  %2859 = vmatprep.subr.bf16.mxu0 %v1092
  %2860 = vmatpush1.bf16.msra.mxu0 %v1091
  %2861 = vmatprep.subr.bf16.mxu0 %v1098
  %2862 = vmatpush1.bf16.msra.mxu0 %v1097
  %2863 = vmatprep.subr.bf16.mxu0 %v1104
  %2864 = vmatpush1.bf16.msra.mxu0 %v1103
  %2865 = vmatprep.subr.bf16.mxu0 %v1110
  %2866 = vmatpush1.bf16.msra.mxu0 %v1109
  %2867 = vmatprep.subr.bf16.mxu0 %v1116
  %2868 = vmatpush1.bf16.msra.mxu0 %v1115
  %2869 = vmatprep.subr.bf16.mxu0 %v1122
  %2870 = vmatpush1.bf16.msra.mxu0 %v1121
  %2871 = vmatprep.subr.bf16.mxu0 %v1128
  %2872 = vmatpush1.bf16.msra.mxu0 %v1127
  %2873 = vmatprep.mubr.bf16.mxu0 %v2718
  %2874 = vmatmul.mubr.bf16.gmra.mrb[0].mxu0 %v2717
  %v2875 = vpop.f32.mrb[0].mxu0
  %v2876 = vadd.f32 0.0, %v2875
  %v2877 = vpop.f32.mrb[0].mxu0
  %v2878 = vadd.f32 0.0, %v2877
  %v2879 = vpop.f32.mrb[0].mxu0
  %v2880 = vadd.f32 0.0, %v2879
  %v2881 = vpop.f32.mrb[0].mxu0
  %v2882 = vadd.f32 0.0, %v2881
  %2883 = vdwg.mxu0
  %v2884 = vadd.f32 %v2743, %v2790
  %v2885 = vadd.f32 %v2744, %v2792
  %v2886 = vadd.f32 %v2745, %v2833
  %v2887 = vadd.f32 %v2746, %v2835
  %v2888 = vadd.f32 %v2749, %v2794
  %v2889 = vadd.f32 %v2750, %v2796
  %v2890 = vadd.f32 %v2751, %v2837
  %v2891 = vadd.f32 %v2752, %v2839
  %v2892 = vxor.u32 %v2884, 2147483648
  %v2893 = vxor.u32 %v2885, 2147483648
  %v2894 = vxor.u32 %v2886, 2147483648
  %v2895 = vxor.u32 %v2887, 2147483648
  %v2896 = vxor.u32 %v2888, 2147483648
  %v2897 = vxor.u32 %v2889, 2147483648
  %v2898 = vxor.u32 %v2890, 2147483648
  %v2899 = vxor.u32 %v2891, 2147483648
  %v2900 = vmul.f32 %v2892, 1.442695
  %v2901 = vpow.pop %v2900
  %v2902 = vmul.f32 %v2893, 1.442695
  %v2903 = vpow.pop %v2902
  %v2904 = vmul.f32 %v2894, 1.442695
  %v2905 = vpow.pop %v2904
  %v2906 = vmul.f32 %v2895, 1.442695
  %v2907 = vpow.pop %v2906
  %v2908 = vmul.f32 %v2896, 1.442695
  %v2909 = vpow.pop %v2908
  %v2910 = vmul.f32 %v2897, 1.442695
  %v2911 = vpow.pop %v2910
  %v2912 = vmul.f32 %v2898, 1.442695
  %v2913 = vpow.pop %v2912
  %v2914 = vmul.f32 %v2899, 1.442695
  %v2915 = vpow.pop %v2914
  %v2916 = vadd.f32 %v2901, 1.0
  %v2917 = vadd.f32 %v2903, 1.0
  %v2918 = vadd.f32 %v2905, 1.0
  %v2919 = vadd.f32 %v2907, 1.0
  %v2920 = vadd.f32 %v2909, 1.0
  %v2921 = vadd.f32 %v2911, 1.0
  %v2922 = vadd.f32 %v2913, 1.0
  %v2923 = vadd.f32 %v2915, 1.0
  %v2924 = vrcp.pop %v2916
  %v2925 = vmul.f32 1.0, %v2924
  %v2926 = vrcp.pop %v2917
  %v2927 = vmul.f32 1.0, %v2926
  %v2928 = vrcp.pop %v2918
  %v2929 = vmul.f32 1.0, %v2928
  %v2930 = vrcp.pop %v2919
  %v2931 = vmul.f32 1.0, %v2930
  %v2932 = vrcp.pop %v2920
  %v2933 = vmul.f32 1.0, %v2932
  %v2934 = vrcp.pop %v2921
  %v2935 = vmul.f32 1.0, %v2934
  %v2936 = vrcp.pop %v2922
  %v2937 = vmul.f32 1.0, %v2936
  %v2938 = vrcp.pop %v2923
  %v2939 = vmul.f32 1.0, %v2938
  %v2940 = vadd.f32 %v2876, %v711
  %v2941 = vadd.f32 %v2878, %v715
  %v2942 = vadd.f32 %v2880, %v711
  %v2943 = vadd.f32 %v2882, %v715
  %v2944 = vmul.f32 %v2925, %v2940
  %v2945 = vmul.f32 %v2927, %v2941
  %v2946 = vmul.f32 %v2933, %v2942
  %v2947 = vmul.f32 %v2935, %v2943
  %v2948 = vadd.f32 %v2747, %v2944
  %v2949 = vadd.f32 %v2748, %v2945
  %v2950 = vadd.f32 %v2753, %v2946
  %v2951 = vadd.f32 %v2754, %v2947
  %v2952 = vtanh.pop %v2948
  %v2953 = vtanh.pop %v2949
  %v2954 = vtanh.pop %v2950
  %v2955 = vtanh.pop %v2951
  %v2956 = vsub.f32 1.0, %v2929
  %v2957 = vsub.f32 1.0, %v2931
  %v2958 = vsub.f32 1.0, %v2937
  %v2959 = vsub.f32 1.0, %v2939
  %v2960 = vmul.f32 %v2956, %v2952
  %v2961 = vmul.f32 %v2957, %v2953
  %v2962 = vmul.f32 %v2958, %v2954
  %v2963 = vmul.f32 %v2959, %v2955
  %v2964 = vmul.f32 %v2929, %v2713
  %v2965 = vmul.f32 %v2931, %v2714
  %v2966 = vmul.f32 %v2937, %v2715
  %v2967 = vmul.f32 %v2939, %v2716
  %v2968 = vadd.f32 %v2960, %v2964
  %v2969 = vadd.f32 %v2961, %v2965
  %v2970 = vadd.f32 %v2962, %v2966
  %v2971 = vadd.f32 %v2963, %v2967
  %v2972 = vpack.c.bf16 %v2970, %v2968
  %v2973 = vpack.c.bf16 %v2971, %v2969
  %v2976 = vunpack.c.l.b16 %v2972
  %v2977 = vunpack.c.l.b16 %v2973
  %v2978 = vunpack.c.h.b16 %v2972
  %v2979 = vunpack.c.h.b16 %v2973
  %v2980 = vpack.c.b16 %v2977, %v2976
  %v2981 = vpack.c.b16 %v2979, %v2978
  %s2984 = smul.u32 12, 2
  %s2985 = smul.addr %s2984, 4
  %s2986 = scalar_lea.vmem %s6, %s2985
  %2987 = vst [vmem:[%s2986] sm:$0xff] %v2980
  %2988 = vst [vmem:[%s2986 + $0x8] sm:$0xff] %v2981
  %s2989 = smul.u32 7, 6
  %s2990 = smul.addr %s2989, 8
  %s2991 = scalar_lea.vmem [#allocation2], %s2990
  %v2992 = vld [vmem:[%s2991] sm:$0xff]
  %v2993 = vld [vmem:[%s2991 + $0x8] sm:$0xff]
  %v2994 = vld [vmem:[%s2991 + $0x10] sm:$0xff]
  %v2995 = vld [vmem:[%s2991 + $0x18] sm:$0xff]
  %v2996 = vld [vmem:[%s2991 + $0x20] sm:$0xff]
  %v2997 = vld [vmem:[%s2991 + $0x28] sm:$0xff]
  %v2998 = vunpack.c.l.bf16 %v2992
  %v2999 = vunpack.c.l.bf16 %v2993
  %v3000 = vunpack.c.l.bf16 %v2994
  %v3001 = vunpack.c.l.bf16 %v2995
  %v3002 = vunpack.c.l.bf16 %v2996
  %v3003 = vunpack.c.l.bf16 %v2997
  %v3004 = vunpack.c.h.bf16 %v2992
  %v3005 = vunpack.c.h.bf16 %v2993
  %v3006 = vunpack.c.h.bf16 %v2994
  %v3007 = vunpack.c.h.bf16 %v2995
  %v3008 = vunpack.c.h.bf16 %v2996
  %v3009 = vunpack.c.h.bf16 %v2997
  %3010 = vmatprep.subr.bf16.mxu0 %v1034
  %3011 = vmatpush1.bf16.msra.mxu0 %v1033
  %3012 = vmatprep.subr.bf16.mxu0 %v1040
  %3013 = vmatpush1.bf16.msra.mxu0 %v1039
  %3014 = vmatprep.subr.bf16.mxu0 %v1046
  %3015 = vmatpush1.bf16.msra.mxu0 %v1045
  %3016 = vmatprep.subr.bf16.mxu0 %v1052
  %3017 = vmatpush1.bf16.msra.mxu0 %v1051
  %3018 = vmatprep.subr.bf16.mxu0 %v1058
  %3019 = vmatpush1.bf16.msra.mxu0 %v1057
  %3020 = vmatprep.subr.bf16.mxu0 %v1064
  %3021 = vmatpush1.bf16.msra.mxu0 %v1063
  %3022 = vmatprep.subr.bf16.mxu0 %v1070
  %3023 = vmatpush1.bf16.msra.mxu0 %v1069
  %3024 = vmatprep.subr.bf16.mxu0 %v1076
  %3025 = vmatpush1.bf16.msra.mxu0 %v1075
  %3026 = vmatprep.subr.bf16.mxu0 %v1082
  %3027 = vmatpush1.bf16.msra.mxu0 %v1081
  %3028 = vmatprep.subr.bf16.mxu0 %v1088
  %3029 = vmatpush1.bf16.msra.mxu0 %v1087
  %3030 = vmatprep.subr.bf16.mxu0 %v1094
  %3031 = vmatpush1.bf16.msra.mxu0 %v1093
  %3032 = vmatprep.subr.bf16.mxu0 %v1100
  %3033 = vmatpush1.bf16.msra.mxu0 %v1099
  %3034 = vmatprep.subr.bf16.mxu0 %v1106
  %3035 = vmatpush1.bf16.msra.mxu0 %v1105
  %3036 = vmatprep.subr.bf16.mxu0 %v1112
  %3037 = vmatpush1.bf16.msra.mxu0 %v1111
  %3038 = vmatprep.subr.bf16.mxu0 %v1118
  %3039 = vmatpush1.bf16.msra.mxu0 %v1117
  %3040 = vmatprep.subr.bf16.mxu0 %v1124
  %3041 = vmatpush1.bf16.msra.mxu0 %v1123
  %3042 = vmatprep.mubr.bf16.mxu0 %v2973
  %3043 = vmatmul.mubr.bf16.gmra.mrb[0].mxu0 %v2972
  %v3044 = vpop.f32.mrb[0].mxu0
  %v3045 = vadd.f32 0.0, %v3044
  %v3046 = vpop.f32.mrb[0].mxu0
  %v3047 = vadd.f32 0.0, %v3046
  %v3048 = vpop.f32.mrb[0].mxu0
  %v3049 = vadd.f32 0.0, %v3048
  %v3050 = vpop.f32.mrb[0].mxu0
  %v3051 = vadd.f32 0.0, %v3050
  %3052 = vdwg.mxu0
  %3053 = vmatprep.subr.bf16.mxu0 %v1036
  %3054 = vmatpush1.bf16.msra.mxu0 %v1035
  %3055 = vmatprep.subr.bf16.mxu0 %v1042
  %3056 = vmatpush1.bf16.msra.mxu0 %v1041
  %3057 = vmatprep.subr.bf16.mxu0 %v1048
  %3058 = vmatpush1.bf16.msra.mxu0 %v1047
  %3059 = vmatprep.subr.bf16.mxu0 %v1054
  %3060 = vmatpush1.bf16.msra.mxu0 %v1053
  %3061 = vmatprep.subr.bf16.mxu0 %v1060
  %3062 = vmatpush1.bf16.msra.mxu0 %v1059
  %3063 = vmatprep.subr.bf16.mxu0 %v1066
  %3064 = vmatpush1.bf16.msra.mxu0 %v1065
  %3065 = vmatprep.subr.bf16.mxu0 %v1072
  %3066 = vmatpush1.bf16.msra.mxu0 %v1071
  %3067 = vmatprep.subr.bf16.mxu0 %v1078
  %3068 = vmatpush1.bf16.msra.mxu0 %v1077
  %3069 = vmatprep.subr.bf16.mxu0 %v1084
  %3070 = vmatpush1.bf16.msra.mxu0 %v1083
  %3071 = vmatprep.subr.bf16.mxu0 %v1090
  %3072 = vmatpush1.bf16.msra.mxu0 %v1089
  %3073 = vmatprep.subr.bf16.mxu0 %v1096
  %3074 = vmatpush1.bf16.msra.mxu0 %v1095
  %3075 = vmatprep.subr.bf16.mxu0 %v1102
  %3076 = vmatpush1.bf16.msra.mxu0 %v1101
  %3077 = vmatprep.subr.bf16.mxu0 %v1108
  %3078 = vmatpush1.bf16.msra.mxu0 %v1107
  %3079 = vmatprep.subr.bf16.mxu0 %v1114
  %3080 = vmatpush1.bf16.msra.mxu0 %v1113
  %3081 = vmatprep.subr.bf16.mxu0 %v1120
  %3082 = vmatpush1.bf16.msra.mxu0 %v1119
  %3083 = vmatprep.subr.bf16.mxu0 %v1126
  %3084 = vmatpush1.bf16.msra.mxu0 %v1125
  %3085 = vmatprep.mubr.bf16.mxu0 %v2973
  %3086 = vmatmul.mubr.bf16.gmra.mrb[0].mxu0 %v2972
  %v3087 = vpop.f32.mrb[0].mxu0
  %v3088 = vadd.f32 0.0, %v3087
  %v3089 = vpop.f32.mrb[0].mxu0
  %v3090 = vadd.f32 0.0, %v3089
  %v3091 = vpop.f32.mrb[0].mxu0
  %v3092 = vadd.f32 0.0, %v3091
  %v3093 = vpop.f32.mrb[0].mxu0
  %v3094 = vadd.f32 0.0, %v3093
  %3095 = vdwg.mxu0
  %3096 = vmatprep.subr.bf16.mxu0 %v1038
  %3097 = vmatpush1.bf16.msra.mxu0 %v1037
  %3098 = vmatprep.subr.bf16.mxu0 %v1044
  %3099 = vmatpush1.bf16.msra.mxu0 %v1043
  %3100 = vmatprep.subr.bf16.mxu0 %v1050
  %3101 = vmatpush1.bf16.msra.mxu0 %v1049
  %3102 = vmatprep.subr.bf16.mxu0 %v1056
  %3103 = vmatpush1.bf16.msra.mxu0 %v1055
  %3104 = vmatprep.subr.bf16.mxu0 %v1062
  %3105 = vmatpush1.bf16.msra.mxu0 %v1061
  %3106 = vmatprep.subr.bf16.mxu0 %v1068
  %3107 = vmatpush1.bf16.msra.mxu0 %v1067
  %3108 = vmatprep.subr.bf16.mxu0 %v1074
  %3109 = vmatpush1.bf16.msra.mxu0 %v1073
  %3110 = vmatprep.subr.bf16.mxu0 %v1080
  %3111 = vmatpush1.bf16.msra.mxu0 %v1079
  %3112 = vmatprep.subr.bf16.mxu0 %v1086
  %3113 = vmatpush1.bf16.msra.mxu0 %v1085
  %3114 = vmatprep.subr.bf16.mxu0 %v1092
  %3115 = vmatpush1.bf16.msra.mxu0 %v1091
  %3116 = vmatprep.subr.bf16.mxu0 %v1098
  %3117 = vmatpush1.bf16.msra.mxu0 %v1097
  %3118 = vmatprep.subr.bf16.mxu0 %v1104
  %3119 = vmatpush1.bf16.msra.mxu0 %v1103
  %3120 = vmatprep.subr.bf16.mxu0 %v1110
  %3121 = vmatpush1.bf16.msra.mxu0 %v1109
  %3122 = vmatprep.subr.bf16.mxu0 %v1116
  %3123 = vmatpush1.bf16.msra.mxu0 %v1115
  %3124 = vmatprep.subr.bf16.mxu0 %v1122
  %3125 = vmatpush1.bf16.msra.mxu0 %v1121
  %3126 = vmatprep.subr.bf16.mxu0 %v1128
  %3127 = vmatpush1.bf16.msra.mxu0 %v1127
  %3128 = vmatprep.mubr.bf16.mxu0 %v2973
  %3129 = vmatmul.mubr.bf16.gmra.mrb[0].mxu0 %v2972
  %v3130 = vpop.f32.mrb[0].mxu0
  %v3131 = vadd.f32 0.0, %v3130
  %v3132 = vpop.f32.mrb[0].mxu0
  %v3133 = vadd.f32 0.0, %v3132
  %v3134 = vpop.f32.mrb[0].mxu0
  %v3135 = vadd.f32 0.0, %v3134
  %v3136 = vpop.f32.mrb[0].mxu0
  %v3137 = vadd.f32 0.0, %v3136
  %3138 = vdwg.mxu0
  %v3139 = vadd.f32 %v2998, %v3045
  %v3140 = vadd.f32 %v2999, %v3047
  %v3141 = vadd.f32 %v3000, %v3088
  %v3142 = vadd.f32 %v3001, %v3090
  %v3143 = vadd.f32 %v3004, %v3049
  %v3144 = vadd.f32 %v3005, %v3051
  %v3145 = vadd.f32 %v3006, %v3092
  %v3146 = vadd.f32 %v3007, %v3094
  %v3147 = vxor.u32 %v3139, 2147483648
  %v3148 = vxor.u32 %v3140, 2147483648
  %v3149 = vxor.u32 %v3141, 2147483648
  %v3150 = vxor.u32 %v3142, 2147483648
  %v3151 = vxor.u32 %v3143, 2147483648
  %v3152 = vxor.u32 %v3144, 2147483648
  %v3153 = vxor.u32 %v3145, 2147483648
  %v3154 = vxor.u32 %v3146, 2147483648
  %v3155 = vmul.f32 %v3147, 1.442695
  %v3156 = vpow.pop %v3155
  %v3157 = vmul.f32 %v3148, 1.442695
  %v3158 = vpow.pop %v3157
  %v3159 = vmul.f32 %v3149, 1.442695
  %v3160 = vpow.pop %v3159
  %v3161 = vmul.f32 %v3150, 1.442695
  %v3162 = vpow.pop %v3161
  %v3163 = vmul.f32 %v3151, 1.442695
  %v3164 = vpow.pop %v3163
  %v3165 = vmul.f32 %v3152, 1.442695
  %v3166 = vpow.pop %v3165
  %v3167 = vmul.f32 %v3153, 1.442695
  %v3168 = vpow.pop %v3167
  %v3169 = vmul.f32 %v3154, 1.442695
  %v3170 = vpow.pop %v3169
  %v3171 = vadd.f32 %v3156, 1.0
  %v3172 = vadd.f32 %v3158, 1.0
  %v3173 = vadd.f32 %v3160, 1.0
  %v3174 = vadd.f32 %v3162, 1.0
  %v3175 = vadd.f32 %v3164, 1.0
  %v3176 = vadd.f32 %v3166, 1.0
  %v3177 = vadd.f32 %v3168, 1.0
  %v3178 = vadd.f32 %v3170, 1.0
  %v3179 = vrcp.pop %v3171
  %v3180 = vmul.f32 1.0, %v3179
  %v3181 = vrcp.pop %v3172
  %v3182 = vmul.f32 1.0, %v3181
  %v3183 = vrcp.pop %v3173
  %v3184 = vmul.f32 1.0, %v3183
  %v3185 = vrcp.pop %v3174
  %v3186 = vmul.f32 1.0, %v3185
  %v3187 = vrcp.pop %v3175
  %v3188 = vmul.f32 1.0, %v3187
  %v3189 = vrcp.pop %v3176
  %v3190 = vmul.f32 1.0, %v3189
  %v3191 = vrcp.pop %v3177
  %v3192 = vmul.f32 1.0, %v3191
  %v3193 = vrcp.pop %v3178
  %v3194 = vmul.f32 1.0, %v3193
  %v3195 = vadd.f32 %v3131, %v711
  %v3196 = vadd.f32 %v3133, %v715
  %v3197 = vadd.f32 %v3135, %v711
  %v3198 = vadd.f32 %v3137, %v715
  %v3199 = vmul.f32 %v3180, %v3195
  %v3200 = vmul.f32 %v3182, %v3196
  %v3201 = vmul.f32 %v3188, %v3197
  %v3202 = vmul.f32 %v3190, %v3198
  %v3203 = vadd.f32 %v3002, %v3199
  %v3204 = vadd.f32 %v3003, %v3200
  %v3205 = vadd.f32 %v3008, %v3201
  %v3206 = vadd.f32 %v3009, %v3202
  %v3207 = vtanh.pop %v3203
  %v3208 = vtanh.pop %v3204
  %v3209 = vtanh.pop %v3205
  %v3210 = vtanh.pop %v3206
  %v3211 = vsub.f32 1.0, %v3184
  %v3212 = vsub.f32 1.0, %v3186
  %v3213 = vsub.f32 1.0, %v3192
  %v3214 = vsub.f32 1.0, %v3194
  %v3215 = vmul.f32 %v3211, %v3207
  %v3216 = vmul.f32 %v3212, %v3208
  %v3217 = vmul.f32 %v3213, %v3209
  %v3218 = vmul.f32 %v3214, %v3210
  %v3219 = vmul.f32 %v3184, %v2968
  %v3220 = vmul.f32 %v3186, %v2969
  %v3221 = vmul.f32 %v3192, %v2970
  %v3222 = vmul.f32 %v3194, %v2971
  %v3223 = vadd.f32 %v3215, %v3219
  %v3224 = vadd.f32 %v3216, %v3220
  %v3225 = vadd.f32 %v3217, %v3221
  %v3226 = vadd.f32 %v3218, %v3222
  %v3227 = vpack.c.bf16 %v3225, %v3223
  %v3228 = vpack.c.bf16 %v3226, %v3224
  %v3231 = vunpack.c.l.b16 %v3227
  %v3232 = vunpack.c.l.b16 %v3228
  %v3233 = vunpack.c.h.b16 %v3227
  %v3234 = vunpack.c.h.b16 %v3228
  %v3235 = vpack.c.b16 %v3232, %v3231
  %v3236 = vpack.c.b16 %v3234, %v3233
  %s3239 = smul.u32 14, 2
  %s3240 = smul.addr %s3239, 4
  %s3241 = scalar_lea.vmem %s6, %s3240
  %3242 = vst [vmem:[%s3241] sm:$0xff] %v3235
  %3243 = vst [vmem:[%s3241 + $0x8] sm:$0xff] %v3236
  %3244 = vst [vmem:[%s7] sm:$0xff] %v3223
  %3245 = vst [vmem:[%s7 + $0x8] sm:$0xff] %v3224
  %3246 = vst [vmem:[%s7 + $0x10] sm:$0xff] %v3225
  %3247 = vst [vmem:[%s7 + $0x18] sm:$0xff] %v3226
  // Predicated region
  $region26: #{seq2seq_forward.4} parent=0 // pred_check
    _
  $region27: #{seq2seq_forward.4} parent=0 // pred_check_branch
    %3249 = sbr.rel (0) target = $region29
  $region28: #{seq2seq_forward.4} parent=0 // pred_region
    _
  $region29: #{seq2seq_forward.4} parent=0 // pred_fallthru
    _
  // Predicated region
  $region30: #{seq2seq_forward.4} parent=0 // pred_check
    _
  $region31: #{seq2seq_forward.4} parent=0 // pred_check_branch
    %3251 = sbr.rel (0) target = $region33
  $region32: #{seq2seq_forward.4} parent=0 // pred_region
    _
  $region33: #{seq2seq_forward.4} parent=0 // pred_fallthru
    _
  // Predicated region
  $region34: #{seq2seq_forward.4} parent=0 // pred_check
    _
  $region35: #{seq2seq_forward.4} parent=0 // pred_check_branch
    %3253 = sbr.rel (0) target = $region37
  $region36: #{seq2seq_forward.4} parent=0 // pred_region
    _
  $region37: #{seq2seq_forward.4} parent=0 // pred_fallthru
    _
  // Predicated region
  $region38: #{seq2seq_forward.4} parent=0 // pred_check
    _
  $region39: #{seq2seq_forward.4} parent=0 // pred_check_branch
    %3255 = sbr.rel (0) target = $region41
  $region40: #{seq2seq_forward.4} parent=0 // pred_region
    _
  $region41: #{seq2seq_forward.4} parent=0 // pred_fallthru
    _

</llo_original>
